<compile_context>
chip_gen: v6e
topology: v6e:2x2x1
jax: 0.10.0
libtpu: 0.0.40
codegen_flags: <defaults>
</compile_context>

<pallas_src>
import functools

import jax
import jax.numpy as jnp
from jax.experimental import pallas as pl
from jax.experimental.pallas import tpu as pltpu


# ----------------------------- in-kernel helpers ---------------------------- #

def _ln(x, g, b, eps):
    """LayerNorm over the last dim. x: (rows, D) f32; g, b: (1, D) f32."""
    mean = jnp.mean(x, axis=-1, keepdims=True)
    xc = x - mean
    var = jnp.mean(xc * xc, axis=-1, keepdims=True)
    return xc * jax.lax.rsqrt(var + eps) * g + b


# ----------------------------- Pallas kernels ------------------------------ #

def _patch_embed_kernel(xp_ref, w_ref, b_ref, cls_ref, pos_ref, o_ref,
                        *, bt, p_per_img, n_pad):
    # xp_ref: (bt*P, K) f32   w_ref: (K, D) bf16   b/cls: (1, D) f32
    # pos_ref: (N, D) f32     o_ref: (bt*n_pad, D) f32
    D = w_ref.shape[1]
    emb = jnp.dot(xp_ref[...].astype(jnp.bfloat16), w_ref[...],
                  preferred_element_type=jnp.float32) + b_ref[...]     # (bt*P, D)
    cls_tok = cls_ref[...] + pos_ref[0:1, :]                           # (1, D)
    body = emb.reshape(bt, p_per_img, D) + pos_ref[1:, :]              # (bt, P, D)
    cls3 = jnp.broadcast_to(cls_tok, (bt, 1, D))
    padz = jnp.zeros((bt, n_pad - 1 - p_per_img, D), jnp.float32)      # pad rows
    out = jnp.concatenate([cls3, body, padz], axis=1).reshape(bt * n_pad, D)
    o_ref[...] = out.astype(o_ref.dtype)                               # one aligned store


def _vit_block_kernel(tok_ref, ln1_g, ln1_b, qkv_w, qkv_b, proj_w, proj_b,
                      ln2_g, ln2_b, fc1_w, fc1_b, fc2_w, fc2_b, o_ref,
                      *, bt, n_pad, n_valid, heads, eps):
    M, D = tok_ref.shape                       # M = bt * n_pad (rows, 8-aligned)
    dh = D // heads
    x = tok_ref[...]                           # (M, D) f32 residual stream

    # ---- attention: LN1 -> QKV -> per-image masked softmax -> proj -> resid --
    h = _ln(x, ln1_g[...], ln1_b[...], eps)
    qkv = jnp.dot(h.astype(jnp.bfloat16), qkv_w[...],
                  preferred_element_type=jnp.float32) + qkv_b[...]     # (M, 3D)
    # 128-lane-aligned q/k/v slices; 1/sqrt(dh) already folded into the Q weights.
    q = qkv[:, :D].astype(jnp.bfloat16)
    k = qkv[:, D:2 * D].astype(jnp.bfloat16)
    v = qkv[:, 2 * D:].astype(jnp.bfloat16)

    pw = proj_w[...]                           # (D, D) bf16, loaded once
    acc = jnp.zeros((M, D), jnp.float32)
    # Static unroll over heads; per-head projection accumulate (no lane concat).
    # At real ViT-L (16 heads) restructure with a batched-head einsum / head grid
    # axis instead of an unrolled loop.
    for hd in range(heads):
        q3 = q[:, hd * dh:(hd + 1) * dh].reshape(bt, n_pad, dh)
        k3 = k[:, hd * dh:(hd + 1) * dh].reshape(bt, n_pad, dh)
        v3 = v[:, hd * dh:(hd + 1) * dh].reshape(bt, n_pad, dh)
        s = jnp.einsum('bqd,bkd->bqk', q3, k3,
                       preferred_element_type=jnp.float32)             # (bt,n_pad,n_pad)
        kcol = jax.lax.broadcasted_iota(jnp.int32, s.shape, 2)
        s = jnp.where(kcol < n_valid, s, -1e30)                        # mask pad keys
        s = s - jnp.max(s, axis=-1, keepdims=True)
        p = jnp.exp(s)
        p = p * pl.reciprocal(jnp.sum(p, axis=-1, keepdims=True), approx=True)
        o3 = jnp.einsum('bqk,bkd->bqd', p.astype(jnp.bfloat16), v3,
                        preferred_element_type=jnp.float32)            # (bt,n_pad,dh)
        acc = acc + jnp.dot(o3.reshape(M, dh).astype(jnp.bfloat16),
                            pw[hd * dh:(hd + 1) * dh, :],              # 8-aligned sublane slice
                            preferred_element_type=jnp.float32)
    x = x + acc + proj_b[...]

    # ---- MLP: LN2 -> fc1 + GELU -> fc2 -> residual ----
    h = _ln(x, ln2_g[...], ln2_b[...], eps)
    h = jnp.dot(h.astype(jnp.bfloat16), fc1_w[...],
                preferred_element_type=jnp.float32) + fc1_b[...]
    # TODO(synk): torch nn.GELU default is the exact erf form; tanh approx used
    # here (max abs diff ~1e-3) since erf has no guaranteed Mosaic lowering.
    h = jax.nn.gelu(h, approximate=True)
    h = jnp.dot(h.astype(jnp.bfloat16), fc2_w[...],
                preferred_element_type=jnp.float32) + fc2_b[...]
    o_ref[...] = (x + h).astype(o_ref.dtype)


def _pool_fcnorm_kernel(tok_ref, g_ref, b_ref, o_ref, *, n_pad, n_patch, eps):
    # Fused: mean over patch (non-cls, non-pad) tokens, then fc_norm LayerNorm.
    Bp, D = o_ref.shape
    x = tok_ref[...].reshape(Bp, n_pad, D)
    pooled = jnp.sum(x[:, 1:1 + n_patch, :], axis=1) * (1.0 / n_patch)  # (Bp, D)
    o_ref[...] = _ln(pooled, g_ref[...], b_ref[...], eps).astype(o_ref.dtype)


# ------------------------------ wrappers ------------------------------------ #

_PARALLEL = pltpu.CompilerParams(dimension_semantics=("parallel",))


def patch_embed_cls_pos(xp, w, b, cls, pos, *, batch, p_per_img, n_pad, bt):
    # xp: (B*P, K) f32; output tokens: (B*n_pad, D) f32 (pad rows zeroed).
    K = xp.shape[-1]
    D = w.shape[1]
    N = pos.shape[1]
    kernel = functools.partial(_patch_embed_kernel, bt=bt,
                               p_per_img=p_per_img, n_pad=n_pad)
    return pl.pallas_call(
        kernel,
        out_shape=jax.ShapeDtypeStruct((batch * n_pad, D), jnp.float32),
        grid=(batch // bt,),
        in_specs=[
            pl.BlockSpec((bt * p_per_img, K), lambda g: (g, 0)),
            pl.BlockSpec((K, D), lambda g: (0, 0)),
            pl.BlockSpec((1, D), lambda g: (0, 0)),
            pl.BlockSpec((1, D), lambda g: (0, 0)),
            pl.BlockSpec((N, D), lambda g: (0, 0)),
        ],
        out_specs=pl.BlockSpec((bt * n_pad, D), lambda g: (g, 0)),
        compiler_params=_PARALLEL,
    )(xp, w, b.reshape(1, D), cls.reshape(1, D), pos.reshape(N, D))


def vit_block(tok, blk, *, bt, n_pad, n_valid, heads, eps=1e-6):
    R, D = tok.shape                     # R = B * n_pad
    Mh = blk["fc1_w"].shape[1]
    kernel = functools.partial(_vit_block_kernel, bt=bt, n_pad=n_pad,
                               n_valid=n_valid, heads=heads, eps=eps)

    def wspec(shape):
        # Constant block index across the batch-tile grid -> weight stays VMEM
        # resident (no re-DMA per grid step). For real ViT-L also set
        # pipeline_mode=pl.Buffered(1) so weights are not double-buffered.
        return pl.BlockSpec(shape, lambda g: (0, 0))

    return pl.pallas_call(
        kernel,
        out_shape=jax.ShapeDtypeStruct((R, D), tok.dtype),
        grid=(R // (bt * n_pad),),
        in_specs=[
            pl.BlockSpec((bt * n_pad, D), lambda g: (g, 0)),     # tokens
            wspec((1, D)), wspec((1, D)),                        # ln1 g/b
            wspec((D, 3 * D)), wspec((1, 3 * D)),                # qkv w/b (bf16/f32)
            wspec((D, D)), wspec((1, D)),                        # proj w/b
            wspec((1, D)), wspec((1, D)),                        # ln2 g/b
            wspec((D, Mh)), wspec((1, Mh)),                      # fc1 w/b
            wspec((Mh, D)), wspec((1, D)),                       # fc2 w/b
        ],
        out_specs=pl.BlockSpec((bt * n_pad, D), lambda g: (g, 0)),
        compiler_params=_PARALLEL,
    )(tok,
      blk["ln1_g"].reshape(1, D), blk["ln1_b"].reshape(1, D),
      blk["qkv_w"], blk["qkv_b"].reshape(1, 3 * D),
      blk["proj_w"], blk["proj_b"].reshape(1, D),
      blk["ln2_g"].reshape(1, D), blk["ln2_b"].reshape(1, D),
      blk["fc1_w"], blk["fc1_b"].reshape(1, Mh),
      blk["fc2_w"], blk["fc2_b"].reshape(1, D))


def pool_fc_norm(tok, g, b, *, batch, n_pad, n_patch, bp, eps=1e-6):
    R, D = tok.shape
    kernel = functools.partial(_pool_fcnorm_kernel, n_pad=n_pad,
                               n_patch=n_patch, eps=eps)
    return pl.pallas_call(
        kernel,
        out_shape=jax.ShapeDtypeStruct((batch, D), jnp.float32),
        grid=(batch // bp,),
        in_specs=[
            pl.BlockSpec((bp * n_pad, D), lambda g: (g, 0)),
            pl.BlockSpec((1, D), lambda g: (0, 0)),
            pl.BlockSpec((1, D), lambda g: (0, 0)),
        ],
        out_specs=pl.BlockSpec((bp, D), lambda g: (g, 0)),
        compiler_params=_PARALLEL,
    )(tok, g.reshape(1, D), b.reshape(1, D))


# ------------------------------ Model (glue) -------------------------------- #

def init_params(key, cfg):
    C, p, D = cfg["in_chans"], cfg["patch"], cfg["dim"]
    depth, mlp, heads = cfg["depth"], cfg["mlp_hidden"], cfg["heads"]
    n_tokens = (cfg["img"] // p) ** 2 + 1
    dh = D // heads
    scale = float(dh) ** -0.5
    keys = jax.random.split(key, 4 + depth)

    def nrm(k, shape, std=0.02):
        return (std * jax.random.normal(k, shape)).astype(jnp.float32)

    params = {
        # matmul weights stored bf16 (MXU-native, half the VMEM/DMA bytes)
        "patch_w": nrm(keys[0], (C * p * p, D)).astype(jnp.bfloat16),
        "patch_b": jnp.zeros((D,), jnp.float32),
        "cls": nrm(keys[1], (1, 1, D)),
        "pos": nrm(keys[2], (1, n_tokens, D)),
        "fc_norm_g": jnp.ones((D,), jnp.float32),
        "fc_norm_b": jnp.zeros((D,), jnp.float32),
        "blocks": [],
    }
    for d in range(depth):
        bk = jax.random.split(keys[4 + d], 4)
        qkv_w = nrm(bk[0], (D, 3 * D))
        qkv_b = jnp.zeros((3 * D,), jnp.float32)
        # Fold the 1/sqrt(dh) attention scale into the Q columns (one-time
        # weight transform instead of a per-call VPU multiply in the kernel).
        qkv_w = qkv_w.at[:, :D].multiply(scale)
        qkv_b = qkv_b.at[:D].multiply(scale)
        params["blocks"].append({
            "ln1_g": jnp.ones((D,), jnp.float32),
            "ln1_b": jnp.zeros((D,), jnp.float32),
            "qkv_w": qkv_w.astype(jnp.bfloat16),
            "qkv_b": qkv_b,
            "proj_w": nrm(bk[1], (D, D)).astype(jnp.bfloat16),
            "proj_b": jnp.zeros((D,), jnp.float32),
            "ln2_g": jnp.ones((D,), jnp.float32),
            "ln2_b": jnp.zeros((D,), jnp.float32),
            "fc1_w": nrm(bk[2], (D, mlp)).astype(jnp.bfloat16),
            "fc1_b": jnp.zeros((mlp,), jnp.float32),
            "fc2_w": nrm(bk[3], (mlp, D)).astype(jnp.bfloat16),
            "fc2_b": jnp.zeros((D,), jnp.float32),
        })
    return params


def image_encoder_vit_forward(x, params, cfg):
    B, C, H, W = x.shape
    p, heads = cfg["patch"], cfg["heads"]
    gh, gw = H // p, W // p
    P = gh * gw
    N = P + 1
    n_pad = 8 * ((N + 7) // 8)          # pad tokens to a full sublane tile
    bt = max(1, B // 2)                 # >=2 parallel grid steps (v7x: 2 TCs)

    # Conv2d(k=p, stride=p) patch extraction: pure data rearrangement, left to
    # XLA; flatten order (C, ph, pw) matches conv_weight.reshape(D, -1).
    # TODO(synk): at real 224x224 scale, fold this rearrangement into the
    # patch-embed kernel's index_map/DMA instead of an XLA HBM->HBM transpose.
    xp = x.reshape(B, C, gh, p, gw, p).transpose(0, 2, 4, 1, 3, 5)
    xp = xp.reshape(B * P, C * p * p)

    # patch embed + cls token + pos embed + pad-to-8 tokens (one fused kernel)
    tok = patch_embed_cls_pos(xp, params["patch_w"], params["patch_b"],
                              params["cls"], params["pos"],
                              batch=B, p_per_img=P, n_pad=n_pad, bt=bt)

    # transformer blocks (one fused kernel per block, batch folded into M)
    for blk in params["blocks"]:
        tok = vit_block(tok, blk, bt=bt, n_pad=n_pad, n_valid=N, heads=heads)

    # global_pool='avg' over patch tokens (pad rows excluded) + fc_norm; head=Identity
    return pool_fc_norm(tok, params["fc_norm_g"], params["fc_norm_b"],
                        batch=B, n_pad=n_pad, n_patch=P, bp=bt)


# ---------------------------------- main ------------------------------------ #

if __name__ == "__main__":
    cfg = dict(img=16, patch=8, in_chans=3, dim=128, depth=2, heads=4,
               mlp_hidden=512)
    B = 16
    key = jax.random.PRNGKey(0)
    kp, kx = jax.random.split(key)
    params = init_params(kp, cfg)
    x = jax.random.normal(kx, (B, cfg["in_chans"], cfg["img"], cfg["img"]),
                          jnp.float32)

    fwd = jax.jit(lambda xx, pp: image_encoder_vit_forward(xx, pp, cfg))
    out = fwd(x, params)
    out = jax.block_until_ready(out)
    assert out.shape == (B, cfg["dim"]), out.shape
    assert out.dtype == jnp.float32
    assert bool(jnp.all(jnp.isfinite(out)))
    print("KERNEL_OK")
</pallas_src>

<mosaic_0001>
module attributes {stable_mosaic.version = 11 : i64} {
  func.func @_patch_embed_kernel(%arg0: i32, %arg1: memref<32x192xf32, #tpu.memory_space<vmem>>, %arg2: memref<192x128xbf16, #tpu.memory_space<vmem>>, %arg3: memref<1x128xf32, #tpu.memory_space<vmem>>, %arg4: memref<1x128xf32, #tpu.memory_space<vmem>>, %arg5: memref<5x128xf32, #tpu.memory_space<vmem>>, %arg6: memref<64x128xf32, #tpu.memory_space<vmem>>) attributes {dimension_semantics = [#tpu.dimension_semantics<parallel>], iteration_bounds = array<i64: 2>, scalar_prefetch = 0 : i64, scratch_operands = 0 : i64, tpu.core_type = #tpu.core_type<tc>, window_params = [{transform_indices = @transform_0, window_bounds = array<i64: 32, 192>}, {pipeline_mode = #tpu.pipeline_mode<synchronous>, transform_indices = @transform_1, window_bounds = array<i64: 192, 128>}, {pipeline_mode = #tpu.pipeline_mode<synchronous>, transform_indices = @transform_2, window_bounds = array<i64: 1, 128>}, {pipeline_mode = #tpu.pipeline_mode<synchronous>, transform_indices = @transform_3, window_bounds = array<i64: 1, 128>}, {pipeline_mode = #tpu.pipeline_mode<synchronous>, transform_indices = @transform_4, window_bounds = array<i64: 5, 128>}, {transform_indices = @transform_5, window_bounds = array<i64: 64, 128>}]} {
    %c0 = arith.constant 0 : index
    %c0_0 = arith.constant 0 : index
    %0 = vector.load %arg1[%c0, %c0_0] : memref<32x192xf32, #tpu.memory_space<vmem>>, vector<32x192xf32>
    %1 = arith.truncf %0 : vector<32x192xf32> to vector<32x192xbf16>
    %c0_1 = arith.constant 0 : index
    %c0_2 = arith.constant 0 : index
    %2 = vector.load %arg2[%c0_1, %c0_2] : memref<192x128xbf16, #tpu.memory_space<vmem>>, vector<192x128xbf16>
    %cst = arith.constant dense<0.000000e+00> : vector<32x128xf32>
    %3 = tpu.matmul %1, %2, %cst {dimension_numbers = #tpu.dot_dimension_numbers<[1], [0], [0], [1], [0, 0, 1, 1], [], []>} : vector<32x192xbf16>, vector<192x128xbf16>, vector<32x128xf32> -> vector<32x128xf32>
    %c0_3 = arith.constant 0 : index
    %c0_4 = arith.constant 0 : index
    %4 = vector.load %arg3[%c0_3, %c0_4] : memref<1x128xf32, #tpu.memory_space<vmem>>, vector<1x128xf32>
    %5 = vector.broadcast %4 : vector<1x128xf32> to vector<32x128xf32>
    %6 = arith.addf %3, %5 : vector<32x128xf32>
    %c0_5 = arith.constant 0 : index
    %c0_6 = arith.constant 0 : index
    %7 = vector.load %arg4[%c0_5, %c0_6] : memref<1x128xf32, #tpu.memory_space<vmem>>, vector<1x128xf32>
    %c0_7 = arith.constant 0 : index
    %c0_8 = arith.constant 0 : index
    %8 = vector.load %arg5[%c0_7, %c0_8] : memref<5x128xf32, #tpu.memory_space<vmem>>, vector<1x128xf32>
    %9 = arith.addf %7, %8 : vector<1x128xf32>
    %10 = vector.shape_cast %6 : vector<32x128xf32> to vector<8x4x128xf32>
    %c1 = arith.constant 1 : index
    %c0_9 = arith.constant 0 : index
    %11 = vector.load %arg5[%c1, %c0_9] : memref<5x128xf32, #tpu.memory_space<vmem>>, vector<4x128xf32>
    %12 = vector.shape_cast %11 : vector<4x128xf32> to vector<1x4x128xf32>
    %13 = vector.broadcast %12 : vector<1x4x128xf32> to vector<8x4x128xf32>
    %14 = arith.addf %10, %13 : vector<8x4x128xf32>
    %15 = vector.shape_cast %9 : vector<1x128xf32> to vector<1x1x128xf32>
    %16 = vector.broadcast %15 : vector<1x1x128xf32> to vector<8x1x128xf32>
    %cst_10 = arith.constant 0.000000e+00 : f32
    %17 = vector.broadcast %cst_10 : f32 to vector<8x3x128xf32>
    %18 = tpu.concatenate %16, %14, %17 in 1 : vector<8x1x128xf32>, vector<8x4x128xf32>, vector<8x3x128xf32> -> vector<8x8x128xf32>
    %19 = vector.shape_cast %18 : vector<8x8x128xf32> to vector<64x128xf32>
    %c0_11 = arith.constant 0 : index
    %c0_12 = arith.constant 0 : index
    %20 = vector.load %arg6[%c0_11, %c0_12] : memref<64x128xf32, #tpu.memory_space<vmem>>, vector<64x128xf32>
    tpu.vector_store %arg6[%c0_11, %c0_12], %19 {strides = array<i32>} : memref<64x128xf32, #tpu.memory_space<vmem>>, vector<64x128xf32>,
    return
  }
  func.func @transform_0(%arg0: i32) -> (i32, i32) {
    %c0_i32 = arith.constant 0 : i32
    %c0_i32_0 = arith.constant 0 : i32
    return %arg0, %c0_i32 : i32, i32
  }
  func.func @transform_1(%arg0: i32) -> (i32, i32) {
    %c0_i32 = arith.constant 0 : i32
    %c0_i32_0 = arith.constant 0 : i32
    %c0_i32_1 = arith.constant 0 : i32
    return %c0_i32, %c0_i32_0 : i32, i32
  }
  func.func @transform_2(%arg0: i32) -> (i32, i32) {
    %c0_i32 = arith.constant 0 : i32
    %c0_i32_0 = arith.constant 0 : i32
    %c0_i32_1 = arith.constant 0 : i32
    return %c0_i32, %c0_i32_0 : i32, i32
  }
  func.func @transform_3(%arg0: i32) -> (i32, i32) {
    %c0_i32 = arith.constant 0 : i32
    %c0_i32_0 = arith.constant 0 : i32
    %c0_i32_1 = arith.constant 0 : i32
    return %c0_i32, %c0_i32_0 : i32, i32
  }
  func.func @transform_4(%arg0: i32) -> (i32, i32) {
    %c0_i32 = arith.constant 0 : i32
    %c0_i32_0 = arith.constant 0 : i32
    %c0_i32_1 = arith.constant 0 : i32
    return %c0_i32, %c0_i32_0 : i32, i32
  }
  func.func @transform_5(%arg0: i32) -> (i32, i32) {
    %c0_i32 = arith.constant 0 : i32
    %c0_i32_0 = arith.constant 0 : i32
    return %arg0, %c0_i32 : i32, i32
  }
}

module attributes {stable_mosaic.version = 11 : i64} {
  func.func @_pool_fcnorm_kernel(%arg0: i32, %arg1: memref<64x128xf32, #tpu.memory_space<vmem>>, %arg2: memref<1x128xf32, #tpu.memory_space<vmem>>, %arg3: memref<1x128xf32, #tpu.memory_space<vmem>>, %arg4: memref<8x128xf32, #tpu.memory_space<vmem>>) attributes {dimension_semantics = [#tpu.dimension_semantics<parallel>], iteration_bounds = array<i64: 2>, scalar_prefetch = 0 : i64, scratch_operands = 0 : i64, tpu.core_type = #tpu.core_type<tc>, window_params = [{transform_indices = @transform_0, window_bounds = array<i64: 64, 128>}, {pipeline_mode = #tpu.pipeline_mode<synchronous>, transform_indices = @transform_1, window_bounds = array<i64: 1, 128>}, {pipeline_mode = #tpu.pipeline_mode<synchronous>, transform_indices = @transform_2, window_bounds = array<i64: 1, 128>}, {transform_indices = @transform_3, window_bounds = array<i64: 8, 128>}]} {
    %c0 = arith.constant 0 : index
    %c0_0 = arith.constant 0 : index
    %0 = vector.load %arg1[%c0, %c0_0] : memref<64x128xf32, #tpu.memory_space<vmem>>, vector<64x128xf32>
    %1 = vector.shape_cast %0 : vector<64x128xf32> to vector<8x8x128xf32>
    %2 = vector.extract_strided_slice %1 {offsets = [0, 1, 0], sizes = [8, 4, 128], strides = [1, 1, 1]} : vector<8x8x128xf32> to vector<8x4x128xf32>
    %cst = arith.constant dense<0.000000e+00> : vector<8x128xf32>
    %3 = vector.multi_reduction <add>, %2, %cst [1] : vector<8x4x128xf32> to vector<8x128xf32>
    %cst_1 = arith.constant 2.500000e-01 : f32
    %4 = vector.broadcast %cst_1 : f32 to vector<8x128xf32>
    %5 = arith.mulf %3, %4 : vector<8x128xf32>
    %c0_2 = arith.constant 0 : index
    %c0_3 = arith.constant 0 : index
    %6 = vector.load %arg2[%c0_2, %c0_3] : memref<1x128xf32, #tpu.memory_space<vmem>>, vector<1x128xf32>
    %c0_4 = arith.constant 0 : index
    %c0_5 = arith.constant 0 : index
    %7 = vector.load %arg3[%c0_4, %c0_5] : memref<1x128xf32, #tpu.memory_space<vmem>>, vector<1x128xf32>
    %cst_6 = arith.constant dense<0.000000e+00> : vector<8xf32>
    %8 = vector.multi_reduction <add>, %5, %cst_6 [1] : vector<8x128xf32> to vector<8xf32>
    %9 = vector.shape_cast %8 : vector<8xf32> to vector<8x1xf32>
    %cst_7 = arith.constant 1.280000e+02 : f32
    %10 = vector.broadcast %cst_7 : f32 to vector<8x1xf32>
    %11 = arith.divf %9, %10 : vector<8x1xf32>
    %12 = vector.broadcast %11 : vector<8x1xf32> to vector<8x128xf32>
    %13 = arith.subf %5, %12 : vector<8x128xf32>
    %14 = arith.mulf %13, %13 : vector<8x128xf32>
    %cst_8 = arith.constant dense<0.000000e+00> : vector<8xf32>
    %15 = vector.multi_reduction <add>, %14, %cst_8 [1] : vector<8x128xf32> to vector<8xf32>
    %16 = vector.shape_cast %15 : vector<8xf32> to vector<8x1xf32>
    %cst_9 = arith.constant 1.280000e+02 : f32
    %17 = vector.broadcast %cst_9 : f32 to vector<8x1xf32>
    %18 = arith.divf %16, %17 : vector<8x1xf32>
    %cst_10 = arith.constant 9.99999997E-7 : f32
    %19 = vector.broadcast %cst_10 : f32 to vector<8x1xf32>
    %20 = arith.addf %18, %19 : vector<8x1xf32>
    %21 = math.rsqrt %20 : vector<8x1xf32>
    %22 = vector.broadcast %21 : vector<8x1xf32> to vector<8x128xf32>
    %23 = arith.mulf %13, %22 : vector<8x128xf32>
    %24 = vector.broadcast %6 : vector<1x128xf32> to vector<8x128xf32>
    %25 = arith.mulf %23, %24 : vector<8x128xf32>
    %26 = vector.broadcast %7 : vector<1x128xf32> to vector<8x128xf32>
    %27 = arith.addf %25, %26 : vector<8x128xf32>
    %c0_11 = arith.constant 0 : index
    %c0_12 = arith.constant 0 : index
    %28 = vector.load %arg4[%c0_11, %c0_12] : memref<8x128xf32, #tpu.memory_space<vmem>>, vector<8x128xf32>
    tpu.vector_store %arg4[%c0_11, %c0_12], %27 {strides = array<i32>} : memref<8x128xf32, #tpu.memory_space<vmem>>, vector<8x128xf32>,
    return
  }
  func.func @transform_0(%arg0: i32) -> (i32, i32) {
    %c0_i32 = arith.constant 0 : i32
    %c0_i32_0 = arith.constant 0 : i32
    return %arg0, %c0_i32 : i32, i32
  }
  func.func @transform_1(%arg0: i32) -> (i32, i32) {
    %c0_i32 = arith.constant 0 : i32
    %c0_i32_0 = arith.constant 0 : i32
    %c0_i32_1 = arith.constant 0 : i32
    return %c0_i32, %c0_i32_0 : i32, i32
  }
  func.func @transform_2(%arg0: i32) -> (i32, i32) {
    %c0_i32 = arith.constant 0 : i32
    %c0_i32_0 = arith.constant 0 : i32
    %c0_i32_1 = arith.constant 0 : i32
    return %c0_i32, %c0_i32_0 : i32, i32
  }
  func.func @transform_3(%arg0: i32) -> (i32, i32) {
    %c0_i32 = arith.constant 0 : i32
    %c0_i32_0 = arith.constant 0 : i32
    return %arg0, %c0_i32 : i32, i32
  }
}

module attributes {stable_mosaic.version = 11 : i64} {
  func.func @_vit_block_kernel(%arg0: i32, %arg1: memref<64x128xf32, #tpu.memory_space<vmem>>, %arg2: memref<1x128xf32, #tpu.memory_space<vmem>>, %arg3: memref<1x128xf32, #tpu.memory_space<vmem>>, %arg4: memref<128x384xbf16, #tpu.memory_space<vmem>>, %arg5: memref<1x384xf32, #tpu.memory_space<vmem>>, %arg6: memref<128x128xbf16, #tpu.memory_space<vmem>>, %arg7: memref<1x128xf32, #tpu.memory_space<vmem>>, %arg8: memref<1x128xf32, #tpu.memory_space<vmem>>, %arg9: memref<1x128xf32, #tpu.memory_space<vmem>>, %arg10: memref<128x512xbf16, #tpu.memory_space<vmem>>, %arg11: memref<1x512xf32, #tpu.memory_space<vmem>>, %arg12: memref<512x128xbf16, #tpu.memory_space<vmem>>, %arg13: memref<1x128xf32, #tpu.memory_space<vmem>>, %arg14: memref<64x128xf32, #tpu.memory_space<vmem>>) attributes {dimension_semantics = [#tpu.dimension_semantics<parallel>], iteration_bounds = array<i64: 2>, scalar_prefetch = 0 : i64, scratch_operands = 0 : i64, tpu.core_type = #tpu.core_type<tc>, window_params = [{transform_indices = @transform_0, window_bounds = array<i64: 64, 128>}, {pipeline_mode = #tpu.pipeline_mode<synchronous>, transform_indices = @transform_1, window_bounds = array<i64: 1, 128>}, {pipeline_mode = #tpu.pipeline_mode<synchronous>, transform_indices = @transform_2, window_bounds = array<i64: 1, 128>}, {pipeline_mode = #tpu.pipeline_mode<synchronous>, transform_indices = @transform_3, window_bounds = array<i64: 128, 384>}, {pipeline_mode = #tpu.pipeline_mode<synchronous>, transform_indices = @transform_4, window_bounds = array<i64: 1, 384>}, {pipeline_mode = #tpu.pipeline_mode<synchronous>, transform_indices = @transform_5, window_bounds = array<i64: 128, 128>}, {pipeline_mode = #tpu.pipeline_mode<synchronous>, transform_indices = @transform_6, window_bounds = array<i64: 1, 128>}, {pipeline_mode = #tpu.pipeline_mode<synchronous>, transform_indices = @transform_7, window_bounds = array<i64: 1, 128>}, {pipeline_mode = #tpu.pipeline_mode<synchronous>, transform_indices = @transform_8, window_bounds = array<i64: 1, 128>}, {pipeline_mode = #tpu.pipeline_mode<synchronous>, transform_indices = @transform_9, window_bounds = array<i64: 128, 512>}, {pipeline_mode = #tpu.pipeline_mode<synchronous>, transform_indices = @transform_10, window_bounds = array<i64: 1, 512>}, {pipeline_mode = #tpu.pipeline_mode<synchronous>, transform_indices = @transform_11, window_bounds = array<i64: 512, 128>}, {pipeline_mode = #tpu.pipeline_mode<synchronous>, transform_indices = @transform_12, window_bounds = array<i64: 1, 128>}, {transform_indices = @transform_13, window_bounds = array<i64: 64, 128>}]} {
    %c0 = arith.constant 0 : index
    %c0_0 = arith.constant 0 : index
    %0 = vector.load %arg1[%c0, %c0_0] : memref<64x128xf32, #tpu.memory_space<vmem>>, vector<64x128xf32>
    %c0_1 = arith.constant 0 : index
    %c0_2 = arith.constant 0 : index
    %1 = vector.load %arg2[%c0_1, %c0_2] : memref<1x128xf32, #tpu.memory_space<vmem>>, vector<1x128xf32>
    %c0_3 = arith.constant 0 : index
    %c0_4 = arith.constant 0 : index
    %2 = vector.load %arg3[%c0_3, %c0_4] : memref<1x128xf32, #tpu.memory_space<vmem>>, vector<1x128xf32>
    %cst = arith.constant dense<0.000000e+00> : vector<64xf32>
    %3 = vector.multi_reduction <add>, %0, %cst [1] : vector<64x128xf32> to vector<64xf32>
    %4 = vector.shape_cast %3 : vector<64xf32> to vector<64x1xf32>
    %cst_5 = arith.constant 1.280000e+02 : f32
    %5 = vector.broadcast %cst_5 : f32 to vector<64x1xf32>
    %6 = arith.divf %4, %5 : vector<64x1xf32>
    %7 = vector.broadcast %6 : vector<64x1xf32> to vector<64x128xf32>
    %8 = arith.subf %0, %7 : vector<64x128xf32>
    %9 = arith.mulf %8, %8 : vector<64x128xf32>
    %cst_6 = arith.constant dense<0.000000e+00> : vector<64xf32>
    %10 = vector.multi_reduction <add>, %9, %cst_6 [1] : vector<64x128xf32> to vector<64xf32>
    %11 = vector.shape_cast %10 : vector<64xf32> to vector<64x1xf32>
    %cst_7 = arith.constant 1.280000e+02 : f32
    %12 = vector.broadcast %cst_7 : f32 to vector<64x1xf32>
    %13 = arith.divf %11, %12 : vector<64x1xf32>
    %cst_8 = arith.constant 9.99999997E-7 : f32
    %14 = vector.broadcast %cst_8 : f32 to vector<64x1xf32>
    %15 = arith.addf %13, %14 : vector<64x1xf32>
    %16 = math.rsqrt %15 : vector<64x1xf32>
    %17 = vector.broadcast %16 : vector<64x1xf32> to vector<64x128xf32>
    %18 = arith.mulf %8, %17 : vector<64x128xf32>
    %19 = vector.broadcast %1 : vector<1x128xf32> to vector<64x128xf32>
    %20 = arith.mulf %18, %19 : vector<64x128xf32>
    %21 = vector.broadcast %2 : vector<1x128xf32> to vector<64x128xf32>
    %22 = arith.addf %20, %21 : vector<64x128xf32>
    %23 = arith.truncf %22 : vector<64x128xf32> to vector<64x128xbf16>
    %c0_9 = arith.constant 0 : index
    %c0_10 = arith.constant 0 : index
    %24 = vector.load %arg4[%c0_9, %c0_10] : memref<128x384xbf16, #tpu.memory_space<vmem>>, vector<128x384xbf16>
    %cst_11 = arith.constant dense<0.000000e+00> : vector<64x384xf32>
    %25 = tpu.matmul %23, %24, %cst_11 {dimension_numbers = #tpu.dot_dimension_numbers<[1], [0], [0], [1], [0, 0, 1, 1], [], []>} : vector<64x128xbf16>, vector<128x384xbf16>, vector<64x384xf32> -> vector<64x384xf32>
    %c0_12 = arith.constant 0 : index
    %c0_13 = arith.constant 0 : index
    %26 = vector.load %arg5[%c0_12, %c0_13] : memref<1x384xf32, #tpu.memory_space<vmem>>, vector<1x384xf32>
    %27 = vector.broadcast %26 : vector<1x384xf32> to vector<64x384xf32>
    %28 = arith.addf %25, %27 : vector<64x384xf32>
    %29 = vector.extract_strided_slice %28 {offsets = [0, 0], sizes = [64, 128], strides = [1, 1]} : vector<64x384xf32> to vector<64x128xf32>
    %30 = arith.truncf %29 : vector<64x128xf32> to vector<64x128xbf16>
    %31 = vector.extract_strided_slice %28 {offsets = [0, 128], sizes = [64, 128], strides = [1, 1]} : vector<64x384xf32> to vector<64x128xf32>
    %32 = arith.truncf %31 : vector<64x128xf32> to vector<64x128xbf16>
    %33 = vector.extract_strided_slice %28 {offsets = [0, 256], sizes = [64, 128], strides = [1, 1]} : vector<64x384xf32> to vector<64x128xf32>
    %34 = arith.truncf %33 : vector<64x128xf32> to vector<64x128xbf16>
    %c0_14 = arith.constant 0 : index
    %c0_15 = arith.constant 0 : index
    %35 = vector.load %arg6[%c0_14, %c0_15] : memref<128x128xbf16, #tpu.memory_space<vmem>>, vector<128x128xbf16>
    %cst_16 = arith.constant 0.000000e+00 : f32
    %36 = vector.broadcast %cst_16 : f32 to vector<64x128xf32>
    %37 = vector.extract_strided_slice %30 {offsets = [0, 0], sizes = [64, 32], strides = [1, 1]} : vector<64x128xbf16> to vector<64x32xbf16>
    %38 = vector.shape_cast %37 : vector<64x32xbf16> to vector<8x8x32xbf16>
    %39 = vector.extract_strided_slice %32 {offsets = [0, 0], sizes = [64, 32], strides = [1, 1]} : vector<64x128xbf16> to vector<64x32xbf16>
    %40 = vector.shape_cast %39 : vector<64x32xbf16> to vector<8x8x32xbf16>
    %41 = vector.extract_strided_slice %34 {offsets = [0, 0], sizes = [64, 32], strides = [1, 1]} : vector<64x128xbf16> to vector<64x32xbf16>
    %42 = vector.shape_cast %41 : vector<64x32xbf16> to vector<8x8x32xbf16>
    "tpu.trace_start"() <{level = 10 : i32, message = "bqd,bkd->bqk"}> : () -> ()
    %cst_17 = arith.constant dense<0.000000e+00> : vector<8x8x8xf32>
    %43 = tpu.matmul %38, %40, %cst_17 {dimension_numbers = #tpu.dot_dimension_numbers<[2], [2], [1], [1], [0, 0, 0, 1, 1, 1], [0], [0]>} : vector<8x8x32xbf16>, vector<8x8x32xbf16>, vector<8x8x8xf32> -> vector<8x8x8xf32>
    "tpu.trace_stop"() : () -> ()
    %44 = tpu.iota {dimensions = array<i32: 2>} : vector<8x8x8xi32>
    %c5_i32 = arith.constant 5 : i32
    %45 = vector.broadcast %c5_i32 : i32 to vector<8x8x8xi32>
    %46 = arith.cmpi slt, %44, %45 : vector<8x8x8xi32>
    %cst_18 = arith.constant -1.000000e+30 : f32
    %47 = vector.broadcast %cst_18 : f32 to vector<8x8x8xf32>
    %48 = arith.select %46, %43, %47 : vector<8x8x8xi1>, vector<8x8x8xf32>
    %cst_19 = arith.constant dense<0xFF800000> : vector<8x8xf32>
    %49 = vector.multi_reduction <maximumf>, %48, %cst_19 [2] : vector<8x8x8xf32> to vector<8x8xf32>
    %50 = vector.shape_cast %49 : vector<8x8xf32> to vector<8x8x1xf32>
    %51 = vector.broadcast %50 : vector<8x8x1xf32> to vector<8x8x8xf32>
    %52 = arith.subf %48, %51 : vector<8x8x8xf32>
    %53 = math.exp %52 : vector<8x8x8xf32>
    %cst_20 = arith.constant dense<0.000000e+00> : vector<8x8xf32>
    %54 = vector.multi_reduction <add>, %53, %cst_20 [2] : vector<8x8x8xf32> to vector<8x8xf32>
    %55 = vector.shape_cast %54 : vector<8x8xf32> to vector<8x8x1xf32>
    %56 = tpu.reciprocal %55 {approx = true} : vector<8x8x1xf32> -> vector<8x8x1xf32>
    %57 = vector.broadcast %56 : vector<8x8x1xf32> to vector<8x8x8xf32>
    %58 = arith.mulf %53, %57 : vector<8x8x8xf32>
    %59 = arith.truncf %58 : vector<8x8x8xf32> to vector<8x8x8xbf16>
    "tpu.trace_start"() <{level = 10 : i32, message = "bqk,bkd->bqd"}> : () -> ()
    %cst_21 = arith.constant dense<0.000000e+00> : vector<8x8x32xf32>
    %60 = tpu.matmul %59, %42, %cst_21 {dimension_numbers = #tpu.dot_dimension_numbers<[2], [1], [1], [2], [0, 0, 0, 1, 1, 2], [0], [0]>} : vector<8x8x8xbf16>, vector<8x8x32xbf16>, vector<8x8x32xf32> -> vector<8x8x32xf32>
    "tpu.trace_stop"() : () -> ()
    %61 = vector.shape_cast %60 : vector<8x8x32xf32> to vector<64x32xf32>
    %62 = arith.truncf %61 : vector<64x32xf32> to vector<64x32xbf16>
    %63 = vector.extract_strided_slice %35 {offsets = [0, 0], sizes = [32, 128], strides = [1, 1]} : vector<128x128xbf16> to vector<32x128xbf16>
    %cst_22 = arith.constant dense<0.000000e+00> : vector<64x128xf32>
    %64 = tpu.matmul %62, %63, %cst_22 {dimension_numbers = #tpu.dot_dimension_numbers<[1], [0], [0], [1], [0, 0, 1, 1], [], []>} : vector<64x32xbf16>, vector<32x128xbf16>, vector<64x128xf32> -> vector<64x128xf32>
    %65 = arith.addf %36, %64 : vector<64x128xf32>
    %66 = vector.extract_strided_slice %30 {offsets = [0, 32], sizes = [64, 32], strides = [1, 1]} : vector<64x128xbf16> to vector<64x32xbf16>
    %67 = vector.shape_cast %66 : vector<64x32xbf16> to vector<8x8x32xbf16>
    %68 = vector.extract_strided_slice %32 {offsets = [0, 32], sizes = [64, 32], strides = [1, 1]} : vector<64x128xbf16> to vector<64x32xbf16>
    %69 = vector.shape_cast %68 : vector<64x32xbf16> to vector<8x8x32xbf16>
    %70 = vector.extract_strided_slice %34 {offsets = [0, 32], sizes = [64, 32], strides = [1, 1]} : vector<64x128xbf16> to vector<64x32xbf16>
    %71 = vector.shape_cast %70 : vector<64x32xbf16> to vector<8x8x32xbf16>
    "tpu.trace_start"() <{level = 10 : i32, message = "bqd,bkd->bqk"}> : () -> ()
    %cst_23 = arith.constant dense<0.000000e+00> : vector<8x8x8xf32>
    %72 = tpu.matmul %67, %69, %cst_23 {dimension_numbers = #tpu.dot_dimension_numbers<[2], [2], [1], [1], [0, 0, 0, 1, 1, 1], [0], [0]>} : vector<8x8x32xbf16>, vector<8x8x32xbf16>, vector<8x8x8xf32> -> vector<8x8x8xf32>
    "tpu.trace_stop"() : () -> ()
    %73 = tpu.iota {dimensions = array<i32: 2>} : vector<8x8x8xi32>
    %c5_i32_24 = arith.constant 5 : i32
    %74 = vector.broadcast %c5_i32_24 : i32 to vector<8x8x8xi32>
    %75 = arith.cmpi slt, %73, %74 : vector<8x8x8xi32>
    %cst_25 = arith.constant -1.000000e+30 : f32
    %76 = vector.broadcast %cst_25 : f32 to vector<8x8x8xf32>
    %77 = arith.select %75, %72, %76 : vector<8x8x8xi1>, vector<8x8x8xf32>
    %cst_26 = arith.constant dense<0xFF800000> : vector<8x8xf32>
    %78 = vector.multi_reduction <maximumf>, %77, %cst_26 [2] : vector<8x8x8xf32> to vector<8x8xf32>
    %79 = vector.shape_cast %78 : vector<8x8xf32> to vector<8x8x1xf32>
    %80 = vector.broadcast %79 : vector<8x8x1xf32> to vector<8x8x8xf32>
    %81 = arith.subf %77, %80 : vector<8x8x8xf32>
    %82 = math.exp %81 : vector<8x8x8xf32>
    %cst_27 = arith.constant dense<0.000000e+00> : vector<8x8xf32>
    %83 = vector.multi_reduction <add>, %82, %cst_27 [2] : vector<8x8x8xf32> to vector<8x8xf32>
    %84 = vector.shape_cast %83 : vector<8x8xf32> to vector<8x8x1xf32>
    %85 = tpu.reciprocal %84 {approx = true} : vector<8x8x1xf32> -> vector<8x8x1xf32>
    %86 = vector.broadcast %85 : vector<8x8x1xf32> to vector<8x8x8xf32>
    %87 = arith.mulf %82, %86 : vector<8x8x8xf32>
    %88 = arith.truncf %87 : vector<8x8x8xf32> to vector<8x8x8xbf16>
    "tpu.trace_start"() <{level = 10 : i32, message = "bqk,bkd->bqd"}> : () -> ()
    %cst_28 = arith.constant dense<0.000000e+00> : vector<8x8x32xf32>
    %89 = tpu.matmul %88, %71, %cst_28 {dimension_numbers = #tpu.dot_dimension_numbers<[2], [1], [1], [2], [0, 0, 0, 1, 1, 2], [0], [0]>} : vector<8x8x8xbf16>, vector<8x8x32xbf16>, vector<8x8x32xf32> -> vector<8x8x32xf32>
    "tpu.trace_stop"() : () -> ()
    %90 = vector.shape_cast %89 : vector<8x8x32xf32> to vector<64x32xf32>
    %91 = arith.truncf %90 : vector<64x32xf32> to vector<64x32xbf16>
    %92 = vector.extract_strided_slice %35 {offsets = [32, 0], sizes = [32, 128], strides = [1, 1]} : vector<128x128xbf16> to vector<32x128xbf16>
    %cst_29 = arith.constant dense<0.000000e+00> : vector<64x128xf32>
    %93 = tpu.matmul %91, %92, %cst_29 {dimension_numbers = #tpu.dot_dimension_numbers<[1], [0], [0], [1], [0, 0, 1, 1], [], []>} : vector<64x32xbf16>, vector<32x128xbf16>, vector<64x128xf32> -> vector<64x128xf32>
    %94 = arith.addf %65, %93 : vector<64x128xf32>
    %95 = vector.extract_strided_slice %30 {offsets = [0, 64], sizes = [64, 32], strides = [1, 1]} : vector<64x128xbf16> to vector<64x32xbf16>
    %96 = vector.shape_cast %95 : vector<64x32xbf16> to vector<8x8x32xbf16>
    %97 = vector.extract_strided_slice %32 {offsets = [0, 64], sizes = [64, 32], strides = [1, 1]} : vector<64x128xbf16> to vector<64x32xbf16>
    %98 = vector.shape_cast %97 : vector<64x32xbf16> to vector<8x8x32xbf16>
    %99 = vector.extract_strided_slice %34 {offsets = [0, 64], sizes = [64, 32], strides = [1, 1]} : vector<64x128xbf16> to vector<64x32xbf16>
    %100 = vector.shape_cast %99 : vector<64x32xbf16> to vector<8x8x32xbf16>
    "tpu.trace_start"() <{level = 10 : i32, message = "bqd,bkd->bqk"}> : () -> ()
    %cst_30 = arith.constant dense<0.000000e+00> : vector<8x8x8xf32>
    %101 = tpu.matmul %96, %98, %cst_30 {dimension_numbers = #tpu.dot_dimension_numbers<[2], [2], [1], [1], [0, 0, 0, 1, 1, 1], [0], [0]>} : vector<8x8x32xbf16>, vector<8x8x32xbf16>, vector<8x8x8xf32> -> vector<8x8x8xf32>
    "tpu.trace_stop"() : () -> ()
    %102 = tpu.iota {dimensions = array<i32: 2>} : vector<8x8x8xi32>
    %c5_i32_31 = arith.constant 5 : i32
    %103 = vector.broadcast %c5_i32_31 : i32 to vector<8x8x8xi32>
    %104 = arith.cmpi slt, %102, %103 : vector<8x8x8xi32>
    %cst_32 = arith.constant -1.000000e+30 : f32
    %105 = vector.broadcast %cst_32 : f32 to vector<8x8x8xf32>
    %106 = arith.select %104, %101, %105 : vector<8x8x8xi1>, vector<8x8x8xf32>
    %cst_33 = arith.constant dense<0xFF800000> : vector<8x8xf32>
    %107 = vector.multi_reduction <maximumf>, %106, %cst_33 [2] : vector<8x8x8xf32> to vector<8x8xf32>
    %108 = vector.shape_cast %107 : vector<8x8xf32> to vector<8x8x1xf32>
    %109 = vector.broadcast %108 : vector<8x8x1xf32> to vector<8x8x8xf32>
    %110 = arith.subf %106, %109 : vector<8x8x8xf32>
    %111 = math.exp %110 : vector<8x8x8xf32>
    %cst_34 = arith.constant dense<0.000000e+00> : vector<8x8xf32>
    %112 = vector.multi_reduction <add>, %111, %cst_34 [2] : vector<8x8x8xf32> to vector<8x8xf32>
    %113 = vector.shape_cast %112 : vector<8x8xf32> to vector<8x8x1xf32>
    %114 = tpu.reciprocal %113 {approx = true} : vector<8x8x1xf32> -> vector<8x8x1xf32>
    %115 = vector.broadcast %114 : vector<8x8x1xf32> to vector<8x8x8xf32>
    %116 = arith.mulf %111, %115 : vector<8x8x8xf32>
    %117 = arith.truncf %116 : vector<8x8x8xf32> to vector<8x8x8xbf16>
    "tpu.trace_start"() <{level = 10 : i32, message = "bqk,bkd->bqd"}> : () -> ()
    %cst_35 = arith.constant dense<0.000000e+00> : vector<8x8x32xf32>
    %118 = tpu.matmul %117, %100, %cst_35 {dimension_numbers = #tpu.dot_dimension_numbers<[2], [1], [1], [2], [0, 0, 0, 1, 1, 2], [0], [0]>} : vector<8x8x8xbf16>, vector<8x8x32xbf16>, vector<8x8x32xf32> -> vector<8x8x32xf32>
    "tpu.trace_stop"() : () -> ()
    %119 = vector.shape_cast %118 : vector<8x8x32xf32> to vector<64x32xf32>
    %120 = arith.truncf %119 : vector<64x32xf32> to vector<64x32xbf16>
    %121 = vector.extract_strided_slice %35 {offsets = [64, 0], sizes = [32, 128], strides = [1, 1]} : vector<128x128xbf16> to vector<32x128xbf16>
    %cst_36 = arith.constant dense<0.000000e+00> : vector<64x128xf32>
    %122 = tpu.matmul %120, %121, %cst_36 {dimension_numbers = #tpu.dot_dimension_numbers<[1], [0], [0], [1], [0, 0, 1, 1], [], []>} : vector<64x32xbf16>, vector<32x128xbf16>, vector<64x128xf32> -> vector<64x128xf32>
    %123 = arith.addf %94, %122 : vector<64x128xf32>
    %124 = vector.extract_strided_slice %30 {offsets = [0, 96], sizes = [64, 32], strides = [1, 1]} : vector<64x128xbf16> to vector<64x32xbf16>
    %125 = vector.shape_cast %124 : vector<64x32xbf16> to vector<8x8x32xbf16>
    %126 = vector.extract_strided_slice %32 {offsets = [0, 96], sizes = [64, 32], strides = [1, 1]} : vector<64x128xbf16> to vector<64x32xbf16>
    %127 = vector.shape_cast %126 : vector<64x32xbf16> to vector<8x8x32xbf16>
    %128 = vector.extract_strided_slice %34 {offsets = [0, 96], sizes = [64, 32], strides = [1, 1]} : vector<64x128xbf16> to vector<64x32xbf16>
    %129 = vector.shape_cast %128 : vector<64x32xbf16> to vector<8x8x32xbf16>
    "tpu.trace_start"() <{level = 10 : i32, message = "bqd,bkd->bqk"}> : () -> ()
    %cst_37 = arith.constant dense<0.000000e+00> : vector<8x8x8xf32>
    %130 = tpu.matmul %125, %127, %cst_37 {dimension_numbers = #tpu.dot_dimension_numbers<[2], [2], [1], [1], [0, 0, 0, 1, 1, 1], [0], [0]>} : vector<8x8x32xbf16>, vector<8x8x32xbf16>, vector<8x8x8xf32> -> vector<8x8x8xf32>
    "tpu.trace_stop"() : () -> ()
    %131 = tpu.iota {dimensions = array<i32: 2>} : vector<8x8x8xi32>
    %c5_i32_38 = arith.constant 5 : i32
    %132 = vector.broadcast %c5_i32_38 : i32 to vector<8x8x8xi32>
    %133 = arith.cmpi slt, %131, %132 : vector<8x8x8xi32>
    %cst_39 = arith.constant -1.000000e+30 : f32
    %134 = vector.broadcast %cst_39 : f32 to vector<8x8x8xf32>
    %135 = arith.select %133, %130, %134 : vector<8x8x8xi1>, vector<8x8x8xf32>
    %cst_40 = arith.constant dense<0xFF800000> : vector<8x8xf32>
    %136 = vector.multi_reduction <maximumf>, %135, %cst_40 [2] : vector<8x8x8xf32> to vector<8x8xf32>
    %137 = vector.shape_cast %136 : vector<8x8xf32> to vector<8x8x1xf32>
    %138 = vector.broadcast %137 : vector<8x8x1xf32> to vector<8x8x8xf32>
    %139 = arith.subf %135, %138 : vector<8x8x8xf32>
    %140 = math.exp %139 : vector<8x8x8xf32>
    %cst_41 = arith.constant dense<0.000000e+00> : vector<8x8xf32>
    %141 = vector.multi_reduction <add>, %140, %cst_41 [2] : vector<8x8x8xf32> to vector<8x8xf32>
    %142 = vector.shape_cast %141 : vector<8x8xf32> to vector<8x8x1xf32>
    %143 = tpu.reciprocal %142 {approx = true} : vector<8x8x1xf32> -> vector<8x8x1xf32>
    %144 = vector.broadcast %143 : vector<8x8x1xf32> to vector<8x8x8xf32>
    %145 = arith.mulf %140, %144 : vector<8x8x8xf32>
    %146 = arith.truncf %145 : vector<8x8x8xf32> to vector<8x8x8xbf16>
    "tpu.trace_start"() <{level = 10 : i32, message = "bqk,bkd->bqd"}> : () -> ()
    %cst_42 = arith.constant dense<0.000000e+00> : vector<8x8x32xf32>
    %147 = tpu.matmul %146, %129, %cst_42 {dimension_numbers = #tpu.dot_dimension_numbers<[2], [1], [1], [2], [0, 0, 0, 1, 1, 2], [0], [0]>} : vector<8x8x8xbf16>, vector<8x8x32xbf16>, vector<8x8x32xf32> -> vector<8x8x32xf32>
    "tpu.trace_stop"() : () -> ()
    %148 = vector.shape_cast %147 : vector<8x8x32xf32> to vector<64x32xf32>
    %149 = arith.truncf %148 : vector<64x32xf32> to vector<64x32xbf16>
    %150 = vector.extract_strided_slice %35 {offsets = [96, 0], sizes = [32, 128], strides = [1, 1]} : vector<128x128xbf16> to vector<32x128xbf16>
    %cst_43 = arith.constant dense<0.000000e+00> : vector<64x128xf32>
    %151 = tpu.matmul %149, %150, %cst_43 {dimension_numbers = #tpu.dot_dimension_numbers<[1], [0], [0], [1], [0, 0, 1, 1], [], []>} : vector<64x32xbf16>, vector<32x128xbf16>, vector<64x128xf32> -> vector<64x128xf32>
    %152 = arith.addf %123, %151 : vector<64x128xf32>
    %153 = arith.addf %0, %152 : vector<64x128xf32>
    %c0_44 = arith.constant 0 : index
    %c0_45 = arith.constant 0 : index
    %154 = vector.load %arg7[%c0_44, %c0_45] : memref<1x128xf32, #tpu.memory_space<vmem>>, vector<1x128xf32>
    %155 = vector.broadcast %154 : vector<1x128xf32> to vector<64x128xf32>
    %156 = arith.addf %153, %155 : vector<64x128xf32>
    %c0_46 = arith.constant 0 : index
    %c0_47 = arith.constant 0 : index
    %157 = vector.load %arg8[%c0_46, %c0_47] : memref<1x128xf32, #tpu.memory_space<vmem>>, vector<1x128xf32>
    %c0_48 = arith.constant 0 : index
    %c0_49 = arith.constant 0 : index
    %158 = vector.load %arg9[%c0_48, %c0_49] : memref<1x128xf32, #tpu.memory_space<vmem>>, vector<1x128xf32>
    %cst_50 = arith.constant dense<0.000000e+00> : vector<64xf32>
    %159 = vector.multi_reduction <add>, %156, %cst_50 [1] : vector<64x128xf32> to vector<64xf32>
    %160 = vector.shape_cast %159 : vector<64xf32> to vector<64x1xf32>
    %cst_51 = arith.constant 1.280000e+02 : f32
    %161 = vector.broadcast %cst_51 : f32 to vector<64x1xf32>
    %162 = arith.divf %160, %161 : vector<64x1xf32>
    %163 = vector.broadcast %162 : vector<64x1xf32> to vector<64x128xf32>
    %164 = arith.subf %156, %163 : vector<64x128xf32>
    %165 = arith.mulf %164, %164 : vector<64x128xf32>
    %cst_52 = arith.constant dense<0.000000e+00> : vector<64xf32>
    %166 = vector.multi_reduction <add>, %165, %cst_52 [1] : vector<64x128xf32> to vector<64xf32>
    %167 = vector.shape_cast %166 : vector<64xf32> to vector<64x1xf32>
    %cst_53 = arith.constant 1.280000e+02 : f32
    %168 = vector.broadcast %cst_53 : f32 to vector<64x1xf32>
    %169 = arith.divf %167, %168 : vector<64x1xf32>
    %cst_54 = arith.constant 9.99999997E-7 : f32
    %170 = vector.broadcast %cst_54 : f32 to vector<64x1xf32>
    %171 = arith.addf %169, %170 : vector<64x1xf32>
    %172 = math.rsqrt %171 : vector<64x1xf32>
    %173 = vector.broadcast %172 : vector<64x1xf32> to vector<64x128xf32>
    %174 = arith.mulf %164, %173 : vector<64x128xf32>
    %175 = vector.broadcast %157 : vector<1x128xf32> to vector<64x128xf32>
    %176 = arith.mulf %174, %175 : vector<64x128xf32>
    %177 = vector.broadcast %158 : vector<1x128xf32> to vector<64x128xf32>
    %178 = arith.addf %176, %177 : vector<64x128xf32>
    %179 = arith.truncf %178 : vector<64x128xf32> to vector<64x128xbf16>
    %c0_55 = arith.constant 0 : index
    %c0_56 = arith.constant 0 : index
    %180 = vector.load %arg10[%c0_55, %c0_56] : memref<128x512xbf16, #tpu.memory_space<vmem>>, vector<128x512xbf16>
    %cst_57 = arith.constant dense<0.000000e+00> : vector<64x512xf32>
    %181 = tpu.matmul %179, %180, %cst_57 {dimension_numbers = #tpu.dot_dimension_numbers<[1], [0], [0], [1], [0, 0, 1, 1], [], []>} : vector<64x128xbf16>, vector<128x512xbf16>, vector<64x512xf32> -> vector<64x512xf32>
    %c0_58 = arith.constant 0 : index
    %c0_59 = arith.constant 0 : index
    %182 = vector.load %arg11[%c0_58, %c0_59] : memref<1x512xf32, #tpu.memory_space<vmem>>, vector<1x512xf32>
    %183 = vector.broadcast %182 : vector<1x512xf32> to vector<64x512xf32>
    %184 = arith.addf %181, %183 : vector<64x512xf32>
    %185 = arith.mulf %184, %184 : vector<64x512xf32>
    %186 = arith.mulf %184, %185 : vector<64x512xf32>
    %cst_60 = arith.constant 4.471500e-02 : f32
    %187 = vector.broadcast %cst_60 : f32 to vector<64x512xf32>
    %188 = arith.mulf %187, %186 : vector<64x512xf32>
    %189 = arith.addf %184, %188 : vector<64x512xf32>
    %cst_61 = arith.constant 0.797884583 : f32
    %190 = vector.broadcast %cst_61 : f32 to vector<64x512xf32>
    %191 = arith.mulf %190, %189 : vector<64x512xf32>
    %192 = math.tanh %191 : vector<64x512xf32>
    %cst_62 = arith.constant 1.000000e+00 : f32
    %193 = vector.broadcast %cst_62 : f32 to vector<64x512xf32>
    %194 = arith.addf %193, %192 : vector<64x512xf32>
    %cst_63 = arith.constant 5.000000e-01 : f32
    %195 = vector.broadcast %cst_63 : f32 to vector<64x512xf32>
    %196 = arith.mulf %195, %194 : vector<64x512xf32>
    %197 = arith.mulf %184, %196 : vector<64x512xf32>
    %198 = arith.truncf %197 : vector<64x512xf32> to vector<64x512xbf16>
    %c0_64 = arith.constant 0 : index
    %c0_65 = arith.constant 0 : index
    %199 = vector.load %arg12[%c0_64, %c0_65] : memref<512x128xbf16, #tpu.memory_space<vmem>>, vector<512x128xbf16>
    %cst_66 = arith.constant dense<0.000000e+00> : vector<64x128xf32>
    %200 = tpu.matmul %198, %199, %cst_66 {dimension_numbers = #tpu.dot_dimension_numbers<[1], [0], [0], [1], [0, 0, 1, 1], [], []>} : vector<64x512xbf16>, vector<512x128xbf16>, vector<64x128xf32> -> vector<64x128xf32>
    %c0_67 = arith.constant 0 : index
    %c0_68 = arith.constant 0 : index
    %201 = vector.load %arg13[%c0_67, %c0_68] : memref<1x128xf32, #tpu.memory_space<vmem>>, vector<1x128xf32>
    %202 = vector.broadcast %201 : vector<1x128xf32> to vector<64x128xf32>
    %203 = arith.addf %200, %202 : vector<64x128xf32>
    %204 = arith.addf %156, %203 : vector<64x128xf32>
    %c0_69 = arith.constant 0 : index
    %c0_70 = arith.constant 0 : index
    %205 = vector.load %arg14[%c0_69, %c0_70] : memref<64x128xf32, #tpu.memory_space<vmem>>, vector<64x128xf32>
    tpu.vector_store %arg14[%c0_69, %c0_70], %204 {strides = array<i32>} : memref<64x128xf32, #tpu.memory_space<vmem>>, vector<64x128xf32>,
    return
  }
  func.func @transform_0(%arg0: i32) -> (i32, i32) {
    %c0_i32 = arith.constant 0 : i32
    %c0_i32_0 = arith.constant 0 : i32
    return %arg0, %c0_i32 : i32, i32
  }
  func.func @transform_1(%arg0: i32) -> (i32, i32) {
    %c0_i32 = arith.constant 0 : i32
    %c0_i32_0 = arith.constant 0 : i32
    %c0_i32_1 = arith.constant 0 : i32
    return %c0_i32, %c0_i32_0 : i32, i32
  }
  func.func @transform_2(%arg0: i32) -> (i32, i32) {
    %c0_i32 = arith.constant 0 : i32
    %c0_i32_0 = arith.constant 0 : i32
    %c0_i32_1 = arith.constant 0 : i32
    return %c0_i32, %c0_i32_0 : i32, i32
  }
  func.func @transform_3(%arg0: i32) -> (i32, i32) {
    %c0_i32 = arith.constant 0 : i32
    %c0_i32_0 = arith.constant 0 : i32
    %c0_i32_1 = arith.constant 0 : i32
    return %c0_i32, %c0_i32_0 : i32, i32
  }
  func.func @transform_4(%arg0: i32) -> (i32, i32) {
    %c0_i32 = arith.constant 0 : i32
    %c0_i32_0 = arith.constant 0 : i32
    %c0_i32_1 = arith.constant 0 : i32
    return %c0_i32, %c0_i32_0 : i32, i32
  }
  func.func @transform_5(%arg0: i32) -> (i32, i32) {
    %c0_i32 = arith.constant 0 : i32
    %c0_i32_0 = arith.constant 0 : i32
    %c0_i32_1 = arith.constant 0 : i32
    return %c0_i32, %c0_i32_0 : i32, i32
  }
  func.func @transform_6(%arg0: i32) -> (i32, i32) {
    %c0_i32 = arith.constant 0 : i32
    %c0_i32_0 = arith.constant 0 : i32
    %c0_i32_1 = arith.constant 0 : i32
    return %c0_i32, %c0_i32_0 : i32, i32
  }
  func.func @transform_7(%arg0: i32) -> (i32, i32) {
    %c0_i32 = arith.constant 0 : i32
    %c0_i32_0 = arith.constant 0 : i32
    %c0_i32_1 = arith.constant 0 : i32
    return %c0_i32, %c0_i32_0 : i32, i32
  }
  func.func @transform_8(%arg0: i32) -> (i32, i32) {
    %c0_i32 = arith.constant 0 : i32
    %c0_i32_0 = arith.constant 0 : i32
    %c0_i32_1 = arith.constant 0 : i32
    return %c0_i32, %c0_i32_0 : i32, i32
  }
  func.func @transform_9(%arg0: i32) -> (i32, i32) {
    %c0_i32 = arith.constant 0 : i32
    %c0_i32_0 = arith.constant 0 : i32
    %c0_i32_1 = arith.constant 0 : i32
    return %c0_i32, %c0_i32_0 : i32, i32
  }
  func.func @transform_10(%arg0: i32) -> (i32, i32) {
    %c0_i32 = arith.constant 0 : i32
    %c0_i32_0 = arith.constant 0 : i32
    %c0_i32_1 = arith.constant 0 : i32
    return %c0_i32, %c0_i32_0 : i32, i32
  }
  func.func @transform_11(%arg0: i32) -> (i32, i32) {
    %c0_i32 = arith.constant 0 : i32
    %c0_i32_0 = arith.constant 0 : i32
    %c0_i32_1 = arith.constant 0 : i32
    return %c0_i32, %c0_i32_0 : i32, i32
  }
  func.func @transform_12(%arg0: i32) -> (i32, i32) {
    %c0_i32 = arith.constant 0 : i32
    %c0_i32_0 = arith.constant 0 : i32
    %c0_i32_1 = arith.constant 0 : i32
    return %c0_i32, %c0_i32_0 : i32, i32
  }
  func.func @transform_13(%arg0: i32) -> (i32, i32) {
    %c0_i32 = arith.constant 0 : i32
    %c0_i32_0 = arith.constant 0 : i32
    return %arg0, %c0_i32 : i32, i32
  }
}

</mosaic_0001>

<llo_original>
// kernel: _lambda_.4
$region0: #{_lambda_.4}
  #allocation0 [shape = 'u32[]', space=smem, size = 0x4, offset = 0x4, fixed_abs, tag = 'smem constant byte address 0x4 - core index']
  #allocation1 [shape = 'u32[144,128]{1,0:T(1,128)}', space=vmem, size = 0x12000, scoped, tag = 'internal scratch']
  %s0 = inlined_call_operand.vmem [shape: f32[64,192], index: 0, kind: input, shape index: {}]
  %s1 = inlined_call_operand.vmem [shape: bf16[192,128], index: 1, kind: input, shape index: {}]
  %s2 = inlined_call_operand.vmem [shape: f32[1,128], index: 2, kind: input, shape index: {}]
  %s3 = inlined_call_operand.vmem [shape: f32[1,128], index: 3, kind: input, shape index: {}]
  %s4 = inlined_call_operand.vmem [shape: f32[5,128], index: 4, kind: input, shape index: {}]
  %s5 = inlined_call_operand.vmem [shape: f32[128,128], index: 5, kind: output, shape index: {}]
  %s6 = sld [smem:[#allocation0]]
  $region53: #{_lambda_.4} parent=0
    _
  %s8 = ssub.s32 1, %s6
  %s9 = scalar_select 0, %s8, %s6
  loop: start=0, step=1, limit=4
  $region2: #{_lambda_.4} parent=0 // loop_pre_header
    _
  $region3: #{_lambda_.4} parent=0 // loop_header
    %s11 = sphi 0, %s15
    %p12 = scmp.ge.s32.totalorder %s11, 4
    %s21 = sphi 0, %s23
    %s24 = sphi 0, %s21
    %s25 = sphi 0, %s24
    %s41 = sphi 0, %s25
    %s45 = sphi 0, %s45
    %s47 = sphi 0, %s45
    %s48 = sphi 0, %s47
    %s62 = sphi 0, %s48
    %s66 = sphi 0, %s66
    %s68 = sphi 0, %s66
    %s69 = sphi 0, %s68
    %s83 = sphi 0, %s69
    %s87 = sphi 0, %s87
    %s89 = sphi 0, %s87
    %s90 = sphi 0, %s89
    %s104 = sphi 0, %s90
    %s108 = sphi 0, %s108
    %s110 = sphi 0, %s108
    %s111 = sphi 0, %s110
    %s125 = sphi 0, %s111
    %s131 = sphi 0, %s133
    %s134 = sphi 0, %s131
    %s135 = sphi 0, %s134
    %s151 = sphi 0, %s135
  $region4: #{_lambda_.4} parent=0 // loop_header_branch
    %14 = sbr.rel (%p12) target = $region8
  $region5: #{_lambda_.4} parent=0 // loop_body
    %s16 = ssub.s32 %s11, 1
    %s17 = ssub.s32 %s11, 2
    %s18 = sadd.s32 %s11, 1
    %s19 = ssub.s32 %s11, %s18
    %p20 = scmp.eq.s32.totalorder %s19, 0
    %s22 = sadd.s32 %s21, 1
    %s23 = scalar_select %p20, %s21, %s22
    %p26 = pneg %p20
    %p27 = scmp.eq.s32.totalorder %s11, 1
    %p28 = por %p26, %p27
    %p29 = scmp.ne.s32.totalorder %s21, %s24
    %p30 = scmp.eq.s32.totalorder %s11, 0
    %p31 = por %p29, %p30
    %p32 = scmp.ne.s32.totalorder %s21, %s24
    %p33 = scmp.eq.s32.totalorder %s16, 1
    %p34 = por %p32, %p33
    %p35 = scmp.ne.s32.totalorder %s24, %s25
    %p36 = scmp.eq.s32.totalorder %s16, 0
    %p37 = por %p35, %p36
    %p38 = scmp.ne.s32.totalorder %s24, %s25
    %p39 = scmp.eq.s32.totalorder %s17, 1
    %p40 = por %p38, %p39
    %p42 = scmp.ne.s32.totalorder %s25, %s41
    %p43 = scmp.eq.s32.totalorder %s17, 0
    %p44 = por %p42, %p43
    %s46 = sadd.s32 %s45, 1
    %p49 = scmp.eq.s32.totalorder %s11, 1
    %p50 = scmp.ne.s32.totalorder %s45, %s47
    %p51 = scmp.eq.s32.totalorder %s11, 0
    %p52 = por %p50, %p51
    %p53 = scmp.ne.s32.totalorder %s45, %s47
    %p54 = scmp.eq.s32.totalorder %s16, 1
    %p55 = por %p53, %p54
    %p56 = scmp.ne.s32.totalorder %s47, %s48
    %p57 = scmp.eq.s32.totalorder %s16, 0
    %p58 = por %p56, %p57
    %p59 = scmp.ne.s32.totalorder %s47, %s48
    %p60 = scmp.eq.s32.totalorder %s17, 1
    %p61 = por %p59, %p60
    %p63 = scmp.ne.s32.totalorder %s48, %s62
    %p64 = scmp.eq.s32.totalorder %s17, 0
    %p65 = por %p63, %p64
    %s67 = sadd.s32 %s66, 1
    %p70 = scmp.eq.s32.totalorder %s11, 1
    %p71 = scmp.ne.s32.totalorder %s66, %s68
    %p72 = scmp.eq.s32.totalorder %s11, 0
    %p73 = por %p71, %p72
    %p74 = scmp.ne.s32.totalorder %s66, %s68
    %p75 = scmp.eq.s32.totalorder %s16, 1
    %p76 = por %p74, %p75
    %p77 = scmp.ne.s32.totalorder %s68, %s69
    %p78 = scmp.eq.s32.totalorder %s16, 0
    %p79 = por %p77, %p78
    %p80 = scmp.ne.s32.totalorder %s68, %s69
    %p81 = scmp.eq.s32.totalorder %s17, 1
    %p82 = por %p80, %p81
    %p84 = scmp.ne.s32.totalorder %s69, %s83
    %p85 = scmp.eq.s32.totalorder %s17, 0
    %p86 = por %p84, %p85
    %s88 = sadd.s32 %s87, 1
    %p91 = scmp.eq.s32.totalorder %s11, 1
    %p92 = scmp.ne.s32.totalorder %s87, %s89
    %p93 = scmp.eq.s32.totalorder %s11, 0
    %p94 = por %p92, %p93
    %p95 = scmp.ne.s32.totalorder %s87, %s89
    %p96 = scmp.eq.s32.totalorder %s16, 1
    %p97 = por %p95, %p96
    %p98 = scmp.ne.s32.totalorder %s89, %s90
    %p99 = scmp.eq.s32.totalorder %s16, 0
    %p100 = por %p98, %p99
    %p101 = scmp.ne.s32.totalorder %s89, %s90
    %p102 = scmp.eq.s32.totalorder %s17, 1
    %p103 = por %p101, %p102
    %p105 = scmp.ne.s32.totalorder %s90, %s104
    %p106 = scmp.eq.s32.totalorder %s17, 0
    %p107 = por %p105, %p106
    %s109 = sadd.s32 %s108, 1
    %p112 = scmp.eq.s32.totalorder %s11, 1
    %p113 = scmp.ne.s32.totalorder %s108, %s110
    %p114 = scmp.eq.s32.totalorder %s11, 0
    %p115 = por %p113, %p114
    %p116 = scmp.ne.s32.totalorder %s108, %s110
    %p117 = scmp.eq.s32.totalorder %s16, 1
    %p118 = por %p116, %p117
    %p119 = scmp.ne.s32.totalorder %s110, %s111
    %p120 = scmp.eq.s32.totalorder %s16, 0
    %p121 = por %p119, %p120
    %p122 = scmp.ne.s32.totalorder %s110, %s111
    %p123 = scmp.eq.s32.totalorder %s17, 1
    %p124 = por %p122, %p123
    %p126 = scmp.ne.s32.totalorder %s111, %s125
    %p127 = scmp.eq.s32.totalorder %s17, 0
    %p128 = por %p126, %p127
    %s129 = ssub.s32 %s11, %s18
    %p130 = scmp.eq.s32.totalorder %s129, 0
    %s132 = sadd.s32 %s131, 1
    %s133 = scalar_select %p130, %s131, %s132
    %p136 = pneg %p130
    %p137 = scmp.eq.s32.totalorder %s11, 1
    %p138 = por %p136, %p137
    %p139 = scmp.ne.s32.totalorder %s131, %s134
    %p140 = scmp.eq.s32.totalorder %s11, 0
    %p141 = por %p139, %p140
    %p142 = scmp.ne.s32.totalorder %s131, %s134
    %p143 = scmp.eq.s32.totalorder %s16, 1
    %p144 = por %p142, %p143
    %p145 = scmp.ne.s32.totalorder %s134, %s135
    %p146 = scmp.eq.s32.totalorder %s16, 0
    %p147 = por %p145, %p146
    %p148 = scmp.ne.s32.totalorder %s134, %s135
    %p149 = scmp.eq.s32.totalorder %s17, 1
    %p150 = por %p148, %p149
    %p152 = scmp.ne.s32.totalorder %s135, %s151
    %p153 = scmp.eq.s32.totalorder %s17, 0
    %p154 = por %p152, %p153
    %p155 = scmp.le.s32.totalorder 1, %s11
    %p156 = scmp.lt.s32.totalorder %s11, 3
    %p157 = pnand %p155, %p156
    %p158 = pneg %p157
    // Predicated region
    $region9: #{_lambda_.4} parent=5 // pred_check
      _
    $region10: #{_lambda_.4} parent=5 // pred_check_branch
      %160 = sbr.rel (%p157) target = $region12
    $region11: #{_lambda_.4} parent=5 // pred_region
      %s161 = ssub.s32 %s11, 1
      // Predicated region
      $region13: #{_lambda_.4} parent=11 // pred_check
        %p162 = pneg %p58
      $region14: #{_lambda_.4} parent=11 // pred_check_branch
        %164 = sbr.rel (%p162) target = $region16
      $region15: #{_lambda_.4} parent=11 // pred_region
        _
      $region16: #{_lambda_.4} parent=11 // pred_fallthru
        _
      // Predicated region
      $region17: #{_lambda_.4} parent=11 // pred_check
        %p165 = pneg %p79
      $region18: #{_lambda_.4} parent=11 // pred_check_branch
        %167 = sbr.rel (%p165) target = $region20
      $region19: #{_lambda_.4} parent=11 // pred_region
        _
      $region20: #{_lambda_.4} parent=11 // pred_fallthru
        _
      // Predicated region
      $region21: #{_lambda_.4} parent=11 // pred_check
        %p168 = pneg %p100
      $region22: #{_lambda_.4} parent=11 // pred_check_branch
        %170 = sbr.rel (%p168) target = $region24
      $region23: #{_lambda_.4} parent=11 // pred_region
        _
      $region24: #{_lambda_.4} parent=11 // pred_fallthru
        _
      // Predicated region
      $region25: #{_lambda_.4} parent=11 // pred_check
        %p171 = pneg %p121
      $region26: #{_lambda_.4} parent=11 // pred_check_branch
        %173 = sbr.rel (%p171) target = $region28
      $region27: #{_lambda_.4} parent=11 // pred_region
        _
      $region28: #{_lambda_.4} parent=11 // pred_fallthru
        _
    $region12: #{_lambda_.4} parent=5 // pred_fallthru
      _
    %p174 = scmp.lt.s32.totalorder %s11, 2
    // Predicated region
    $region29: #{_lambda_.4} parent=5 // pred_check
      %p175 = pneg %p174
    $region30: #{_lambda_.4} parent=5 // pred_check_branch
      %177 = sbr.rel (%p175) target = $region32
    $region31: #{_lambda_.4} parent=5 // pred_region
      // Predicated region
      $region33: #{_lambda_.4} parent=31 // pred_check
        %p178 = pneg %p31
      $region34: #{_lambda_.4} parent=31 // pred_check_branch
        %180 = sbr.rel (%p178) target = $region36
      $region35: #{_lambda_.4} parent=31 // pred_region
        %s181 = smul.u32 4, %s11
        %p182 = scmp.lt.s32.totalorder %s181, 7
        %s183 = scalar_select %p182, %s181, 7
        %s184 = smul.addr %s183, 2
        %s185 = smul.addr %s184, 8
        %s186 = scalar_lea.vmem %s0, %s185
        %s187 = smul.u32 4, %s11
      $region36: #{_lambda_.4} parent=31 // pred_fallthru
        _
    $region32: #{_lambda_.4} parent=5 // pred_fallthru
      _
    %p188 = scmp.le.s32.totalorder 1, %s11
    %p189 = scmp.lt.s32.totalorder %s11, 3
    %p190 = pnand %p188, %p189
    %p191 = pneg %p190
    // Predicated region
    $region37: #{_lambda_.4} parent=5 // pred_check
      _
    $region38: #{_lambda_.4} parent=5 // pred_check_branch
      %193 = sbr.rel (%p190) target = $region40
    $region39: #{_lambda_.4} parent=5 // pred_region
      %s194 = ssub.s32 %s11, 1
      %s195 = smul.u32 4, %s16
      %p196 = scmp.lt.s32.totalorder %s195, 7
      %s197 = scalar_select %p196, %s195, 7
      %s198 = smul.addr %s197, 2
      %s199 = smul.addr %s198, 8
      %s200 = scalar_lea.vmem %s0, %s199
      %p201 = pneg %p37
      %p202 = pneg %p34
      %p203 = pneg %p58
      %p204 = pneg %p55
      %p205 = pneg %p79
      %p206 = pneg %p76
      %p207 = pneg %p100
      %p208 = pneg %p97
      %p209 = pneg %p121
      %p210 = pneg %p118
      %p211 = pneg %p147
      %p212 = pneg %p144
      %s213 = smul.u32 8, %s16
      %p214 = scmp.lt.s32.totalorder %s213, 15
      %s215 = scalar_select %p214, %s213, 15
      %s216 = smul.addr %s215, 8
      %s217 = scalar_lea.vmem %s5, %s216
      %s218 = smul.u32 4, %s16
      %p219 = scmp.lt.s32.totalorder %s218, 7
      %s220 = scalar_select %p219, %s218, 7
      %s221 = smul.addr %s220, 2
      %s222 = smul.addr %s221, 8
      %s223 = scalar_lea.vmem %s0, %s222
      %s224 = smul.u32 4, %s16
      %s225 = smul.u32 8, %s16
      %p226 = scmp.lt.s32.totalorder %s225, 15
      %s227 = scalar_select %p226, %s225, 15
      %s228 = smul.addr %s227, 8
      %s229 = scalar_lea.vmem %s5, %s228
      %s230 = smul.u32 8, %s16
      %v232 = vld [vmem:[%s223] sm:$0xff]
      %v233 = vld [vmem:[%s223 + $0x8] sm:$0xff]
      %v234 = vld [vmem:[%s223 + $0x10] sm:$0xff]
      %v235 = vld [vmem:[%s223 + $0x18] sm:$0xff]
      %v236 = vld [vmem:[%s223 + $0x20] sm:$0xff]
      %v237 = vld [vmem:[%s223 + $0x28] sm:$0xff]
      %v238 = vld [vmem:[%s223 + $0x30] sm:$0xff]
      %v239 = vld [vmem:[%s223 + $0x38] sm:$0xff]
      %v240 = vpack.c.bf16 %v234, %v232
      %v241 = vpack.c.bf16 %v235, %v233
      %v242 = vpack.c.bf16 %v238, %v236
      %v243 = vpack.c.bf16 %v239, %v237
      %v244 = vld [vmem:[%s1] sm:$0xf]
      %v245 = vld [vmem:[%s1 + $0x4] sm:$0xf]
      %v246 = vld [vmem:[%s1 + $0x8] sm:$0xf]
      %v247 = vld [vmem:[%s1 + $0xc] sm:$0xf]
      %v248 = vld [vmem:[%s1 + $0x10] sm:$0xf]
      %v249 = vld [vmem:[%s1 + $0x14] sm:$0xf]
      %v250 = vld [vmem:[%s1 + $0x18] sm:$0xf]
      %v251 = vld [vmem:[%s1 + $0x1c] sm:$0xf]
      %v252 = vld [vmem:[%s1 + $0x20] sm:$0xf]
      %v253 = vld [vmem:[%s1 + $0x24] sm:$0xf]
      %v254 = vld [vmem:[%s1 + $0x28] sm:$0xf]
      %v255 = vld [vmem:[%s1 + $0x2c] sm:$0xf]
      %v256 = vld [vmem:[%s1 + $0x30] sm:$0xf]
      %v257 = vld [vmem:[%s1 + $0x34] sm:$0xf]
      %v258 = vld [vmem:[%s1 + $0x38] sm:$0xf]
      %v259 = vld [vmem:[%s1 + $0x3c] sm:$0xf]
      %v260 = vld [vmem:[%s1 + $0x40] sm:$0xf]
      %v261 = vld [vmem:[%s1 + $0x44] sm:$0xf]
      %v262 = vld [vmem:[%s1 + $0x48] sm:$0xf]
      %v263 = vld [vmem:[%s1 + $0x4c] sm:$0xf]
      %v264 = vld [vmem:[%s1 + $0x50] sm:$0xf]
      %v265 = vld [vmem:[%s1 + $0x54] sm:$0xf]
      %v266 = vld [vmem:[%s1 + $0x58] sm:$0xf]
      %v267 = vld [vmem:[%s1 + $0x5c] sm:$0xf]
      %v268 = vld [vmem:[%s2] sm:$0x1]
      %v270 = vlaneseq
      %v271 = vshrl.u32 %v270, 7
      %v272 = vsub.s32 0, %v271
      %v273 = vrot.slane %v268, %v272
      %v299 = vunpack.c.l.b16 %v244
      %v300 = vunpack.c.l.b16 %v245
      %v301 = vunpack.c.l.b16 %v246
      %v302 = vunpack.c.l.b16 %v247
      %v303 = vunpack.c.l.b16 %v248
      %v304 = vunpack.c.l.b16 %v249
      %v305 = vunpack.c.l.b16 %v250
      %v306 = vunpack.c.l.b16 %v251
      %v307 = vunpack.c.l.b16 %v252
      %v308 = vunpack.c.l.b16 %v253
      %v309 = vunpack.c.l.b16 %v254
      %v310 = vunpack.c.l.b16 %v255
      %v311 = vunpack.c.l.b16 %v256
      %v312 = vunpack.c.l.b16 %v257
      %v313 = vunpack.c.l.b16 %v258
      %v314 = vunpack.c.l.b16 %v259
      %v315 = vunpack.c.l.b16 %v260
      %v316 = vunpack.c.l.b16 %v261
      %v317 = vunpack.c.l.b16 %v262
      %v318 = vunpack.c.l.b16 %v263
      %v319 = vunpack.c.l.b16 %v264
      %v320 = vunpack.c.l.b16 %v265
      %v321 = vunpack.c.l.b16 %v266
      %v322 = vunpack.c.l.b16 %v267
      %v323 = vpack.c.b16 %v300, %v299
      %v324 = vpack.c.b16 %v302, %v301
      %v325 = vpack.c.b16 %v304, %v303
      %v326 = vpack.c.b16 %v306, %v305
      %v327 = vpack.c.b16 %v308, %v307
      %v328 = vpack.c.b16 %v310, %v309
      %v329 = vpack.c.b16 %v312, %v311
      %v330 = vpack.c.b16 %v314, %v313
      %v331 = vpack.c.b16 %v316, %v315
      %v332 = vpack.c.b16 %v318, %v317
      %v333 = vpack.c.b16 %v320, %v319
      %v334 = vpack.c.b16 %v322, %v321
      %vm347 = vcmask 523264
      %v349 = vsel %vm347, %v241, 0
      %v352 = vsel %vm347, %v243, 0
      %354 = vmatprep.subr.bf16.mxu0 0
      %355 = vmatpush1.bf16.msra.mxu0 %v330
      %356 = vmatprep.subr.bf16.mxu0 0
      %357 = vmatpush1.bf16.msra.mxu0 %v329
      %358 = vmatprep.subr.bf16.mxu0 0
      %359 = vmatpush1.bf16.msra.mxu0 %v328
      %360 = vmatprep.subr.bf16.mxu0 0
      %361 = vmatpush1.bf16.msra.mxu0 %v327
      %362 = vmatprep.subr.bf16.mxu0 0
      %363 = vmatpush1.bf16.msra.mxu0 %v326
      %364 = vmatprep.subr.bf16.mxu0 0
      %365 = vmatpush1.bf16.msra.mxu0 %v325
      %366 = vmatprep.subr.bf16.mxu0 0
      %367 = vmatpush1.bf16.msra.mxu0 %v324
      %368 = vmatprep.subr.bf16.mxu0 0
      %369 = vmatpush1.bf16.msra.mxu0 %v323
      %370 = vmatprep.subr.bf16.mxu0 0
      %371 = vmatpush2.bf16.msra.mxu0 0
      %372 = vmatprep.subr.bf16.mxu0 0
      %373 = vmatpush2.bf16.msra.mxu0 0
      %374 = vmatprep.subr.bf16.mxu0 0
      %375 = vmatpush2.bf16.msra.mxu0 0
      %376 = vmatprep.subr.bf16.mxu0 0
      %377 = vmatpush2.bf16.msra.mxu0 0
      %378 = vmatprep.subr.bf16.mxu0 0
      %379 = vmatpush2.bf16.msra.mxu0 %v334
      %380 = vmatprep.subr.bf16.mxu0 0
      %381 = vmatpush2.bf16.msra.mxu0 %v333
      %382 = vmatprep.subr.bf16.mxu0 0
      %383 = vmatpush2.bf16.msra.mxu0 %v332
      %384 = vmatprep.subr.bf16.mxu0 0
      %385 = vmatpush2.bf16.msra.mxu0 %v331
      %386 = vmatprep.mubr.bf16.mxu0 %v349
      %387 = vmatmul.mubr.bf16.gmra.mxu0 %v240
      %v388 = vpop.f32.mrf.mxu0
      %v389 = vadd.f32 %v273, %v388
      %v390 = vpop.f32.mrf.mxu0
      %v391 = vpop.f32.mrf.mxu0
      %v392 = vadd.f32 %v273, %v391
      %v393 = vpop.f32.mrf.mxu0
      %394 = vmatprep.mubr.bf16.mxu0 %v352
      %395 = vmatmul.mubr.bf16.gmra.mxu0 %v242
      %v396 = vpop.f32.mrf.mxu0
      %v397 = vadd.f32 %v273, %v396
      %v398 = vpop.f32.mrf.mxu0
      %v399 = vpop.f32.mrf.mxu0
      %v400 = vadd.f32 %v273, %v399
      %v401 = vpop.f32.mrf.mxu0
      %402 = vdwg.mxu0
      %v403 = vld [vmem:[%s3] sm:$0x1]
      %v404 = vld [vmem:[%s4] sm:$0x1]
      %v405 = vadd.f32 %v403, %v404
      %v410 = vcombine.high %v389, %v389
      %v411 = vcombine.high %v392, %v392
      %v412 = vcombine.high %v397, %v397
      %v413 = vcombine.high %v400, %v400
      %v418 = vld [vmem:[%s4 + $0x1] sm:$0xf]
      %v419 = vadd.f32 %v389, %v418
      %v420 = vadd.f32 %v410, %v418
      %v421 = vadd.f32 %v392, %v418
      %v422 = vadd.f32 %v411, %v418
      %v423 = vadd.f32 %v397, %v418
      %v424 = vadd.f32 %v412, %v418
      %v425 = vadd.f32 %v400, %v418
      %v426 = vadd.f32 %v413, %v418
      %v435 = vrot.slane %v419, 7
      %v436 = vrot.slane %v420, 7
      %v437 = vrot.slane %v421, 7
      %v438 = vrot.slane %v422, 7
      %v439 = vrot.slane %v423, 7
      %v440 = vrot.slane %v424, 7
      %v441 = vrot.slane %v425, 7
      %v442 = vrot.slane %v426, 7
      %vm451 = vcmask 1040384
      %v452 = vsel %vm451, %v405, %v435
      %v453 = vsel %vm451, %v405, %v436
      %v454 = vsel %vm451, %v405, %v437
      %v455 = vsel %vm451, %v405, %v438
      %v456 = vsel %vm451, %v405, %v439
      %v457 = vsel %vm451, %v405, %v440
      %v458 = vsel %vm451, %v405, %v441
      %v459 = vsel %vm451, %v405, %v442
      %vm460 = vcmask 1044480
      %v461 = vsel %vm460, %v452, 0.0
      %v462 = vsel %vm460, %v453, 0.0
      %v463 = vsel %vm460, %v454, 0.0
      %v464 = vsel %vm460, %v455, 0.0
      %v465 = vsel %vm460, %v456, 0.0
      %v466 = vsel %vm460, %v457, 0.0
      %v467 = vsel %vm460, %v458, 0.0
      %v468 = vsel %vm460, %v459, 0.0
      %469 = vst [vmem:[%s229] sm:$0xff] %v461
      %470 = vst [vmem:[%s229 + $0x8] sm:$0xff] %v462
      %471 = vst [vmem:[%s229 + $0x10] sm:$0xff] %v463
      %472 = vst [vmem:[%s229 + $0x18] sm:$0xff] %v464
      %473 = vst [vmem:[%s229 + $0x20] sm:$0xff] %v465
      %474 = vst [vmem:[%s229 + $0x28] sm:$0xff] %v466
      %475 = vst [vmem:[%s229 + $0x30] sm:$0xff] %v467
      %476 = vst [vmem:[%s229 + $0x38] sm:$0xff] %v468
      %s477 = smul.u32 8, %s16
      %p478 = scmp.lt.s32.totalorder %s477, 15
      %s479 = scalar_select %p478, %s477, 15
      %s480 = smul.addr %s479, 8
      %s481 = scalar_lea.vmem %s5, %s480
      // Predicated region
      $region41: #{_lambda_.4} parent=39 // pred_check
        %p482 = pneg %p144
      $region42: #{_lambda_.4} parent=39 // pred_check_branch
        %484 = sbr.rel (%p482) target = $region44
      $region43: #{_lambda_.4} parent=39 // pred_region
        %s485 = smul.u32 8, %s16
      $region44: #{_lambda_.4} parent=39 // pred_fallthru
        _
    $region40: #{_lambda_.4} parent=5 // pred_fallthru
      _
    %p486 = scmp.le.s32.totalorder 2, %s11
    // Predicated region
    $region45: #{_lambda_.4} parent=5 // pred_check
      %p487 = pneg %p486
    $region46: #{_lambda_.4} parent=5 // pred_check_branch
      %489 = sbr.rel (%p487) target = $region48
    $region47: #{_lambda_.4} parent=5 // pred_region
      %s490 = ssub.s32 %s11, 2
      // Predicated region
      $region49: #{_lambda_.4} parent=47 // pred_check
        %p491 = pneg %p150
      $region50: #{_lambda_.4} parent=47 // pred_check_branch
        %493 = sbr.rel (%p491) target = $region52
      $region51: #{_lambda_.4} parent=47 // pred_region
        %s494 = smul.u32 8, %s17
        %p495 = scmp.lt.s32.totalorder %s494, 15
        %s496 = scalar_select %p495, %s494, 15
        %s497 = smul.addr %s496, 8
        %s498 = scalar_lea.vmem %s5, %s497
      $region52: #{_lambda_.4} parent=47 // pred_fallthru
        _
    $region48: #{_lambda_.4} parent=5 // pred_fallthru
      _
  $region6: #{_lambda_.4} parent=0 // loop_footer
    %s15 = sadd.s32 1, %s11
  $region7: #{_lambda_.4} parent=0 // loop_footer_branch
    %10 = sbr.rel target = $region3
  $region8: #{_lambda_.4} parent=0 // loop_exit
    _

// kernel: _lambda_.7
$region0: #{_lambda_.7}
  #allocation0 [shape = 'u32[]', space=smem, size = 0x4, offset = 0x4, fixed_abs, tag = 'smem constant byte address 0x4 - core index']
  #allocation1 [shape = 'u32[144,128]{1,0:T(1,128)}', space=vmem, size = 0x12000, scoped, tag = 'internal scratch']
  %s0 = inlined_call_operand.vmem [shape: f32[128,128], index: 0, kind: input, shape index: {}]
  %s1 = inlined_call_operand.vmem [shape: f32[1,128], index: 1, kind: input, shape index: {}]
  %s2 = inlined_call_operand.vmem [shape: f32[1,128], index: 2, kind: input, shape index: {}]
  %s3 = inlined_call_operand.hbm [shape: f32[16,128], index: 3, kind: output, shape index: {}]
  %s4 = sld [smem:[#allocation0]]
  $region45: #{_lambda_.7} parent=0
    _
  %s6 = ssub.s32 1, %s4
  %s7 = scalar_select 0, %s6, %s4
  $region1: #{_lambda_.7} parent=0
    #allocation2 [shape = 'u8[8192]{0}', space=vmem, size = 0x2000, scoped, tag = 'output window, operand 0']
    #allocation3 [shape = 's32[2]{0}', space=sflag, size = 0x8, scoped, tag = 'scoped memory for _lambda_.7']
    %8 = vsyncpa [#allocation3], 0
    %s9 = scalar_lea.sflag [#allocation3], 1
    %10 = vsyncpa %s9, 0
    loop: start=0, step=1, limit=4
    $region2: #{_lambda_.7} parent=1 // loop_pre_header
      _
    $region3: #{_lambda_.7} parent=1 // loop_header
      %s12 = sphi 0, %s16
      %p13 = scmp.ge.s32.totalorder %s12, 4
      %s22 = sphi 0, %s24
      %s25 = sphi 0, %s22
      %s26 = sphi 0, %s25
      %s42 = sphi 0, %s26
      %s46 = sphi 0, %s46
      %s48 = sphi 0, %s46
      %s49 = sphi 0, %s48
      %s63 = sphi 0, %s49
      %s67 = sphi 0, %s67
      %s69 = sphi 0, %s67
      %s70 = sphi 0, %s69
      %s84 = sphi 0, %s70
      %s90 = sphi 0, %s92
      %s93 = sphi 0, %s90
      %s94 = sphi 0, %s93
      %s110 = sphi 0, %s94
    $region4: #{_lambda_.7} parent=1 // loop_header_branch
      %15 = sbr.rel (%p13) target = $region8
    $region5: #{_lambda_.7} parent=1 // loop_body
      %s17 = ssub.s32 %s12, 1
      %s18 = ssub.s32 %s12, 2
      %s19 = sadd.s32 %s12, 1
      %s20 = ssub.s32 %s12, %s19
      %p21 = scmp.eq.s32.totalorder %s20, 0
      %s23 = sadd.s32 %s22, 1
      %s24 = scalar_select %p21, %s22, %s23
      %p27 = pneg %p21
      %p28 = scmp.eq.s32.totalorder %s12, 1
      %p29 = por %p27, %p28
      %p30 = scmp.ne.s32.totalorder %s22, %s25
      %p31 = scmp.eq.s32.totalorder %s12, 0
      %p32 = por %p30, %p31
      %p33 = scmp.ne.s32.totalorder %s22, %s25
      %p34 = scmp.eq.s32.totalorder %s17, 1
      %p35 = por %p33, %p34
      %p36 = scmp.ne.s32.totalorder %s25, %s26
      %p37 = scmp.eq.s32.totalorder %s17, 0
      %p38 = por %p36, %p37
      %p39 = scmp.ne.s32.totalorder %s25, %s26
      %p40 = scmp.eq.s32.totalorder %s18, 1
      %p41 = por %p39, %p40
      %p43 = scmp.ne.s32.totalorder %s26, %s42
      %p44 = scmp.eq.s32.totalorder %s18, 0
      %p45 = por %p43, %p44
      %s47 = sadd.s32 %s46, 1
      %p50 = scmp.eq.s32.totalorder %s12, 1
      %p51 = scmp.ne.s32.totalorder %s46, %s48
      %p52 = scmp.eq.s32.totalorder %s12, 0
      %p53 = por %p51, %p52
      %p54 = scmp.ne.s32.totalorder %s46, %s48
      %p55 = scmp.eq.s32.totalorder %s17, 1
      %p56 = por %p54, %p55
      %p57 = scmp.ne.s32.totalorder %s48, %s49
      %p58 = scmp.eq.s32.totalorder %s17, 0
      %p59 = por %p57, %p58
      %p60 = scmp.ne.s32.totalorder %s48, %s49
      %p61 = scmp.eq.s32.totalorder %s18, 1
      %p62 = por %p60, %p61
      %p64 = scmp.ne.s32.totalorder %s49, %s63
      %p65 = scmp.eq.s32.totalorder %s18, 0
      %p66 = por %p64, %p65
      %s68 = sadd.s32 %s67, 1
      %p71 = scmp.eq.s32.totalorder %s12, 1
      %p72 = scmp.ne.s32.totalorder %s67, %s69
      %p73 = scmp.eq.s32.totalorder %s12, 0
      %p74 = por %p72, %p73
      %p75 = scmp.ne.s32.totalorder %s67, %s69
      %p76 = scmp.eq.s32.totalorder %s17, 1
      %p77 = por %p75, %p76
      %p78 = scmp.ne.s32.totalorder %s69, %s70
      %p79 = scmp.eq.s32.totalorder %s17, 0
      %p80 = por %p78, %p79
      %p81 = scmp.ne.s32.totalorder %s69, %s70
      %p82 = scmp.eq.s32.totalorder %s18, 1
      %p83 = por %p81, %p82
      %p85 = scmp.ne.s32.totalorder %s70, %s84
      %p86 = scmp.eq.s32.totalorder %s18, 0
      %p87 = por %p85, %p86
      %s88 = ssub.s32 %s12, %s19
      %p89 = scmp.eq.s32.totalorder %s88, 0
      %s91 = sadd.s32 %s90, 1
      %s92 = scalar_select %p89, %s90, %s91
      %p95 = pneg %p89
      %p96 = scmp.eq.s32.totalorder %s12, 1
      %p97 = por %p95, %p96
      %p98 = scmp.ne.s32.totalorder %s90, %s93
      %p99 = scmp.eq.s32.totalorder %s12, 0
      %p100 = por %p98, %p99
      %p101 = scmp.ne.s32.totalorder %s90, %s93
      %p102 = scmp.eq.s32.totalorder %s17, 1
      %p103 = por %p101, %p102
      %p104 = scmp.ne.s32.totalorder %s93, %s94
      %p105 = scmp.eq.s32.totalorder %s17, 0
      %p106 = por %p104, %p105
      %p107 = scmp.ne.s32.totalorder %s93, %s94
      %p108 = scmp.eq.s32.totalorder %s18, 1
      %p109 = por %p107, %p108
      %p111 = scmp.ne.s32.totalorder %s94, %s110
      %p112 = scmp.eq.s32.totalorder %s18, 0
      %p113 = por %p111, %p112
      %p114 = scmp.le.s32.totalorder 1, %s12
      %p115 = scmp.lt.s32.totalorder %s12, 3
      %p116 = pnand %p114, %p115
      %p117 = pneg %p116
      // Predicated region
      $region9: #{_lambda_.7} parent=5 // pred_check
        _
      $region10: #{_lambda_.7} parent=5 // pred_check_branch
        %119 = sbr.rel (%p116) target = $region12
      $region11: #{_lambda_.7} parent=5 // pred_region
        %s120 = ssub.s32 %s12, 1
        // Predicated region
        $region13: #{_lambda_.7} parent=11 // pred_check
          %p121 = pneg %p59
        $region14: #{_lambda_.7} parent=11 // pred_check_branch
          %123 = sbr.rel (%p121) target = $region16
        $region15: #{_lambda_.7} parent=11 // pred_region
          _
        $region16: #{_lambda_.7} parent=11 // pred_fallthru
          _
        // Predicated region
        $region17: #{_lambda_.7} parent=11 // pred_check
          %p124 = pneg %p80
        $region18: #{_lambda_.7} parent=11 // pred_check_branch
          %126 = sbr.rel (%p124) target = $region20
        $region19: #{_lambda_.7} parent=11 // pred_region
          _
        $region20: #{_lambda_.7} parent=11 // pred_fallthru
          _
      $region12: #{_lambda_.7} parent=5 // pred_fallthru
        _
      %p127 = scmp.lt.s32.totalorder %s12, 2
      // Predicated region
      $region21: #{_lambda_.7} parent=5 // pred_check
        %p128 = pneg %p127
      $region22: #{_lambda_.7} parent=5 // pred_check_branch
        %130 = sbr.rel (%p128) target = $region24
      $region23: #{_lambda_.7} parent=5 // pred_region
        // Predicated region
        $region25: #{_lambda_.7} parent=23 // pred_check
          %p131 = pneg %p32
        $region26: #{_lambda_.7} parent=23 // pred_check_branch
          %133 = sbr.rel (%p131) target = $region28
        $region27: #{_lambda_.7} parent=23 // pred_region
          %s134 = smul.u32 8, %s12
          %p135 = scmp.lt.s32.totalorder %s134, 15
          %s136 = scalar_select %p135, %s134, 15
          %s137 = smul.addr %s136, 8
          %s138 = scalar_lea.vmem %s0, %s137
          %s139 = smul.u32 8, %s12
        $region28: #{_lambda_.7} parent=23 // pred_fallthru
          _
      $region24: #{_lambda_.7} parent=5 // pred_fallthru
        _
      %p140 = scmp.le.s32.totalorder 1, %s12
      %p141 = scmp.lt.s32.totalorder %s12, 3
      %p142 = pnand %p140, %p141
      %p143 = pneg %p142
      // Predicated region
      $region29: #{_lambda_.7} parent=5 // pred_check
        _
      $region30: #{_lambda_.7} parent=5 // pred_check_branch
        %145 = sbr.rel (%p142) target = $region32
      $region31: #{_lambda_.7} parent=5 // pred_region
        %s146 = ssub.s32 %s12, 1
        %s147 = smul.u32 8, %s17
        %p148 = scmp.lt.s32.totalorder %s147, 15
        %s149 = scalar_select %p148, %s147, 15
        %s150 = smul.addr %s149, 8
        %s151 = scalar_lea.vmem %s0, %s150
        %p152 = pneg %p38
        %p153 = pneg %p35
        %p154 = pneg %p59
        %p155 = pneg %p56
        %p156 = pneg %p80
        %p157 = pneg %p77
        %p158 = pneg %p106
        %p159 = pneg %p103
        %s160 = sand.u32 %s93, 1
        %s161 = scalar_lea.sflag [#allocation3], %s160
        %s162 = sand.u32 %s93, 1
        %s163 = smul.addr %s162, 8
        %s164 = scalar_lea.vmem [#allocation2], %s163
        %s165 = smul.u32 8, %s17
        %p166 = scmp.lt.s32.totalorder %s165, 15
        %s167 = scalar_select %p166, %s165, 15
        %s168 = smul.addr %s167, 8
        %s169 = scalar_lea.vmem %s0, %s168
        %s170 = smul.u32 8, %s17
        %v171 = vld [vmem:[%s169] sm:$0xff]
        %v172 = vld [vmem:[%s169 + $0x8] sm:$0xff]
        %v173 = vld [vmem:[%s169 + $0x10] sm:$0xff]
        %v174 = vld [vmem:[%s169 + $0x18] sm:$0xff]
        %v175 = vld [vmem:[%s169 + $0x20] sm:$0xff]
        %v176 = vld [vmem:[%s169 + $0x28] sm:$0xff]
        %v177 = vld [vmem:[%s169 + $0x30] sm:$0xff]
        %v178 = vld [vmem:[%s169 + $0x38] sm:$0xff]
        %v187 = vrot.slane %v171, 1
        %v188 = vrot.slane %v172, 1
        %v189 = vrot.slane %v173, 1
        %v190 = vrot.slane %v174, 1
        %v191 = vrot.slane %v175, 1
        %v192 = vrot.slane %v176, 1
        %v193 = vrot.slane %v177, 1
        %v194 = vrot.slane %v178, 1
        %vm203 = vcmask 1043456
        %v204 = vsel %vm203, %v187, 0.0
        %v205 = vrot.slane %v204, 4
        %v206 = vadd.f32 %v204, %v205
        %v207 = vrot.slane %v206, 2
        %v208 = vadd.f32 %v206, %v207
        %v209 = vrot.slane %v208, 1
        %v210 = vadd.f32 %v208, %v209
        %v211 = vsel %vm203, %v188, 0.0
        %v212 = vrot.slane %v211, 4
        %v213 = vadd.f32 %v211, %v212
        %v214 = vrot.slane %v213, 2
        %v215 = vadd.f32 %v213, %v214
        %v216 = vrot.slane %v215, 1
        %v217 = vadd.f32 %v215, %v216
        %v218 = vsel %vm203, %v189, 0.0
        %v219 = vrot.slane %v218, 4
        %v220 = vadd.f32 %v218, %v219
        %v221 = vrot.slane %v220, 2
        %v222 = vadd.f32 %v220, %v221
        %v223 = vrot.slane %v222, 1
        %v224 = vadd.f32 %v222, %v223
        %v225 = vsel %vm203, %v190, 0.0
        %v226 = vrot.slane %v225, 4
        %v227 = vadd.f32 %v225, %v226
        %v228 = vrot.slane %v227, 2
        %v229 = vadd.f32 %v227, %v228
        %v230 = vrot.slane %v229, 1
        %v231 = vadd.f32 %v229, %v230
        %v232 = vsel %vm203, %v191, 0.0
        %v233 = vrot.slane %v232, 4
        %v234 = vadd.f32 %v232, %v233
        %v235 = vrot.slane %v234, 2
        %v236 = vadd.f32 %v234, %v235
        %v237 = vrot.slane %v236, 1
        %v238 = vadd.f32 %v236, %v237
        %v239 = vsel %vm203, %v192, 0.0
        %v240 = vrot.slane %v239, 4
        %v241 = vadd.f32 %v239, %v240
        %v242 = vrot.slane %v241, 2
        %v243 = vadd.f32 %v241, %v242
        %v244 = vrot.slane %v243, 1
        %v245 = vadd.f32 %v243, %v244
        %v246 = vsel %vm203, %v193, 0.0
        %v247 = vrot.slane %v246, 4
        %v248 = vadd.f32 %v246, %v247
        %v249 = vrot.slane %v248, 2
        %v250 = vadd.f32 %v248, %v249
        %v251 = vrot.slane %v250, 1
        %v252 = vadd.f32 %v250, %v251
        %v253 = vsel %vm203, %v194, 0.0
        %v254 = vrot.slane %v253, 4
        %v255 = vadd.f32 %v253, %v254
        %v256 = vrot.slane %v255, 2
        %v257 = vadd.f32 %v255, %v256
        %v258 = vrot.slane %v257, 1
        %v259 = vadd.f32 %v257, %v258
        %v260 = vmul.f32 %v210, 0.25
        %v261 = vmul.f32 %v217, 0.25
        %v262 = vmul.f32 %v224, 0.25
        %v263 = vmul.f32 %v231, 0.25
        %v264 = vmul.f32 %v238, 0.25
        %v265 = vmul.f32 %v245, 0.25
        %v266 = vmul.f32 %v252, 0.25
        %v267 = vmul.f32 %v259, 0.25
        %v268 = vld [vmem:[%s1] sm:$0x1]
        %v269 = vld [vmem:[%s2] sm:$0x1]
        %vm278 = vcmask 1041409
        %v279 = vsel %vm278, %v261, %v260
        %vm280 = vcmask 1042434
        %v281 = vsel %vm280, %v262, %v279
        %vm282 = vcmask 1043459
        %v283 = vsel %vm282, %v263, %v281
        %vm284 = vcmask 1044484
        %v285 = vsel %vm284, %v264, %v283
        %vm286 = vcmask 1045509
        %v287 = vsel %vm286, %v265, %v285
        %vm288 = vcmask 1046534
        %v289 = vsel %vm288, %v266, %v287
        %vm290 = vcmask 1047559
        %v291 = vsel %vm290, %v267, %v289
        %293 = vadd.xlane.f32.xlu0 %v291
        %v294 = vpop.xlane.xlu0 %293
        %v295 = vrcp.pop 128.0
        %v296 = vmul.f32 %v294, %v295
        %v298 = vrot.slane %v296, 1
        %v299 = vrot.slane %v296, 2
        %v300 = vrot.slane %v296, 3
        %v301 = vrot.slane %v296, 4
        %v302 = vrot.slane %v296, 5
        %v303 = vrot.slane %v296, 6
        %v304 = vrot.slane %v296, 7
        %v313 = vsub.f32 %v260, %v296
        %v314 = vsub.f32 %v261, %v298
        %v315 = vsub.f32 %v262, %v299
        %v316 = vsub.f32 %v263, %v300
        %v317 = vsub.f32 %v264, %v301
        %v318 = vsub.f32 %v265, %v302
        %v319 = vsub.f32 %v266, %v303
        %v320 = vsub.f32 %v267, %v304
        %v321 = vmul.f32 %v313, %v313
        %v322 = vmul.f32 %v314, %v314
        %v323 = vmul.f32 %v315, %v315
        %v324 = vmul.f32 %v316, %v316
        %v325 = vmul.f32 %v317, %v317
        %v326 = vmul.f32 %v318, %v318
        %v327 = vmul.f32 %v319, %v319
        %v328 = vmul.f32 %v320, %v320
        %v337 = vrot.slane %v322, 7
        %v338 = vsel %vm278, %v337, %v321
        %v339 = vrot.slane %v323, 6
        %v340 = vsel %vm280, %v339, %v338
        %v341 = vrot.slane %v324, 5
        %v342 = vsel %vm282, %v341, %v340
        %v343 = vrot.slane %v325, 4
        %v344 = vsel %vm284, %v343, %v342
        %v345 = vrot.slane %v326, 3
        %v346 = vsel %vm286, %v345, %v344
        %v347 = vrot.slane %v327, 2
        %v348 = vsel %vm288, %v347, %v346
        %v349 = vrot.slane %v328, 1
        %v350 = vsel %vm290, %v349, %v348
        %352 = vadd.xlane.f32.xlu0 %v350
        %v353 = vpop.xlane.xlu0 %352
        %v354 = vmul.f32 %v353, %v295
        %v355 = vadd.f32 %v354, 1e-06
        %v356 = vrsqrt.pop %v355
        %v358 = vrot.slane %v356, 1
        %v359 = vrot.slane %v356, 2
        %v360 = vrot.slane %v356, 3
        %v361 = vrot.slane %v356, 4
        %v362 = vrot.slane %v356, 5
        %v363 = vrot.slane %v356, 6
        %v364 = vrot.slane %v356, 7
        %v373 = vmul.f32 %v313, %v356
        %v374 = vmul.f32 %v314, %v358
        %v375 = vmul.f32 %v315, %v359
        %v376 = vmul.f32 %v316, %v360
        %v377 = vmul.f32 %v317, %v361
        %v378 = vmul.f32 %v318, %v362
        %v379 = vmul.f32 %v319, %v363
        %v380 = vmul.f32 %v320, %v364
        %v382 = vlaneseq
        %v383 = vshrl.u32 %v382, 7
        %v384 = vsub.s32 0, %v383
        %v385 = vrot.slane %v268, %v384
        %v387 = vmul.f32 %v373, %v385
        %v388 = vmul.f32 %v374, %v385
        %v389 = vmul.f32 %v375, %v385
        %v390 = vmul.f32 %v376, %v385
        %v391 = vmul.f32 %v377, %v385
        %v392 = vmul.f32 %v378, %v385
        %v393 = vmul.f32 %v379, %v385
        %v394 = vmul.f32 %v380, %v385
        %v396 = vlaneseq
        %v397 = vshrl.u32 %v396, 7
        %v398 = vsub.s32 0, %v397
        %v399 = vrot.slane %v269, %v398
        %v401 = vadd.f32 %v387, %v399
        %v402 = vadd.f32 %v388, %v399
        %v403 = vadd.f32 %v389, %v399
        %v404 = vadd.f32 %v390, %v399
        %v405 = vadd.f32 %v391, %v399
        %v406 = vadd.f32 %v392, %v399
        %v407 = vadd.f32 %v393, %v399
        %v408 = vadd.f32 %v394, %v399
        %v417 = vrot.slane %v402, 7
        %v418 = vsel %vm278, %v417, %v401
        %v419 = vrot.slane %v403, 6
        %v420 = vsel %vm280, %v419, %v418
        %v421 = vrot.slane %v404, 5
        %v422 = vsel %vm282, %v421, %v420
        %v423 = vrot.slane %v405, 4
        %v424 = vsel %vm284, %v423, %v422
        %v425 = vrot.slane %v406, 3
        %v426 = vsel %vm286, %v425, %v424
        %v427 = vrot.slane %v407, 2
        %v428 = vsel %vm288, %v427, %v426
        %v429 = vrot.slane %v408, 1
        %v430 = vsel %vm290, %v429, %v428
        %432 = vst [vmem:[%s164] sm:$0xff] %v430
        %s433 = sand.u32 %s93, 1
        %s434 = scalar_lea.sflag [#allocation3], %s433
        %s435 = sand.u32 %s93, 1
        %s436 = smul.addr %s435, 8
        %s437 = scalar_lea.vmem [#allocation2], %s436
        // Predicated region
        $region33: #{_lambda_.7} parent=31 // pred_check
          %p438 = pneg %p103
        $region34: #{_lambda_.7} parent=31 // pred_check_branch
          %440 = sbr.rel (%p438) target = $region36
        $region35: #{_lambda_.7} parent=31 // pred_region
          %s442 = ssub.s32 128, 128
          %443 = vsyncadd %s434, %s442
          %s444 = smul.addr %s17, 128
          %s445 = scalar_lea.hbm %s3, %s444
          %s447 = sshll.u32 %s437, 4
          %s448 = int_to_ptr.vmem [resolvable:$true] %s447
          %450 = dma.vmem_to_hbm [thread:$0]  %s448, 128, %s445, %s434
        $region36: #{_lambda_.7} parent=31 // pred_fallthru
          _
      $region32: #{_lambda_.7} parent=5 // pred_fallthru
        _
      %p451 = scmp.le.s32.totalorder 2, %s12
      // Predicated region
      $region37: #{_lambda_.7} parent=5 // pred_check
        %p452 = pneg %p451
      $region38: #{_lambda_.7} parent=5 // pred_check_branch
        %454 = sbr.rel (%p452) target = $region40
      $region39: #{_lambda_.7} parent=5 // pred_region
        %s455 = ssub.s32 %s12, 2
        // Predicated region
        $region41: #{_lambda_.7} parent=39 // pred_check
          %p456 = pneg %p109
        $region42: #{_lambda_.7} parent=39 // pred_check_branch
          %458 = sbr.rel (%p456) target = $region44
        $region43: #{_lambda_.7} parent=39 // pred_region
          %s459 = sand.u32 %s94, 1
          %s460 = scalar_lea.sflag [#allocation3], %s459
          %s461 = sand.u32 %s94, 1
          %s462 = smul.addr %s461, 8
          %s463 = scalar_lea.vmem [#allocation2], %s462
          %464 = dma.done %s460, 128
        $region44: #{_lambda_.7} parent=39 // pred_fallthru
          _
      $region40: #{_lambda_.7} parent=5 // pred_fallthru
        _
    $region6: #{_lambda_.7} parent=1 // loop_footer
      %s16 = sadd.s32 1, %s12
    $region7: #{_lambda_.7} parent=1 // loop_footer_branch
      %11 = sbr.rel target = $region3
    $region8: #{_lambda_.7} parent=1 // loop_exit
      _
    %465 = vsyncpa [#allocation3], 1
    %s466 = scalar_lea.sflag [#allocation3], 1
    %467 = vsyncpa %s466, 1

// kernel: _lambda_.5
$region0: #{_lambda_.5}
  #allocation0 [shape = 'u32[]', space=smem, size = 0x4, offset = 0x4, fixed_abs, tag = 'smem constant byte address 0x4 - core index']
  #allocation1 [shape = 'u32[144,128]{1,0:T(1,128)}', space=vmem, size = 0x12000, scoped, tag = 'internal scratch']
  %s0 = inlined_call_operand.vmem [shape: f32[128,128], index: 0, kind: input, shape index: {}]
  %s1 = inlined_call_operand.vmem [shape: f32[1,128], index: 1, kind: input, shape index: {}]
  %s2 = inlined_call_operand.vmem [shape: f32[1,128], index: 2, kind: input, shape index: {}]
  %s3 = inlined_call_operand.vmem [shape: bf16[128,384], index: 3, kind: input, shape index: {}]
  %s4 = inlined_call_operand.vmem [shape: f32[1,384], index: 4, kind: input, shape index: {}]
  %s5 = inlined_call_operand.vmem [shape: bf16[128,128], index: 5, kind: input, shape index: {}]
  %s6 = inlined_call_operand.vmem [shape: f32[1,128], index: 6, kind: input, shape index: {}]
  %s7 = inlined_call_operand.vmem [shape: f32[1,128], index: 7, kind: input, shape index: {}]
  %s8 = inlined_call_operand.vmem [shape: f32[1,128], index: 8, kind: input, shape index: {}]
  %s9 = inlined_call_operand.vmem [shape: bf16[128,512], index: 9, kind: input, shape index: {}]
  %s10 = inlined_call_operand.vmem [shape: f32[1,512], index: 10, kind: input, shape index: {}]
  %s11 = inlined_call_operand.vmem [shape: bf16[512,128], index: 11, kind: input, shape index: {}]
  %s12 = inlined_call_operand.vmem [shape: f32[1,128], index: 12, kind: input, shape index: {}]
  %s13 = inlined_call_operand.vmem [shape: f32[128,128], index: 13, kind: output, shape index: {}]
  %s14 = sld [smem:[#allocation0]]
  $region85: #{_lambda_.5} parent=0
    _
  %s16 = ssub.s32 1, %s14
  %s17 = scalar_select 0, %s16, %s14
  loop: start=0, step=1, limit=4
  $region2: #{_lambda_.5} parent=0 // loop_pre_header
    _
  $region3: #{_lambda_.5} parent=0 // loop_header
    %s19 = sphi 0, %s23
    %p20 = scmp.ge.s32.totalorder %s19, 4
    %s29 = sphi 0, %s31
    %s32 = sphi 0, %s29
    %s33 = sphi 0, %s32
    %s49 = sphi 0, %s33
    %s53 = sphi 0, %s53
    %s55 = sphi 0, %s53
    %s56 = sphi 0, %s55
    %s70 = sphi 0, %s56
    %s74 = sphi 0, %s74
    %s76 = sphi 0, %s74
    %s77 = sphi 0, %s76
    %s91 = sphi 0, %s77
    %s95 = sphi 0, %s95
    %s97 = sphi 0, %s95
    %s98 = sphi 0, %s97
    %s112 = sphi 0, %s98
    %s116 = sphi 0, %s116
    %s118 = sphi 0, %s116
    %s119 = sphi 0, %s118
    %s133 = sphi 0, %s119
    %s137 = sphi 0, %s137
    %s139 = sphi 0, %s137
    %s140 = sphi 0, %s139
    %s154 = sphi 0, %s140
    %s158 = sphi 0, %s158
    %s160 = sphi 0, %s158
    %s161 = sphi 0, %s160
    %s175 = sphi 0, %s161
    %s179 = sphi 0, %s179
    %s181 = sphi 0, %s179
    %s182 = sphi 0, %s181
    %s196 = sphi 0, %s182
    %s200 = sphi 0, %s200
    %s202 = sphi 0, %s200
    %s203 = sphi 0, %s202
    %s217 = sphi 0, %s203
    %s221 = sphi 0, %s221
    %s223 = sphi 0, %s221
    %s224 = sphi 0, %s223
    %s238 = sphi 0, %s224
    %s242 = sphi 0, %s242
    %s244 = sphi 0, %s242
    %s245 = sphi 0, %s244
    %s259 = sphi 0, %s245
    %s263 = sphi 0, %s263
    %s265 = sphi 0, %s263
    %s266 = sphi 0, %s265
    %s280 = sphi 0, %s266
    %s284 = sphi 0, %s284
    %s286 = sphi 0, %s284
    %s287 = sphi 0, %s286
    %s301 = sphi 0, %s287
    %s307 = sphi 0, %s309
    %s310 = sphi 0, %s307
    %s311 = sphi 0, %s310
    %s327 = sphi 0, %s311
  $region4: #{_lambda_.5} parent=0 // loop_header_branch
    %22 = sbr.rel (%p20) target = $region8
  $region5: #{_lambda_.5} parent=0 // loop_body
    %s24 = ssub.s32 %s19, 1
    %s25 = ssub.s32 %s19, 2
    %s26 = sadd.s32 %s19, 1
    %s27 = ssub.s32 %s19, %s26
    %p28 = scmp.eq.s32.totalorder %s27, 0
    %s30 = sadd.s32 %s29, 1
    %s31 = scalar_select %p28, %s29, %s30
    %p34 = pneg %p28
    %p35 = scmp.eq.s32.totalorder %s19, 1
    %p36 = por %p34, %p35
    %p37 = scmp.ne.s32.totalorder %s29, %s32
    %p38 = scmp.eq.s32.totalorder %s19, 0
    %p39 = por %p37, %p38
    %p40 = scmp.ne.s32.totalorder %s29, %s32
    %p41 = scmp.eq.s32.totalorder %s24, 1
    %p42 = por %p40, %p41
    %p43 = scmp.ne.s32.totalorder %s32, %s33
    %p44 = scmp.eq.s32.totalorder %s24, 0
    %p45 = por %p43, %p44
    %p46 = scmp.ne.s32.totalorder %s32, %s33
    %p47 = scmp.eq.s32.totalorder %s25, 1
    %p48 = por %p46, %p47
    %p50 = scmp.ne.s32.totalorder %s33, %s49
    %p51 = scmp.eq.s32.totalorder %s25, 0
    %p52 = por %p50, %p51
    %s54 = sadd.s32 %s53, 1
    %p57 = scmp.eq.s32.totalorder %s19, 1
    %p58 = scmp.ne.s32.totalorder %s53, %s55
    %p59 = scmp.eq.s32.totalorder %s19, 0
    %p60 = por %p58, %p59
    %p61 = scmp.ne.s32.totalorder %s53, %s55
    %p62 = scmp.eq.s32.totalorder %s24, 1
    %p63 = por %p61, %p62
    %p64 = scmp.ne.s32.totalorder %s55, %s56
    %p65 = scmp.eq.s32.totalorder %s24, 0
    %p66 = por %p64, %p65
    %p67 = scmp.ne.s32.totalorder %s55, %s56
    %p68 = scmp.eq.s32.totalorder %s25, 1
    %p69 = por %p67, %p68
    %p71 = scmp.ne.s32.totalorder %s56, %s70
    %p72 = scmp.eq.s32.totalorder %s25, 0
    %p73 = por %p71, %p72
    %s75 = sadd.s32 %s74, 1
    %p78 = scmp.eq.s32.totalorder %s19, 1
    %p79 = scmp.ne.s32.totalorder %s74, %s76
    %p80 = scmp.eq.s32.totalorder %s19, 0
    %p81 = por %p79, %p80
    %p82 = scmp.ne.s32.totalorder %s74, %s76
    %p83 = scmp.eq.s32.totalorder %s24, 1
    %p84 = por %p82, %p83
    %p85 = scmp.ne.s32.totalorder %s76, %s77
    %p86 = scmp.eq.s32.totalorder %s24, 0
    %p87 = por %p85, %p86
    %p88 = scmp.ne.s32.totalorder %s76, %s77
    %p89 = scmp.eq.s32.totalorder %s25, 1
    %p90 = por %p88, %p89
    %p92 = scmp.ne.s32.totalorder %s77, %s91
    %p93 = scmp.eq.s32.totalorder %s25, 0
    %p94 = por %p92, %p93
    %s96 = sadd.s32 %s95, 1
    %p99 = scmp.eq.s32.totalorder %s19, 1
    %p100 = scmp.ne.s32.totalorder %s95, %s97
    %p101 = scmp.eq.s32.totalorder %s19, 0
    %p102 = por %p100, %p101
    %p103 = scmp.ne.s32.totalorder %s95, %s97
    %p104 = scmp.eq.s32.totalorder %s24, 1
    %p105 = por %p103, %p104
    %p106 = scmp.ne.s32.totalorder %s97, %s98
    %p107 = scmp.eq.s32.totalorder %s24, 0
    %p108 = por %p106, %p107
    %p109 = scmp.ne.s32.totalorder %s97, %s98
    %p110 = scmp.eq.s32.totalorder %s25, 1
    %p111 = por %p109, %p110
    %p113 = scmp.ne.s32.totalorder %s98, %s112
    %p114 = scmp.eq.s32.totalorder %s25, 0
    %p115 = por %p113, %p114
    %s117 = sadd.s32 %s116, 1
    %p120 = scmp.eq.s32.totalorder %s19, 1
    %p121 = scmp.ne.s32.totalorder %s116, %s118
    %p122 = scmp.eq.s32.totalorder %s19, 0
    %p123 = por %p121, %p122
    %p124 = scmp.ne.s32.totalorder %s116, %s118
    %p125 = scmp.eq.s32.totalorder %s24, 1
    %p126 = por %p124, %p125
    %p127 = scmp.ne.s32.totalorder %s118, %s119
    %p128 = scmp.eq.s32.totalorder %s24, 0
    %p129 = por %p127, %p128
    %p130 = scmp.ne.s32.totalorder %s118, %s119
    %p131 = scmp.eq.s32.totalorder %s25, 1
    %p132 = por %p130, %p131
    %p134 = scmp.ne.s32.totalorder %s119, %s133
    %p135 = scmp.eq.s32.totalorder %s25, 0
    %p136 = por %p134, %p135
    %s138 = sadd.s32 %s137, 1
    %p141 = scmp.eq.s32.totalorder %s19, 1
    %p142 = scmp.ne.s32.totalorder %s137, %s139
    %p143 = scmp.eq.s32.totalorder %s19, 0
    %p144 = por %p142, %p143
    %p145 = scmp.ne.s32.totalorder %s137, %s139
    %p146 = scmp.eq.s32.totalorder %s24, 1
    %p147 = por %p145, %p146
    %p148 = scmp.ne.s32.totalorder %s139, %s140
    %p149 = scmp.eq.s32.totalorder %s24, 0
    %p150 = por %p148, %p149
    %p151 = scmp.ne.s32.totalorder %s139, %s140
    %p152 = scmp.eq.s32.totalorder %s25, 1
    %p153 = por %p151, %p152
    %p155 = scmp.ne.s32.totalorder %s140, %s154
    %p156 = scmp.eq.s32.totalorder %s25, 0
    %p157 = por %p155, %p156
    %s159 = sadd.s32 %s158, 1
    %p162 = scmp.eq.s32.totalorder %s19, 1
    %p163 = scmp.ne.s32.totalorder %s158, %s160
    %p164 = scmp.eq.s32.totalorder %s19, 0
    %p165 = por %p163, %p164
    %p166 = scmp.ne.s32.totalorder %s158, %s160
    %p167 = scmp.eq.s32.totalorder %s24, 1
    %p168 = por %p166, %p167
    %p169 = scmp.ne.s32.totalorder %s160, %s161
    %p170 = scmp.eq.s32.totalorder %s24, 0
    %p171 = por %p169, %p170
    %p172 = scmp.ne.s32.totalorder %s160, %s161
    %p173 = scmp.eq.s32.totalorder %s25, 1
    %p174 = por %p172, %p173
    %p176 = scmp.ne.s32.totalorder %s161, %s175
    %p177 = scmp.eq.s32.totalorder %s25, 0
    %p178 = por %p176, %p177
    %s180 = sadd.s32 %s179, 1
    %p183 = scmp.eq.s32.totalorder %s19, 1
    %p184 = scmp.ne.s32.totalorder %s179, %s181
    %p185 = scmp.eq.s32.totalorder %s19, 0
    %p186 = por %p184, %p185
    %p187 = scmp.ne.s32.totalorder %s179, %s181
    %p188 = scmp.eq.s32.totalorder %s24, 1
    %p189 = por %p187, %p188
    %p190 = scmp.ne.s32.totalorder %s181, %s182
    %p191 = scmp.eq.s32.totalorder %s24, 0
    %p192 = por %p190, %p191
    %p193 = scmp.ne.s32.totalorder %s181, %s182
    %p194 = scmp.eq.s32.totalorder %s25, 1
    %p195 = por %p193, %p194
    %p197 = scmp.ne.s32.totalorder %s182, %s196
    %p198 = scmp.eq.s32.totalorder %s25, 0
    %p199 = por %p197, %p198
    %s201 = sadd.s32 %s200, 1
    %p204 = scmp.eq.s32.totalorder %s19, 1
    %p205 = scmp.ne.s32.totalorder %s200, %s202
    %p206 = scmp.eq.s32.totalorder %s19, 0
    %p207 = por %p205, %p206
    %p208 = scmp.ne.s32.totalorder %s200, %s202
    %p209 = scmp.eq.s32.totalorder %s24, 1
    %p210 = por %p208, %p209
    %p211 = scmp.ne.s32.totalorder %s202, %s203
    %p212 = scmp.eq.s32.totalorder %s24, 0
    %p213 = por %p211, %p212
    %p214 = scmp.ne.s32.totalorder %s202, %s203
    %p215 = scmp.eq.s32.totalorder %s25, 1
    %p216 = por %p214, %p215
    %p218 = scmp.ne.s32.totalorder %s203, %s217
    %p219 = scmp.eq.s32.totalorder %s25, 0
    %p220 = por %p218, %p219
    %s222 = sadd.s32 %s221, 1
    %p225 = scmp.eq.s32.totalorder %s19, 1
    %p226 = scmp.ne.s32.totalorder %s221, %s223
    %p227 = scmp.eq.s32.totalorder %s19, 0
    %p228 = por %p226, %p227
    %p229 = scmp.ne.s32.totalorder %s221, %s223
    %p230 = scmp.eq.s32.totalorder %s24, 1
    %p231 = por %p229, %p230
    %p232 = scmp.ne.s32.totalorder %s223, %s224
    %p233 = scmp.eq.s32.totalorder %s24, 0
    %p234 = por %p232, %p233
    %p235 = scmp.ne.s32.totalorder %s223, %s224
    %p236 = scmp.eq.s32.totalorder %s25, 1
    %p237 = por %p235, %p236
    %p239 = scmp.ne.s32.totalorder %s224, %s238
    %p240 = scmp.eq.s32.totalorder %s25, 0
    %p241 = por %p239, %p240
    %s243 = sadd.s32 %s242, 1
    %p246 = scmp.eq.s32.totalorder %s19, 1
    %p247 = scmp.ne.s32.totalorder %s242, %s244
    %p248 = scmp.eq.s32.totalorder %s19, 0
    %p249 = por %p247, %p248
    %p250 = scmp.ne.s32.totalorder %s242, %s244
    %p251 = scmp.eq.s32.totalorder %s24, 1
    %p252 = por %p250, %p251
    %p253 = scmp.ne.s32.totalorder %s244, %s245
    %p254 = scmp.eq.s32.totalorder %s24, 0
    %p255 = por %p253, %p254
    %p256 = scmp.ne.s32.totalorder %s244, %s245
    %p257 = scmp.eq.s32.totalorder %s25, 1
    %p258 = por %p256, %p257
    %p260 = scmp.ne.s32.totalorder %s245, %s259
    %p261 = scmp.eq.s32.totalorder %s25, 0
    %p262 = por %p260, %p261
    %s264 = sadd.s32 %s263, 1
    %p267 = scmp.eq.s32.totalorder %s19, 1
    %p268 = scmp.ne.s32.totalorder %s263, %s265
    %p269 = scmp.eq.s32.totalorder %s19, 0
    %p270 = por %p268, %p269
    %p271 = scmp.ne.s32.totalorder %s263, %s265
    %p272 = scmp.eq.s32.totalorder %s24, 1
    %p273 = por %p271, %p272
    %p274 = scmp.ne.s32.totalorder %s265, %s266
    %p275 = scmp.eq.s32.totalorder %s24, 0
    %p276 = por %p274, %p275
    %p277 = scmp.ne.s32.totalorder %s265, %s266
    %p278 = scmp.eq.s32.totalorder %s25, 1
    %p279 = por %p277, %p278
    %p281 = scmp.ne.s32.totalorder %s266, %s280
    %p282 = scmp.eq.s32.totalorder %s25, 0
    %p283 = por %p281, %p282
    %s285 = sadd.s32 %s284, 1
    %p288 = scmp.eq.s32.totalorder %s19, 1
    %p289 = scmp.ne.s32.totalorder %s284, %s286
    %p290 = scmp.eq.s32.totalorder %s19, 0
    %p291 = por %p289, %p290
    %p292 = scmp.ne.s32.totalorder %s284, %s286
    %p293 = scmp.eq.s32.totalorder %s24, 1
    %p294 = por %p292, %p293
    %p295 = scmp.ne.s32.totalorder %s286, %s287
    %p296 = scmp.eq.s32.totalorder %s24, 0
    %p297 = por %p295, %p296
    %p298 = scmp.ne.s32.totalorder %s286, %s287
    %p299 = scmp.eq.s32.totalorder %s25, 1
    %p300 = por %p298, %p299
    %p302 = scmp.ne.s32.totalorder %s287, %s301
    %p303 = scmp.eq.s32.totalorder %s25, 0
    %p304 = por %p302, %p303
    %s305 = ssub.s32 %s19, %s26
    %p306 = scmp.eq.s32.totalorder %s305, 0
    %s308 = sadd.s32 %s307, 1
    %s309 = scalar_select %p306, %s307, %s308
    %p312 = pneg %p306
    %p313 = scmp.eq.s32.totalorder %s19, 1
    %p314 = por %p312, %p313
    %p315 = scmp.ne.s32.totalorder %s307, %s310
    %p316 = scmp.eq.s32.totalorder %s19, 0
    %p317 = por %p315, %p316
    %p318 = scmp.ne.s32.totalorder %s307, %s310
    %p319 = scmp.eq.s32.totalorder %s24, 1
    %p320 = por %p318, %p319
    %p321 = scmp.ne.s32.totalorder %s310, %s311
    %p322 = scmp.eq.s32.totalorder %s24, 0
    %p323 = por %p321, %p322
    %p324 = scmp.ne.s32.totalorder %s310, %s311
    %p325 = scmp.eq.s32.totalorder %s25, 1
    %p326 = por %p324, %p325
    %p328 = scmp.ne.s32.totalorder %s311, %s327
    %p329 = scmp.eq.s32.totalorder %s25, 0
    %p330 = por %p328, %p329
    %p331 = scmp.le.s32.totalorder 1, %s19
    %p332 = scmp.lt.s32.totalorder %s19, 3
    %p333 = pnand %p331, %p332
    %p334 = pneg %p333
    // Predicated region
    $region9: #{_lambda_.5} parent=5 // pred_check
      _
    $region10: #{_lambda_.5} parent=5 // pred_check_branch
      %336 = sbr.rel (%p333) target = $region12
    $region11: #{_lambda_.5} parent=5 // pred_region
      %s337 = ssub.s32 %s19, 1
      // Predicated region
      $region13: #{_lambda_.5} parent=11 // pred_check
        %p338 = pneg %p66
      $region14: #{_lambda_.5} parent=11 // pred_check_branch
        %340 = sbr.rel (%p338) target = $region16
      $region15: #{_lambda_.5} parent=11 // pred_region
        _
      $region16: #{_lambda_.5} parent=11 // pred_fallthru
        _
      // Predicated region
      $region17: #{_lambda_.5} parent=11 // pred_check
        %p341 = pneg %p87
      $region18: #{_lambda_.5} parent=11 // pred_check_branch
        %343 = sbr.rel (%p341) target = $region20
      $region19: #{_lambda_.5} parent=11 // pred_region
        _
      $region20: #{_lambda_.5} parent=11 // pred_fallthru
        _
      // Predicated region
      $region21: #{_lambda_.5} parent=11 // pred_check
        %p344 = pneg %p108
      $region22: #{_lambda_.5} parent=11 // pred_check_branch
        %346 = sbr.rel (%p344) target = $region24
      $region23: #{_lambda_.5} parent=11 // pred_region
        _
      $region24: #{_lambda_.5} parent=11 // pred_fallthru
        _
      // Predicated region
      $region25: #{_lambda_.5} parent=11 // pred_check
        %p347 = pneg %p129
      $region26: #{_lambda_.5} parent=11 // pred_check_branch
        %349 = sbr.rel (%p347) target = $region28
      $region27: #{_lambda_.5} parent=11 // pred_region
        _
      $region28: #{_lambda_.5} parent=11 // pred_fallthru
        _
      // Predicated region
      $region29: #{_lambda_.5} parent=11 // pred_check
        %p350 = pneg %p150
      $region30: #{_lambda_.5} parent=11 // pred_check_branch
        %352 = sbr.rel (%p350) target = $region32
      $region31: #{_lambda_.5} parent=11 // pred_region
        _
      $region32: #{_lambda_.5} parent=11 // pred_fallthru
        _
      // Predicated region
      $region33: #{_lambda_.5} parent=11 // pred_check
        %p353 = pneg %p171
      $region34: #{_lambda_.5} parent=11 // pred_check_branch
        %355 = sbr.rel (%p353) target = $region36
      $region35: #{_lambda_.5} parent=11 // pred_region
        _
      $region36: #{_lambda_.5} parent=11 // pred_fallthru
        _
      // Predicated region
      $region37: #{_lambda_.5} parent=11 // pred_check
        %p356 = pneg %p192
      $region38: #{_lambda_.5} parent=11 // pred_check_branch
        %358 = sbr.rel (%p356) target = $region40
      $region39: #{_lambda_.5} parent=11 // pred_region
        _
      $region40: #{_lambda_.5} parent=11 // pred_fallthru
        _
      // Predicated region
      $region41: #{_lambda_.5} parent=11 // pred_check
        %p359 = pneg %p213
      $region42: #{_lambda_.5} parent=11 // pred_check_branch
        %361 = sbr.rel (%p359) target = $region44
      $region43: #{_lambda_.5} parent=11 // pred_region
        _
      $region44: #{_lambda_.5} parent=11 // pred_fallthru
        _
      // Predicated region
      $region45: #{_lambda_.5} parent=11 // pred_check
        %p362 = pneg %p234
      $region46: #{_lambda_.5} parent=11 // pred_check_branch
        %364 = sbr.rel (%p362) target = $region48
      $region47: #{_lambda_.5} parent=11 // pred_region
        _
      $region48: #{_lambda_.5} parent=11 // pred_fallthru
        _
      // Predicated region
      $region49: #{_lambda_.5} parent=11 // pred_check
        %p365 = pneg %p255
      $region50: #{_lambda_.5} parent=11 // pred_check_branch
        %367 = sbr.rel (%p365) target = $region52
      $region51: #{_lambda_.5} parent=11 // pred_region
        _
      $region52: #{_lambda_.5} parent=11 // pred_fallthru
        _
      // Predicated region
      $region53: #{_lambda_.5} parent=11 // pred_check
        %p368 = pneg %p276
      $region54: #{_lambda_.5} parent=11 // pred_check_branch
        %370 = sbr.rel (%p368) target = $region56
      $region55: #{_lambda_.5} parent=11 // pred_region
        _
      $region56: #{_lambda_.5} parent=11 // pred_fallthru
        _
      // Predicated region
      $region57: #{_lambda_.5} parent=11 // pred_check
        %p371 = pneg %p297
      $region58: #{_lambda_.5} parent=11 // pred_check_branch
        %373 = sbr.rel (%p371) target = $region60
      $region59: #{_lambda_.5} parent=11 // pred_region
        _
      $region60: #{_lambda_.5} parent=11 // pred_fallthru
        _
    $region12: #{_lambda_.5} parent=5 // pred_fallthru
      _
    %p374 = scmp.lt.s32.totalorder %s19, 2
    // Predicated region
    $region61: #{_lambda_.5} parent=5 // pred_check
      %p375 = pneg %p374
    $region62: #{_lambda_.5} parent=5 // pred_check_branch
      %377 = sbr.rel (%p375) target = $region64
    $region63: #{_lambda_.5} parent=5 // pred_region
      // Predicated region
      $region65: #{_lambda_.5} parent=63 // pred_check
        %p378 = pneg %p39
      $region66: #{_lambda_.5} parent=63 // pred_check_branch
        %380 = sbr.rel (%p378) target = $region68
      $region67: #{_lambda_.5} parent=63 // pred_region
        %s381 = smul.u32 8, %s19
        %p382 = scmp.lt.s32.totalorder %s381, 15
        %s383 = scalar_select %p382, %s381, 15
        %s384 = smul.addr %s383, 8
        %s385 = scalar_lea.vmem %s0, %s384
        %s386 = smul.u32 8, %s19
      $region68: #{_lambda_.5} parent=63 // pred_fallthru
        _
    $region64: #{_lambda_.5} parent=5 // pred_fallthru
      _
    %p387 = scmp.le.s32.totalorder 1, %s19
    %p388 = scmp.lt.s32.totalorder %s19, 3
    %p389 = pnand %p387, %p388
    %p390 = pneg %p389
    // Predicated region
    $region69: #{_lambda_.5} parent=5 // pred_check
      _
    $region70: #{_lambda_.5} parent=5 // pred_check_branch
      %392 = sbr.rel (%p389) target = $region72
    $region71: #{_lambda_.5} parent=5 // pred_region
      %s393 = ssub.s32 %s19, 1
      %s394 = smul.u32 8, %s24
      %p395 = scmp.lt.s32.totalorder %s394, 15
      %s396 = scalar_select %p395, %s394, 15
      %s397 = smul.addr %s396, 8
      %s398 = scalar_lea.vmem %s0, %s397
      %p399 = pneg %p45
      %p400 = pneg %p42
      %p401 = pneg %p66
      %p402 = pneg %p63
      %p403 = pneg %p87
      %p404 = pneg %p84
      %p405 = pneg %p108
      %p406 = pneg %p105
      %p407 = pneg %p129
      %p408 = pneg %p126
      %p409 = pneg %p150
      %p410 = pneg %p147
      %p411 = pneg %p171
      %p412 = pneg %p168
      %p413 = pneg %p192
      %p414 = pneg %p189
      %p415 = pneg %p213
      %p416 = pneg %p210
      %p417 = pneg %p234
      %p418 = pneg %p231
      %p419 = pneg %p255
      %p420 = pneg %p252
      %p421 = pneg %p276
      %p422 = pneg %p273
      %p423 = pneg %p297
      %p424 = pneg %p294
      %p425 = pneg %p323
      %p426 = pneg %p320
      %s427 = smul.u32 8, %s24
      %p428 = scmp.lt.s32.totalorder %s427, 15
      %s429 = scalar_select %p428, %s427, 15
      %s430 = smul.addr %s429, 8
      %s431 = scalar_lea.vmem %s13, %s430
      %s432 = smul.u32 8, %s24
      %p433 = scmp.lt.s32.totalorder %s432, 15
      %s434 = scalar_select %p433, %s432, 15
      %s435 = smul.addr %s434, 8
      %s436 = scalar_lea.vmem %s0, %s435
      %s437 = smul.u32 8, %s24
      %s438 = smul.u32 8, %s24
      %p439 = scmp.lt.s32.totalorder %s438, 15
      %s440 = scalar_select %p439, %s438, 15
      %s441 = smul.addr %s440, 8
      %s442 = scalar_lea.vmem %s13, %s441
      %s443 = smul.u32 8, %s24
      %v445 = vld [vmem:[%s436] sm:$0xff]
      %v446 = vld [vmem:[%s436 + $0x8] sm:$0xff]
      %v447 = vld [vmem:[%s436 + $0x10] sm:$0xff]
      %v448 = vld [vmem:[%s436 + $0x18] sm:$0xff]
      %v449 = vld [vmem:[%s436 + $0x20] sm:$0xff]
      %v450 = vld [vmem:[%s436 + $0x28] sm:$0xff]
      %v451 = vld [vmem:[%s436 + $0x30] sm:$0xff]
      %v452 = vld [vmem:[%s436 + $0x38] sm:$0xff]
      %v453 = vld [vmem:[%s1] sm:$0x1]
      %v454 = vld [vmem:[%s2] sm:$0x1]
      %455 = vadd.xlane.f32.xlu0 %v445
      %v456 = vpop.xlane.xlu0 %455
      %457 = vadd.xlane.f32.xlu0 %v446
      %v458 = vpop.xlane.xlu0 %457
      %459 = vadd.xlane.f32.xlu0 %v447
      %v460 = vpop.xlane.xlu0 %459
      %461 = vadd.xlane.f32.xlu0 %v448
      %v462 = vpop.xlane.xlu0 %461
      %463 = vadd.xlane.f32.xlu0 %v449
      %v464 = vpop.xlane.xlu0 %463
      %465 = vadd.xlane.f32.xlu0 %v450
      %v466 = vpop.xlane.xlu0 %465
      %467 = vadd.xlane.f32.xlu0 %v451
      %v468 = vpop.xlane.xlu0 %467
      %469 = vadd.xlane.f32.xlu0 %v452
      %v470 = vpop.xlane.xlu0 %469
      %v471 = vrcp.pop 128.0
      %v472 = vmul.f32 %v456, %v471
      %v473 = vmul.f32 %v458, %v471
      %v474 = vmul.f32 %v460, %v471
      %v475 = vmul.f32 %v462, %v471
      %v476 = vmul.f32 %v464, %v471
      %v477 = vmul.f32 %v466, %v471
      %v478 = vmul.f32 %v468, %v471
      %v479 = vmul.f32 %v470, %v471
      %v480 = vsub.f32 %v445, %v472
      %v481 = vsub.f32 %v446, %v473
      %v482 = vsub.f32 %v447, %v474
      %v483 = vsub.f32 %v448, %v475
      %v484 = vsub.f32 %v449, %v476
      %v485 = vsub.f32 %v450, %v477
      %v486 = vsub.f32 %v451, %v478
      %v487 = vsub.f32 %v452, %v479
      %v488 = vmul.f32 %v480, %v480
      %v489 = vmul.f32 %v481, %v481
      %v490 = vmul.f32 %v482, %v482
      %v491 = vmul.f32 %v483, %v483
      %v492 = vmul.f32 %v484, %v484
      %v493 = vmul.f32 %v485, %v485
      %v494 = vmul.f32 %v486, %v486
      %v495 = vmul.f32 %v487, %v487
      %496 = vadd.xlane.f32.xlu0 %v488
      %v497 = vpop.xlane.xlu0 %496
      %498 = vadd.xlane.f32.xlu0 %v489
      %v499 = vpop.xlane.xlu0 %498
      %500 = vadd.xlane.f32.xlu0 %v490
      %v501 = vpop.xlane.xlu0 %500
      %502 = vadd.xlane.f32.xlu0 %v491
      %v503 = vpop.xlane.xlu0 %502
      %504 = vadd.xlane.f32.xlu0 %v492
      %v505 = vpop.xlane.xlu0 %504
      %506 = vadd.xlane.f32.xlu0 %v493
      %v507 = vpop.xlane.xlu0 %506
      %508 = vadd.xlane.f32.xlu0 %v494
      %v509 = vpop.xlane.xlu0 %508
      %510 = vadd.xlane.f32.xlu0 %v495
      %v511 = vpop.xlane.xlu0 %510
      %v512 = vmul.f32 %v497, %v471
      %v513 = vmul.f32 %v499, %v471
      %v514 = vmul.f32 %v501, %v471
      %v515 = vmul.f32 %v503, %v471
      %v516 = vmul.f32 %v505, %v471
      %v517 = vmul.f32 %v507, %v471
      %v518 = vmul.f32 %v509, %v471
      %v519 = vmul.f32 %v511, %v471
      %v520 = vadd.f32 %v512, 1e-06
      %v521 = vadd.f32 %v513, 1e-06
      %v522 = vadd.f32 %v514, 1e-06
      %v523 = vadd.f32 %v515, 1e-06
      %v524 = vadd.f32 %v516, 1e-06
      %v525 = vadd.f32 %v517, 1e-06
      %v526 = vadd.f32 %v518, 1e-06
      %v527 = vadd.f32 %v519, 1e-06
      %v528 = vrsqrt.pop %v520
      %v529 = vrsqrt.pop %v521
      %v530 = vrsqrt.pop %v522
      %v531 = vrsqrt.pop %v523
      %v532 = vrsqrt.pop %v524
      %v533 = vrsqrt.pop %v525
      %v534 = vrsqrt.pop %v526
      %v535 = vrsqrt.pop %v527
      %v536 = vmul.f32 %v480, %v528
      %v537 = vmul.f32 %v481, %v529
      %v538 = vmul.f32 %v482, %v530
      %v539 = vmul.f32 %v483, %v531
      %v540 = vmul.f32 %v484, %v532
      %v541 = vmul.f32 %v485, %v533
      %v542 = vmul.f32 %v486, %v534
      %v543 = vmul.f32 %v487, %v535
      %v545 = vlaneseq
      %v546 = vshrl.u32 %v545, 7
      %v547 = vsub.s32 0, %v546
      %v548 = vrot.slane %v453, %v547
      %v550 = vmul.f32 %v536, %v548
      %v551 = vmul.f32 %v537, %v548
      %v552 = vmul.f32 %v538, %v548
      %v553 = vmul.f32 %v539, %v548
      %v554 = vmul.f32 %v540, %v548
      %v555 = vmul.f32 %v541, %v548
      %v556 = vmul.f32 %v542, %v548
      %v557 = vmul.f32 %v543, %v548
      %v559 = vlaneseq
      %v560 = vshrl.u32 %v559, 7
      %v561 = vsub.s32 0, %v560
      %v562 = vrot.slane %v454, %v561
      %v564 = vadd.f32 %v550, %v562
      %v565 = vadd.f32 %v551, %v562
      %v566 = vadd.f32 %v552, %v562
      %v567 = vadd.f32 %v553, %v562
      %v568 = vadd.f32 %v554, %v562
      %v569 = vadd.f32 %v555, %v562
      %v570 = vadd.f32 %v556, %v562
      %v571 = vadd.f32 %v557, %v562
      %v572 = vpack.c.bf16 %v565, %v564
      %v573 = vpack.c.bf16 %v567, %v566
      %v574 = vpack.c.bf16 %v569, %v568
      %v575 = vpack.c.bf16 %v571, %v570
      %v576 = vld [vmem:[%s3] sm:$0xff]
      %v577 = vld [vmem:[%s3 + $0x8] sm:$0xf]
      %v578 = vld [vmem:[%s3 + $0xc] sm:$0xff]
      %v579 = vld [vmem:[%s3 + $0x14] sm:$0xf]
      %v580 = vld [vmem:[%s3 + $0x18] sm:$0xff]
      %v581 = vld [vmem:[%s3 + $0x20] sm:$0xf]
      %v582 = vld [vmem:[%s3 + $0x24] sm:$0xff]
      %v583 = vld [vmem:[%s3 + $0x2c] sm:$0xf]
      %v584 = vld [vmem:[%s3 + $0x30] sm:$0xff]
      %v585 = vld [vmem:[%s3 + $0x38] sm:$0xf]
      %v586 = vld [vmem:[%s3 + $0x3c] sm:$0xff]
      %v587 = vld [vmem:[%s3 + $0x44] sm:$0xf]
      %v588 = vld [vmem:[%s3 + $0x48] sm:$0xff]
      %v589 = vld [vmem:[%s3 + $0x50] sm:$0xf]
      %v590 = vld [vmem:[%s3 + $0x54] sm:$0xff]
      %v591 = vld [vmem:[%s3 + $0x5c] sm:$0xf]
      %v592 = vld [vmem:[%s3 + $0x60] sm:$0xff]
      %v593 = vld [vmem:[%s3 + $0x68] sm:$0xf]
      %v594 = vld [vmem:[%s3 + $0x6c] sm:$0xff]
      %v595 = vld [vmem:[%s3 + $0x74] sm:$0xf]
      %v596 = vld [vmem:[%s3 + $0x78] sm:$0xff]
      %v597 = vld [vmem:[%s3 + $0x80] sm:$0xf]
      %v598 = vld [vmem:[%s3 + $0x84] sm:$0xff]
      %v599 = vld [vmem:[%s3 + $0x8c] sm:$0xf]
      %v600 = vld [vmem:[%s3 + $0x90] sm:$0xff]
      %v601 = vld [vmem:[%s3 + $0x98] sm:$0xf]
      %v602 = vld [vmem:[%s3 + $0x9c] sm:$0xff]
      %v603 = vld [vmem:[%s3 + $0xa4] sm:$0xf]
      %v604 = vld [vmem:[%s3 + $0xa8] sm:$0xff]
      %v605 = vld [vmem:[%s3 + $0xb0] sm:$0xf]
      %v606 = vld [vmem:[%s3 + $0xb4] sm:$0xff]
      %v607 = vld [vmem:[%s3 + $0xbc] sm:$0xf]
      %v608 = vld [vmem:[%s4] sm:$0x7]
      %v610 = vlaneseq
      %v611 = vshrl.u32 %v610, 7
      %v612 = vsub.s32 0, %v611
      %v613 = vrot.slane %v608, %v612
      %v614 = vlaneseq
      %v615 = vshrl.u32 %v614, 7
      %v616 = vsub.s32 1, %v615
      %v617 = vrot.slane %v608, %v616
      %v618 = vlaneseq
      %v619 = vshrl.u32 %v618, 7
      %v620 = vsub.s32 2, %v619
      %v621 = vrot.slane %v608, %v620
      %v657 = vunpack.c.l.b16 %v576
      %v658 = vunpack.c.h.b16 %v576
      %v659 = vunpack.c.l.b16 %v577
      %v660 = vunpack.c.l.b16 %v578
      %v661 = vunpack.c.h.b16 %v578
      %v662 = vunpack.c.l.b16 %v579
      %v663 = vunpack.c.l.b16 %v580
      %v664 = vunpack.c.h.b16 %v580
      %v665 = vunpack.c.l.b16 %v581
      %v666 = vunpack.c.l.b16 %v582
      %v667 = vunpack.c.h.b16 %v582
      %v668 = vunpack.c.l.b16 %v583
      %v669 = vunpack.c.l.b16 %v584
      %v670 = vunpack.c.h.b16 %v584
      %v671 = vunpack.c.l.b16 %v585
      %v672 = vunpack.c.l.b16 %v586
      %v673 = vunpack.c.h.b16 %v586
      %v674 = vunpack.c.l.b16 %v587
      %v675 = vunpack.c.l.b16 %v588
      %v676 = vunpack.c.h.b16 %v588
      %v677 = vunpack.c.l.b16 %v589
      %v678 = vunpack.c.l.b16 %v590
      %v679 = vunpack.c.h.b16 %v590
      %v680 = vunpack.c.l.b16 %v591
      %v681 = vunpack.c.l.b16 %v592
      %v682 = vunpack.c.h.b16 %v592
      %v683 = vunpack.c.l.b16 %v593
      %v684 = vunpack.c.l.b16 %v594
      %v685 = vunpack.c.h.b16 %v594
      %v686 = vunpack.c.l.b16 %v595
      %v687 = vunpack.c.l.b16 %v596
      %v688 = vunpack.c.h.b16 %v596
      %v689 = vunpack.c.l.b16 %v597
      %v690 = vunpack.c.l.b16 %v598
      %v691 = vunpack.c.h.b16 %v598
      %v692 = vunpack.c.l.b16 %v599
      %v693 = vunpack.c.l.b16 %v600
      %v694 = vunpack.c.h.b16 %v600
      %v695 = vunpack.c.l.b16 %v601
      %v696 = vunpack.c.l.b16 %v602
      %v697 = vunpack.c.h.b16 %v602
      %v698 = vunpack.c.l.b16 %v603
      %v699 = vunpack.c.l.b16 %v604
      %v700 = vunpack.c.h.b16 %v604
      %v701 = vunpack.c.l.b16 %v605
      %v702 = vunpack.c.l.b16 %v606
      %v703 = vunpack.c.h.b16 %v606
      %v704 = vunpack.c.l.b16 %v607
      %v705 = vpack.c.b16 %v660, %v657
      %v706 = vpack.c.b16 %v661, %v658
      %v707 = vpack.c.b16 %v662, %v659
      %v708 = vpack.c.b16 %v666, %v663
      %v709 = vpack.c.b16 %v667, %v664
      %v710 = vpack.c.b16 %v668, %v665
      %v711 = vpack.c.b16 %v672, %v669
      %v712 = vpack.c.b16 %v673, %v670
      %v713 = vpack.c.b16 %v674, %v671
      %v714 = vpack.c.b16 %v678, %v675
      %v715 = vpack.c.b16 %v679, %v676
      %v716 = vpack.c.b16 %v680, %v677
      %v717 = vpack.c.b16 %v684, %v681
      %v718 = vpack.c.b16 %v685, %v682
      %v719 = vpack.c.b16 %v686, %v683
      %v720 = vpack.c.b16 %v690, %v687
      %v721 = vpack.c.b16 %v691, %v688
      %v722 = vpack.c.b16 %v692, %v689
      %v723 = vpack.c.b16 %v696, %v693
      %v724 = vpack.c.b16 %v697, %v694
      %v725 = vpack.c.b16 %v698, %v695
      %v726 = vpack.c.b16 %v702, %v699
      %v727 = vpack.c.b16 %v703, %v700
      %v728 = vpack.c.b16 %v704, %v701
      %753 = vmatprep.subr.bf16.mxu0 %v727
      %754 = vmatpush1.bf16.msra.mxu0 %v726
      %755 = vmatprep.subr.bf16.mxu0 %v724
      %756 = vmatpush1.bf16.msra.mxu0 %v723
      %757 = vmatprep.subr.bf16.mxu0 %v721
      %758 = vmatpush1.bf16.msra.mxu0 %v720
      %759 = vmatprep.subr.bf16.mxu0 %v718
      %760 = vmatpush1.bf16.msra.mxu0 %v717
      %761 = vmatprep.subr.bf16.mxu0 %v715
      %762 = vmatpush1.bf16.msra.mxu0 %v714
      %763 = vmatprep.subr.bf16.mxu0 %v712
      %764 = vmatpush1.bf16.msra.mxu0 %v711
      %765 = vmatprep.subr.bf16.mxu0 %v709
      %766 = vmatpush1.bf16.msra.mxu0 %v708
      %767 = vmatprep.subr.bf16.mxu0 %v706
      %768 = vmatpush1.bf16.msra.mxu0 %v705
      %769 = vmatprep.subr.bf16.mxu0 0
      %770 = vmatpush2.bf16.msra.mxu0 0
      %771 = vmatprep.subr.bf16.mxu0 0
      %772 = vmatpush2.bf16.msra.mxu0 0
      %773 = vmatprep.subr.bf16.mxu0 0
      %774 = vmatpush2.bf16.msra.mxu0 0
      %775 = vmatprep.subr.bf16.mxu0 0
      %776 = vmatpush2.bf16.msra.mxu0 0
      %777 = vmatprep.subr.bf16.mxu0 0
      %778 = vmatpush2.bf16.msra.mxu0 0
      %779 = vmatprep.subr.bf16.mxu0 0
      %780 = vmatpush2.bf16.msra.mxu0 0
      %781 = vmatprep.subr.bf16.mxu0 0
      %782 = vmatpush2.bf16.msra.mxu0 0
      %783 = vmatprep.subr.bf16.mxu0 0
      %784 = vmatpush2.bf16.msra.mxu0 0
      %785 = vmatprep.mubr.bf16.mxu0 0
      %786 = vmatmul.mubr.bf16.gmra.mxu0 %v572
      %v787 = vpop.f32.mrf.mxu0
      %v788 = vadd.f32 %v613, %v787
      %v789 = vpop.f32.mrf.mxu0
      %v790 = vadd.f32 %v617, %v789
      %v791 = vpop.f32.mrf.mxu0
      %v792 = vadd.f32 %v613, %v791
      %v793 = vpop.f32.mrf.mxu0
      %v794 = vadd.f32 %v617, %v793
      %795 = vmatprep.mubr.bf16.mxu0 0
      %796 = vmatmul.mubr.bf16.gmra.mxu0 %v573
      %v797 = vpop.f32.mrf.mxu0
      %v798 = vadd.f32 %v613, %v797
      %v799 = vpop.f32.mrf.mxu0
      %v800 = vadd.f32 %v617, %v799
      %v801 = vpop.f32.mrf.mxu0
      %v802 = vadd.f32 %v613, %v801
      %v803 = vpop.f32.mrf.mxu0
      %v804 = vadd.f32 %v617, %v803
      %805 = vmatprep.mubr.bf16.mxu0 0
      %806 = vmatmul.mubr.bf16.gmra.mxu0 %v574
      %v807 = vpop.f32.mrf.mxu0
      %v808 = vadd.f32 %v613, %v807
      %v809 = vpop.f32.mrf.mxu0
      %v810 = vadd.f32 %v617, %v809
      %v811 = vpop.f32.mrf.mxu0
      %v812 = vadd.f32 %v613, %v811
      %v813 = vpop.f32.mrf.mxu0
      %v814 = vadd.f32 %v617, %v813
      %815 = vmatprep.mubr.bf16.mxu0 0
      %816 = vmatmul.mubr.bf16.gmra.mxu0 %v575
      %v817 = vpop.f32.mrf.mxu0
      %v818 = vadd.f32 %v613, %v817
      %v819 = vpop.f32.mrf.mxu0
      %v820 = vadd.f32 %v617, %v819
      %v821 = vpop.f32.mrf.mxu0
      %v822 = vadd.f32 %v613, %v821
      %v823 = vpop.f32.mrf.mxu0
      %v824 = vadd.f32 %v617, %v823
      %825 = vdwg.mxu0
      %826 = vmatprep.subr.bf16.mxu0 0
      %827 = vmatpush1.bf16.msra.mxu0 %v728
      %828 = vmatprep.subr.bf16.mxu0 0
      %829 = vmatpush1.bf16.msra.mxu0 %v725
      %830 = vmatprep.subr.bf16.mxu0 0
      %831 = vmatpush1.bf16.msra.mxu0 %v722
      %832 = vmatprep.subr.bf16.mxu0 0
      %833 = vmatpush1.bf16.msra.mxu0 %v719
      %834 = vmatprep.subr.bf16.mxu0 0
      %835 = vmatpush1.bf16.msra.mxu0 %v716
      %836 = vmatprep.subr.bf16.mxu0 0
      %837 = vmatpush1.bf16.msra.mxu0 %v713
      %838 = vmatprep.subr.bf16.mxu0 0
      %839 = vmatpush1.bf16.msra.mxu0 %v710
      %840 = vmatprep.subr.bf16.mxu0 0
      %841 = vmatpush1.bf16.msra.mxu0 %v707
      %842 = vmatprep.subr.bf16.mxu0 0
      %843 = vmatpush2.bf16.msra.mxu0 0
      %844 = vmatprep.subr.bf16.mxu0 0
      %845 = vmatpush2.bf16.msra.mxu0 0
      %846 = vmatprep.subr.bf16.mxu0 0
      %847 = vmatpush2.bf16.msra.mxu0 0
      %848 = vmatprep.subr.bf16.mxu0 0
      %849 = vmatpush2.bf16.msra.mxu0 0
      %850 = vmatprep.subr.bf16.mxu0 0
      %851 = vmatpush2.bf16.msra.mxu0 0
      %852 = vmatprep.subr.bf16.mxu0 0
      %853 = vmatpush2.bf16.msra.mxu0 0
      %854 = vmatprep.subr.bf16.mxu0 0
      %855 = vmatpush2.bf16.msra.mxu0 0
      %856 = vmatprep.subr.bf16.mxu0 0
      %857 = vmatpush2.bf16.msra.mxu0 0
      %858 = vmatprep.mubr.bf16.mxu0 0
      %859 = vmatmul.mubr.bf16.gmra.mxu0 %v572
      %v860 = vpop.f32.mrf.mxu0
      %v861 = vadd.f32 %v621, %v860
      %v862 = vpop.f32.mrf.mxu0
      %v863 = vpop.f32.mrf.mxu0
      %v864 = vadd.f32 %v621, %v863
      %v865 = vpop.f32.mrf.mxu0
      %866 = vmatprep.mubr.bf16.mxu0 0
      %867 = vmatmul.mubr.bf16.gmra.mxu0 %v573
      %v868 = vpop.f32.mrf.mxu0
      %v869 = vadd.f32 %v621, %v868
      %v870 = vpop.f32.mrf.mxu0
      %v871 = vpop.f32.mrf.mxu0
      %v872 = vadd.f32 %v621, %v871
      %v873 = vpop.f32.mrf.mxu0
      %874 = vmatprep.mubr.bf16.mxu0 0
      %875 = vmatmul.mubr.bf16.gmra.mxu0 %v574
      %v876 = vpop.f32.mrf.mxu0
      %v877 = vadd.f32 %v621, %v876
      %v878 = vpop.f32.mrf.mxu0
      %v879 = vpop.f32.mrf.mxu0
      %v880 = vadd.f32 %v621, %v879
      %v881 = vpop.f32.mrf.mxu0
      %882 = vmatprep.mubr.bf16.mxu0 0
      %883 = vmatmul.mubr.bf16.gmra.mxu0 %v575
      %v884 = vpop.f32.mrf.mxu0
      %v885 = vadd.f32 %v621, %v884
      %v886 = vpop.f32.mrf.mxu0
      %v887 = vpop.f32.mrf.mxu0
      %v888 = vadd.f32 %v621, %v887
      %v889 = vpop.f32.mrf.mxu0
      %890 = vdwg.mxu0
      %v891 = vpack.c.bf16 %v792, %v788
      %v892 = vpack.c.bf16 %v802, %v798
      %v893 = vpack.c.bf16 %v812, %v808
      %v894 = vpack.c.bf16 %v822, %v818
      %v895 = vpack.c.bf16 %v794, %v790
      %v896 = vpack.c.bf16 %v804, %v800
      %v897 = vpack.c.bf16 %v814, %v810
      %v898 = vpack.c.bf16 %v824, %v820
      %v899 = vpack.c.bf16 %v864, %v861
      %v900 = vpack.c.bf16 %v872, %v869
      %v901 = vpack.c.bf16 %v880, %v877
      %v902 = vpack.c.bf16 %v888, %v885
      %v903 = vld [vmem:[%s5] sm:$0xf]
      %v904 = vld [vmem:[%s5 + $0x4] sm:$0xf]
      %v905 = vld [vmem:[%s5 + $0x8] sm:$0xf]
      %v906 = vld [vmem:[%s5 + $0xc] sm:$0xf]
      %v907 = vld [vmem:[%s5 + $0x10] sm:$0xf]
      %v908 = vld [vmem:[%s5 + $0x14] sm:$0xf]
      %v909 = vld [vmem:[%s5 + $0x18] sm:$0xf]
      %v910 = vld [vmem:[%s5 + $0x1c] sm:$0xf]
      %v911 = vld [vmem:[%s5 + $0x20] sm:$0xf]
      %v912 = vld [vmem:[%s5 + $0x24] sm:$0xf]
      %v913 = vld [vmem:[%s5 + $0x28] sm:$0xf]
      %v914 = vld [vmem:[%s5 + $0x2c] sm:$0xf]
      %v915 = vld [vmem:[%s5 + $0x30] sm:$0xf]
      %v916 = vld [vmem:[%s5 + $0x34] sm:$0xf]
      %v917 = vld [vmem:[%s5 + $0x38] sm:$0xf]
      %v918 = vld [vmem:[%s5 + $0x3c] sm:$0xf]
      %v923 = vunpack.c.l.b16 %v891
      %v924 = vunpack.c.h.b16 %v891
      %v925 = vunpack.c.l.b16 %v892
      %v926 = vunpack.c.h.b16 %v892
      %v927 = vunpack.c.l.b16 %v893
      %v928 = vunpack.c.h.b16 %v893
      %v929 = vunpack.c.l.b16 %v894
      %v930 = vunpack.c.h.b16 %v894
      %v931 = vpack.c.b16 %v923, %v923
      %v932 = vpack.c.b16 %v924, %v924
      %v933 = vpack.c.b16 %v925, %v925
      %v934 = vpack.c.b16 %v926, %v926
      %v935 = vpack.c.b16 %v927, %v927
      %v936 = vpack.c.b16 %v928, %v928
      %v937 = vpack.c.b16 %v929, %v929
      %v938 = vpack.c.b16 %v930, %v930
      %v943 = vunpack.c.l.b16 %v895
      %v944 = vunpack.c.h.b16 %v895
      %v945 = vunpack.c.l.b16 %v896
      %v946 = vunpack.c.h.b16 %v896
      %v947 = vunpack.c.l.b16 %v897
      %v948 = vunpack.c.h.b16 %v897
      %v949 = vunpack.c.l.b16 %v898
      %v950 = vunpack.c.h.b16 %v898
      %v951 = vpack.c.b16 %v943, %v943
      %v952 = vpack.c.b16 %v944, %v944
      %v953 = vpack.c.b16 %v945, %v945
      %v954 = vpack.c.b16 %v946, %v946
      %v955 = vpack.c.b16 %v947, %v947
      %v956 = vpack.c.b16 %v948, %v948
      %v957 = vpack.c.b16 %v949, %v949
      %v958 = vpack.c.b16 %v950, %v950
      %v963 = vunpack.c.l.b16 %v899
      %v964 = vunpack.c.h.b16 %v899
      %v965 = vunpack.c.l.b16 %v900
      %v966 = vunpack.c.h.b16 %v900
      %v967 = vunpack.c.l.b16 %v901
      %v968 = vunpack.c.h.b16 %v901
      %v969 = vunpack.c.l.b16 %v902
      %v970 = vunpack.c.h.b16 %v902
      %v971 = vpack.c.b16 %v963, %v963
      %v972 = vpack.c.b16 %v964, %v964
      %v973 = vpack.c.b16 %v965, %v965
      %v974 = vpack.c.b16 %v966, %v966
      %v975 = vpack.c.b16 %v967, %v967
      %v976 = vpack.c.b16 %v968, %v968
      %v977 = vpack.c.b16 %v969, %v969
      %v978 = vpack.c.b16 %v970, %v970
      %vm979 = vcmask 261120
      %v981 = vsel %vm979, %v931, 0
      %v984 = vsel %vm979, %v951, 0
      %986 = vmatprep.subr.bf16.mxu0 0
      %987 = vmatpush1.bf16.xpose.msra.mxu0 0
      %988 = vmatprep.subr.bf16.mxu0 0
      %989 = vmatpush1.bf16.xpose.msra.mxu0 0
      %990 = vmatprep.subr.bf16.mxu0 0
      %991 = vmatpush1.bf16.xpose.msra.mxu0 0
      %992 = vmatprep.subr.bf16.mxu0 0
      %993 = vmatpush1.bf16.xpose.msra.mxu0 0
      %994 = vmatprep.subr.bf16.mxu0 0
      %995 = vmatpush1.bf16.xpose.msra.mxu0 0
      %996 = vmatprep.subr.bf16.mxu0 0
      %997 = vmatpush1.bf16.xpose.msra.mxu0 0
      %998 = vmatprep.subr.bf16.mxu0 0
      %999 = vmatpush1.bf16.xpose.msra.mxu0 0
      %1000 = vmatprep.subr.bf16.mxu0 0
      %1001 = vmatpush1.bf16.xpose.msra.mxu0 %v984
      %1002 = vmatprep.subr.bf16.mxu0 0
      %1003 = vmatpush2.bf16.xpose.msra.mxu0 0
      %1004 = vmatprep.subr.bf16.mxu0 0
      %1005 = vmatpush2.bf16.xpose.msra.mxu0 0
      %1006 = vmatprep.subr.bf16.mxu0 0
      %1007 = vmatpush2.bf16.xpose.msra.mxu0 0
      %1008 = vmatprep.subr.bf16.mxu0 0
      %1009 = vmatpush2.bf16.xpose.msra.mxu0 0
      %1010 = vmatprep.subr.bf16.mxu0 0
      %1011 = vmatpush2.bf16.xpose.msra.mxu0 0
      %1012 = vmatprep.subr.bf16.mxu0 0
      %1013 = vmatpush2.bf16.xpose.msra.mxu0 0
      %1014 = vmatprep.subr.bf16.mxu0 0
      %1015 = vmatpush2.bf16.xpose.msra.mxu0 0
      %1016 = vmatprep.subr.bf16.mxu0 0
      %1017 = vmatpush2.bf16.xpose.msra.mxu0 0
      %1018 = vmatprep.mubr.bf16.mxu0 0
      %1019 = vmatmul.mubr.bf16.gmra.mxu0 %v981
      %v1020 = vpop.f32.mrf.mxu0
      %v1021 = vadd.f32 0.0, %v1020
      %v1022 = vpop.f32.mrf.mxu0
      %v1023 = vpop.f32.mrf.mxu0
      %v1024 = vpop.f32.mrf.mxu0
      %1025 = vdwg.mxu0
      %v1027 = vsel %vm979, %v932, 0
      %v1030 = vsel %vm979, %v952, 0
      %1032 = vmatprep.subr.bf16.mxu0 0
      %1033 = vmatpush1.bf16.xpose.msra.mxu0 0
      %1034 = vmatprep.subr.bf16.mxu0 0
      %1035 = vmatpush1.bf16.xpose.msra.mxu0 0
      %1036 = vmatprep.subr.bf16.mxu0 0
      %1037 = vmatpush1.bf16.xpose.msra.mxu0 0
      %1038 = vmatprep.subr.bf16.mxu0 0
      %1039 = vmatpush1.bf16.xpose.msra.mxu0 0
      %1040 = vmatprep.subr.bf16.mxu0 0
      %1041 = vmatpush1.bf16.xpose.msra.mxu0 0
      %1042 = vmatprep.subr.bf16.mxu0 0
      %1043 = vmatpush1.bf16.xpose.msra.mxu0 0
      %1044 = vmatprep.subr.bf16.mxu0 0
      %1045 = vmatpush1.bf16.xpose.msra.mxu0 0
      %1046 = vmatprep.subr.bf16.mxu0 0
      %1047 = vmatpush1.bf16.xpose.msra.mxu0 %v1030
      %1048 = vmatprep.subr.bf16.mxu0 0
      %1049 = vmatpush2.bf16.xpose.msra.mxu0 0
      %1050 = vmatprep.subr.bf16.mxu0 0
      %1051 = vmatpush2.bf16.xpose.msra.mxu0 0
      %1052 = vmatprep.subr.bf16.mxu0 0
      %1053 = vmatpush2.bf16.xpose.msra.mxu0 0
      %1054 = vmatprep.subr.bf16.mxu0 0
      %1055 = vmatpush2.bf16.xpose.msra.mxu0 0
      %1056 = vmatprep.subr.bf16.mxu0 0
      %1057 = vmatpush2.bf16.xpose.msra.mxu0 0
      %1058 = vmatprep.subr.bf16.mxu0 0
      %1059 = vmatpush2.bf16.xpose.msra.mxu0 0
      %1060 = vmatprep.subr.bf16.mxu0 0
      %1061 = vmatpush2.bf16.xpose.msra.mxu0 0
      %1062 = vmatprep.subr.bf16.mxu0 0
      %1063 = vmatpush2.bf16.xpose.msra.mxu0 0
      %1064 = vmatprep.mubr.bf16.mxu0 0
      %1065 = vmatmul.mubr.bf16.gmra.mxu0 %v1027
      %v1066 = vpop.f32.mrf.mxu0
      %v1067 = vadd.f32 0.0, %v1066
      %v1068 = vpop.f32.mrf.mxu0
      %v1069 = vpop.f32.mrf.mxu0
      %v1070 = vpop.f32.mrf.mxu0
      %1071 = vdwg.mxu0
      %v1073 = vsel %vm979, %v933, 0
      %v1076 = vsel %vm979, %v953, 0
      %1078 = vmatprep.subr.bf16.mxu0 0
      %1079 = vmatpush1.bf16.xpose.msra.mxu0 0
      %1080 = vmatprep.subr.bf16.mxu0 0
      %1081 = vmatpush1.bf16.xpose.msra.mxu0 0
      %1082 = vmatprep.subr.bf16.mxu0 0
      %1083 = vmatpush1.bf16.xpose.msra.mxu0 0
      %1084 = vmatprep.subr.bf16.mxu0 0
      %1085 = vmatpush1.bf16.xpose.msra.mxu0 0
      %1086 = vmatprep.subr.bf16.mxu0 0
      %1087 = vmatpush1.bf16.xpose.msra.mxu0 0
      %1088 = vmatprep.subr.bf16.mxu0 0
      %1089 = vmatpush1.bf16.xpose.msra.mxu0 0
      %1090 = vmatprep.subr.bf16.mxu0 0
      %1091 = vmatpush1.bf16.xpose.msra.mxu0 0
      %1092 = vmatprep.subr.bf16.mxu0 0
      %1093 = vmatpush1.bf16.xpose.msra.mxu0 %v1076
      %1094 = vmatprep.subr.bf16.mxu0 0
      %1095 = vmatpush2.bf16.xpose.msra.mxu0 0
      %1096 = vmatprep.subr.bf16.mxu0 0
      %1097 = vmatpush2.bf16.xpose.msra.mxu0 0
      %1098 = vmatprep.subr.bf16.mxu0 0
      %1099 = vmatpush2.bf16.xpose.msra.mxu0 0
      %1100 = vmatprep.subr.bf16.mxu0 0
      %1101 = vmatpush2.bf16.xpose.msra.mxu0 0
      %1102 = vmatprep.subr.bf16.mxu0 0
      %1103 = vmatpush2.bf16.xpose.msra.mxu0 0
      %1104 = vmatprep.subr.bf16.mxu0 0
      %1105 = vmatpush2.bf16.xpose.msra.mxu0 0
      %1106 = vmatprep.subr.bf16.mxu0 0
      %1107 = vmatpush2.bf16.xpose.msra.mxu0 0
      %1108 = vmatprep.subr.bf16.mxu0 0
      %1109 = vmatpush2.bf16.xpose.msra.mxu0 0
      %1110 = vmatprep.mubr.bf16.mxu0 0
      %1111 = vmatmul.mubr.bf16.gmra.mxu0 %v1073
      %v1112 = vpop.f32.mrf.mxu0
      %v1113 = vadd.f32 0.0, %v1112
      %v1114 = vpop.f32.mrf.mxu0
      %v1115 = vpop.f32.mrf.mxu0
      %v1116 = vpop.f32.mrf.mxu0
      %1117 = vdwg.mxu0
      %v1119 = vsel %vm979, %v934, 0
      %v1122 = vsel %vm979, %v954, 0
      %1124 = vmatprep.subr.bf16.mxu0 0
      %1125 = vmatpush1.bf16.xpose.msra.mxu0 0
      %1126 = vmatprep.subr.bf16.mxu0 0
      %1127 = vmatpush1.bf16.xpose.msra.mxu0 0
      %1128 = vmatprep.subr.bf16.mxu0 0
      %1129 = vmatpush1.bf16.xpose.msra.mxu0 0
      %1130 = vmatprep.subr.bf16.mxu0 0
      %1131 = vmatpush1.bf16.xpose.msra.mxu0 0
      %1132 = vmatprep.subr.bf16.mxu0 0
      %1133 = vmatpush1.bf16.xpose.msra.mxu0 0
      %1134 = vmatprep.subr.bf16.mxu0 0
      %1135 = vmatpush1.bf16.xpose.msra.mxu0 0
      %1136 = vmatprep.subr.bf16.mxu0 0
      %1137 = vmatpush1.bf16.xpose.msra.mxu0 0
      %1138 = vmatprep.subr.bf16.mxu0 0
      %1139 = vmatpush1.bf16.xpose.msra.mxu0 %v1122
      %1140 = vmatprep.subr.bf16.mxu0 0
      %1141 = vmatpush2.bf16.xpose.msra.mxu0 0
      %1142 = vmatprep.subr.bf16.mxu0 0
      %1143 = vmatpush2.bf16.xpose.msra.mxu0 0
      %1144 = vmatprep.subr.bf16.mxu0 0
      %1145 = vmatpush2.bf16.xpose.msra.mxu0 0
      %1146 = vmatprep.subr.bf16.mxu0 0
      %1147 = vmatpush2.bf16.xpose.msra.mxu0 0
      %1148 = vmatprep.subr.bf16.mxu0 0
      %1149 = vmatpush2.bf16.xpose.msra.mxu0 0
      %1150 = vmatprep.subr.bf16.mxu0 0
      %1151 = vmatpush2.bf16.xpose.msra.mxu0 0
      %1152 = vmatprep.subr.bf16.mxu0 0
      %1153 = vmatpush2.bf16.xpose.msra.mxu0 0
      %1154 = vmatprep.subr.bf16.mxu0 0
      %1155 = vmatpush2.bf16.xpose.msra.mxu0 0
      %1156 = vmatprep.mubr.bf16.mxu0 0
      %1157 = vmatmul.mubr.bf16.gmra.mxu0 %v1119
      %v1158 = vpop.f32.mrf.mxu0
      %v1159 = vadd.f32 0.0, %v1158
      %v1160 = vpop.f32.mrf.mxu0
      %v1161 = vpop.f32.mrf.mxu0
      %v1162 = vpop.f32.mrf.mxu0
      %1163 = vdwg.mxu0
      %v1165 = vsel %vm979, %v935, 0
      %v1168 = vsel %vm979, %v955, 0
      %1170 = vmatprep.subr.bf16.mxu0 0
      %1171 = vmatpush1.bf16.xpose.msra.mxu0 0
      %1172 = vmatprep.subr.bf16.mxu0 0
      %1173 = vmatpush1.bf16.xpose.msra.mxu0 0
      %1174 = vmatprep.subr.bf16.mxu0 0
      %1175 = vmatpush1.bf16.xpose.msra.mxu0 0
      %1176 = vmatprep.subr.bf16.mxu0 0
      %1177 = vmatpush1.bf16.xpose.msra.mxu0 0
      %1178 = vmatprep.subr.bf16.mxu0 0
      %1179 = vmatpush1.bf16.xpose.msra.mxu0 0
      %1180 = vmatprep.subr.bf16.mxu0 0
      %1181 = vmatpush1.bf16.xpose.msra.mxu0 0
      %1182 = vmatprep.subr.bf16.mxu0 0
      %1183 = vmatpush1.bf16.xpose.msra.mxu0 0
      %1184 = vmatprep.subr.bf16.mxu0 0
      %1185 = vmatpush1.bf16.xpose.msra.mxu0 %v1168
      %1186 = vmatprep.subr.bf16.mxu0 0
      %1187 = vmatpush2.bf16.xpose.msra.mxu0 0
      %1188 = vmatprep.subr.bf16.mxu0 0
      %1189 = vmatpush2.bf16.xpose.msra.mxu0 0
      %1190 = vmatprep.subr.bf16.mxu0 0
      %1191 = vmatpush2.bf16.xpose.msra.mxu0 0
      %1192 = vmatprep.subr.bf16.mxu0 0
      %1193 = vmatpush2.bf16.xpose.msra.mxu0 0
      %1194 = vmatprep.subr.bf16.mxu0 0
      %1195 = vmatpush2.bf16.xpose.msra.mxu0 0
      %1196 = vmatprep.subr.bf16.mxu0 0
      %1197 = vmatpush2.bf16.xpose.msra.mxu0 0
      %1198 = vmatprep.subr.bf16.mxu0 0
      %1199 = vmatpush2.bf16.xpose.msra.mxu0 0
      %1200 = vmatprep.subr.bf16.mxu0 0
      %1201 = vmatpush2.bf16.xpose.msra.mxu0 0
      %1202 = vmatprep.mubr.bf16.mxu0 0
      %1203 = vmatmul.mubr.bf16.gmra.mxu0 %v1165
      %v1204 = vpop.f32.mrf.mxu0
      %v1205 = vadd.f32 0.0, %v1204
      %v1206 = vpop.f32.mrf.mxu0
      %v1207 = vpop.f32.mrf.mxu0
      %v1208 = vpop.f32.mrf.mxu0
      %1209 = vdwg.mxu0
      %v1211 = vsel %vm979, %v936, 0
      %v1214 = vsel %vm979, %v956, 0
      %1216 = vmatprep.subr.bf16.mxu0 0
      %1217 = vmatpush1.bf16.xpose.msra.mxu0 0
      %1218 = vmatprep.subr.bf16.mxu0 0
      %1219 = vmatpush1.bf16.xpose.msra.mxu0 0
      %1220 = vmatprep.subr.bf16.mxu0 0
      %1221 = vmatpush1.bf16.xpose.msra.mxu0 0
      %1222 = vmatprep.subr.bf16.mxu0 0
      %1223 = vmatpush1.bf16.xpose.msra.mxu0 0
      %1224 = vmatprep.subr.bf16.mxu0 0
      %1225 = vmatpush1.bf16.xpose.msra.mxu0 0
      %1226 = vmatprep.subr.bf16.mxu0 0
      %1227 = vmatpush1.bf16.xpose.msra.mxu0 0
      %1228 = vmatprep.subr.bf16.mxu0 0
      %1229 = vmatpush1.bf16.xpose.msra.mxu0 0
      %1230 = vmatprep.subr.bf16.mxu0 0
      %1231 = vmatpush1.bf16.xpose.msra.mxu0 %v1214
      %1232 = vmatprep.subr.bf16.mxu0 0
      %1233 = vmatpush2.bf16.xpose.msra.mxu0 0
      %1234 = vmatprep.subr.bf16.mxu0 0
      %1235 = vmatpush2.bf16.xpose.msra.mxu0 0
      %1236 = vmatprep.subr.bf16.mxu0 0
      %1237 = vmatpush2.bf16.xpose.msra.mxu0 0
      %1238 = vmatprep.subr.bf16.mxu0 0
      %1239 = vmatpush2.bf16.xpose.msra.mxu0 0
      %1240 = vmatprep.subr.bf16.mxu0 0
      %1241 = vmatpush2.bf16.xpose.msra.mxu0 0
      %1242 = vmatprep.subr.bf16.mxu0 0
      %1243 = vmatpush2.bf16.xpose.msra.mxu0 0
      %1244 = vmatprep.subr.bf16.mxu0 0
      %1245 = vmatpush2.bf16.xpose.msra.mxu0 0
      %1246 = vmatprep.subr.bf16.mxu0 0
      %1247 = vmatpush2.bf16.xpose.msra.mxu0 0
      %1248 = vmatprep.mubr.bf16.mxu0 0
      %1249 = vmatmul.mubr.bf16.gmra.mxu0 %v1211
      %v1250 = vpop.f32.mrf.mxu0
      %v1251 = vadd.f32 0.0, %v1250
      %v1252 = vpop.f32.mrf.mxu0
      %v1253 = vpop.f32.mrf.mxu0
      %v1254 = vpop.f32.mrf.mxu0
      %1255 = vdwg.mxu0
      %v1257 = vsel %vm979, %v937, 0
      %v1260 = vsel %vm979, %v957, 0
      %1262 = vmatprep.subr.bf16.mxu0 0
      %1263 = vmatpush1.bf16.xpose.msra.mxu0 0
      %1264 = vmatprep.subr.bf16.mxu0 0
      %1265 = vmatpush1.bf16.xpose.msra.mxu0 0
      %1266 = vmatprep.subr.bf16.mxu0 0
      %1267 = vmatpush1.bf16.xpose.msra.mxu0 0
      %1268 = vmatprep.subr.bf16.mxu0 0
      %1269 = vmatpush1.bf16.xpose.msra.mxu0 0
      %1270 = vmatprep.subr.bf16.mxu0 0
      %1271 = vmatpush1.bf16.xpose.msra.mxu0 0
      %1272 = vmatprep.subr.bf16.mxu0 0
      %1273 = vmatpush1.bf16.xpose.msra.mxu0 0
      %1274 = vmatprep.subr.bf16.mxu0 0
      %1275 = vmatpush1.bf16.xpose.msra.mxu0 0
      %1276 = vmatprep.subr.bf16.mxu0 0
      %1277 = vmatpush1.bf16.xpose.msra.mxu0 %v1260
      %1278 = vmatprep.subr.bf16.mxu0 0
      %1279 = vmatpush2.bf16.xpose.msra.mxu0 0
      %1280 = vmatprep.subr.bf16.mxu0 0
      %1281 = vmatpush2.bf16.xpose.msra.mxu0 0
      %1282 = vmatprep.subr.bf16.mxu0 0
      %1283 = vmatpush2.bf16.xpose.msra.mxu0 0
      %1284 = vmatprep.subr.bf16.mxu0 0
      %1285 = vmatpush2.bf16.xpose.msra.mxu0 0
      %1286 = vmatprep.subr.bf16.mxu0 0
      %1287 = vmatpush2.bf16.xpose.msra.mxu0 0
      %1288 = vmatprep.subr.bf16.mxu0 0
      %1289 = vmatpush2.bf16.xpose.msra.mxu0 0
      %1290 = vmatprep.subr.bf16.mxu0 0
      %1291 = vmatpush2.bf16.xpose.msra.mxu0 0
      %1292 = vmatprep.subr.bf16.mxu0 0
      %1293 = vmatpush2.bf16.xpose.msra.mxu0 0
      %1294 = vmatprep.mubr.bf16.mxu0 0
      %1295 = vmatmul.mubr.bf16.gmra.mxu0 %v1257
      %v1296 = vpop.f32.mrf.mxu0
      %v1297 = vadd.f32 0.0, %v1296
      %v1298 = vpop.f32.mrf.mxu0
      %v1299 = vpop.f32.mrf.mxu0
      %v1300 = vpop.f32.mrf.mxu0
      %1301 = vdwg.mxu0
      %v1303 = vsel %vm979, %v938, 0
      %v1306 = vsel %vm979, %v958, 0
      %1308 = vmatprep.subr.bf16.mxu0 0
      %1309 = vmatpush1.bf16.xpose.msra.mxu0 0
      %1310 = vmatprep.subr.bf16.mxu0 0
      %1311 = vmatpush1.bf16.xpose.msra.mxu0 0
      %1312 = vmatprep.subr.bf16.mxu0 0
      %1313 = vmatpush1.bf16.xpose.msra.mxu0 0
      %1314 = vmatprep.subr.bf16.mxu0 0
      %1315 = vmatpush1.bf16.xpose.msra.mxu0 0
      %1316 = vmatprep.subr.bf16.mxu0 0
      %1317 = vmatpush1.bf16.xpose.msra.mxu0 0
      %1318 = vmatprep.subr.bf16.mxu0 0
      %1319 = vmatpush1.bf16.xpose.msra.mxu0 0
      %1320 = vmatprep.subr.bf16.mxu0 0
      %1321 = vmatpush1.bf16.xpose.msra.mxu0 0
      %1322 = vmatprep.subr.bf16.mxu0 0
      %1323 = vmatpush1.bf16.xpose.msra.mxu0 %v1306
      %1324 = vmatprep.subr.bf16.mxu0 0
      %1325 = vmatpush2.bf16.xpose.msra.mxu0 0
      %1326 = vmatprep.subr.bf16.mxu0 0
      %1327 = vmatpush2.bf16.xpose.msra.mxu0 0
      %1328 = vmatprep.subr.bf16.mxu0 0
      %1329 = vmatpush2.bf16.xpose.msra.mxu0 0
      %1330 = vmatprep.subr.bf16.mxu0 0
      %1331 = vmatpush2.bf16.xpose.msra.mxu0 0
      %1332 = vmatprep.subr.bf16.mxu0 0
      %1333 = vmatpush2.bf16.xpose.msra.mxu0 0
      %1334 = vmatprep.subr.bf16.mxu0 0
      %1335 = vmatpush2.bf16.xpose.msra.mxu0 0
      %1336 = vmatprep.subr.bf16.mxu0 0
      %1337 = vmatpush2.bf16.xpose.msra.mxu0 0
      %1338 = vmatprep.subr.bf16.mxu0 0
      %1339 = vmatpush2.bf16.xpose.msra.mxu0 0
      %1340 = vmatprep.mubr.bf16.mxu0 0
      %1341 = vmatmul.mubr.bf16.gmra.mxu0 %v1303
      %v1342 = vpop.f32.mrf.mxu0
      %v1343 = vadd.f32 0.0, %v1342
      %v1344 = vpop.f32.mrf.mxu0
      %v1345 = vpop.f32.mrf.mxu0
      %v1346 = vpop.f32.mrf.mxu0
      %1347 = vdwg.mxu0
      %v1348 = vlaneseq
      %v1349 = vand.u32 %v1348, 127
      %vm1350 = vcmp.lt.s32.totalorder %v1349, 5
      %v1351 = vsel %vm1350, %v1021, -1e+30
      %v1352 = vsel %vm1350, %v1067, -1e+30
      %v1353 = vsel %vm1350, %v1113, -1e+30
      %v1354 = vsel %vm1350, %v1159, -1e+30
      %v1355 = vsel %vm1350, %v1205, -1e+30
      %v1356 = vsel %vm1350, %v1251, -1e+30
      %v1357 = vsel %vm1350, %v1297, -1e+30
      %v1358 = vsel %vm1350, %v1343, -1e+30
      %vm1359 = vcmask 64512
      %v1360 = vsel %vm1359, %v1351, -inf
      %1361 = vmax.xlane.f32.xlu0 %v1360
      %v1362 = vpop.xlane.xlu0 %1361
      %v1363 = vsel %vm1359, %v1352, -inf
      %1364 = vmax.xlane.f32.xlu0 %v1363
      %v1365 = vpop.xlane.xlu0 %1364
      %v1366 = vsel %vm1359, %v1353, -inf
      %1367 = vmax.xlane.f32.xlu0 %v1366
      %v1368 = vpop.xlane.xlu0 %1367
      %v1369 = vsel %vm1359, %v1354, -inf
      %1370 = vmax.xlane.f32.xlu0 %v1369
      %v1371 = vpop.xlane.xlu0 %1370
      %v1372 = vsel %vm1359, %v1355, -inf
      %1373 = vmax.xlane.f32.xlu0 %v1372
      %v1374 = vpop.xlane.xlu0 %1373
      %v1375 = vsel %vm1359, %v1356, -inf
      %1376 = vmax.xlane.f32.xlu0 %v1375
      %v1377 = vpop.xlane.xlu0 %1376
      %v1378 = vsel %vm1359, %v1357, -inf
      %1379 = vmax.xlane.f32.xlu0 %v1378
      %v1380 = vpop.xlane.xlu0 %1379
      %v1381 = vsel %vm1359, %v1358, -inf
      %1382 = vmax.xlane.f32.xlu0 %v1381
      %v1383 = vpop.xlane.xlu0 %1382
      %v1384 = vsub.f32 %v1351, %v1362
      %v1385 = vsub.f32 %v1352, %v1365
      %v1386 = vsub.f32 %v1353, %v1368
      %v1387 = vsub.f32 %v1354, %v1371
      %v1388 = vsub.f32 %v1355, %v1374
      %v1389 = vsub.f32 %v1356, %v1377
      %v1390 = vsub.f32 %v1357, %v1380
      %v1391 = vsub.f32 %v1358, %v1383
      %v1392 = vmul.f32 %v1384, 1.442695
      %v1393 = vpow.pop %v1392
      %v1394 = vmul.f32 %v1385, 1.442695
      %v1395 = vpow.pop %v1394
      %v1396 = vmul.f32 %v1386, 1.442695
      %v1397 = vpow.pop %v1396
      %v1398 = vmul.f32 %v1387, 1.442695
      %v1399 = vpow.pop %v1398
      %v1400 = vmul.f32 %v1388, 1.442695
      %v1401 = vpow.pop %v1400
      %v1402 = vmul.f32 %v1389, 1.442695
      %v1403 = vpow.pop %v1402
      %v1404 = vmul.f32 %v1390, 1.442695
      %v1405 = vpow.pop %v1404
      %v1406 = vmul.f32 %v1391, 1.442695
      %v1407 = vpow.pop %v1406
      %v1408 = vsel %vm1359, %v1393, 0.0
      %1409 = vadd.xlane.f32.xlu0 %v1408
      %v1410 = vpop.xlane.xlu0 %1409
      %v1411 = vsel %vm1359, %v1395, 0.0
      %1412 = vadd.xlane.f32.xlu0 %v1411
      %v1413 = vpop.xlane.xlu0 %1412
      %v1414 = vsel %vm1359, %v1397, 0.0
      %1415 = vadd.xlane.f32.xlu0 %v1414
      %v1416 = vpop.xlane.xlu0 %1415
      %v1417 = vsel %vm1359, %v1399, 0.0
      %1418 = vadd.xlane.f32.xlu0 %v1417
      %v1419 = vpop.xlane.xlu0 %1418
      %v1420 = vsel %vm1359, %v1401, 0.0
      %1421 = vadd.xlane.f32.xlu0 %v1420
      %v1422 = vpop.xlane.xlu0 %1421
      %v1423 = vsel %vm1359, %v1403, 0.0
      %1424 = vadd.xlane.f32.xlu0 %v1423
      %v1425 = vpop.xlane.xlu0 %1424
      %v1426 = vsel %vm1359, %v1405, 0.0
      %1427 = vadd.xlane.f32.xlu0 %v1426
      %v1428 = vpop.xlane.xlu0 %1427
      %v1429 = vsel %vm1359, %v1407, 0.0
      %1430 = vadd.xlane.f32.xlu0 %v1429
      %v1431 = vpop.xlane.xlu0 %1430
      %v1432 = vrcp.pop %v1410
      %v1433 = vrcp.pop %v1413
      %v1434 = vrcp.pop %v1416
      %v1435 = vrcp.pop %v1419
      %v1436 = vrcp.pop %v1422
      %v1437 = vrcp.pop %v1425
      %v1438 = vrcp.pop %v1428
      %v1439 = vrcp.pop %v1431
      %v1440 = vmul.f32 %v1393, %v1432
      %v1441 = vmul.f32 %v1395, %v1433
      %v1442 = vmul.f32 %v1397, %v1434
      %v1443 = vmul.f32 %v1399, %v1435
      %v1444 = vmul.f32 %v1401, %v1436
      %v1445 = vmul.f32 %v1403, %v1437
      %v1446 = vmul.f32 %v1405, %v1438
      %v1447 = vmul.f32 %v1407, %v1439
      %v1448 = vpack.c.bf16 %v1440, %v1440
      %v1449 = vpack.c.bf16 %v1441, %v1441
      %v1450 = vpack.c.bf16 %v1442, %v1442
      %v1451 = vpack.c.bf16 %v1443, %v1443
      %v1452 = vpack.c.bf16 %v1444, %v1444
      %v1453 = vpack.c.bf16 %v1445, %v1445
      %v1454 = vpack.c.bf16 %v1446, %v1446
      %v1455 = vpack.c.bf16 %v1447, %v1447
      %v1457 = vsel %vm1359, %v1448, 0
      %vm1459 = vcmask 1043456
      %v1461 = vsel %vm1459, %v971, 0
      %1463 = vmatprep.subr.bf16.mxu0 0
      %1464 = vmatpush1.bf16.msra.mxu0 0
      %1465 = vmatprep.subr.bf16.mxu0 0
      %1466 = vmatpush1.bf16.msra.mxu0 0
      %1467 = vmatprep.subr.bf16.mxu0 0
      %1468 = vmatpush1.bf16.msra.mxu0 0
      %1469 = vmatprep.subr.bf16.mxu0 0
      %1470 = vmatpush1.bf16.msra.mxu0 0
      %1471 = vmatprep.subr.bf16.mxu0 0
      %1472 = vmatpush1.bf16.msra.mxu0 0
      %1473 = vmatprep.subr.bf16.mxu0 0
      %1474 = vmatpush1.bf16.msra.mxu0 0
      %1475 = vmatprep.subr.bf16.mxu0 0
      %1476 = vmatpush1.bf16.msra.mxu0 0
      %1477 = vmatprep.subr.bf16.mxu0 0
      %1478 = vmatpush1.bf16.msra.mxu0 %v1461
      %1479 = vmatprep.subr.bf16.mxu0 0
      %1480 = vmatpush2.bf16.msra.mxu0 0
      %1481 = vmatprep.subr.bf16.mxu0 0
      %1482 = vmatpush2.bf16.msra.mxu0 0
      %1483 = vmatprep.subr.bf16.mxu0 0
      %1484 = vmatpush2.bf16.msra.mxu0 0
      %1485 = vmatprep.subr.bf16.mxu0 0
      %1486 = vmatpush2.bf16.msra.mxu0 0
      %1487 = vmatprep.subr.bf16.mxu0 0
      %1488 = vmatpush2.bf16.msra.mxu0 0
      %1489 = vmatprep.subr.bf16.mxu0 0
      %1490 = vmatpush2.bf16.msra.mxu0 0
      %1491 = vmatprep.subr.bf16.mxu0 0
      %1492 = vmatpush2.bf16.msra.mxu0 0
      %1493 = vmatprep.subr.bf16.mxu0 0
      %1494 = vmatpush2.bf16.msra.mxu0 0
      %1495 = vmatprep.mubr.bf16.mxu0 0
      %1496 = vmatmul.mubr.bf16.gmra.mxu0 %v1457
      %v1497 = vpop.f32.mrf.mxu0
      %v1498 = vadd.f32 0.0, %v1497
      %v1499 = vpop.f32.mrf.mxu0
      %v1500 = vpop.f32.mrf.mxu0
      %v1501 = vpop.f32.mrf.mxu0
      %1502 = vdwg.mxu0
      %v1504 = vsel %vm1359, %v1449, 0
      %v1507 = vsel %vm1459, %v972, 0
      %1509 = vmatprep.subr.bf16.mxu0 0
      %1510 = vmatpush1.bf16.msra.mxu0 0
      %1511 = vmatprep.subr.bf16.mxu0 0
      %1512 = vmatpush1.bf16.msra.mxu0 0
      %1513 = vmatprep.subr.bf16.mxu0 0
      %1514 = vmatpush1.bf16.msra.mxu0 0
      %1515 = vmatprep.subr.bf16.mxu0 0
      %1516 = vmatpush1.bf16.msra.mxu0 0
      %1517 = vmatprep.subr.bf16.mxu0 0
      %1518 = vmatpush1.bf16.msra.mxu0 0
      %1519 = vmatprep.subr.bf16.mxu0 0
      %1520 = vmatpush1.bf16.msra.mxu0 0
      %1521 = vmatprep.subr.bf16.mxu0 0
      %1522 = vmatpush1.bf16.msra.mxu0 0
      %1523 = vmatprep.subr.bf16.mxu0 0
      %1524 = vmatpush1.bf16.msra.mxu0 %v1507
      %1525 = vmatprep.subr.bf16.mxu0 0
      %1526 = vmatpush2.bf16.msra.mxu0 0
      %1527 = vmatprep.subr.bf16.mxu0 0
      %1528 = vmatpush2.bf16.msra.mxu0 0
      %1529 = vmatprep.subr.bf16.mxu0 0
      %1530 = vmatpush2.bf16.msra.mxu0 0
      %1531 = vmatprep.subr.bf16.mxu0 0
      %1532 = vmatpush2.bf16.msra.mxu0 0
      %1533 = vmatprep.subr.bf16.mxu0 0
      %1534 = vmatpush2.bf16.msra.mxu0 0
      %1535 = vmatprep.subr.bf16.mxu0 0
      %1536 = vmatpush2.bf16.msra.mxu0 0
      %1537 = vmatprep.subr.bf16.mxu0 0
      %1538 = vmatpush2.bf16.msra.mxu0 0
      %1539 = vmatprep.subr.bf16.mxu0 0
      %1540 = vmatpush2.bf16.msra.mxu0 0
      %1541 = vmatprep.mubr.bf16.mxu0 0
      %1542 = vmatmul.mubr.bf16.gmra.mxu0 %v1504
      %v1543 = vpop.f32.mrf.mxu0
      %v1544 = vadd.f32 0.0, %v1543
      %v1545 = vpop.f32.mrf.mxu0
      %v1546 = vpop.f32.mrf.mxu0
      %v1547 = vpop.f32.mrf.mxu0
      %1548 = vdwg.mxu0
      %v1550 = vsel %vm1359, %v1450, 0
      %v1553 = vsel %vm1459, %v973, 0
      %1555 = vmatprep.subr.bf16.mxu0 0
      %1556 = vmatpush1.bf16.msra.mxu0 0
      %1557 = vmatprep.subr.bf16.mxu0 0
      %1558 = vmatpush1.bf16.msra.mxu0 0
      %1559 = vmatprep.subr.bf16.mxu0 0
      %1560 = vmatpush1.bf16.msra.mxu0 0
      %1561 = vmatprep.subr.bf16.mxu0 0
      %1562 = vmatpush1.bf16.msra.mxu0 0
      %1563 = vmatprep.subr.bf16.mxu0 0
      %1564 = vmatpush1.bf16.msra.mxu0 0
      %1565 = vmatprep.subr.bf16.mxu0 0
      %1566 = vmatpush1.bf16.msra.mxu0 0
      %1567 = vmatprep.subr.bf16.mxu0 0
      %1568 = vmatpush1.bf16.msra.mxu0 0
      %1569 = vmatprep.subr.bf16.mxu0 0
      %1570 = vmatpush1.bf16.msra.mxu0 %v1553
      %1571 = vmatprep.subr.bf16.mxu0 0
      %1572 = vmatpush2.bf16.msra.mxu0 0
      %1573 = vmatprep.subr.bf16.mxu0 0
      %1574 = vmatpush2.bf16.msra.mxu0 0
      %1575 = vmatprep.subr.bf16.mxu0 0
      %1576 = vmatpush2.bf16.msra.mxu0 0
      %1577 = vmatprep.subr.bf16.mxu0 0
      %1578 = vmatpush2.bf16.msra.mxu0 0
      %1579 = vmatprep.subr.bf16.mxu0 0
      %1580 = vmatpush2.bf16.msra.mxu0 0
      %1581 = vmatprep.subr.bf16.mxu0 0
      %1582 = vmatpush2.bf16.msra.mxu0 0
      %1583 = vmatprep.subr.bf16.mxu0 0
      %1584 = vmatpush2.bf16.msra.mxu0 0
      %1585 = vmatprep.subr.bf16.mxu0 0
      %1586 = vmatpush2.bf16.msra.mxu0 0
      %1587 = vmatprep.mubr.bf16.mxu0 0
      %1588 = vmatmul.mubr.bf16.gmra.mxu0 %v1550
      %v1589 = vpop.f32.mrf.mxu0
      %v1590 = vadd.f32 0.0, %v1589
      %v1591 = vpop.f32.mrf.mxu0
      %v1592 = vpop.f32.mrf.mxu0
      %v1593 = vpop.f32.mrf.mxu0
      %1594 = vdwg.mxu0
      %v1596 = vsel %vm1359, %v1451, 0
      %v1599 = vsel %vm1459, %v974, 0
      %1601 = vmatprep.subr.bf16.mxu0 0
      %1602 = vmatpush1.bf16.msra.mxu0 0
      %1603 = vmatprep.subr.bf16.mxu0 0
      %1604 = vmatpush1.bf16.msra.mxu0 0
      %1605 = vmatprep.subr.bf16.mxu0 0
      %1606 = vmatpush1.bf16.msra.mxu0 0
      %1607 = vmatprep.subr.bf16.mxu0 0
      %1608 = vmatpush1.bf16.msra.mxu0 0
      %1609 = vmatprep.subr.bf16.mxu0 0
      %1610 = vmatpush1.bf16.msra.mxu0 0
      %1611 = vmatprep.subr.bf16.mxu0 0
      %1612 = vmatpush1.bf16.msra.mxu0 0
      %1613 = vmatprep.subr.bf16.mxu0 0
      %1614 = vmatpush1.bf16.msra.mxu0 0
      %1615 = vmatprep.subr.bf16.mxu0 0
      %1616 = vmatpush1.bf16.msra.mxu0 %v1599
      %1617 = vmatprep.subr.bf16.mxu0 0
      %1618 = vmatpush2.bf16.msra.mxu0 0
      %1619 = vmatprep.subr.bf16.mxu0 0
      %1620 = vmatpush2.bf16.msra.mxu0 0
      %1621 = vmatprep.subr.bf16.mxu0 0
      %1622 = vmatpush2.bf16.msra.mxu0 0
      %1623 = vmatprep.subr.bf16.mxu0 0
      %1624 = vmatpush2.bf16.msra.mxu0 0
      %1625 = vmatprep.subr.bf16.mxu0 0
      %1626 = vmatpush2.bf16.msra.mxu0 0
      %1627 = vmatprep.subr.bf16.mxu0 0
      %1628 = vmatpush2.bf16.msra.mxu0 0
      %1629 = vmatprep.subr.bf16.mxu0 0
      %1630 = vmatpush2.bf16.msra.mxu0 0
      %1631 = vmatprep.subr.bf16.mxu0 0
      %1632 = vmatpush2.bf16.msra.mxu0 0
      %1633 = vmatprep.mubr.bf16.mxu0 0
      %1634 = vmatmul.mubr.bf16.gmra.mxu0 %v1596
      %v1635 = vpop.f32.mrf.mxu0
      %v1636 = vadd.f32 0.0, %v1635
      %v1637 = vpop.f32.mrf.mxu0
      %v1638 = vpop.f32.mrf.mxu0
      %v1639 = vpop.f32.mrf.mxu0
      %1640 = vdwg.mxu0
      %v1642 = vsel %vm1359, %v1452, 0
      %v1645 = vsel %vm1459, %v975, 0
      %1647 = vmatprep.subr.bf16.mxu0 0
      %1648 = vmatpush1.bf16.msra.mxu0 0
      %1649 = vmatprep.subr.bf16.mxu0 0
      %1650 = vmatpush1.bf16.msra.mxu0 0
      %1651 = vmatprep.subr.bf16.mxu0 0
      %1652 = vmatpush1.bf16.msra.mxu0 0
      %1653 = vmatprep.subr.bf16.mxu0 0
      %1654 = vmatpush1.bf16.msra.mxu0 0
      %1655 = vmatprep.subr.bf16.mxu0 0
      %1656 = vmatpush1.bf16.msra.mxu0 0
      %1657 = vmatprep.subr.bf16.mxu0 0
      %1658 = vmatpush1.bf16.msra.mxu0 0
      %1659 = vmatprep.subr.bf16.mxu0 0
      %1660 = vmatpush1.bf16.msra.mxu0 0
      %1661 = vmatprep.subr.bf16.mxu0 0
      %1662 = vmatpush1.bf16.msra.mxu0 %v1645
      %1663 = vmatprep.subr.bf16.mxu0 0
      %1664 = vmatpush2.bf16.msra.mxu0 0
      %1665 = vmatprep.subr.bf16.mxu0 0
      %1666 = vmatpush2.bf16.msra.mxu0 0
      %1667 = vmatprep.subr.bf16.mxu0 0
      %1668 = vmatpush2.bf16.msra.mxu0 0
      %1669 = vmatprep.subr.bf16.mxu0 0
      %1670 = vmatpush2.bf16.msra.mxu0 0
      %1671 = vmatprep.subr.bf16.mxu0 0
      %1672 = vmatpush2.bf16.msra.mxu0 0
      %1673 = vmatprep.subr.bf16.mxu0 0
      %1674 = vmatpush2.bf16.msra.mxu0 0
      %1675 = vmatprep.subr.bf16.mxu0 0
      %1676 = vmatpush2.bf16.msra.mxu0 0
      %1677 = vmatprep.subr.bf16.mxu0 0
      %1678 = vmatpush2.bf16.msra.mxu0 0
      %1679 = vmatprep.mubr.bf16.mxu0 0
      %1680 = vmatmul.mubr.bf16.gmra.mxu0 %v1642
      %v1681 = vpop.f32.mrf.mxu0
      %v1682 = vadd.f32 0.0, %v1681
      %v1683 = vpop.f32.mrf.mxu0
      %v1684 = vpop.f32.mrf.mxu0
      %v1685 = vpop.f32.mrf.mxu0
      %1686 = vdwg.mxu0
      %v1688 = vsel %vm1359, %v1453, 0
      %v1691 = vsel %vm1459, %v976, 0
      %1693 = vmatprep.subr.bf16.mxu0 0
      %1694 = vmatpush1.bf16.msra.mxu0 0
      %1695 = vmatprep.subr.bf16.mxu0 0
      %1696 = vmatpush1.bf16.msra.mxu0 0
      %1697 = vmatprep.subr.bf16.mxu0 0
      %1698 = vmatpush1.bf16.msra.mxu0 0
      %1699 = vmatprep.subr.bf16.mxu0 0
      %1700 = vmatpush1.bf16.msra.mxu0 0
      %1701 = vmatprep.subr.bf16.mxu0 0
      %1702 = vmatpush1.bf16.msra.mxu0 0
      %1703 = vmatprep.subr.bf16.mxu0 0
      %1704 = vmatpush1.bf16.msra.mxu0 0
      %1705 = vmatprep.subr.bf16.mxu0 0
      %1706 = vmatpush1.bf16.msra.mxu0 0
      %1707 = vmatprep.subr.bf16.mxu0 0
      %1708 = vmatpush1.bf16.msra.mxu0 %v1691
      %1709 = vmatprep.subr.bf16.mxu0 0
      %1710 = vmatpush2.bf16.msra.mxu0 0
      %1711 = vmatprep.subr.bf16.mxu0 0
      %1712 = vmatpush2.bf16.msra.mxu0 0
      %1713 = vmatprep.subr.bf16.mxu0 0
      %1714 = vmatpush2.bf16.msra.mxu0 0
      %1715 = vmatprep.subr.bf16.mxu0 0
      %1716 = vmatpush2.bf16.msra.mxu0 0
      %1717 = vmatprep.subr.bf16.mxu0 0
      %1718 = vmatpush2.bf16.msra.mxu0 0
      %1719 = vmatprep.subr.bf16.mxu0 0
      %1720 = vmatpush2.bf16.msra.mxu0 0
      %1721 = vmatprep.subr.bf16.mxu0 0
      %1722 = vmatpush2.bf16.msra.mxu0 0
      %1723 = vmatprep.subr.bf16.mxu0 0
      %1724 = vmatpush2.bf16.msra.mxu0 0
      %1725 = vmatprep.mubr.bf16.mxu0 0
      %1726 = vmatmul.mubr.bf16.gmra.mxu0 %v1688
      %v1727 = vpop.f32.mrf.mxu0
      %v1728 = vadd.f32 0.0, %v1727
      %v1729 = vpop.f32.mrf.mxu0
      %v1730 = vpop.f32.mrf.mxu0
      %v1731 = vpop.f32.mrf.mxu0
      %1732 = vdwg.mxu0
      %v1734 = vsel %vm1359, %v1454, 0
      %v1737 = vsel %vm1459, %v977, 0
      %1739 = vmatprep.subr.bf16.mxu0 0
      %1740 = vmatpush1.bf16.msra.mxu0 0
      %1741 = vmatprep.subr.bf16.mxu0 0
      %1742 = vmatpush1.bf16.msra.mxu0 0
      %1743 = vmatprep.subr.bf16.mxu0 0
      %1744 = vmatpush1.bf16.msra.mxu0 0
      %1745 = vmatprep.subr.bf16.mxu0 0
      %1746 = vmatpush1.bf16.msra.mxu0 0
      %1747 = vmatprep.subr.bf16.mxu0 0
      %1748 = vmatpush1.bf16.msra.mxu0 0
      %1749 = vmatprep.subr.bf16.mxu0 0
      %1750 = vmatpush1.bf16.msra.mxu0 0
      %1751 = vmatprep.subr.bf16.mxu0 0
      %1752 = vmatpush1.bf16.msra.mxu0 0
      %1753 = vmatprep.subr.bf16.mxu0 0
      %1754 = vmatpush1.bf16.msra.mxu0 %v1737
      %1755 = vmatprep.subr.bf16.mxu0 0
      %1756 = vmatpush2.bf16.msra.mxu0 0
      %1757 = vmatprep.subr.bf16.mxu0 0
      %1758 = vmatpush2.bf16.msra.mxu0 0
      %1759 = vmatprep.subr.bf16.mxu0 0
      %1760 = vmatpush2.bf16.msra.mxu0 0
      %1761 = vmatprep.subr.bf16.mxu0 0
      %1762 = vmatpush2.bf16.msra.mxu0 0
      %1763 = vmatprep.subr.bf16.mxu0 0
      %1764 = vmatpush2.bf16.msra.mxu0 0
      %1765 = vmatprep.subr.bf16.mxu0 0
      %1766 = vmatpush2.bf16.msra.mxu0 0
      %1767 = vmatprep.subr.bf16.mxu0 0
      %1768 = vmatpush2.bf16.msra.mxu0 0
      %1769 = vmatprep.subr.bf16.mxu0 0
      %1770 = vmatpush2.bf16.msra.mxu0 0
      %1771 = vmatprep.mubr.bf16.mxu0 0
      %1772 = vmatmul.mubr.bf16.gmra.mxu0 %v1734
      %v1773 = vpop.f32.mrf.mxu0
      %v1774 = vadd.f32 0.0, %v1773
      %v1775 = vpop.f32.mrf.mxu0
      %v1776 = vpop.f32.mrf.mxu0
      %v1777 = vpop.f32.mrf.mxu0
      %1778 = vdwg.mxu0
      %v1780 = vsel %vm1359, %v1455, 0
      %v1783 = vsel %vm1459, %v978, 0
      %1785 = vmatprep.subr.bf16.mxu0 0
      %1786 = vmatpush1.bf16.msra.mxu0 0
      %1787 = vmatprep.subr.bf16.mxu0 0
      %1788 = vmatpush1.bf16.msra.mxu0 0
      %1789 = vmatprep.subr.bf16.mxu0 0
      %1790 = vmatpush1.bf16.msra.mxu0 0
      %1791 = vmatprep.subr.bf16.mxu0 0
      %1792 = vmatpush1.bf16.msra.mxu0 0
      %1793 = vmatprep.subr.bf16.mxu0 0
      %1794 = vmatpush1.bf16.msra.mxu0 0
      %1795 = vmatprep.subr.bf16.mxu0 0
      %1796 = vmatpush1.bf16.msra.mxu0 0
      %1797 = vmatprep.subr.bf16.mxu0 0
      %1798 = vmatpush1.bf16.msra.mxu0 0
      %1799 = vmatprep.subr.bf16.mxu0 0
      %1800 = vmatpush1.bf16.msra.mxu0 %v1783
      %1801 = vmatprep.subr.bf16.mxu0 0
      %1802 = vmatpush2.bf16.msra.mxu0 0
      %1803 = vmatprep.subr.bf16.mxu0 0
      %1804 = vmatpush2.bf16.msra.mxu0 0
      %1805 = vmatprep.subr.bf16.mxu0 0
      %1806 = vmatpush2.bf16.msra.mxu0 0
      %1807 = vmatprep.subr.bf16.mxu0 0
      %1808 = vmatpush2.bf16.msra.mxu0 0
      %1809 = vmatprep.subr.bf16.mxu0 0
      %1810 = vmatpush2.bf16.msra.mxu0 0
      %1811 = vmatprep.subr.bf16.mxu0 0
      %1812 = vmatpush2.bf16.msra.mxu0 0
      %1813 = vmatprep.subr.bf16.mxu0 0
      %1814 = vmatpush2.bf16.msra.mxu0 0
      %1815 = vmatprep.subr.bf16.mxu0 0
      %1816 = vmatpush2.bf16.msra.mxu0 0
      %1817 = vmatprep.mubr.bf16.mxu0 0
      %1818 = vmatmul.mubr.bf16.gmra.mxu0 %v1780
      %v1819 = vpop.f32.mrf.mxu0
      %v1820 = vadd.f32 0.0, %v1819
      %v1821 = vpop.f32.mrf.mxu0
      %v1822 = vpop.f32.mrf.mxu0
      %v1823 = vpop.f32.mrf.mxu0
      %1824 = vdwg.mxu0
      %v1825 = vpack.c.bf16 %v1544, %v1498
      %v1826 = vpack.c.bf16 %v1636, %v1590
      %v1827 = vpack.c.bf16 %v1728, %v1682
      %v1828 = vpack.c.bf16 %v1820, %v1774
      %1829 = vrot.lane.b32.xlu0 %v931, 96
      %v1830 = vpop.permute.xlu0 %1829
      %1831 = vrot.lane.b32.xlu0 %v951, 96
      %v1832 = vpop.permute.xlu0 %1831
      %v1834 = vsel %vm979, %v1830, 0
      %v1837 = vsel %vm979, %v1832, 0
      %1839 = vmatprep.subr.bf16.mxu0 0
      %1840 = vmatpush1.bf16.xpose.msra.mxu0 0
      %1841 = vmatprep.subr.bf16.mxu0 0
      %1842 = vmatpush1.bf16.xpose.msra.mxu0 0
      %1843 = vmatprep.subr.bf16.mxu0 0
      %1844 = vmatpush1.bf16.xpose.msra.mxu0 0
      %1845 = vmatprep.subr.bf16.mxu0 0
      %1846 = vmatpush1.bf16.xpose.msra.mxu0 0
      %1847 = vmatprep.subr.bf16.mxu0 0
      %1848 = vmatpush1.bf16.xpose.msra.mxu0 0
      %1849 = vmatprep.subr.bf16.mxu0 0
      %1850 = vmatpush1.bf16.xpose.msra.mxu0 0
      %1851 = vmatprep.subr.bf16.mxu0 0
      %1852 = vmatpush1.bf16.xpose.msra.mxu0 0
      %1853 = vmatprep.subr.bf16.mxu0 0
      %1854 = vmatpush1.bf16.xpose.msra.mxu0 %v1837
      %1855 = vmatprep.subr.bf16.mxu0 0
      %1856 = vmatpush2.bf16.xpose.msra.mxu0 0
      %1857 = vmatprep.subr.bf16.mxu0 0
      %1858 = vmatpush2.bf16.xpose.msra.mxu0 0
      %1859 = vmatprep.subr.bf16.mxu0 0
      %1860 = vmatpush2.bf16.xpose.msra.mxu0 0
      %1861 = vmatprep.subr.bf16.mxu0 0
      %1862 = vmatpush2.bf16.xpose.msra.mxu0 0
      %1863 = vmatprep.subr.bf16.mxu0 0
      %1864 = vmatpush2.bf16.xpose.msra.mxu0 0
      %1865 = vmatprep.subr.bf16.mxu0 0
      %1866 = vmatpush2.bf16.xpose.msra.mxu0 0
      %1867 = vmatprep.subr.bf16.mxu0 0
      %1868 = vmatpush2.bf16.xpose.msra.mxu0 0
      %1869 = vmatprep.subr.bf16.mxu0 0
      %1870 = vmatpush2.bf16.xpose.msra.mxu0 0
      %1871 = vmatprep.mubr.bf16.mxu0 0
      %1872 = vmatmul.mubr.bf16.gmra.mxu0 %v1834
      %v1873 = vpop.f32.mrf.mxu0
      %v1874 = vadd.f32 0.0, %v1873
      %v1875 = vpop.f32.mrf.mxu0
      %v1876 = vpop.f32.mrf.mxu0
      %v1877 = vpop.f32.mrf.mxu0
      %1878 = vdwg.mxu0
      %1879 = vrot.lane.b32.xlu0 %v932, 96
      %v1880 = vpop.permute.xlu0 %1879
      %1881 = vrot.lane.b32.xlu0 %v952, 96
      %v1882 = vpop.permute.xlu0 %1881
      %v1884 = vsel %vm979, %v1880, 0
      %v1887 = vsel %vm979, %v1882, 0
      %1889 = vmatprep.subr.bf16.mxu0 0
      %1890 = vmatpush1.bf16.xpose.msra.mxu0 0
      %1891 = vmatprep.subr.bf16.mxu0 0
      %1892 = vmatpush1.bf16.xpose.msra.mxu0 0
      %1893 = vmatprep.subr.bf16.mxu0 0
      %1894 = vmatpush1.bf16.xpose.msra.mxu0 0
      %1895 = vmatprep.subr.bf16.mxu0 0
      %1896 = vmatpush1.bf16.xpose.msra.mxu0 0
      %1897 = vmatprep.subr.bf16.mxu0 0
      %1898 = vmatpush1.bf16.xpose.msra.mxu0 0
      %1899 = vmatprep.subr.bf16.mxu0 0
      %1900 = vmatpush1.bf16.xpose.msra.mxu0 0
      %1901 = vmatprep.subr.bf16.mxu0 0
      %1902 = vmatpush1.bf16.xpose.msra.mxu0 0
      %1903 = vmatprep.subr.bf16.mxu0 0
      %1904 = vmatpush1.bf16.xpose.msra.mxu0 %v1887
      %1905 = vmatprep.subr.bf16.mxu0 0
      %1906 = vmatpush2.bf16.xpose.msra.mxu0 0
      %1907 = vmatprep.subr.bf16.mxu0 0
      %1908 = vmatpush2.bf16.xpose.msra.mxu0 0
      %1909 = vmatprep.subr.bf16.mxu0 0
      %1910 = vmatpush2.bf16.xpose.msra.mxu0 0
      %1911 = vmatprep.subr.bf16.mxu0 0
      %1912 = vmatpush2.bf16.xpose.msra.mxu0 0
      %1913 = vmatprep.subr.bf16.mxu0 0
      %1914 = vmatpush2.bf16.xpose.msra.mxu0 0
      %1915 = vmatprep.subr.bf16.mxu0 0
      %1916 = vmatpush2.bf16.xpose.msra.mxu0 0
      %1917 = vmatprep.subr.bf16.mxu0 0
      %1918 = vmatpush2.bf16.xpose.msra.mxu0 0
      %1919 = vmatprep.subr.bf16.mxu0 0
      %1920 = vmatpush2.bf16.xpose.msra.mxu0 0
      %1921 = vmatprep.mubr.bf16.mxu0 0
      %1922 = vmatmul.mubr.bf16.gmra.mxu0 %v1884
      %v1923 = vpop.f32.mrf.mxu0
      %v1924 = vadd.f32 0.0, %v1923
      %v1925 = vpop.f32.mrf.mxu0
      %v1926 = vpop.f32.mrf.mxu0
      %v1927 = vpop.f32.mrf.mxu0
      %1928 = vdwg.mxu0
      %1929 = vrot.lane.b32.xlu0 %v933, 96
      %v1930 = vpop.permute.xlu0 %1929
      %1931 = vrot.lane.b32.xlu0 %v953, 96
      %v1932 = vpop.permute.xlu0 %1931
      %v1934 = vsel %vm979, %v1930, 0
      %v1937 = vsel %vm979, %v1932, 0
      %1939 = vmatprep.subr.bf16.mxu0 0
      %1940 = vmatpush1.bf16.xpose.msra.mxu0 0
      %1941 = vmatprep.subr.bf16.mxu0 0
      %1942 = vmatpush1.bf16.xpose.msra.mxu0 0
      %1943 = vmatprep.subr.bf16.mxu0 0
      %1944 = vmatpush1.bf16.xpose.msra.mxu0 0
      %1945 = vmatprep.subr.bf16.mxu0 0
      %1946 = vmatpush1.bf16.xpose.msra.mxu0 0
      %1947 = vmatprep.subr.bf16.mxu0 0
      %1948 = vmatpush1.bf16.xpose.msra.mxu0 0
      %1949 = vmatprep.subr.bf16.mxu0 0
      %1950 = vmatpush1.bf16.xpose.msra.mxu0 0
      %1951 = vmatprep.subr.bf16.mxu0 0
      %1952 = vmatpush1.bf16.xpose.msra.mxu0 0
      %1953 = vmatprep.subr.bf16.mxu0 0
      %1954 = vmatpush1.bf16.xpose.msra.mxu0 %v1937
      %1955 = vmatprep.subr.bf16.mxu0 0
      %1956 = vmatpush2.bf16.xpose.msra.mxu0 0
      %1957 = vmatprep.subr.bf16.mxu0 0
      %1958 = vmatpush2.bf16.xpose.msra.mxu0 0
      %1959 = vmatprep.subr.bf16.mxu0 0
      %1960 = vmatpush2.bf16.xpose.msra.mxu0 0
      %1961 = vmatprep.subr.bf16.mxu0 0
      %1962 = vmatpush2.bf16.xpose.msra.mxu0 0
      %1963 = vmatprep.subr.bf16.mxu0 0
      %1964 = vmatpush2.bf16.xpose.msra.mxu0 0
      %1965 = vmatprep.subr.bf16.mxu0 0
      %1966 = vmatpush2.bf16.xpose.msra.mxu0 0
      %1967 = vmatprep.subr.bf16.mxu0 0
      %1968 = vmatpush2.bf16.xpose.msra.mxu0 0
      %1969 = vmatprep.subr.bf16.mxu0 0
      %1970 = vmatpush2.bf16.xpose.msra.mxu0 0
      %1971 = vmatprep.mubr.bf16.mxu0 0
      %1972 = vmatmul.mubr.bf16.gmra.mxu0 %v1934
      %v1973 = vpop.f32.mrf.mxu0
      %v1974 = vadd.f32 0.0, %v1973
      %v1975 = vpop.f32.mrf.mxu0
      %v1976 = vpop.f32.mrf.mxu0
      %v1977 = vpop.f32.mrf.mxu0
      %1978 = vdwg.mxu0
      %1979 = vrot.lane.b32.xlu0 %v934, 96
      %v1980 = vpop.permute.xlu0 %1979
      %1981 = vrot.lane.b32.xlu0 %v954, 96
      %v1982 = vpop.permute.xlu0 %1981
      %v1984 = vsel %vm979, %v1980, 0
      %v1987 = vsel %vm979, %v1982, 0
      %1989 = vmatprep.subr.bf16.mxu0 0
      %1990 = vmatpush1.bf16.xpose.msra.mxu0 0
      %1991 = vmatprep.subr.bf16.mxu0 0
      %1992 = vmatpush1.bf16.xpose.msra.mxu0 0
      %1993 = vmatprep.subr.bf16.mxu0 0
      %1994 = vmatpush1.bf16.xpose.msra.mxu0 0
      %1995 = vmatprep.subr.bf16.mxu0 0
      %1996 = vmatpush1.bf16.xpose.msra.mxu0 0
      %1997 = vmatprep.subr.bf16.mxu0 0
      %1998 = vmatpush1.bf16.xpose.msra.mxu0 0
      %1999 = vmatprep.subr.bf16.mxu0 0
      %2000 = vmatpush1.bf16.xpose.msra.mxu0 0
      %2001 = vmatprep.subr.bf16.mxu0 0
      %2002 = vmatpush1.bf16.xpose.msra.mxu0 0
      %2003 = vmatprep.subr.bf16.mxu0 0
      %2004 = vmatpush1.bf16.xpose.msra.mxu0 %v1987
      %2005 = vmatprep.subr.bf16.mxu0 0
      %2006 = vmatpush2.bf16.xpose.msra.mxu0 0
      %2007 = vmatprep.subr.bf16.mxu0 0
      %2008 = vmatpush2.bf16.xpose.msra.mxu0 0
      %2009 = vmatprep.subr.bf16.mxu0 0
      %2010 = vmatpush2.bf16.xpose.msra.mxu0 0
      %2011 = vmatprep.subr.bf16.mxu0 0
      %2012 = vmatpush2.bf16.xpose.msra.mxu0 0
      %2013 = vmatprep.subr.bf16.mxu0 0
      %2014 = vmatpush2.bf16.xpose.msra.mxu0 0
      %2015 = vmatprep.subr.bf16.mxu0 0
      %2016 = vmatpush2.bf16.xpose.msra.mxu0 0
      %2017 = vmatprep.subr.bf16.mxu0 0
      %2018 = vmatpush2.bf16.xpose.msra.mxu0 0
      %2019 = vmatprep.subr.bf16.mxu0 0
      %2020 = vmatpush2.bf16.xpose.msra.mxu0 0
      %2021 = vmatprep.mubr.bf16.mxu0 0
      %2022 = vmatmul.mubr.bf16.gmra.mxu0 %v1984
      %v2023 = vpop.f32.mrf.mxu0
      %v2024 = vadd.f32 0.0, %v2023
      %v2025 = vpop.f32.mrf.mxu0
      %v2026 = vpop.f32.mrf.mxu0
      %v2027 = vpop.f32.mrf.mxu0
      %2028 = vdwg.mxu0
      %2029 = vrot.lane.b32.xlu0 %v935, 96
      %v2030 = vpop.permute.xlu0 %2029
      %2031 = vrot.lane.b32.xlu0 %v955, 96
      %v2032 = vpop.permute.xlu0 %2031
      %v2034 = vsel %vm979, %v2030, 0
      %v2037 = vsel %vm979, %v2032, 0
      %2039 = vmatprep.subr.bf16.mxu0 0
      %2040 = vmatpush1.bf16.xpose.msra.mxu0 0
      %2041 = vmatprep.subr.bf16.mxu0 0
      %2042 = vmatpush1.bf16.xpose.msra.mxu0 0
      %2043 = vmatprep.subr.bf16.mxu0 0
      %2044 = vmatpush1.bf16.xpose.msra.mxu0 0
      %2045 = vmatprep.subr.bf16.mxu0 0
      %2046 = vmatpush1.bf16.xpose.msra.mxu0 0
      %2047 = vmatprep.subr.bf16.mxu0 0
      %2048 = vmatpush1.bf16.xpose.msra.mxu0 0
      %2049 = vmatprep.subr.bf16.mxu0 0
      %2050 = vmatpush1.bf16.xpose.msra.mxu0 0
      %2051 = vmatprep.subr.bf16.mxu0 0
      %2052 = vmatpush1.bf16.xpose.msra.mxu0 0
      %2053 = vmatprep.subr.bf16.mxu0 0
      %2054 = vmatpush1.bf16.xpose.msra.mxu0 %v2037
      %2055 = vmatprep.subr.bf16.mxu0 0
      %2056 = vmatpush2.bf16.xpose.msra.mxu0 0
      %2057 = vmatprep.subr.bf16.mxu0 0
      %2058 = vmatpush2.bf16.xpose.msra.mxu0 0
      %2059 = vmatprep.subr.bf16.mxu0 0
      %2060 = vmatpush2.bf16.xpose.msra.mxu0 0
      %2061 = vmatprep.subr.bf16.mxu0 0
      %2062 = vmatpush2.bf16.xpose.msra.mxu0 0
      %2063 = vmatprep.subr.bf16.mxu0 0
      %2064 = vmatpush2.bf16.xpose.msra.mxu0 0
      %2065 = vmatprep.subr.bf16.mxu0 0
      %2066 = vmatpush2.bf16.xpose.msra.mxu0 0
      %2067 = vmatprep.subr.bf16.mxu0 0
      %2068 = vmatpush2.bf16.xpose.msra.mxu0 0
      %2069 = vmatprep.subr.bf16.mxu0 0
      %2070 = vmatpush2.bf16.xpose.msra.mxu0 0
      %2071 = vmatprep.mubr.bf16.mxu0 0
      %2072 = vmatmul.mubr.bf16.gmra.mxu0 %v2034
      %v2073 = vpop.f32.mrf.mxu0
      %v2074 = vadd.f32 0.0, %v2073
      %v2075 = vpop.f32.mrf.mxu0
      %v2076 = vpop.f32.mrf.mxu0
      %v2077 = vpop.f32.mrf.mxu0
      %2078 = vdwg.mxu0
      %2079 = vrot.lane.b32.xlu0 %v936, 96
      %v2080 = vpop.permute.xlu0 %2079
      %2081 = vrot.lane.b32.xlu0 %v956, 96
      %v2082 = vpop.permute.xlu0 %2081
      %v2084 = vsel %vm979, %v2080, 0
      %v2087 = vsel %vm979, %v2082, 0
      %2089 = vmatprep.subr.bf16.mxu0 0
      %2090 = vmatpush1.bf16.xpose.msra.mxu0 0
      %2091 = vmatprep.subr.bf16.mxu0 0
      %2092 = vmatpush1.bf16.xpose.msra.mxu0 0
      %2093 = vmatprep.subr.bf16.mxu0 0
      %2094 = vmatpush1.bf16.xpose.msra.mxu0 0
      %2095 = vmatprep.subr.bf16.mxu0 0
      %2096 = vmatpush1.bf16.xpose.msra.mxu0 0
      %2097 = vmatprep.subr.bf16.mxu0 0
      %2098 = vmatpush1.bf16.xpose.msra.mxu0 0
      %2099 = vmatprep.subr.bf16.mxu0 0
      %2100 = vmatpush1.bf16.xpose.msra.mxu0 0
      %2101 = vmatprep.subr.bf16.mxu0 0
      %2102 = vmatpush1.bf16.xpose.msra.mxu0 0
      %2103 = vmatprep.subr.bf16.mxu0 0
      %2104 = vmatpush1.bf16.xpose.msra.mxu0 %v2087
      %2105 = vmatprep.subr.bf16.mxu0 0
      %2106 = vmatpush2.bf16.xpose.msra.mxu0 0
      %2107 = vmatprep.subr.bf16.mxu0 0
      %2108 = vmatpush2.bf16.xpose.msra.mxu0 0
      %2109 = vmatprep.subr.bf16.mxu0 0
      %2110 = vmatpush2.bf16.xpose.msra.mxu0 0
      %2111 = vmatprep.subr.bf16.mxu0 0
      %2112 = vmatpush2.bf16.xpose.msra.mxu0 0
      %2113 = vmatprep.subr.bf16.mxu0 0
      %2114 = vmatpush2.bf16.xpose.msra.mxu0 0
      %2115 = vmatprep.subr.bf16.mxu0 0
      %2116 = vmatpush2.bf16.xpose.msra.mxu0 0
      %2117 = vmatprep.subr.bf16.mxu0 0
      %2118 = vmatpush2.bf16.xpose.msra.mxu0 0
      %2119 = vmatprep.subr.bf16.mxu0 0
      %2120 = vmatpush2.bf16.xpose.msra.mxu0 0
      %2121 = vmatprep.mubr.bf16.mxu0 0
      %2122 = vmatmul.mubr.bf16.gmra.mxu0 %v2084
      %v2123 = vpop.f32.mrf.mxu0
      %v2124 = vadd.f32 0.0, %v2123
      %v2125 = vpop.f32.mrf.mxu0
      %v2126 = vpop.f32.mrf.mxu0
      %v2127 = vpop.f32.mrf.mxu0
      %2128 = vdwg.mxu0
      %2129 = vrot.lane.b32.xlu0 %v937, 96
      %v2130 = vpop.permute.xlu0 %2129
      %2131 = vrot.lane.b32.xlu0 %v957, 96
      %v2132 = vpop.permute.xlu0 %2131
      %v2134 = vsel %vm979, %v2130, 0
      %v2137 = vsel %vm979, %v2132, 0
      %2139 = vmatprep.subr.bf16.mxu0 0
      %2140 = vmatpush1.bf16.xpose.msra.mxu0 0
      %2141 = vmatprep.subr.bf16.mxu0 0
      %2142 = vmatpush1.bf16.xpose.msra.mxu0 0
      %2143 = vmatprep.subr.bf16.mxu0 0
      %2144 = vmatpush1.bf16.xpose.msra.mxu0 0
      %2145 = vmatprep.subr.bf16.mxu0 0
      %2146 = vmatpush1.bf16.xpose.msra.mxu0 0
      %2147 = vmatprep.subr.bf16.mxu0 0
      %2148 = vmatpush1.bf16.xpose.msra.mxu0 0
      %2149 = vmatprep.subr.bf16.mxu0 0
      %2150 = vmatpush1.bf16.xpose.msra.mxu0 0
      %2151 = vmatprep.subr.bf16.mxu0 0
      %2152 = vmatpush1.bf16.xpose.msra.mxu0 0
      %2153 = vmatprep.subr.bf16.mxu0 0
      %2154 = vmatpush1.bf16.xpose.msra.mxu0 %v2137
      %2155 = vmatprep.subr.bf16.mxu0 0
      %2156 = vmatpush2.bf16.xpose.msra.mxu0 0
      %2157 = vmatprep.subr.bf16.mxu0 0
      %2158 = vmatpush2.bf16.xpose.msra.mxu0 0
      %2159 = vmatprep.subr.bf16.mxu0 0
      %2160 = vmatpush2.bf16.xpose.msra.mxu0 0
      %2161 = vmatprep.subr.bf16.mxu0 0
      %2162 = vmatpush2.bf16.xpose.msra.mxu0 0
      %2163 = vmatprep.subr.bf16.mxu0 0
      %2164 = vmatpush2.bf16.xpose.msra.mxu0 0
      %2165 = vmatprep.subr.bf16.mxu0 0
      %2166 = vmatpush2.bf16.xpose.msra.mxu0 0
      %2167 = vmatprep.subr.bf16.mxu0 0
      %2168 = vmatpush2.bf16.xpose.msra.mxu0 0
      %2169 = vmatprep.subr.bf16.mxu0 0
      %2170 = vmatpush2.bf16.xpose.msra.mxu0 0
      %2171 = vmatprep.mubr.bf16.mxu0 0
      %2172 = vmatmul.mubr.bf16.gmra.mxu0 %v2134
      %v2173 = vpop.f32.mrf.mxu0
      %v2174 = vadd.f32 0.0, %v2173
      %v2175 = vpop.f32.mrf.mxu0
      %v2176 = vpop.f32.mrf.mxu0
      %v2177 = vpop.f32.mrf.mxu0
      %2178 = vdwg.mxu0
      %2179 = vrot.lane.b32.xlu0 %v938, 96
      %v2180 = vpop.permute.xlu0 %2179
      %2181 = vrot.lane.b32.xlu0 %v958, 96
      %v2182 = vpop.permute.xlu0 %2181
      %v2184 = vsel %vm979, %v2180, 0
      %v2187 = vsel %vm979, %v2182, 0
      %2189 = vmatprep.subr.bf16.mxu0 0
      %2190 = vmatpush1.bf16.xpose.msra.mxu0 0
      %2191 = vmatprep.subr.bf16.mxu0 0
      %2192 = vmatpush1.bf16.xpose.msra.mxu0 0
      %2193 = vmatprep.subr.bf16.mxu0 0
      %2194 = vmatpush1.bf16.xpose.msra.mxu0 0
      %2195 = vmatprep.subr.bf16.mxu0 0
      %2196 = vmatpush1.bf16.xpose.msra.mxu0 0
      %2197 = vmatprep.subr.bf16.mxu0 0
      %2198 = vmatpush1.bf16.xpose.msra.mxu0 0
      %2199 = vmatprep.subr.bf16.mxu0 0
      %2200 = vmatpush1.bf16.xpose.msra.mxu0 0
      %2201 = vmatprep.subr.bf16.mxu0 0
      %2202 = vmatpush1.bf16.xpose.msra.mxu0 0
      %2203 = vmatprep.subr.bf16.mxu0 0
      %2204 = vmatpush1.bf16.xpose.msra.mxu0 %v2187
      %2205 = vmatprep.subr.bf16.mxu0 0
      %2206 = vmatpush2.bf16.xpose.msra.mxu0 0
      %2207 = vmatprep.subr.bf16.mxu0 0
      %2208 = vmatpush2.bf16.xpose.msra.mxu0 0
      %2209 = vmatprep.subr.bf16.mxu0 0
      %2210 = vmatpush2.bf16.xpose.msra.mxu0 0
      %2211 = vmatprep.subr.bf16.mxu0 0
      %2212 = vmatpush2.bf16.xpose.msra.mxu0 0
      %2213 = vmatprep.subr.bf16.mxu0 0
      %2214 = vmatpush2.bf16.xpose.msra.mxu0 0
      %2215 = vmatprep.subr.bf16.mxu0 0
      %2216 = vmatpush2.bf16.xpose.msra.mxu0 0
      %2217 = vmatprep.subr.bf16.mxu0 0
      %2218 = vmatpush2.bf16.xpose.msra.mxu0 0
      %2219 = vmatprep.subr.bf16.mxu0 0
      %2220 = vmatpush2.bf16.xpose.msra.mxu0 0
      %2221 = vmatprep.mubr.bf16.mxu0 0
      %2222 = vmatmul.mubr.bf16.gmra.mxu0 %v2184
      %v2223 = vpop.f32.mrf.mxu0
      %v2224 = vadd.f32 0.0, %v2223
      %v2225 = vpop.f32.mrf.mxu0
      %v2226 = vpop.f32.mrf.mxu0
      %v2227 = vpop.f32.mrf.mxu0
      %2228 = vdwg.mxu0
      %v2229 = vsel %vm1350, %v1874, -1e+30
      %v2230 = vsel %vm1350, %v1924, -1e+30
      %v2231 = vsel %vm1350, %v1974, -1e+30
      %v2232 = vsel %vm1350, %v2024, -1e+30
      %v2233 = vsel %vm1350, %v2074, -1e+30
      %v2234 = vsel %vm1350, %v2124, -1e+30
      %v2235 = vsel %vm1350, %v2174, -1e+30
      %v2236 = vsel %vm1350, %v2224, -1e+30
      %v2237 = vsel %vm1359, %v2229, -inf
      %2238 = vmax.xlane.f32.xlu0 %v2237
      %v2239 = vpop.xlane.xlu0 %2238
      %v2240 = vsel %vm1359, %v2230, -inf
      %2241 = vmax.xlane.f32.xlu0 %v2240
      %v2242 = vpop.xlane.xlu0 %2241
      %v2243 = vsel %vm1359, %v2231, -inf
      %2244 = vmax.xlane.f32.xlu0 %v2243
      %v2245 = vpop.xlane.xlu0 %2244
      %v2246 = vsel %vm1359, %v2232, -inf
      %2247 = vmax.xlane.f32.xlu0 %v2246
      %v2248 = vpop.xlane.xlu0 %2247
      %v2249 = vsel %vm1359, %v2233, -inf
      %2250 = vmax.xlane.f32.xlu0 %v2249
      %v2251 = vpop.xlane.xlu0 %2250
      %v2252 = vsel %vm1359, %v2234, -inf
      %2253 = vmax.xlane.f32.xlu0 %v2252
      %v2254 = vpop.xlane.xlu0 %2253
      %v2255 = vsel %vm1359, %v2235, -inf
      %2256 = vmax.xlane.f32.xlu0 %v2255
      %v2257 = vpop.xlane.xlu0 %2256
      %v2258 = vsel %vm1359, %v2236, -inf
      %2259 = vmax.xlane.f32.xlu0 %v2258
      %v2260 = vpop.xlane.xlu0 %2259
      %v2261 = vsub.f32 %v2229, %v2239
      %v2262 = vsub.f32 %v2230, %v2242
      %v2263 = vsub.f32 %v2231, %v2245
      %v2264 = vsub.f32 %v2232, %v2248
      %v2265 = vsub.f32 %v2233, %v2251
      %v2266 = vsub.f32 %v2234, %v2254
      %v2267 = vsub.f32 %v2235, %v2257
      %v2268 = vsub.f32 %v2236, %v2260
      %v2269 = vmul.f32 %v2261, 1.442695
      %v2270 = vpow.pop %v2269
      %v2271 = vmul.f32 %v2262, 1.442695
      %v2272 = vpow.pop %v2271
      %v2273 = vmul.f32 %v2263, 1.442695
      %v2274 = vpow.pop %v2273
      %v2275 = vmul.f32 %v2264, 1.442695
      %v2276 = vpow.pop %v2275
      %v2277 = vmul.f32 %v2265, 1.442695
      %v2278 = vpow.pop %v2277
      %v2279 = vmul.f32 %v2266, 1.442695
      %v2280 = vpow.pop %v2279
      %v2281 = vmul.f32 %v2267, 1.442695
      %v2282 = vpow.pop %v2281
      %v2283 = vmul.f32 %v2268, 1.442695
      %v2284 = vpow.pop %v2283
      %v2285 = vsel %vm1359, %v2270, 0.0
      %2286 = vadd.xlane.f32.xlu0 %v2285
      %v2287 = vpop.xlane.xlu0 %2286
      %v2288 = vsel %vm1359, %v2272, 0.0
      %2289 = vadd.xlane.f32.xlu0 %v2288
      %v2290 = vpop.xlane.xlu0 %2289
      %v2291 = vsel %vm1359, %v2274, 0.0
      %2292 = vadd.xlane.f32.xlu0 %v2291
      %v2293 = vpop.xlane.xlu0 %2292
      %v2294 = vsel %vm1359, %v2276, 0.0
      %2295 = vadd.xlane.f32.xlu0 %v2294
      %v2296 = vpop.xlane.xlu0 %2295
      %v2297 = vsel %vm1359, %v2278, 0.0
      %2298 = vadd.xlane.f32.xlu0 %v2297
      %v2299 = vpop.xlane.xlu0 %2298
      %v2300 = vsel %vm1359, %v2280, 0.0
      %2301 = vadd.xlane.f32.xlu0 %v2300
      %v2302 = vpop.xlane.xlu0 %2301
      %v2303 = vsel %vm1359, %v2282, 0.0
      %2304 = vadd.xlane.f32.xlu0 %v2303
      %v2305 = vpop.xlane.xlu0 %2304
      %v2306 = vsel %vm1359, %v2284, 0.0
      %2307 = vadd.xlane.f32.xlu0 %v2306
      %v2308 = vpop.xlane.xlu0 %2307
      %v2309 = vrcp.pop %v2287
      %v2310 = vrcp.pop %v2290
      %v2311 = vrcp.pop %v2293
      %v2312 = vrcp.pop %v2296
      %v2313 = vrcp.pop %v2299
      %v2314 = vrcp.pop %v2302
      %v2315 = vrcp.pop %v2305
      %v2316 = vrcp.pop %v2308
      %v2317 = vmul.f32 %v2270, %v2309
      %v2318 = vmul.f32 %v2272, %v2310
      %v2319 = vmul.f32 %v2274, %v2311
      %v2320 = vmul.f32 %v2276, %v2312
      %v2321 = vmul.f32 %v2278, %v2313
      %v2322 = vmul.f32 %v2280, %v2314
      %v2323 = vmul.f32 %v2282, %v2315
      %v2324 = vmul.f32 %v2284, %v2316
      %v2325 = vpack.c.bf16 %v2317, %v2317
      %v2326 = vpack.c.bf16 %v2318, %v2318
      %v2327 = vpack.c.bf16 %v2319, %v2319
      %v2328 = vpack.c.bf16 %v2320, %v2320
      %v2329 = vpack.c.bf16 %v2321, %v2321
      %v2330 = vpack.c.bf16 %v2322, %v2322
      %v2331 = vpack.c.bf16 %v2323, %v2323
      %v2332 = vpack.c.bf16 %v2324, %v2324
      %2333 = vrot.lane.b32.xlu0 %v971, 96
      %v2334 = vpop.permute.xlu0 %2333
      %v2336 = vsel %vm1359, %v2325, 0
      %v2339 = vsel %vm1459, %v2334, 0
      %2341 = vmatprep.subr.bf16.mxu0 0
      %2342 = vmatpush1.bf16.msra.mxu0 0
      %2343 = vmatprep.subr.bf16.mxu0 0
      %2344 = vmatpush1.bf16.msra.mxu0 0
      %2345 = vmatprep.subr.bf16.mxu0 0
      %2346 = vmatpush1.bf16.msra.mxu0 0
      %2347 = vmatprep.subr.bf16.mxu0 0
      %2348 = vmatpush1.bf16.msra.mxu0 0
      %2349 = vmatprep.subr.bf16.mxu0 0
      %2350 = vmatpush1.bf16.msra.mxu0 0
      %2351 = vmatprep.subr.bf16.mxu0 0
      %2352 = vmatpush1.bf16.msra.mxu0 0
      %2353 = vmatprep.subr.bf16.mxu0 0
      %2354 = vmatpush1.bf16.msra.mxu0 0
      %2355 = vmatprep.subr.bf16.mxu0 0
      %2356 = vmatpush1.bf16.msra.mxu0 %v2339
      %2357 = vmatprep.subr.bf16.mxu0 0
      %2358 = vmatpush2.bf16.msra.mxu0 0
      %2359 = vmatprep.subr.bf16.mxu0 0
      %2360 = vmatpush2.bf16.msra.mxu0 0
      %2361 = vmatprep.subr.bf16.mxu0 0
      %2362 = vmatpush2.bf16.msra.mxu0 0
      %2363 = vmatprep.subr.bf16.mxu0 0
      %2364 = vmatpush2.bf16.msra.mxu0 0
      %2365 = vmatprep.subr.bf16.mxu0 0
      %2366 = vmatpush2.bf16.msra.mxu0 0
      %2367 = vmatprep.subr.bf16.mxu0 0
      %2368 = vmatpush2.bf16.msra.mxu0 0
      %2369 = vmatprep.subr.bf16.mxu0 0
      %2370 = vmatpush2.bf16.msra.mxu0 0
      %2371 = vmatprep.subr.bf16.mxu0 0
      %2372 = vmatpush2.bf16.msra.mxu0 0
      %2373 = vmatprep.mubr.bf16.mxu0 0
      %2374 = vmatmul.mubr.bf16.gmra.mxu0 %v2336
      %v2375 = vpop.f32.mrf.mxu0
      %v2376 = vadd.f32 0.0, %v2375
      %v2377 = vpop.f32.mrf.mxu0
      %v2378 = vpop.f32.mrf.mxu0
      %v2379 = vpop.f32.mrf.mxu0
      %2380 = vdwg.mxu0
      %2381 = vrot.lane.b32.xlu0 %v972, 96
      %v2382 = vpop.permute.xlu0 %2381
      %v2384 = vsel %vm1359, %v2326, 0
      %v2387 = vsel %vm1459, %v2382, 0
      %2389 = vmatprep.subr.bf16.mxu0 0
      %2390 = vmatpush1.bf16.msra.mxu0 0
      %2391 = vmatprep.subr.bf16.mxu0 0
      %2392 = vmatpush1.bf16.msra.mxu0 0
      %2393 = vmatprep.subr.bf16.mxu0 0
      %2394 = vmatpush1.bf16.msra.mxu0 0
      %2395 = vmatprep.subr.bf16.mxu0 0
      %2396 = vmatpush1.bf16.msra.mxu0 0
      %2397 = vmatprep.subr.bf16.mxu0 0
      %2398 = vmatpush1.bf16.msra.mxu0 0
      %2399 = vmatprep.subr.bf16.mxu0 0
      %2400 = vmatpush1.bf16.msra.mxu0 0
      %2401 = vmatprep.subr.bf16.mxu0 0
      %2402 = vmatpush1.bf16.msra.mxu0 0
      %2403 = vmatprep.subr.bf16.mxu0 0
      %2404 = vmatpush1.bf16.msra.mxu0 %v2387
      %2405 = vmatprep.subr.bf16.mxu0 0
      %2406 = vmatpush2.bf16.msra.mxu0 0
      %2407 = vmatprep.subr.bf16.mxu0 0
      %2408 = vmatpush2.bf16.msra.mxu0 0
      %2409 = vmatprep.subr.bf16.mxu0 0
      %2410 = vmatpush2.bf16.msra.mxu0 0
      %2411 = vmatprep.subr.bf16.mxu0 0
      %2412 = vmatpush2.bf16.msra.mxu0 0
      %2413 = vmatprep.subr.bf16.mxu0 0
      %2414 = vmatpush2.bf16.msra.mxu0 0
      %2415 = vmatprep.subr.bf16.mxu0 0
      %2416 = vmatpush2.bf16.msra.mxu0 0
      %2417 = vmatprep.subr.bf16.mxu0 0
      %2418 = vmatpush2.bf16.msra.mxu0 0
      %2419 = vmatprep.subr.bf16.mxu0 0
      %2420 = vmatpush2.bf16.msra.mxu0 0
      %2421 = vmatprep.mubr.bf16.mxu0 0
      %2422 = vmatmul.mubr.bf16.gmra.mxu0 %v2384
      %v2423 = vpop.f32.mrf.mxu0
      %v2424 = vadd.f32 0.0, %v2423
      %v2425 = vpop.f32.mrf.mxu0
      %v2426 = vpop.f32.mrf.mxu0
      %v2427 = vpop.f32.mrf.mxu0
      %2428 = vdwg.mxu0
      %2429 = vrot.lane.b32.xlu0 %v973, 96
      %v2430 = vpop.permute.xlu0 %2429
      %v2432 = vsel %vm1359, %v2327, 0
      %v2435 = vsel %vm1459, %v2430, 0
      %2437 = vmatprep.subr.bf16.mxu0 0
      %2438 = vmatpush1.bf16.msra.mxu0 0
      %2439 = vmatprep.subr.bf16.mxu0 0
      %2440 = vmatpush1.bf16.msra.mxu0 0
      %2441 = vmatprep.subr.bf16.mxu0 0
      %2442 = vmatpush1.bf16.msra.mxu0 0
      %2443 = vmatprep.subr.bf16.mxu0 0
      %2444 = vmatpush1.bf16.msra.mxu0 0
      %2445 = vmatprep.subr.bf16.mxu0 0
      %2446 = vmatpush1.bf16.msra.mxu0 0
      %2447 = vmatprep.subr.bf16.mxu0 0
      %2448 = vmatpush1.bf16.msra.mxu0 0
      %2449 = vmatprep.subr.bf16.mxu0 0
      %2450 = vmatpush1.bf16.msra.mxu0 0
      %2451 = vmatprep.subr.bf16.mxu0 0
      %2452 = vmatpush1.bf16.msra.mxu0 %v2435
      %2453 = vmatprep.subr.bf16.mxu0 0
      %2454 = vmatpush2.bf16.msra.mxu0 0
      %2455 = vmatprep.subr.bf16.mxu0 0
      %2456 = vmatpush2.bf16.msra.mxu0 0
      %2457 = vmatprep.subr.bf16.mxu0 0
      %2458 = vmatpush2.bf16.msra.mxu0 0
      %2459 = vmatprep.subr.bf16.mxu0 0
      %2460 = vmatpush2.bf16.msra.mxu0 0
      %2461 = vmatprep.subr.bf16.mxu0 0
      %2462 = vmatpush2.bf16.msra.mxu0 0
      %2463 = vmatprep.subr.bf16.mxu0 0
      %2464 = vmatpush2.bf16.msra.mxu0 0
      %2465 = vmatprep.subr.bf16.mxu0 0
      %2466 = vmatpush2.bf16.msra.mxu0 0
      %2467 = vmatprep.subr.bf16.mxu0 0
      %2468 = vmatpush2.bf16.msra.mxu0 0
      %2469 = vmatprep.mubr.bf16.mxu0 0
      %2470 = vmatmul.mubr.bf16.gmra.mxu0 %v2432
      %v2471 = vpop.f32.mrf.mxu0
      %v2472 = vadd.f32 0.0, %v2471
      %v2473 = vpop.f32.mrf.mxu0
      %v2474 = vpop.f32.mrf.mxu0
      %v2475 = vpop.f32.mrf.mxu0
      %2476 = vdwg.mxu0
      %2477 = vrot.lane.b32.xlu0 %v974, 96
      %v2478 = vpop.permute.xlu0 %2477
      %v2480 = vsel %vm1359, %v2328, 0
      %v2483 = vsel %vm1459, %v2478, 0
      %2485 = vmatprep.subr.bf16.mxu0 0
      %2486 = vmatpush1.bf16.msra.mxu0 0
      %2487 = vmatprep.subr.bf16.mxu0 0
      %2488 = vmatpush1.bf16.msra.mxu0 0
      %2489 = vmatprep.subr.bf16.mxu0 0
      %2490 = vmatpush1.bf16.msra.mxu0 0
      %2491 = vmatprep.subr.bf16.mxu0 0
      %2492 = vmatpush1.bf16.msra.mxu0 0
      %2493 = vmatprep.subr.bf16.mxu0 0
      %2494 = vmatpush1.bf16.msra.mxu0 0
      %2495 = vmatprep.subr.bf16.mxu0 0
      %2496 = vmatpush1.bf16.msra.mxu0 0
      %2497 = vmatprep.subr.bf16.mxu0 0
      %2498 = vmatpush1.bf16.msra.mxu0 0
      %2499 = vmatprep.subr.bf16.mxu0 0
      %2500 = vmatpush1.bf16.msra.mxu0 %v2483
      %2501 = vmatprep.subr.bf16.mxu0 0
      %2502 = vmatpush2.bf16.msra.mxu0 0
      %2503 = vmatprep.subr.bf16.mxu0 0
      %2504 = vmatpush2.bf16.msra.mxu0 0
      %2505 = vmatprep.subr.bf16.mxu0 0
      %2506 = vmatpush2.bf16.msra.mxu0 0
      %2507 = vmatprep.subr.bf16.mxu0 0
      %2508 = vmatpush2.bf16.msra.mxu0 0
      %2509 = vmatprep.subr.bf16.mxu0 0
      %2510 = vmatpush2.bf16.msra.mxu0 0
      %2511 = vmatprep.subr.bf16.mxu0 0
      %2512 = vmatpush2.bf16.msra.mxu0 0
      %2513 = vmatprep.subr.bf16.mxu0 0
      %2514 = vmatpush2.bf16.msra.mxu0 0
      %2515 = vmatprep.subr.bf16.mxu0 0
      %2516 = vmatpush2.bf16.msra.mxu0 0
      %2517 = vmatprep.mubr.bf16.mxu0 0
      %2518 = vmatmul.mubr.bf16.gmra.mxu0 %v2480
      %v2519 = vpop.f32.mrf.mxu0
      %v2520 = vadd.f32 0.0, %v2519
      %v2521 = vpop.f32.mrf.mxu0
      %v2522 = vpop.f32.mrf.mxu0
      %v2523 = vpop.f32.mrf.mxu0
      %2524 = vdwg.mxu0
      %2525 = vrot.lane.b32.xlu0 %v975, 96
      %v2526 = vpop.permute.xlu0 %2525
      %v2528 = vsel %vm1359, %v2329, 0
      %v2531 = vsel %vm1459, %v2526, 0
      %2533 = vmatprep.subr.bf16.mxu0 0
      %2534 = vmatpush1.bf16.msra.mxu0 0
      %2535 = vmatprep.subr.bf16.mxu0 0
      %2536 = vmatpush1.bf16.msra.mxu0 0
      %2537 = vmatprep.subr.bf16.mxu0 0
      %2538 = vmatpush1.bf16.msra.mxu0 0
      %2539 = vmatprep.subr.bf16.mxu0 0
      %2540 = vmatpush1.bf16.msra.mxu0 0
      %2541 = vmatprep.subr.bf16.mxu0 0
      %2542 = vmatpush1.bf16.msra.mxu0 0
      %2543 = vmatprep.subr.bf16.mxu0 0
      %2544 = vmatpush1.bf16.msra.mxu0 0
      %2545 = vmatprep.subr.bf16.mxu0 0
      %2546 = vmatpush1.bf16.msra.mxu0 0
      %2547 = vmatprep.subr.bf16.mxu0 0
      %2548 = vmatpush1.bf16.msra.mxu0 %v2531
      %2549 = vmatprep.subr.bf16.mxu0 0
      %2550 = vmatpush2.bf16.msra.mxu0 0
      %2551 = vmatprep.subr.bf16.mxu0 0
      %2552 = vmatpush2.bf16.msra.mxu0 0
      %2553 = vmatprep.subr.bf16.mxu0 0
      %2554 = vmatpush2.bf16.msra.mxu0 0
      %2555 = vmatprep.subr.bf16.mxu0 0
      %2556 = vmatpush2.bf16.msra.mxu0 0
      %2557 = vmatprep.subr.bf16.mxu0 0
      %2558 = vmatpush2.bf16.msra.mxu0 0
      %2559 = vmatprep.subr.bf16.mxu0 0
      %2560 = vmatpush2.bf16.msra.mxu0 0
      %2561 = vmatprep.subr.bf16.mxu0 0
      %2562 = vmatpush2.bf16.msra.mxu0 0
      %2563 = vmatprep.subr.bf16.mxu0 0
      %2564 = vmatpush2.bf16.msra.mxu0 0
      %2565 = vmatprep.mubr.bf16.mxu0 0
      %2566 = vmatmul.mubr.bf16.gmra.mxu0 %v2528
      %v2567 = vpop.f32.mrf.mxu0
      %v2568 = vadd.f32 0.0, %v2567
      %v2569 = vpop.f32.mrf.mxu0
      %v2570 = vpop.f32.mrf.mxu0
      %v2571 = vpop.f32.mrf.mxu0
      %2572 = vdwg.mxu0
      %2573 = vrot.lane.b32.xlu0 %v976, 96
      %v2574 = vpop.permute.xlu0 %2573
      %v2576 = vsel %vm1359, %v2330, 0
      %v2579 = vsel %vm1459, %v2574, 0
      %2581 = vmatprep.subr.bf16.mxu0 0
      %2582 = vmatpush1.bf16.msra.mxu0 0
      %2583 = vmatprep.subr.bf16.mxu0 0
      %2584 = vmatpush1.bf16.msra.mxu0 0
      %2585 = vmatprep.subr.bf16.mxu0 0
      %2586 = vmatpush1.bf16.msra.mxu0 0
      %2587 = vmatprep.subr.bf16.mxu0 0
      %2588 = vmatpush1.bf16.msra.mxu0 0
      %2589 = vmatprep.subr.bf16.mxu0 0
      %2590 = vmatpush1.bf16.msra.mxu0 0
      %2591 = vmatprep.subr.bf16.mxu0 0
      %2592 = vmatpush1.bf16.msra.mxu0 0
      %2593 = vmatprep.subr.bf16.mxu0 0
      %2594 = vmatpush1.bf16.msra.mxu0 0
      %2595 = vmatprep.subr.bf16.mxu0 0
      %2596 = vmatpush1.bf16.msra.mxu0 %v2579
      %2597 = vmatprep.subr.bf16.mxu0 0
      %2598 = vmatpush2.bf16.msra.mxu0 0
      %2599 = vmatprep.subr.bf16.mxu0 0
      %2600 = vmatpush2.bf16.msra.mxu0 0
      %2601 = vmatprep.subr.bf16.mxu0 0
      %2602 = vmatpush2.bf16.msra.mxu0 0
      %2603 = vmatprep.subr.bf16.mxu0 0
      %2604 = vmatpush2.bf16.msra.mxu0 0
      %2605 = vmatprep.subr.bf16.mxu0 0
      %2606 = vmatpush2.bf16.msra.mxu0 0
      %2607 = vmatprep.subr.bf16.mxu0 0
      %2608 = vmatpush2.bf16.msra.mxu0 0
      %2609 = vmatprep.subr.bf16.mxu0 0
      %2610 = vmatpush2.bf16.msra.mxu0 0
      %2611 = vmatprep.subr.bf16.mxu0 0
      %2612 = vmatpush2.bf16.msra.mxu0 0
      %2613 = vmatprep.mubr.bf16.mxu0 0
      %2614 = vmatmul.mubr.bf16.gmra.mxu0 %v2576
      %v2615 = vpop.f32.mrf.mxu0
      %v2616 = vadd.f32 0.0, %v2615
      %v2617 = vpop.f32.mrf.mxu0
      %v2618 = vpop.f32.mrf.mxu0
      %v2619 = vpop.f32.mrf.mxu0
      %2620 = vdwg.mxu0
      %2621 = vrot.lane.b32.xlu0 %v977, 96
      %v2622 = vpop.permute.xlu0 %2621
      %v2624 = vsel %vm1359, %v2331, 0
      %v2627 = vsel %vm1459, %v2622, 0
      %2629 = vmatprep.subr.bf16.mxu0 0
      %2630 = vmatpush1.bf16.msra.mxu0 0
      %2631 = vmatprep.subr.bf16.mxu0 0
      %2632 = vmatpush1.bf16.msra.mxu0 0
      %2633 = vmatprep.subr.bf16.mxu0 0
      %2634 = vmatpush1.bf16.msra.mxu0 0
      %2635 = vmatprep.subr.bf16.mxu0 0
      %2636 = vmatpush1.bf16.msra.mxu0 0
      %2637 = vmatprep.subr.bf16.mxu0 0
      %2638 = vmatpush1.bf16.msra.mxu0 0
      %2639 = vmatprep.subr.bf16.mxu0 0
      %2640 = vmatpush1.bf16.msra.mxu0 0
      %2641 = vmatprep.subr.bf16.mxu0 0
      %2642 = vmatpush1.bf16.msra.mxu0 0
      %2643 = vmatprep.subr.bf16.mxu0 0
      %2644 = vmatpush1.bf16.msra.mxu0 %v2627
      %2645 = vmatprep.subr.bf16.mxu0 0
      %2646 = vmatpush2.bf16.msra.mxu0 0
      %2647 = vmatprep.subr.bf16.mxu0 0
      %2648 = vmatpush2.bf16.msra.mxu0 0
      %2649 = vmatprep.subr.bf16.mxu0 0
      %2650 = vmatpush2.bf16.msra.mxu0 0
      %2651 = vmatprep.subr.bf16.mxu0 0
      %2652 = vmatpush2.bf16.msra.mxu0 0
      %2653 = vmatprep.subr.bf16.mxu0 0
      %2654 = vmatpush2.bf16.msra.mxu0 0
      %2655 = vmatprep.subr.bf16.mxu0 0
      %2656 = vmatpush2.bf16.msra.mxu0 0
      %2657 = vmatprep.subr.bf16.mxu0 0
      %2658 = vmatpush2.bf16.msra.mxu0 0
      %2659 = vmatprep.subr.bf16.mxu0 0
      %2660 = vmatpush2.bf16.msra.mxu0 0
      %2661 = vmatprep.mubr.bf16.mxu0 0
      %2662 = vmatmul.mubr.bf16.gmra.mxu0 %v2624
      %v2663 = vpop.f32.mrf.mxu0
      %v2664 = vadd.f32 0.0, %v2663
      %v2665 = vpop.f32.mrf.mxu0
      %v2666 = vpop.f32.mrf.mxu0
      %v2667 = vpop.f32.mrf.mxu0
      %2668 = vdwg.mxu0
      %2669 = vrot.lane.b32.xlu0 %v978, 96
      %v2670 = vpop.permute.xlu0 %2669
      %v2672 = vsel %vm1359, %v2332, 0
      %v2675 = vsel %vm1459, %v2670, 0
      %2677 = vmatprep.subr.bf16.mxu0 0
      %2678 = vmatpush1.bf16.msra.mxu0 0
      %2679 = vmatprep.subr.bf16.mxu0 0
      %2680 = vmatpush1.bf16.msra.mxu0 0
      %2681 = vmatprep.subr.bf16.mxu0 0
      %2682 = vmatpush1.bf16.msra.mxu0 0
      %2683 = vmatprep.subr.bf16.mxu0 0
      %2684 = vmatpush1.bf16.msra.mxu0 0
      %2685 = vmatprep.subr.bf16.mxu0 0
      %2686 = vmatpush1.bf16.msra.mxu0 0
      %2687 = vmatprep.subr.bf16.mxu0 0
      %2688 = vmatpush1.bf16.msra.mxu0 0
      %2689 = vmatprep.subr.bf16.mxu0 0
      %2690 = vmatpush1.bf16.msra.mxu0 0
      %2691 = vmatprep.subr.bf16.mxu0 0
      %2692 = vmatpush1.bf16.msra.mxu0 %v2675
      %2693 = vmatprep.subr.bf16.mxu0 0
      %2694 = vmatpush2.bf16.msra.mxu0 0
      %2695 = vmatprep.subr.bf16.mxu0 0
      %2696 = vmatpush2.bf16.msra.mxu0 0
      %2697 = vmatprep.subr.bf16.mxu0 0
      %2698 = vmatpush2.bf16.msra.mxu0 0
      %2699 = vmatprep.subr.bf16.mxu0 0
      %2700 = vmatpush2.bf16.msra.mxu0 0
      %2701 = vmatprep.subr.bf16.mxu0 0
      %2702 = vmatpush2.bf16.msra.mxu0 0
      %2703 = vmatprep.subr.bf16.mxu0 0
      %2704 = vmatpush2.bf16.msra.mxu0 0
      %2705 = vmatprep.subr.bf16.mxu0 0
      %2706 = vmatpush2.bf16.msra.mxu0 0
      %2707 = vmatprep.subr.bf16.mxu0 0
      %2708 = vmatpush2.bf16.msra.mxu0 0
      %2709 = vmatprep.mubr.bf16.mxu0 0
      %2710 = vmatmul.mubr.bf16.gmra.mxu0 %v2672
      %v2711 = vpop.f32.mrf.mxu0
      %v2712 = vadd.f32 0.0, %v2711
      %v2713 = vpop.f32.mrf.mxu0
      %v2714 = vpop.f32.mrf.mxu0
      %v2715 = vpop.f32.mrf.mxu0
      %2716 = vdwg.mxu0
      %v2717 = vpack.c.bf16 %v2424, %v2376
      %v2718 = vpack.c.bf16 %v2520, %v2472
      %v2719 = vpack.c.bf16 %v2616, %v2568
      %v2720 = vpack.c.bf16 %v2712, %v2664
      %v2725 = vunpack.c.l.b16 %v907
      %v2726 = vunpack.c.l.b16 %v908
      %v2727 = vunpack.c.l.b16 %v909
      %v2728 = vunpack.c.l.b16 %v910
      %v2729 = vpack.c.b16 %v2726, %v2725
      %v2730 = vpack.c.b16 %v2728, %v2727
      %v2734 = vsel %vm979, %v2717, 0
      %v2737 = vsel %vm979, %v2718, 0
      %v2740 = vsel %vm979, %v2719, 0
      %v2743 = vsel %vm979, %v2720, 0
      %2745 = vmatprep.subr.bf16.mxu0 0
      %2746 = vmatpush1.bf16.msra.mxu0 0
      %2747 = vmatprep.subr.bf16.mxu0 0
      %2748 = vmatpush1.bf16.msra.mxu0 0
      %2749 = vmatprep.subr.bf16.mxu0 0
      %2750 = vmatpush1.bf16.msra.mxu0 0
      %2751 = vmatprep.subr.bf16.mxu0 0
      %2752 = vmatpush1.bf16.msra.mxu0 0
      %2753 = vmatprep.subr.bf16.mxu0 0
      %2754 = vmatpush1.bf16.msra.mxu0 0
      %2755 = vmatprep.subr.bf16.mxu0 0
      %2756 = vmatpush1.bf16.msra.mxu0 0
      %2757 = vmatprep.subr.bf16.mxu0 0
      %2758 = vmatpush1.bf16.msra.mxu0 %v2730
      %2759 = vmatprep.subr.bf16.mxu0 0
      %2760 = vmatpush1.bf16.msra.mxu0 %v2729
      %2761 = vmatprep.subr.bf16.mxu0 0
      %2762 = vmatpush2.bf16.msra.mxu0 0
      %2763 = vmatprep.subr.bf16.mxu0 0
      %2764 = vmatpush2.bf16.msra.mxu0 0
      %2765 = vmatprep.subr.bf16.mxu0 0
      %2766 = vmatpush2.bf16.msra.mxu0 0
      %2767 = vmatprep.subr.bf16.mxu0 0
      %2768 = vmatpush2.bf16.msra.mxu0 0
      %2769 = vmatprep.subr.bf16.mxu0 0
      %2770 = vmatpush2.bf16.msra.mxu0 0
      %2771 = vmatprep.subr.bf16.mxu0 0
      %2772 = vmatpush2.bf16.msra.mxu0 0
      %2773 = vmatprep.subr.bf16.mxu0 0
      %2774 = vmatpush2.bf16.msra.mxu0 0
      %2775 = vmatprep.subr.bf16.mxu0 0
      %2776 = vmatpush2.bf16.msra.mxu0 0
      %2777 = vmatprep.mubr.bf16.mxu0 0
      %2778 = vmatmul.mubr.bf16.gmra.mxu0 %v2734
      %v2779 = vpop.f32.mrf.mxu0
      %v2780 = vadd.f32 0.0, %v2779
      %v2781 = vpop.f32.mrf.mxu0
      %v2782 = vpop.f32.mrf.mxu0
      %v2783 = vadd.f32 0.0, %v2782
      %v2784 = vpop.f32.mrf.mxu0
      %2785 = vmatprep.mubr.bf16.mxu0 0
      %2786 = vmatmul.mubr.bf16.gmra.mxu0 %v2737
      %v2787 = vpop.f32.mrf.mxu0
      %v2788 = vadd.f32 0.0, %v2787
      %v2789 = vpop.f32.mrf.mxu0
      %v2790 = vpop.f32.mrf.mxu0
      %v2791 = vadd.f32 0.0, %v2790
      %v2792 = vpop.f32.mrf.mxu0
      %2793 = vmatprep.mubr.bf16.mxu0 0
      %2794 = vmatmul.mubr.bf16.gmra.mxu0 %v2740
      %v2795 = vpop.f32.mrf.mxu0
      %v2796 = vadd.f32 0.0, %v2795
      %v2797 = vpop.f32.mrf.mxu0
      %v2798 = vpop.f32.mrf.mxu0
      %v2799 = vadd.f32 0.0, %v2798
      %v2800 = vpop.f32.mrf.mxu0
      %2801 = vmatprep.mubr.bf16.mxu0 0
      %2802 = vmatmul.mubr.bf16.gmra.mxu0 %v2743
      %v2803 = vpop.f32.mrf.mxu0
      %v2804 = vadd.f32 0.0, %v2803
      %v2805 = vpop.f32.mrf.mxu0
      %v2806 = vpop.f32.mrf.mxu0
      %v2807 = vadd.f32 0.0, %v2806
      %v2808 = vpop.f32.mrf.mxu0
      %2809 = vdwg.mxu0
      %v2814 = vunpack.c.l.b16 %v903
      %v2815 = vunpack.c.l.b16 %v904
      %v2816 = vunpack.c.l.b16 %v905
      %v2817 = vunpack.c.l.b16 %v906
      %v2818 = vpack.c.b16 %v2815, %v2814
      %v2819 = vpack.c.b16 %v2817, %v2816
      %v2823 = vsel %vm979, %v1825, 0
      %v2826 = vsel %vm979, %v1826, 0
      %v2829 = vsel %vm979, %v1827, 0
      %v2832 = vsel %vm979, %v1828, 0
      %2834 = vmatprep.subr.bf16.mxu0 0
      %2835 = vmatpush1.bf16.msra.mxu0 0
      %2836 = vmatprep.subr.bf16.mxu0 0
      %2837 = vmatpush1.bf16.msra.mxu0 0
      %2838 = vmatprep.subr.bf16.mxu0 0
      %2839 = vmatpush1.bf16.msra.mxu0 0
      %2840 = vmatprep.subr.bf16.mxu0 0
      %2841 = vmatpush1.bf16.msra.mxu0 0
      %2842 = vmatprep.subr.bf16.mxu0 0
      %2843 = vmatpush1.bf16.msra.mxu0 0
      %2844 = vmatprep.subr.bf16.mxu0 0
      %2845 = vmatpush1.bf16.msra.mxu0 0
      %2846 = vmatprep.subr.bf16.mxu0 0
      %2847 = vmatpush1.bf16.msra.mxu0 %v2819
      %2848 = vmatprep.subr.bf16.mxu0 0
      %2849 = vmatpush1.bf16.msra.mxu0 %v2818
      %2850 = vmatprep.subr.bf16.mxu0 0
      %2851 = vmatpush2.bf16.msra.mxu0 0
      %2852 = vmatprep.subr.bf16.mxu0 0
      %2853 = vmatpush2.bf16.msra.mxu0 0
      %2854 = vmatprep.subr.bf16.mxu0 0
      %2855 = vmatpush2.bf16.msra.mxu0 0
      %2856 = vmatprep.subr.bf16.mxu0 0
      %2857 = vmatpush2.bf16.msra.mxu0 0
      %2858 = vmatprep.subr.bf16.mxu0 0
      %2859 = vmatpush2.bf16.msra.mxu0 0
      %2860 = vmatprep.subr.bf16.mxu0 0
      %2861 = vmatpush2.bf16.msra.mxu0 0
      %2862 = vmatprep.subr.bf16.mxu0 0
      %2863 = vmatpush2.bf16.msra.mxu0 0
      %2864 = vmatprep.subr.bf16.mxu0 0
      %2865 = vmatpush2.bf16.msra.mxu0 0
      %2866 = vmatprep.mubr.bf16.mxu0 0
      %2867 = vmatmul.mubr.bf16.gmra.mxu0 %v2823
      %v2868 = vpop.f32.mrf.mxu0
      %v2869 = vadd.f32 %v2780, %v2868
      %v2870 = vpop.f32.mrf.mxu0
      %v2871 = vpop.f32.mrf.mxu0
      %v2872 = vadd.f32 %v2783, %v2871
      %v2873 = vpop.f32.mrf.mxu0
      %2874 = vmatprep.mubr.bf16.mxu0 0
      %2875 = vmatmul.mubr.bf16.gmra.mxu0 %v2826
      %v2876 = vpop.f32.mrf.mxu0
      %v2877 = vadd.f32 %v2788, %v2876
      %v2878 = vpop.f32.mrf.mxu0
      %v2879 = vpop.f32.mrf.mxu0
      %v2880 = vadd.f32 %v2791, %v2879
      %v2881 = vpop.f32.mrf.mxu0
      %2882 = vmatprep.mubr.bf16.mxu0 0
      %2883 = vmatmul.mubr.bf16.gmra.mxu0 %v2829
      %v2884 = vpop.f32.mrf.mxu0
      %v2885 = vadd.f32 %v2796, %v2884
      %v2886 = vpop.f32.mrf.mxu0
      %v2887 = vpop.f32.mrf.mxu0
      %v2888 = vadd.f32 %v2799, %v2887
      %v2889 = vpop.f32.mrf.mxu0
      %2890 = vmatprep.mubr.bf16.mxu0 0
      %2891 = vmatmul.mubr.bf16.gmra.mxu0 %v2832
      %v2892 = vpop.f32.mrf.mxu0
      %v2893 = vadd.f32 %v2804, %v2892
      %v2894 = vpop.f32.mrf.mxu0
      %v2895 = vpop.f32.mrf.mxu0
      %v2896 = vadd.f32 %v2807, %v2895
      %v2897 = vpop.f32.mrf.mxu0
      %2898 = vdwg.mxu0
      %2899 = vrot.lane.b32.xlu0 %v931, 64
      %v2900 = vpop.permute.xlu0 %2899
      %2901 = vrot.lane.b32.xlu0 %v951, 64
      %v2902 = vpop.permute.xlu0 %2901
      %v2904 = vsel %vm979, %v2900, 0
      %v2907 = vsel %vm979, %v2902, 0
      %2909 = vmatprep.subr.bf16.mxu0 0
      %2910 = vmatpush1.bf16.xpose.msra.mxu0 0
      %2911 = vmatprep.subr.bf16.mxu0 0
      %2912 = vmatpush1.bf16.xpose.msra.mxu0 0
      %2913 = vmatprep.subr.bf16.mxu0 0
      %2914 = vmatpush1.bf16.xpose.msra.mxu0 0
      %2915 = vmatprep.subr.bf16.mxu0 0
      %2916 = vmatpush1.bf16.xpose.msra.mxu0 0
      %2917 = vmatprep.subr.bf16.mxu0 0
      %2918 = vmatpush1.bf16.xpose.msra.mxu0 0
      %2919 = vmatprep.subr.bf16.mxu0 0
      %2920 = vmatpush1.bf16.xpose.msra.mxu0 0
      %2921 = vmatprep.subr.bf16.mxu0 0
      %2922 = vmatpush1.bf16.xpose.msra.mxu0 0
      %2923 = vmatprep.subr.bf16.mxu0 0
      %2924 = vmatpush1.bf16.xpose.msra.mxu0 %v2907
      %2925 = vmatprep.subr.bf16.mxu0 0
      %2926 = vmatpush2.bf16.xpose.msra.mxu0 0
      %2927 = vmatprep.subr.bf16.mxu0 0
      %2928 = vmatpush2.bf16.xpose.msra.mxu0 0
      %2929 = vmatprep.subr.bf16.mxu0 0
      %2930 = vmatpush2.bf16.xpose.msra.mxu0 0
      %2931 = vmatprep.subr.bf16.mxu0 0
      %2932 = vmatpush2.bf16.xpose.msra.mxu0 0
      %2933 = vmatprep.subr.bf16.mxu0 0
      %2934 = vmatpush2.bf16.xpose.msra.mxu0 0
      %2935 = vmatprep.subr.bf16.mxu0 0
      %2936 = vmatpush2.bf16.xpose.msra.mxu0 0
      %2937 = vmatprep.subr.bf16.mxu0 0
      %2938 = vmatpush2.bf16.xpose.msra.mxu0 0
      %2939 = vmatprep.subr.bf16.mxu0 0
      %2940 = vmatpush2.bf16.xpose.msra.mxu0 0
      %2941 = vmatprep.mubr.bf16.mxu0 0
      %2942 = vmatmul.mubr.bf16.gmra.mxu0 %v2904
      %v2943 = vpop.f32.mrf.mxu0
      %v2944 = vadd.f32 0.0, %v2943
      %v2945 = vpop.f32.mrf.mxu0
      %v2946 = vpop.f32.mrf.mxu0
      %v2947 = vpop.f32.mrf.mxu0
      %2948 = vdwg.mxu0
      %2949 = vrot.lane.b32.xlu0 %v932, 64
      %v2950 = vpop.permute.xlu0 %2949
      %2951 = vrot.lane.b32.xlu0 %v952, 64
      %v2952 = vpop.permute.xlu0 %2951
      %v2954 = vsel %vm979, %v2950, 0
      %v2957 = vsel %vm979, %v2952, 0
      %2959 = vmatprep.subr.bf16.mxu0 0
      %2960 = vmatpush1.bf16.xpose.msra.mxu0 0
      %2961 = vmatprep.subr.bf16.mxu0 0
      %2962 = vmatpush1.bf16.xpose.msra.mxu0 0
      %2963 = vmatprep.subr.bf16.mxu0 0
      %2964 = vmatpush1.bf16.xpose.msra.mxu0 0
      %2965 = vmatprep.subr.bf16.mxu0 0
      %2966 = vmatpush1.bf16.xpose.msra.mxu0 0
      %2967 = vmatprep.subr.bf16.mxu0 0
      %2968 = vmatpush1.bf16.xpose.msra.mxu0 0
      %2969 = vmatprep.subr.bf16.mxu0 0
      %2970 = vmatpush1.bf16.xpose.msra.mxu0 0
      %2971 = vmatprep.subr.bf16.mxu0 0
      %2972 = vmatpush1.bf16.xpose.msra.mxu0 0
      %2973 = vmatprep.subr.bf16.mxu0 0
      %2974 = vmatpush1.bf16.xpose.msra.mxu0 %v2957
      %2975 = vmatprep.subr.bf16.mxu0 0
      %2976 = vmatpush2.bf16.xpose.msra.mxu0 0
      %2977 = vmatprep.subr.bf16.mxu0 0
      %2978 = vmatpush2.bf16.xpose.msra.mxu0 0
      %2979 = vmatprep.subr.bf16.mxu0 0
      %2980 = vmatpush2.bf16.xpose.msra.mxu0 0
      %2981 = vmatprep.subr.bf16.mxu0 0
      %2982 = vmatpush2.bf16.xpose.msra.mxu0 0
      %2983 = vmatprep.subr.bf16.mxu0 0
      %2984 = vmatpush2.bf16.xpose.msra.mxu0 0
      %2985 = vmatprep.subr.bf16.mxu0 0
      %2986 = vmatpush2.bf16.xpose.msra.mxu0 0
      %2987 = vmatprep.subr.bf16.mxu0 0
      %2988 = vmatpush2.bf16.xpose.msra.mxu0 0
      %2989 = vmatprep.subr.bf16.mxu0 0
      %2990 = vmatpush2.bf16.xpose.msra.mxu0 0
      %2991 = vmatprep.mubr.bf16.mxu0 0
      %2992 = vmatmul.mubr.bf16.gmra.mxu0 %v2954
      %v2993 = vpop.f32.mrf.mxu0
      %v2994 = vadd.f32 0.0, %v2993
      %v2995 = vpop.f32.mrf.mxu0
      %v2996 = vpop.f32.mrf.mxu0
      %v2997 = vpop.f32.mrf.mxu0
      %2998 = vdwg.mxu0
      %2999 = vrot.lane.b32.xlu0 %v933, 64
      %v3000 = vpop.permute.xlu0 %2999
      %3001 = vrot.lane.b32.xlu0 %v953, 64
      %v3002 = vpop.permute.xlu0 %3001
      %v3004 = vsel %vm979, %v3000, 0
      %v3007 = vsel %vm979, %v3002, 0
      %3009 = vmatprep.subr.bf16.mxu0 0
      %3010 = vmatpush1.bf16.xpose.msra.mxu0 0
      %3011 = vmatprep.subr.bf16.mxu0 0
      %3012 = vmatpush1.bf16.xpose.msra.mxu0 0
      %3013 = vmatprep.subr.bf16.mxu0 0
      %3014 = vmatpush1.bf16.xpose.msra.mxu0 0
      %3015 = vmatprep.subr.bf16.mxu0 0
      %3016 = vmatpush1.bf16.xpose.msra.mxu0 0
      %3017 = vmatprep.subr.bf16.mxu0 0
      %3018 = vmatpush1.bf16.xpose.msra.mxu0 0
      %3019 = vmatprep.subr.bf16.mxu0 0
      %3020 = vmatpush1.bf16.xpose.msra.mxu0 0
      %3021 = vmatprep.subr.bf16.mxu0 0
      %3022 = vmatpush1.bf16.xpose.msra.mxu0 0
      %3023 = vmatprep.subr.bf16.mxu0 0
      %3024 = vmatpush1.bf16.xpose.msra.mxu0 %v3007
      %3025 = vmatprep.subr.bf16.mxu0 0
      %3026 = vmatpush2.bf16.xpose.msra.mxu0 0
      %3027 = vmatprep.subr.bf16.mxu0 0
      %3028 = vmatpush2.bf16.xpose.msra.mxu0 0
      %3029 = vmatprep.subr.bf16.mxu0 0
      %3030 = vmatpush2.bf16.xpose.msra.mxu0 0
      %3031 = vmatprep.subr.bf16.mxu0 0
      %3032 = vmatpush2.bf16.xpose.msra.mxu0 0
      %3033 = vmatprep.subr.bf16.mxu0 0
      %3034 = vmatpush2.bf16.xpose.msra.mxu0 0
      %3035 = vmatprep.subr.bf16.mxu0 0
      %3036 = vmatpush2.bf16.xpose.msra.mxu0 0
      %3037 = vmatprep.subr.bf16.mxu0 0
      %3038 = vmatpush2.bf16.xpose.msra.mxu0 0
      %3039 = vmatprep.subr.bf16.mxu0 0
      %3040 = vmatpush2.bf16.xpose.msra.mxu0 0
      %3041 = vmatprep.mubr.bf16.mxu0 0
      %3042 = vmatmul.mubr.bf16.gmra.mxu0 %v3004
      %v3043 = vpop.f32.mrf.mxu0
      %v3044 = vadd.f32 0.0, %v3043
      %v3045 = vpop.f32.mrf.mxu0
      %v3046 = vpop.f32.mrf.mxu0
      %v3047 = vpop.f32.mrf.mxu0
      %3048 = vdwg.mxu0
      %3049 = vrot.lane.b32.xlu0 %v934, 64
      %v3050 = vpop.permute.xlu0 %3049
      %3051 = vrot.lane.b32.xlu0 %v954, 64
      %v3052 = vpop.permute.xlu0 %3051
      %v3054 = vsel %vm979, %v3050, 0
      %v3057 = vsel %vm979, %v3052, 0
      %3059 = vmatprep.subr.bf16.mxu0 0
      %3060 = vmatpush1.bf16.xpose.msra.mxu0 0
      %3061 = vmatprep.subr.bf16.mxu0 0
      %3062 = vmatpush1.bf16.xpose.msra.mxu0 0
      %3063 = vmatprep.subr.bf16.mxu0 0
      %3064 = vmatpush1.bf16.xpose.msra.mxu0 0
      %3065 = vmatprep.subr.bf16.mxu0 0
      %3066 = vmatpush1.bf16.xpose.msra.mxu0 0
      %3067 = vmatprep.subr.bf16.mxu0 0
      %3068 = vmatpush1.bf16.xpose.msra.mxu0 0
      %3069 = vmatprep.subr.bf16.mxu0 0
      %3070 = vmatpush1.bf16.xpose.msra.mxu0 0
      %3071 = vmatprep.subr.bf16.mxu0 0
      %3072 = vmatpush1.bf16.xpose.msra.mxu0 0
      %3073 = vmatprep.subr.bf16.mxu0 0
      %3074 = vmatpush1.bf16.xpose.msra.mxu0 %v3057
      %3075 = vmatprep.subr.bf16.mxu0 0
      %3076 = vmatpush2.bf16.xpose.msra.mxu0 0
      %3077 = vmatprep.subr.bf16.mxu0 0
      %3078 = vmatpush2.bf16.xpose.msra.mxu0 0
      %3079 = vmatprep.subr.bf16.mxu0 0
      %3080 = vmatpush2.bf16.xpose.msra.mxu0 0
      %3081 = vmatprep.subr.bf16.mxu0 0
      %3082 = vmatpush2.bf16.xpose.msra.mxu0 0
      %3083 = vmatprep.subr.bf16.mxu0 0
      %3084 = vmatpush2.bf16.xpose.msra.mxu0 0
      %3085 = vmatprep.subr.bf16.mxu0 0
      %3086 = vmatpush2.bf16.xpose.msra.mxu0 0
      %3087 = vmatprep.subr.bf16.mxu0 0
      %3088 = vmatpush2.bf16.xpose.msra.mxu0 0
      %3089 = vmatprep.subr.bf16.mxu0 0
      %3090 = vmatpush2.bf16.xpose.msra.mxu0 0
      %3091 = vmatprep.mubr.bf16.mxu0 0
      %3092 = vmatmul.mubr.bf16.gmra.mxu0 %v3054
      %v3093 = vpop.f32.mrf.mxu0
      %v3094 = vadd.f32 0.0, %v3093
      %v3095 = vpop.f32.mrf.mxu0
      %v3096 = vpop.f32.mrf.mxu0
      %v3097 = vpop.f32.mrf.mxu0
      %3098 = vdwg.mxu0
      %3099 = vrot.lane.b32.xlu0 %v935, 64
      %v3100 = vpop.permute.xlu0 %3099
      %3101 = vrot.lane.b32.xlu0 %v955, 64
      %v3102 = vpop.permute.xlu0 %3101
      %v3104 = vsel %vm979, %v3100, 0
      %v3107 = vsel %vm979, %v3102, 0
      %3109 = vmatprep.subr.bf16.mxu0 0
      %3110 = vmatpush1.bf16.xpose.msra.mxu0 0
      %3111 = vmatprep.subr.bf16.mxu0 0
      %3112 = vmatpush1.bf16.xpose.msra.mxu0 0
      %3113 = vmatprep.subr.bf16.mxu0 0
      %3114 = vmatpush1.bf16.xpose.msra.mxu0 0
      %3115 = vmatprep.subr.bf16.mxu0 0
      %3116 = vmatpush1.bf16.xpose.msra.mxu0 0
      %3117 = vmatprep.subr.bf16.mxu0 0
      %3118 = vmatpush1.bf16.xpose.msra.mxu0 0
      %3119 = vmatprep.subr.bf16.mxu0 0
      %3120 = vmatpush1.bf16.xpose.msra.mxu0 0
      %3121 = vmatprep.subr.bf16.mxu0 0
      %3122 = vmatpush1.bf16.xpose.msra.mxu0 0
      %3123 = vmatprep.subr.bf16.mxu0 0
      %3124 = vmatpush1.bf16.xpose.msra.mxu0 %v3107
      %3125 = vmatprep.subr.bf16.mxu0 0
      %3126 = vmatpush2.bf16.xpose.msra.mxu0 0
      %3127 = vmatprep.subr.bf16.mxu0 0
      %3128 = vmatpush2.bf16.xpose.msra.mxu0 0
      %3129 = vmatprep.subr.bf16.mxu0 0
      %3130 = vmatpush2.bf16.xpose.msra.mxu0 0
      %3131 = vmatprep.subr.bf16.mxu0 0
      %3132 = vmatpush2.bf16.xpose.msra.mxu0 0
      %3133 = vmatprep.subr.bf16.mxu0 0
      %3134 = vmatpush2.bf16.xpose.msra.mxu0 0
      %3135 = vmatprep.subr.bf16.mxu0 0
      %3136 = vmatpush2.bf16.xpose.msra.mxu0 0
      %3137 = vmatprep.subr.bf16.mxu0 0
      %3138 = vmatpush2.bf16.xpose.msra.mxu0 0
      %3139 = vmatprep.subr.bf16.mxu0 0
      %3140 = vmatpush2.bf16.xpose.msra.mxu0 0
      %3141 = vmatprep.mubr.bf16.mxu0 0
      %3142 = vmatmul.mubr.bf16.gmra.mxu0 %v3104
      %v3143 = vpop.f32.mrf.mxu0
      %v3144 = vadd.f32 0.0, %v3143
      %v3145 = vpop.f32.mrf.mxu0
      %v3146 = vpop.f32.mrf.mxu0
      %v3147 = vpop.f32.mrf.mxu0
      %3148 = vdwg.mxu0
      %3149 = vrot.lane.b32.xlu0 %v936, 64
      %v3150 = vpop.permute.xlu0 %3149
      %3151 = vrot.lane.b32.xlu0 %v956, 64
      %v3152 = vpop.permute.xlu0 %3151
      %v3154 = vsel %vm979, %v3150, 0
      %v3157 = vsel %vm979, %v3152, 0
      %3159 = vmatprep.subr.bf16.mxu0 0
      %3160 = vmatpush1.bf16.xpose.msra.mxu0 0
      %3161 = vmatprep.subr.bf16.mxu0 0
      %3162 = vmatpush1.bf16.xpose.msra.mxu0 0
      %3163 = vmatprep.subr.bf16.mxu0 0
      %3164 = vmatpush1.bf16.xpose.msra.mxu0 0
      %3165 = vmatprep.subr.bf16.mxu0 0
      %3166 = vmatpush1.bf16.xpose.msra.mxu0 0
      %3167 = vmatprep.subr.bf16.mxu0 0
      %3168 = vmatpush1.bf16.xpose.msra.mxu0 0
      %3169 = vmatprep.subr.bf16.mxu0 0
      %3170 = vmatpush1.bf16.xpose.msra.mxu0 0
      %3171 = vmatprep.subr.bf16.mxu0 0
      %3172 = vmatpush1.bf16.xpose.msra.mxu0 0
      %3173 = vmatprep.subr.bf16.mxu0 0
      %3174 = vmatpush1.bf16.xpose.msra.mxu0 %v3157
      %3175 = vmatprep.subr.bf16.mxu0 0
      %3176 = vmatpush2.bf16.xpose.msra.mxu0 0
      %3177 = vmatprep.subr.bf16.mxu0 0
      %3178 = vmatpush2.bf16.xpose.msra.mxu0 0
      %3179 = vmatprep.subr.bf16.mxu0 0
      %3180 = vmatpush2.bf16.xpose.msra.mxu0 0
      %3181 = vmatprep.subr.bf16.mxu0 0
      %3182 = vmatpush2.bf16.xpose.msra.mxu0 0
      %3183 = vmatprep.subr.bf16.mxu0 0
      %3184 = vmatpush2.bf16.xpose.msra.mxu0 0
      %3185 = vmatprep.subr.bf16.mxu0 0
      %3186 = vmatpush2.bf16.xpose.msra.mxu0 0
      %3187 = vmatprep.subr.bf16.mxu0 0
      %3188 = vmatpush2.bf16.xpose.msra.mxu0 0
      %3189 = vmatprep.subr.bf16.mxu0 0
      %3190 = vmatpush2.bf16.xpose.msra.mxu0 0
      %3191 = vmatprep.mubr.bf16.mxu0 0
      %3192 = vmatmul.mubr.bf16.gmra.mxu0 %v3154
      %v3193 = vpop.f32.mrf.mxu0
      %v3194 = vadd.f32 0.0, %v3193
      %v3195 = vpop.f32.mrf.mxu0
      %v3196 = vpop.f32.mrf.mxu0
      %v3197 = vpop.f32.mrf.mxu0
      %3198 = vdwg.mxu0
      %3199 = vrot.lane.b32.xlu0 %v937, 64
      %v3200 = vpop.permute.xlu0 %3199
      %3201 = vrot.lane.b32.xlu0 %v957, 64
      %v3202 = vpop.permute.xlu0 %3201
      %v3204 = vsel %vm979, %v3200, 0
      %v3207 = vsel %vm979, %v3202, 0
      %3209 = vmatprep.subr.bf16.mxu0 0
      %3210 = vmatpush1.bf16.xpose.msra.mxu0 0
      %3211 = vmatprep.subr.bf16.mxu0 0
      %3212 = vmatpush1.bf16.xpose.msra.mxu0 0
      %3213 = vmatprep.subr.bf16.mxu0 0
      %3214 = vmatpush1.bf16.xpose.msra.mxu0 0
      %3215 = vmatprep.subr.bf16.mxu0 0
      %3216 = vmatpush1.bf16.xpose.msra.mxu0 0
      %3217 = vmatprep.subr.bf16.mxu0 0
      %3218 = vmatpush1.bf16.xpose.msra.mxu0 0
      %3219 = vmatprep.subr.bf16.mxu0 0
      %3220 = vmatpush1.bf16.xpose.msra.mxu0 0
      %3221 = vmatprep.subr.bf16.mxu0 0
      %3222 = vmatpush1.bf16.xpose.msra.mxu0 0
      %3223 = vmatprep.subr.bf16.mxu0 0
      %3224 = vmatpush1.bf16.xpose.msra.mxu0 %v3207
      %3225 = vmatprep.subr.bf16.mxu0 0
      %3226 = vmatpush2.bf16.xpose.msra.mxu0 0
      %3227 = vmatprep.subr.bf16.mxu0 0
      %3228 = vmatpush2.bf16.xpose.msra.mxu0 0
      %3229 = vmatprep.subr.bf16.mxu0 0
      %3230 = vmatpush2.bf16.xpose.msra.mxu0 0
      %3231 = vmatprep.subr.bf16.mxu0 0
      %3232 = vmatpush2.bf16.xpose.msra.mxu0 0
      %3233 = vmatprep.subr.bf16.mxu0 0
      %3234 = vmatpush2.bf16.xpose.msra.mxu0 0
      %3235 = vmatprep.subr.bf16.mxu0 0
      %3236 = vmatpush2.bf16.xpose.msra.mxu0 0
      %3237 = vmatprep.subr.bf16.mxu0 0
      %3238 = vmatpush2.bf16.xpose.msra.mxu0 0
      %3239 = vmatprep.subr.bf16.mxu0 0
      %3240 = vmatpush2.bf16.xpose.msra.mxu0 0
      %3241 = vmatprep.mubr.bf16.mxu0 0
      %3242 = vmatmul.mubr.bf16.gmra.mxu0 %v3204
      %v3243 = vpop.f32.mrf.mxu0
      %v3244 = vadd.f32 0.0, %v3243
      %v3245 = vpop.f32.mrf.mxu0
      %v3246 = vpop.f32.mrf.mxu0
      %v3247 = vpop.f32.mrf.mxu0
      %3248 = vdwg.mxu0
      %3249 = vrot.lane.b32.xlu0 %v938, 64
      %v3250 = vpop.permute.xlu0 %3249
      %3251 = vrot.lane.b32.xlu0 %v958, 64
      %v3252 = vpop.permute.xlu0 %3251
      %v3254 = vsel %vm979, %v3250, 0
      %v3257 = vsel %vm979, %v3252, 0
      %3259 = vmatprep.subr.bf16.mxu0 0
      %3260 = vmatpush1.bf16.xpose.msra.mxu0 0
      %3261 = vmatprep.subr.bf16.mxu0 0
      %3262 = vmatpush1.bf16.xpose.msra.mxu0 0
      %3263 = vmatprep.subr.bf16.mxu0 0
      %3264 = vmatpush1.bf16.xpose.msra.mxu0 0
      %3265 = vmatprep.subr.bf16.mxu0 0
      %3266 = vmatpush1.bf16.xpose.msra.mxu0 0
      %3267 = vmatprep.subr.bf16.mxu0 0
      %3268 = vmatpush1.bf16.xpose.msra.mxu0 0
      %3269 = vmatprep.subr.bf16.mxu0 0
      %3270 = vmatpush1.bf16.xpose.msra.mxu0 0
      %3271 = vmatprep.subr.bf16.mxu0 0
      %3272 = vmatpush1.bf16.xpose.msra.mxu0 0
      %3273 = vmatprep.subr.bf16.mxu0 0
      %3274 = vmatpush1.bf16.xpose.msra.mxu0 %v3257
      %3275 = vmatprep.subr.bf16.mxu0 0
      %3276 = vmatpush2.bf16.xpose.msra.mxu0 0
      %3277 = vmatprep.subr.bf16.mxu0 0
      %3278 = vmatpush2.bf16.xpose.msra.mxu0 0
      %3279 = vmatprep.subr.bf16.mxu0 0
      %3280 = vmatpush2.bf16.xpose.msra.mxu0 0
      %3281 = vmatprep.subr.bf16.mxu0 0
      %3282 = vmatpush2.bf16.xpose.msra.mxu0 0
      %3283 = vmatprep.subr.bf16.mxu0 0
      %3284 = vmatpush2.bf16.xpose.msra.mxu0 0
      %3285 = vmatprep.subr.bf16.mxu0 0
      %3286 = vmatpush2.bf16.xpose.msra.mxu0 0
      %3287 = vmatprep.subr.bf16.mxu0 0
      %3288 = vmatpush2.bf16.xpose.msra.mxu0 0
      %3289 = vmatprep.subr.bf16.mxu0 0
      %3290 = vmatpush2.bf16.xpose.msra.mxu0 0
      %3291 = vmatprep.mubr.bf16.mxu0 0
      %3292 = vmatmul.mubr.bf16.gmra.mxu0 %v3254
      %v3293 = vpop.f32.mrf.mxu0
      %v3294 = vadd.f32 0.0, %v3293
      %v3295 = vpop.f32.mrf.mxu0
      %v3296 = vpop.f32.mrf.mxu0
      %v3297 = vpop.f32.mrf.mxu0
      %3298 = vdwg.mxu0
      %v3299 = vsel %vm1350, %v2944, -1e+30
      %v3300 = vsel %vm1350, %v2994, -1e+30
      %v3301 = vsel %vm1350, %v3044, -1e+30
      %v3302 = vsel %vm1350, %v3094, -1e+30
      %v3303 = vsel %vm1350, %v3144, -1e+30
      %v3304 = vsel %vm1350, %v3194, -1e+30
      %v3305 = vsel %vm1350, %v3244, -1e+30
      %v3306 = vsel %vm1350, %v3294, -1e+30
      %v3307 = vsel %vm1359, %v3299, -inf
      %3308 = vmax.xlane.f32.xlu0 %v3307
      %v3309 = vpop.xlane.xlu0 %3308
      %v3310 = vsel %vm1359, %v3300, -inf
      %3311 = vmax.xlane.f32.xlu0 %v3310
      %v3312 = vpop.xlane.xlu0 %3311
      %v3313 = vsel %vm1359, %v3301, -inf
      %3314 = vmax.xlane.f32.xlu0 %v3313
      %v3315 = vpop.xlane.xlu0 %3314
      %v3316 = vsel %vm1359, %v3302, -inf
      %3317 = vmax.xlane.f32.xlu0 %v3316
      %v3318 = vpop.xlane.xlu0 %3317
      %v3319 = vsel %vm1359, %v3303, -inf
      %3320 = vmax.xlane.f32.xlu0 %v3319
      %v3321 = vpop.xlane.xlu0 %3320
      %v3322 = vsel %vm1359, %v3304, -inf
      %3323 = vmax.xlane.f32.xlu0 %v3322
      %v3324 = vpop.xlane.xlu0 %3323
      %v3325 = vsel %vm1359, %v3305, -inf
      %3326 = vmax.xlane.f32.xlu0 %v3325
      %v3327 = vpop.xlane.xlu0 %3326
      %v3328 = vsel %vm1359, %v3306, -inf
      %3329 = vmax.xlane.f32.xlu0 %v3328
      %v3330 = vpop.xlane.xlu0 %3329
      %v3331 = vsub.f32 %v3299, %v3309
      %v3332 = vsub.f32 %v3300, %v3312
      %v3333 = vsub.f32 %v3301, %v3315
      %v3334 = vsub.f32 %v3302, %v3318
      %v3335 = vsub.f32 %v3303, %v3321
      %v3336 = vsub.f32 %v3304, %v3324
      %v3337 = vsub.f32 %v3305, %v3327
      %v3338 = vsub.f32 %v3306, %v3330
      %v3339 = vmul.f32 %v3331, 1.442695
      %v3340 = vpow.pop %v3339
      %v3341 = vmul.f32 %v3332, 1.442695
      %v3342 = vpow.pop %v3341
      %v3343 = vmul.f32 %v3333, 1.442695
      %v3344 = vpow.pop %v3343
      %v3345 = vmul.f32 %v3334, 1.442695
      %v3346 = vpow.pop %v3345
      %v3347 = vmul.f32 %v3335, 1.442695
      %v3348 = vpow.pop %v3347
      %v3349 = vmul.f32 %v3336, 1.442695
      %v3350 = vpow.pop %v3349
      %v3351 = vmul.f32 %v3337, 1.442695
      %v3352 = vpow.pop %v3351
      %v3353 = vmul.f32 %v3338, 1.442695
      %v3354 = vpow.pop %v3353
      %v3355 = vsel %vm1359, %v3340, 0.0
      %3356 = vadd.xlane.f32.xlu0 %v3355
      %v3357 = vpop.xlane.xlu0 %3356
      %v3358 = vsel %vm1359, %v3342, 0.0
      %3359 = vadd.xlane.f32.xlu0 %v3358
      %v3360 = vpop.xlane.xlu0 %3359
      %v3361 = vsel %vm1359, %v3344, 0.0
      %3362 = vadd.xlane.f32.xlu0 %v3361
      %v3363 = vpop.xlane.xlu0 %3362
      %v3364 = vsel %vm1359, %v3346, 0.0
      %3365 = vadd.xlane.f32.xlu0 %v3364
      %v3366 = vpop.xlane.xlu0 %3365
      %v3367 = vsel %vm1359, %v3348, 0.0
      %3368 = vadd.xlane.f32.xlu0 %v3367
      %v3369 = vpop.xlane.xlu0 %3368
      %v3370 = vsel %vm1359, %v3350, 0.0
      %3371 = vadd.xlane.f32.xlu0 %v3370
      %v3372 = vpop.xlane.xlu0 %3371
      %v3373 = vsel %vm1359, %v3352, 0.0
      %3374 = vadd.xlane.f32.xlu0 %v3373
      %v3375 = vpop.xlane.xlu0 %3374
      %v3376 = vsel %vm1359, %v3354, 0.0
      %3377 = vadd.xlane.f32.xlu0 %v3376
      %v3378 = vpop.xlane.xlu0 %3377
      %v3379 = vrcp.pop %v3357
      %v3380 = vrcp.pop %v3360
      %v3381 = vrcp.pop %v3363
      %v3382 = vrcp.pop %v3366
      %v3383 = vrcp.pop %v3369
      %v3384 = vrcp.pop %v3372
      %v3385 = vrcp.pop %v3375
      %v3386 = vrcp.pop %v3378
      %v3387 = vmul.f32 %v3340, %v3379
      %v3388 = vmul.f32 %v3342, %v3380
      %v3389 = vmul.f32 %v3344, %v3381
      %v3390 = vmul.f32 %v3346, %v3382
      %v3391 = vmul.f32 %v3348, %v3383
      %v3392 = vmul.f32 %v3350, %v3384
      %v3393 = vmul.f32 %v3352, %v3385
      %v3394 = vmul.f32 %v3354, %v3386
      %v3395 = vpack.c.bf16 %v3387, %v3387
      %v3396 = vpack.c.bf16 %v3388, %v3388
      %v3397 = vpack.c.bf16 %v3389, %v3389
      %v3398 = vpack.c.bf16 %v3390, %v3390
      %v3399 = vpack.c.bf16 %v3391, %v3391
      %v3400 = vpack.c.bf16 %v3392, %v3392
      %v3401 = vpack.c.bf16 %v3393, %v3393
      %v3402 = vpack.c.bf16 %v3394, %v3394
      %3403 = vrot.lane.b32.xlu0 %v971, 64
      %v3404 = vpop.permute.xlu0 %3403
      %v3406 = vsel %vm1359, %v3395, 0
      %v3409 = vsel %vm1459, %v3404, 0
      %3411 = vmatprep.subr.bf16.mxu0 0
      %3412 = vmatpush1.bf16.msra.mxu0 0
      %3413 = vmatprep.subr.bf16.mxu0 0
      %3414 = vmatpush1.bf16.msra.mxu0 0
      %3415 = vmatprep.subr.bf16.mxu0 0
      %3416 = vmatpush1.bf16.msra.mxu0 0
      %3417 = vmatprep.subr.bf16.mxu0 0
      %3418 = vmatpush1.bf16.msra.mxu0 0
      %3419 = vmatprep.subr.bf16.mxu0 0
      %3420 = vmatpush1.bf16.msra.mxu0 0
      %3421 = vmatprep.subr.bf16.mxu0 0
      %3422 = vmatpush1.bf16.msra.mxu0 0
      %3423 = vmatprep.subr.bf16.mxu0 0
      %3424 = vmatpush1.bf16.msra.mxu0 0
      %3425 = vmatprep.subr.bf16.mxu0 0
      %3426 = vmatpush1.bf16.msra.mxu0 %v3409
      %3427 = vmatprep.subr.bf16.mxu0 0
      %3428 = vmatpush2.bf16.msra.mxu0 0
      %3429 = vmatprep.subr.bf16.mxu0 0
      %3430 = vmatpush2.bf16.msra.mxu0 0
      %3431 = vmatprep.subr.bf16.mxu0 0
      %3432 = vmatpush2.bf16.msra.mxu0 0
      %3433 = vmatprep.subr.bf16.mxu0 0
      %3434 = vmatpush2.bf16.msra.mxu0 0
      %3435 = vmatprep.subr.bf16.mxu0 0
      %3436 = vmatpush2.bf16.msra.mxu0 0
      %3437 = vmatprep.subr.bf16.mxu0 0
      %3438 = vmatpush2.bf16.msra.mxu0 0
      %3439 = vmatprep.subr.bf16.mxu0 0
      %3440 = vmatpush2.bf16.msra.mxu0 0
      %3441 = vmatprep.subr.bf16.mxu0 0
      %3442 = vmatpush2.bf16.msra.mxu0 0
      %3443 = vmatprep.mubr.bf16.mxu0 0
      %3444 = vmatmul.mubr.bf16.gmra.mxu0 %v3406
      %v3445 = vpop.f32.mrf.mxu0
      %v3446 = vadd.f32 0.0, %v3445
      %v3447 = vpop.f32.mrf.mxu0
      %v3448 = vpop.f32.mrf.mxu0
      %v3449 = vpop.f32.mrf.mxu0
      %3450 = vdwg.mxu0
      %3451 = vrot.lane.b32.xlu0 %v972, 64
      %v3452 = vpop.permute.xlu0 %3451
      %v3454 = vsel %vm1359, %v3396, 0
      %v3457 = vsel %vm1459, %v3452, 0
      %3459 = vmatprep.subr.bf16.mxu0 0
      %3460 = vmatpush1.bf16.msra.mxu0 0
      %3461 = vmatprep.subr.bf16.mxu0 0
      %3462 = vmatpush1.bf16.msra.mxu0 0
      %3463 = vmatprep.subr.bf16.mxu0 0
      %3464 = vmatpush1.bf16.msra.mxu0 0
      %3465 = vmatprep.subr.bf16.mxu0 0
      %3466 = vmatpush1.bf16.msra.mxu0 0
      %3467 = vmatprep.subr.bf16.mxu0 0
      %3468 = vmatpush1.bf16.msra.mxu0 0
      %3469 = vmatprep.subr.bf16.mxu0 0
      %3470 = vmatpush1.bf16.msra.mxu0 0
      %3471 = vmatprep.subr.bf16.mxu0 0
      %3472 = vmatpush1.bf16.msra.mxu0 0
      %3473 = vmatprep.subr.bf16.mxu0 0
      %3474 = vmatpush1.bf16.msra.mxu0 %v3457
      %3475 = vmatprep.subr.bf16.mxu0 0
      %3476 = vmatpush2.bf16.msra.mxu0 0
      %3477 = vmatprep.subr.bf16.mxu0 0
      %3478 = vmatpush2.bf16.msra.mxu0 0
      %3479 = vmatprep.subr.bf16.mxu0 0
      %3480 = vmatpush2.bf16.msra.mxu0 0
      %3481 = vmatprep.subr.bf16.mxu0 0
      %3482 = vmatpush2.bf16.msra.mxu0 0
      %3483 = vmatprep.subr.bf16.mxu0 0
      %3484 = vmatpush2.bf16.msra.mxu0 0
      %3485 = vmatprep.subr.bf16.mxu0 0
      %3486 = vmatpush2.bf16.msra.mxu0 0
      %3487 = vmatprep.subr.bf16.mxu0 0
      %3488 = vmatpush2.bf16.msra.mxu0 0
      %3489 = vmatprep.subr.bf16.mxu0 0
      %3490 = vmatpush2.bf16.msra.mxu0 0
      %3491 = vmatprep.mubr.bf16.mxu0 0
      %3492 = vmatmul.mubr.bf16.gmra.mxu0 %v3454
      %v3493 = vpop.f32.mrf.mxu0
      %v3494 = vadd.f32 0.0, %v3493
      %v3495 = vpop.f32.mrf.mxu0
      %v3496 = vpop.f32.mrf.mxu0
      %v3497 = vpop.f32.mrf.mxu0
      %3498 = vdwg.mxu0
      %3499 = vrot.lane.b32.xlu0 %v973, 64
      %v3500 = vpop.permute.xlu0 %3499
      %v3502 = vsel %vm1359, %v3397, 0
      %v3505 = vsel %vm1459, %v3500, 0
      %3507 = vmatprep.subr.bf16.mxu0 0
      %3508 = vmatpush1.bf16.msra.mxu0 0
      %3509 = vmatprep.subr.bf16.mxu0 0
      %3510 = vmatpush1.bf16.msra.mxu0 0
      %3511 = vmatprep.subr.bf16.mxu0 0
      %3512 = vmatpush1.bf16.msra.mxu0 0
      %3513 = vmatprep.subr.bf16.mxu0 0
      %3514 = vmatpush1.bf16.msra.mxu0 0
      %3515 = vmatprep.subr.bf16.mxu0 0
      %3516 = vmatpush1.bf16.msra.mxu0 0
      %3517 = vmatprep.subr.bf16.mxu0 0
      %3518 = vmatpush1.bf16.msra.mxu0 0
      %3519 = vmatprep.subr.bf16.mxu0 0
      %3520 = vmatpush1.bf16.msra.mxu0 0
      %3521 = vmatprep.subr.bf16.mxu0 0
      %3522 = vmatpush1.bf16.msra.mxu0 %v3505
      %3523 = vmatprep.subr.bf16.mxu0 0
      %3524 = vmatpush2.bf16.msra.mxu0 0
      %3525 = vmatprep.subr.bf16.mxu0 0
      %3526 = vmatpush2.bf16.msra.mxu0 0
      %3527 = vmatprep.subr.bf16.mxu0 0
      %3528 = vmatpush2.bf16.msra.mxu0 0
      %3529 = vmatprep.subr.bf16.mxu0 0
      %3530 = vmatpush2.bf16.msra.mxu0 0
      %3531 = vmatprep.subr.bf16.mxu0 0
      %3532 = vmatpush2.bf16.msra.mxu0 0
      %3533 = vmatprep.subr.bf16.mxu0 0
      %3534 = vmatpush2.bf16.msra.mxu0 0
      %3535 = vmatprep.subr.bf16.mxu0 0
      %3536 = vmatpush2.bf16.msra.mxu0 0
      %3537 = vmatprep.subr.bf16.mxu0 0
      %3538 = vmatpush2.bf16.msra.mxu0 0
      %3539 = vmatprep.mubr.bf16.mxu0 0
      %3540 = vmatmul.mubr.bf16.gmra.mxu0 %v3502
      %v3541 = vpop.f32.mrf.mxu0
      %v3542 = vadd.f32 0.0, %v3541
      %v3543 = vpop.f32.mrf.mxu0
      %v3544 = vpop.f32.mrf.mxu0
      %v3545 = vpop.f32.mrf.mxu0
      %3546 = vdwg.mxu0
      %3547 = vrot.lane.b32.xlu0 %v974, 64
      %v3548 = vpop.permute.xlu0 %3547
      %v3550 = vsel %vm1359, %v3398, 0
      %v3553 = vsel %vm1459, %v3548, 0
      %3555 = vmatprep.subr.bf16.mxu0 0
      %3556 = vmatpush1.bf16.msra.mxu0 0
      %3557 = vmatprep.subr.bf16.mxu0 0
      %3558 = vmatpush1.bf16.msra.mxu0 0
      %3559 = vmatprep.subr.bf16.mxu0 0
      %3560 = vmatpush1.bf16.msra.mxu0 0
      %3561 = vmatprep.subr.bf16.mxu0 0
      %3562 = vmatpush1.bf16.msra.mxu0 0
      %3563 = vmatprep.subr.bf16.mxu0 0
      %3564 = vmatpush1.bf16.msra.mxu0 0
      %3565 = vmatprep.subr.bf16.mxu0 0
      %3566 = vmatpush1.bf16.msra.mxu0 0
      %3567 = vmatprep.subr.bf16.mxu0 0
      %3568 = vmatpush1.bf16.msra.mxu0 0
      %3569 = vmatprep.subr.bf16.mxu0 0
      %3570 = vmatpush1.bf16.msra.mxu0 %v3553
      %3571 = vmatprep.subr.bf16.mxu0 0
      %3572 = vmatpush2.bf16.msra.mxu0 0
      %3573 = vmatprep.subr.bf16.mxu0 0
      %3574 = vmatpush2.bf16.msra.mxu0 0
      %3575 = vmatprep.subr.bf16.mxu0 0
      %3576 = vmatpush2.bf16.msra.mxu0 0
      %3577 = vmatprep.subr.bf16.mxu0 0
      %3578 = vmatpush2.bf16.msra.mxu0 0
      %3579 = vmatprep.subr.bf16.mxu0 0
      %3580 = vmatpush2.bf16.msra.mxu0 0
      %3581 = vmatprep.subr.bf16.mxu0 0
      %3582 = vmatpush2.bf16.msra.mxu0 0
      %3583 = vmatprep.subr.bf16.mxu0 0
      %3584 = vmatpush2.bf16.msra.mxu0 0
      %3585 = vmatprep.subr.bf16.mxu0 0
      %3586 = vmatpush2.bf16.msra.mxu0 0
      %3587 = vmatprep.mubr.bf16.mxu0 0
      %3588 = vmatmul.mubr.bf16.gmra.mxu0 %v3550
      %v3589 = vpop.f32.mrf.mxu0
      %v3590 = vadd.f32 0.0, %v3589
      %v3591 = vpop.f32.mrf.mxu0
      %v3592 = vpop.f32.mrf.mxu0
      %v3593 = vpop.f32.mrf.mxu0
      %3594 = vdwg.mxu0
      %3595 = vrot.lane.b32.xlu0 %v975, 64
      %v3596 = vpop.permute.xlu0 %3595
      %v3598 = vsel %vm1359, %v3399, 0
      %v3601 = vsel %vm1459, %v3596, 0
      %3603 = vmatprep.subr.bf16.mxu0 0
      %3604 = vmatpush1.bf16.msra.mxu0 0
      %3605 = vmatprep.subr.bf16.mxu0 0
      %3606 = vmatpush1.bf16.msra.mxu0 0
      %3607 = vmatprep.subr.bf16.mxu0 0
      %3608 = vmatpush1.bf16.msra.mxu0 0
      %3609 = vmatprep.subr.bf16.mxu0 0
      %3610 = vmatpush1.bf16.msra.mxu0 0
      %3611 = vmatprep.subr.bf16.mxu0 0
      %3612 = vmatpush1.bf16.msra.mxu0 0
      %3613 = vmatprep.subr.bf16.mxu0 0
      %3614 = vmatpush1.bf16.msra.mxu0 0
      %3615 = vmatprep.subr.bf16.mxu0 0
      %3616 = vmatpush1.bf16.msra.mxu0 0
      %3617 = vmatprep.subr.bf16.mxu0 0
      %3618 = vmatpush1.bf16.msra.mxu0 %v3601
      %3619 = vmatprep.subr.bf16.mxu0 0
      %3620 = vmatpush2.bf16.msra.mxu0 0
      %3621 = vmatprep.subr.bf16.mxu0 0
      %3622 = vmatpush2.bf16.msra.mxu0 0
      %3623 = vmatprep.subr.bf16.mxu0 0
      %3624 = vmatpush2.bf16.msra.mxu0 0
      %3625 = vmatprep.subr.bf16.mxu0 0
      %3626 = vmatpush2.bf16.msra.mxu0 0
      %3627 = vmatprep.subr.bf16.mxu0 0
      %3628 = vmatpush2.bf16.msra.mxu0 0
      %3629 = vmatprep.subr.bf16.mxu0 0
      %3630 = vmatpush2.bf16.msra.mxu0 0
      %3631 = vmatprep.subr.bf16.mxu0 0
      %3632 = vmatpush2.bf16.msra.mxu0 0
      %3633 = vmatprep.subr.bf16.mxu0 0
      %3634 = vmatpush2.bf16.msra.mxu0 0
      %3635 = vmatprep.mubr.bf16.mxu0 0
      %3636 = vmatmul.mubr.bf16.gmra.mxu0 %v3598
      %v3637 = vpop.f32.mrf.mxu0
      %v3638 = vadd.f32 0.0, %v3637
      %v3639 = vpop.f32.mrf.mxu0
      %v3640 = vpop.f32.mrf.mxu0
      %v3641 = vpop.f32.mrf.mxu0
      %3642 = vdwg.mxu0
      %3643 = vrot.lane.b32.xlu0 %v976, 64
      %v3644 = vpop.permute.xlu0 %3643
      %v3646 = vsel %vm1359, %v3400, 0
      %v3649 = vsel %vm1459, %v3644, 0
      %3651 = vmatprep.subr.bf16.mxu0 0
      %3652 = vmatpush1.bf16.msra.mxu0 0
      %3653 = vmatprep.subr.bf16.mxu0 0
      %3654 = vmatpush1.bf16.msra.mxu0 0
      %3655 = vmatprep.subr.bf16.mxu0 0
      %3656 = vmatpush1.bf16.msra.mxu0 0
      %3657 = vmatprep.subr.bf16.mxu0 0
      %3658 = vmatpush1.bf16.msra.mxu0 0
      %3659 = vmatprep.subr.bf16.mxu0 0
      %3660 = vmatpush1.bf16.msra.mxu0 0
      %3661 = vmatprep.subr.bf16.mxu0 0
      %3662 = vmatpush1.bf16.msra.mxu0 0
      %3663 = vmatprep.subr.bf16.mxu0 0
      %3664 = vmatpush1.bf16.msra.mxu0 0
      %3665 = vmatprep.subr.bf16.mxu0 0
      %3666 = vmatpush1.bf16.msra.mxu0 %v3649
      %3667 = vmatprep.subr.bf16.mxu0 0
      %3668 = vmatpush2.bf16.msra.mxu0 0
      %3669 = vmatprep.subr.bf16.mxu0 0
      %3670 = vmatpush2.bf16.msra.mxu0 0
      %3671 = vmatprep.subr.bf16.mxu0 0
      %3672 = vmatpush2.bf16.msra.mxu0 0
      %3673 = vmatprep.subr.bf16.mxu0 0
      %3674 = vmatpush2.bf16.msra.mxu0 0
      %3675 = vmatprep.subr.bf16.mxu0 0
      %3676 = vmatpush2.bf16.msra.mxu0 0
      %3677 = vmatprep.subr.bf16.mxu0 0
      %3678 = vmatpush2.bf16.msra.mxu0 0
      %3679 = vmatprep.subr.bf16.mxu0 0
      %3680 = vmatpush2.bf16.msra.mxu0 0
      %3681 = vmatprep.subr.bf16.mxu0 0
      %3682 = vmatpush2.bf16.msra.mxu0 0
      %3683 = vmatprep.mubr.bf16.mxu0 0
      %3684 = vmatmul.mubr.bf16.gmra.mxu0 %v3646
      %v3685 = vpop.f32.mrf.mxu0
      %v3686 = vadd.f32 0.0, %v3685
      %v3687 = vpop.f32.mrf.mxu0
      %v3688 = vpop.f32.mrf.mxu0
      %v3689 = vpop.f32.mrf.mxu0
      %3690 = vdwg.mxu0
      %3691 = vrot.lane.b32.xlu0 %v977, 64
      %v3692 = vpop.permute.xlu0 %3691
      %v3694 = vsel %vm1359, %v3401, 0
      %v3697 = vsel %vm1459, %v3692, 0
      %3699 = vmatprep.subr.bf16.mxu0 0
      %3700 = vmatpush1.bf16.msra.mxu0 0
      %3701 = vmatprep.subr.bf16.mxu0 0
      %3702 = vmatpush1.bf16.msra.mxu0 0
      %3703 = vmatprep.subr.bf16.mxu0 0
      %3704 = vmatpush1.bf16.msra.mxu0 0
      %3705 = vmatprep.subr.bf16.mxu0 0
      %3706 = vmatpush1.bf16.msra.mxu0 0
      %3707 = vmatprep.subr.bf16.mxu0 0
      %3708 = vmatpush1.bf16.msra.mxu0 0
      %3709 = vmatprep.subr.bf16.mxu0 0
      %3710 = vmatpush1.bf16.msra.mxu0 0
      %3711 = vmatprep.subr.bf16.mxu0 0
      %3712 = vmatpush1.bf16.msra.mxu0 0
      %3713 = vmatprep.subr.bf16.mxu0 0
      %3714 = vmatpush1.bf16.msra.mxu0 %v3697
      %3715 = vmatprep.subr.bf16.mxu0 0
      %3716 = vmatpush2.bf16.msra.mxu0 0
      %3717 = vmatprep.subr.bf16.mxu0 0
      %3718 = vmatpush2.bf16.msra.mxu0 0
      %3719 = vmatprep.subr.bf16.mxu0 0
      %3720 = vmatpush2.bf16.msra.mxu0 0
      %3721 = vmatprep.subr.bf16.mxu0 0
      %3722 = vmatpush2.bf16.msra.mxu0 0
      %3723 = vmatprep.subr.bf16.mxu0 0
      %3724 = vmatpush2.bf16.msra.mxu0 0
      %3725 = vmatprep.subr.bf16.mxu0 0
      %3726 = vmatpush2.bf16.msra.mxu0 0
      %3727 = vmatprep.subr.bf16.mxu0 0
      %3728 = vmatpush2.bf16.msra.mxu0 0
      %3729 = vmatprep.subr.bf16.mxu0 0
      %3730 = vmatpush2.bf16.msra.mxu0 0
      %3731 = vmatprep.mubr.bf16.mxu0 0
      %3732 = vmatmul.mubr.bf16.gmra.mxu0 %v3694
      %v3733 = vpop.f32.mrf.mxu0
      %v3734 = vadd.f32 0.0, %v3733
      %v3735 = vpop.f32.mrf.mxu0
      %v3736 = vpop.f32.mrf.mxu0
      %v3737 = vpop.f32.mrf.mxu0
      %3738 = vdwg.mxu0
      %3739 = vrot.lane.b32.xlu0 %v978, 64
      %v3740 = vpop.permute.xlu0 %3739
      %v3742 = vsel %vm1359, %v3402, 0
      %v3745 = vsel %vm1459, %v3740, 0
      %3747 = vmatprep.subr.bf16.mxu0 0
      %3748 = vmatpush1.bf16.msra.mxu0 0
      %3749 = vmatprep.subr.bf16.mxu0 0
      %3750 = vmatpush1.bf16.msra.mxu0 0
      %3751 = vmatprep.subr.bf16.mxu0 0
      %3752 = vmatpush1.bf16.msra.mxu0 0
      %3753 = vmatprep.subr.bf16.mxu0 0
      %3754 = vmatpush1.bf16.msra.mxu0 0
      %3755 = vmatprep.subr.bf16.mxu0 0
      %3756 = vmatpush1.bf16.msra.mxu0 0
      %3757 = vmatprep.subr.bf16.mxu0 0
      %3758 = vmatpush1.bf16.msra.mxu0 0
      %3759 = vmatprep.subr.bf16.mxu0 0
      %3760 = vmatpush1.bf16.msra.mxu0 0
      %3761 = vmatprep.subr.bf16.mxu0 0
      %3762 = vmatpush1.bf16.msra.mxu0 %v3745
      %3763 = vmatprep.subr.bf16.mxu0 0
      %3764 = vmatpush2.bf16.msra.mxu0 0
      %3765 = vmatprep.subr.bf16.mxu0 0
      %3766 = vmatpush2.bf16.msra.mxu0 0
      %3767 = vmatprep.subr.bf16.mxu0 0
      %3768 = vmatpush2.bf16.msra.mxu0 0
      %3769 = vmatprep.subr.bf16.mxu0 0
      %3770 = vmatpush2.bf16.msra.mxu0 0
      %3771 = vmatprep.subr.bf16.mxu0 0
      %3772 = vmatpush2.bf16.msra.mxu0 0
      %3773 = vmatprep.subr.bf16.mxu0 0
      %3774 = vmatpush2.bf16.msra.mxu0 0
      %3775 = vmatprep.subr.bf16.mxu0 0
      %3776 = vmatpush2.bf16.msra.mxu0 0
      %3777 = vmatprep.subr.bf16.mxu0 0
      %3778 = vmatpush2.bf16.msra.mxu0 0
      %3779 = vmatprep.mubr.bf16.mxu0 0
      %3780 = vmatmul.mubr.bf16.gmra.mxu0 %v3742
      %v3781 = vpop.f32.mrf.mxu0
      %v3782 = vadd.f32 0.0, %v3781
      %v3783 = vpop.f32.mrf.mxu0
      %v3784 = vpop.f32.mrf.mxu0
      %v3785 = vpop.f32.mrf.mxu0
      %3786 = vdwg.mxu0
      %v3787 = vpack.c.bf16 %v3494, %v3446
      %v3788 = vpack.c.bf16 %v3590, %v3542
      %v3789 = vpack.c.bf16 %v3686, %v3638
      %v3790 = vpack.c.bf16 %v3782, %v3734
      %v3795 = vunpack.c.l.b16 %v911
      %v3796 = vunpack.c.l.b16 %v912
      %v3797 = vunpack.c.l.b16 %v913
      %v3798 = vunpack.c.l.b16 %v914
      %v3799 = vpack.c.b16 %v3796, %v3795
      %v3800 = vpack.c.b16 %v3798, %v3797
      %v3804 = vsel %vm979, %v3787, 0
      %v3807 = vsel %vm979, %v3788, 0
      %v3810 = vsel %vm979, %v3789, 0
      %v3813 = vsel %vm979, %v3790, 0
      %3815 = vmatprep.subr.bf16.mxu0 0
      %3816 = vmatpush1.bf16.msra.mxu0 0
      %3817 = vmatprep.subr.bf16.mxu0 0
      %3818 = vmatpush1.bf16.msra.mxu0 0
      %3819 = vmatprep.subr.bf16.mxu0 0
      %3820 = vmatpush1.bf16.msra.mxu0 0
      %3821 = vmatprep.subr.bf16.mxu0 0
      %3822 = vmatpush1.bf16.msra.mxu0 0
      %3823 = vmatprep.subr.bf16.mxu0 0
      %3824 = vmatpush1.bf16.msra.mxu0 0
      %3825 = vmatprep.subr.bf16.mxu0 0
      %3826 = vmatpush1.bf16.msra.mxu0 0
      %3827 = vmatprep.subr.bf16.mxu0 0
      %3828 = vmatpush1.bf16.msra.mxu0 %v3800
      %3829 = vmatprep.subr.bf16.mxu0 0
      %3830 = vmatpush1.bf16.msra.mxu0 %v3799
      %3831 = vmatprep.subr.bf16.mxu0 0
      %3832 = vmatpush2.bf16.msra.mxu0 0
      %3833 = vmatprep.subr.bf16.mxu0 0
      %3834 = vmatpush2.bf16.msra.mxu0 0
      %3835 = vmatprep.subr.bf16.mxu0 0
      %3836 = vmatpush2.bf16.msra.mxu0 0
      %3837 = vmatprep.subr.bf16.mxu0 0
      %3838 = vmatpush2.bf16.msra.mxu0 0
      %3839 = vmatprep.subr.bf16.mxu0 0
      %3840 = vmatpush2.bf16.msra.mxu0 0
      %3841 = vmatprep.subr.bf16.mxu0 0
      %3842 = vmatpush2.bf16.msra.mxu0 0
      %3843 = vmatprep.subr.bf16.mxu0 0
      %3844 = vmatpush2.bf16.msra.mxu0 0
      %3845 = vmatprep.subr.bf16.mxu0 0
      %3846 = vmatpush2.bf16.msra.mxu0 0
      %3847 = vmatprep.mubr.bf16.mxu0 0
      %3848 = vmatmul.mubr.bf16.gmra.mxu0 %v3804
      %v3849 = vpop.f32.mrf.mxu0
      %v3850 = vadd.f32 0.0, %v3849
      %v3851 = vpop.f32.mrf.mxu0
      %v3852 = vpop.f32.mrf.mxu0
      %v3853 = vadd.f32 0.0, %v3852
      %v3854 = vpop.f32.mrf.mxu0
      %3855 = vmatprep.mubr.bf16.mxu0 0
      %3856 = vmatmul.mubr.bf16.gmra.mxu0 %v3807
      %v3857 = vpop.f32.mrf.mxu0
      %v3858 = vadd.f32 0.0, %v3857
      %v3859 = vpop.f32.mrf.mxu0
      %v3860 = vpop.f32.mrf.mxu0
      %v3861 = vadd.f32 0.0, %v3860
      %v3862 = vpop.f32.mrf.mxu0
      %3863 = vmatprep.mubr.bf16.mxu0 0
      %3864 = vmatmul.mubr.bf16.gmra.mxu0 %v3810
      %v3865 = vpop.f32.mrf.mxu0
      %v3866 = vadd.f32 0.0, %v3865
      %v3867 = vpop.f32.mrf.mxu0
      %v3868 = vpop.f32.mrf.mxu0
      %v3869 = vadd.f32 0.0, %v3868
      %v3870 = vpop.f32.mrf.mxu0
      %3871 = vmatprep.mubr.bf16.mxu0 0
      %3872 = vmatmul.mubr.bf16.gmra.mxu0 %v3813
      %v3873 = vpop.f32.mrf.mxu0
      %v3874 = vadd.f32 0.0, %v3873
      %v3875 = vpop.f32.mrf.mxu0
      %v3876 = vpop.f32.mrf.mxu0
      %v3877 = vadd.f32 0.0, %v3876
      %v3878 = vpop.f32.mrf.mxu0
      %3879 = vdwg.mxu0
      %v3880 = vadd.f32 %v2869, %v3850
      %v3881 = vadd.f32 %v2872, %v3853
      %v3882 = vadd.f32 %v2877, %v3858
      %v3883 = vadd.f32 %v2880, %v3861
      %v3884 = vadd.f32 %v2885, %v3866
      %v3885 = vadd.f32 %v2888, %v3869
      %v3886 = vadd.f32 %v2893, %v3874
      %v3887 = vadd.f32 %v2896, %v3877
      %3888 = vrot.lane.b32.xlu0 %v931, 32
      %v3889 = vpop.permute.xlu0 %3888
      %3890 = vrot.lane.b32.xlu0 %v951, 32
      %v3891 = vpop.permute.xlu0 %3890
      %v3893 = vsel %vm979, %v3889, 0
      %v3896 = vsel %vm979, %v3891, 0
      %3898 = vmatprep.subr.bf16.mxu0 0
      %3899 = vmatpush1.bf16.xpose.msra.mxu0 0
      %3900 = vmatprep.subr.bf16.mxu0 0
      %3901 = vmatpush1.bf16.xpose.msra.mxu0 0
      %3902 = vmatprep.subr.bf16.mxu0 0
      %3903 = vmatpush1.bf16.xpose.msra.mxu0 0
      %3904 = vmatprep.subr.bf16.mxu0 0
      %3905 = vmatpush1.bf16.xpose.msra.mxu0 0
      %3906 = vmatprep.subr.bf16.mxu0 0
      %3907 = vmatpush1.bf16.xpose.msra.mxu0 0
      %3908 = vmatprep.subr.bf16.mxu0 0
      %3909 = vmatpush1.bf16.xpose.msra.mxu0 0
      %3910 = vmatprep.subr.bf16.mxu0 0
      %3911 = vmatpush1.bf16.xpose.msra.mxu0 0
      %3912 = vmatprep.subr.bf16.mxu0 0
      %3913 = vmatpush1.bf16.xpose.msra.mxu0 %v3896
      %3914 = vmatprep.subr.bf16.mxu0 0
      %3915 = vmatpush2.bf16.xpose.msra.mxu0 0
      %3916 = vmatprep.subr.bf16.mxu0 0
      %3917 = vmatpush2.bf16.xpose.msra.mxu0 0
      %3918 = vmatprep.subr.bf16.mxu0 0
      %3919 = vmatpush2.bf16.xpose.msra.mxu0 0
      %3920 = vmatprep.subr.bf16.mxu0 0
      %3921 = vmatpush2.bf16.xpose.msra.mxu0 0
      %3922 = vmatprep.subr.bf16.mxu0 0
      %3923 = vmatpush2.bf16.xpose.msra.mxu0 0
      %3924 = vmatprep.subr.bf16.mxu0 0
      %3925 = vmatpush2.bf16.xpose.msra.mxu0 0
      %3926 = vmatprep.subr.bf16.mxu0 0
      %3927 = vmatpush2.bf16.xpose.msra.mxu0 0
      %3928 = vmatprep.subr.bf16.mxu0 0
      %3929 = vmatpush2.bf16.xpose.msra.mxu0 0
      %3930 = vmatprep.mubr.bf16.mxu0 0
      %3931 = vmatmul.mubr.bf16.gmra.mxu0 %v3893
      %v3932 = vpop.f32.mrf.mxu0
      %v3933 = vadd.f32 0.0, %v3932
      %v3934 = vpop.f32.mrf.mxu0
      %v3935 = vpop.f32.mrf.mxu0
      %v3936 = vpop.f32.mrf.mxu0
      %3937 = vdwg.mxu0
      %3938 = vrot.lane.b32.xlu0 %v932, 32
      %v3939 = vpop.permute.xlu0 %3938
      %3940 = vrot.lane.b32.xlu0 %v952, 32
      %v3941 = vpop.permute.xlu0 %3940
      %v3943 = vsel %vm979, %v3939, 0
      %v3946 = vsel %vm979, %v3941, 0
      %3948 = vmatprep.subr.bf16.mxu0 0
      %3949 = vmatpush1.bf16.xpose.msra.mxu0 0
      %3950 = vmatprep.subr.bf16.mxu0 0
      %3951 = vmatpush1.bf16.xpose.msra.mxu0 0
      %3952 = vmatprep.subr.bf16.mxu0 0
      %3953 = vmatpush1.bf16.xpose.msra.mxu0 0
      %3954 = vmatprep.subr.bf16.mxu0 0
      %3955 = vmatpush1.bf16.xpose.msra.mxu0 0
      %3956 = vmatprep.subr.bf16.mxu0 0
      %3957 = vmatpush1.bf16.xpose.msra.mxu0 0
      %3958 = vmatprep.subr.bf16.mxu0 0
      %3959 = vmatpush1.bf16.xpose.msra.mxu0 0
      %3960 = vmatprep.subr.bf16.mxu0 0
      %3961 = vmatpush1.bf16.xpose.msra.mxu0 0
      %3962 = vmatprep.subr.bf16.mxu0 0
      %3963 = vmatpush1.bf16.xpose.msra.mxu0 %v3946
      %3964 = vmatprep.subr.bf16.mxu0 0
      %3965 = vmatpush2.bf16.xpose.msra.mxu0 0
      %3966 = vmatprep.subr.bf16.mxu0 0
      %3967 = vmatpush2.bf16.xpose.msra.mxu0 0
      %3968 = vmatprep.subr.bf16.mxu0 0
      %3969 = vmatpush2.bf16.xpose.msra.mxu0 0
      %3970 = vmatprep.subr.bf16.mxu0 0
      %3971 = vmatpush2.bf16.xpose.msra.mxu0 0
      %3972 = vmatprep.subr.bf16.mxu0 0
      %3973 = vmatpush2.bf16.xpose.msra.mxu0 0
      %3974 = vmatprep.subr.bf16.mxu0 0
      %3975 = vmatpush2.bf16.xpose.msra.mxu0 0
      %3976 = vmatprep.subr.bf16.mxu0 0
      %3977 = vmatpush2.bf16.xpose.msra.mxu0 0
      %3978 = vmatprep.subr.bf16.mxu0 0
      %3979 = vmatpush2.bf16.xpose.msra.mxu0 0
      %3980 = vmatprep.mubr.bf16.mxu0 0
      %3981 = vmatmul.mubr.bf16.gmra.mxu0 %v3943
      %v3982 = vpop.f32.mrf.mxu0
      %v3983 = vadd.f32 0.0, %v3982
      %v3984 = vpop.f32.mrf.mxu0
      %v3985 = vpop.f32.mrf.mxu0
      %v3986 = vpop.f32.mrf.mxu0
      %3987 = vdwg.mxu0
      %3988 = vrot.lane.b32.xlu0 %v933, 32
      %v3989 = vpop.permute.xlu0 %3988
      %3990 = vrot.lane.b32.xlu0 %v953, 32
      %v3991 = vpop.permute.xlu0 %3990
      %v3993 = vsel %vm979, %v3989, 0
      %v3996 = vsel %vm979, %v3991, 0
      %3998 = vmatprep.subr.bf16.mxu0 0
      %3999 = vmatpush1.bf16.xpose.msra.mxu0 0
      %4000 = vmatprep.subr.bf16.mxu0 0
      %4001 = vmatpush1.bf16.xpose.msra.mxu0 0
      %4002 = vmatprep.subr.bf16.mxu0 0
      %4003 = vmatpush1.bf16.xpose.msra.mxu0 0
      %4004 = vmatprep.subr.bf16.mxu0 0
      %4005 = vmatpush1.bf16.xpose.msra.mxu0 0
      %4006 = vmatprep.subr.bf16.mxu0 0
      %4007 = vmatpush1.bf16.xpose.msra.mxu0 0
      %4008 = vmatprep.subr.bf16.mxu0 0
      %4009 = vmatpush1.bf16.xpose.msra.mxu0 0
      %4010 = vmatprep.subr.bf16.mxu0 0
      %4011 = vmatpush1.bf16.xpose.msra.mxu0 0
      %4012 = vmatprep.subr.bf16.mxu0 0
      %4013 = vmatpush1.bf16.xpose.msra.mxu0 %v3996
      %4014 = vmatprep.subr.bf16.mxu0 0
      %4015 = vmatpush2.bf16.xpose.msra.mxu0 0
      %4016 = vmatprep.subr.bf16.mxu0 0
      %4017 = vmatpush2.bf16.xpose.msra.mxu0 0
      %4018 = vmatprep.subr.bf16.mxu0 0
      %4019 = vmatpush2.bf16.xpose.msra.mxu0 0
      %4020 = vmatprep.subr.bf16.mxu0 0
      %4021 = vmatpush2.bf16.xpose.msra.mxu0 0
      %4022 = vmatprep.subr.bf16.mxu0 0
      %4023 = vmatpush2.bf16.xpose.msra.mxu0 0
      %4024 = vmatprep.subr.bf16.mxu0 0
      %4025 = vmatpush2.bf16.xpose.msra.mxu0 0
      %4026 = vmatprep.subr.bf16.mxu0 0
      %4027 = vmatpush2.bf16.xpose.msra.mxu0 0
      %4028 = vmatprep.subr.bf16.mxu0 0
      %4029 = vmatpush2.bf16.xpose.msra.mxu0 0
      %4030 = vmatprep.mubr.bf16.mxu0 0
      %4031 = vmatmul.mubr.bf16.gmra.mxu0 %v3993
      %v4032 = vpop.f32.mrf.mxu0
      %v4033 = vadd.f32 0.0, %v4032
      %v4034 = vpop.f32.mrf.mxu0
      %v4035 = vpop.f32.mrf.mxu0
      %v4036 = vpop.f32.mrf.mxu0
      %4037 = vdwg.mxu0
      %4038 = vrot.lane.b32.xlu0 %v934, 32
      %v4039 = vpop.permute.xlu0 %4038
      %4040 = vrot.lane.b32.xlu0 %v954, 32
      %v4041 = vpop.permute.xlu0 %4040
      %v4043 = vsel %vm979, %v4039, 0
      %v4046 = vsel %vm979, %v4041, 0
      %4048 = vmatprep.subr.bf16.mxu0 0
      %4049 = vmatpush1.bf16.xpose.msra.mxu0 0
      %4050 = vmatprep.subr.bf16.mxu0 0
      %4051 = vmatpush1.bf16.xpose.msra.mxu0 0
      %4052 = vmatprep.subr.bf16.mxu0 0
      %4053 = vmatpush1.bf16.xpose.msra.mxu0 0
      %4054 = vmatprep.subr.bf16.mxu0 0
      %4055 = vmatpush1.bf16.xpose.msra.mxu0 0
      %4056 = vmatprep.subr.bf16.mxu0 0
      %4057 = vmatpush1.bf16.xpose.msra.mxu0 0
      %4058 = vmatprep.subr.bf16.mxu0 0
      %4059 = vmatpush1.bf16.xpose.msra.mxu0 0
      %4060 = vmatprep.subr.bf16.mxu0 0
      %4061 = vmatpush1.bf16.xpose.msra.mxu0 0
      %4062 = vmatprep.subr.bf16.mxu0 0
      %4063 = vmatpush1.bf16.xpose.msra.mxu0 %v4046
      %4064 = vmatprep.subr.bf16.mxu0 0
      %4065 = vmatpush2.bf16.xpose.msra.mxu0 0
      %4066 = vmatprep.subr.bf16.mxu0 0
      %4067 = vmatpush2.bf16.xpose.msra.mxu0 0
      %4068 = vmatprep.subr.bf16.mxu0 0
      %4069 = vmatpush2.bf16.xpose.msra.mxu0 0
      %4070 = vmatprep.subr.bf16.mxu0 0
      %4071 = vmatpush2.bf16.xpose.msra.mxu0 0
      %4072 = vmatprep.subr.bf16.mxu0 0
      %4073 = vmatpush2.bf16.xpose.msra.mxu0 0
      %4074 = vmatprep.subr.bf16.mxu0 0
      %4075 = vmatpush2.bf16.xpose.msra.mxu0 0
      %4076 = vmatprep.subr.bf16.mxu0 0
      %4077 = vmatpush2.bf16.xpose.msra.mxu0 0
      %4078 = vmatprep.subr.bf16.mxu0 0
      %4079 = vmatpush2.bf16.xpose.msra.mxu0 0
      %4080 = vmatprep.mubr.bf16.mxu0 0
      %4081 = vmatmul.mubr.bf16.gmra.mxu0 %v4043
      %v4082 = vpop.f32.mrf.mxu0
      %v4083 = vadd.f32 0.0, %v4082
      %v4084 = vpop.f32.mrf.mxu0
      %v4085 = vpop.f32.mrf.mxu0
      %v4086 = vpop.f32.mrf.mxu0
      %4087 = vdwg.mxu0
      %4088 = vrot.lane.b32.xlu0 %v935, 32
      %v4089 = vpop.permute.xlu0 %4088
      %4090 = vrot.lane.b32.xlu0 %v955, 32
      %v4091 = vpop.permute.xlu0 %4090
      %v4093 = vsel %vm979, %v4089, 0
      %v4096 = vsel %vm979, %v4091, 0
      %4098 = vmatprep.subr.bf16.mxu0 0
      %4099 = vmatpush1.bf16.xpose.msra.mxu0 0
      %4100 = vmatprep.subr.bf16.mxu0 0
      %4101 = vmatpush1.bf16.xpose.msra.mxu0 0
      %4102 = vmatprep.subr.bf16.mxu0 0
      %4103 = vmatpush1.bf16.xpose.msra.mxu0 0
      %4104 = vmatprep.subr.bf16.mxu0 0
      %4105 = vmatpush1.bf16.xpose.msra.mxu0 0
      %4106 = vmatprep.subr.bf16.mxu0 0
      %4107 = vmatpush1.bf16.xpose.msra.mxu0 0
      %4108 = vmatprep.subr.bf16.mxu0 0
      %4109 = vmatpush1.bf16.xpose.msra.mxu0 0
      %4110 = vmatprep.subr.bf16.mxu0 0
      %4111 = vmatpush1.bf16.xpose.msra.mxu0 0
      %4112 = vmatprep.subr.bf16.mxu0 0
      %4113 = vmatpush1.bf16.xpose.msra.mxu0 %v4096
      %4114 = vmatprep.subr.bf16.mxu0 0
      %4115 = vmatpush2.bf16.xpose.msra.mxu0 0
      %4116 = vmatprep.subr.bf16.mxu0 0
      %4117 = vmatpush2.bf16.xpose.msra.mxu0 0
      %4118 = vmatprep.subr.bf16.mxu0 0
      %4119 = vmatpush2.bf16.xpose.msra.mxu0 0
      %4120 = vmatprep.subr.bf16.mxu0 0
      %4121 = vmatpush2.bf16.xpose.msra.mxu0 0
      %4122 = vmatprep.subr.bf16.mxu0 0
      %4123 = vmatpush2.bf16.xpose.msra.mxu0 0
      %4124 = vmatprep.subr.bf16.mxu0 0
      %4125 = vmatpush2.bf16.xpose.msra.mxu0 0
      %4126 = vmatprep.subr.bf16.mxu0 0
      %4127 = vmatpush2.bf16.xpose.msra.mxu0 0
      %4128 = vmatprep.subr.bf16.mxu0 0
      %4129 = vmatpush2.bf16.xpose.msra.mxu0 0
      %4130 = vmatprep.mubr.bf16.mxu0 0
      %4131 = vmatmul.mubr.bf16.gmra.mxu0 %v4093
      %v4132 = vpop.f32.mrf.mxu0
      %v4133 = vadd.f32 0.0, %v4132
      %v4134 = vpop.f32.mrf.mxu0
      %v4135 = vpop.f32.mrf.mxu0
      %v4136 = vpop.f32.mrf.mxu0
      %4137 = vdwg.mxu0
      %4138 = vrot.lane.b32.xlu0 %v936, 32
      %v4139 = vpop.permute.xlu0 %4138
      %4140 = vrot.lane.b32.xlu0 %v956, 32
      %v4141 = vpop.permute.xlu0 %4140
      %v4143 = vsel %vm979, %v4139, 0
      %v4146 = vsel %vm979, %v4141, 0
      %4148 = vmatprep.subr.bf16.mxu0 0
      %4149 = vmatpush1.bf16.xpose.msra.mxu0 0
      %4150 = vmatprep.subr.bf16.mxu0 0
      %4151 = vmatpush1.bf16.xpose.msra.mxu0 0
      %4152 = vmatprep.subr.bf16.mxu0 0
      %4153 = vmatpush1.bf16.xpose.msra.mxu0 0
      %4154 = vmatprep.subr.bf16.mxu0 0
      %4155 = vmatpush1.bf16.xpose.msra.mxu0 0
      %4156 = vmatprep.subr.bf16.mxu0 0
      %4157 = vmatpush1.bf16.xpose.msra.mxu0 0
      %4158 = vmatprep.subr.bf16.mxu0 0
      %4159 = vmatpush1.bf16.xpose.msra.mxu0 0
      %4160 = vmatprep.subr.bf16.mxu0 0
      %4161 = vmatpush1.bf16.xpose.msra.mxu0 0
      %4162 = vmatprep.subr.bf16.mxu0 0
      %4163 = vmatpush1.bf16.xpose.msra.mxu0 %v4146
      %4164 = vmatprep.subr.bf16.mxu0 0
      %4165 = vmatpush2.bf16.xpose.msra.mxu0 0
      %4166 = vmatprep.subr.bf16.mxu0 0
      %4167 = vmatpush2.bf16.xpose.msra.mxu0 0
      %4168 = vmatprep.subr.bf16.mxu0 0
      %4169 = vmatpush2.bf16.xpose.msra.mxu0 0
      %4170 = vmatprep.subr.bf16.mxu0 0
      %4171 = vmatpush2.bf16.xpose.msra.mxu0 0
      %4172 = vmatprep.subr.bf16.mxu0 0
      %4173 = vmatpush2.bf16.xpose.msra.mxu0 0
      %4174 = vmatprep.subr.bf16.mxu0 0
      %4175 = vmatpush2.bf16.xpose.msra.mxu0 0
      %4176 = vmatprep.subr.bf16.mxu0 0
      %4177 = vmatpush2.bf16.xpose.msra.mxu0 0
      %4178 = vmatprep.subr.bf16.mxu0 0
      %4179 = vmatpush2.bf16.xpose.msra.mxu0 0
      %4180 = vmatprep.mubr.bf16.mxu0 0
      %4181 = vmatmul.mubr.bf16.gmra.mxu0 %v4143
      %v4182 = vpop.f32.mrf.mxu0
      %v4183 = vadd.f32 0.0, %v4182
      %v4184 = vpop.f32.mrf.mxu0
      %v4185 = vpop.f32.mrf.mxu0
      %v4186 = vpop.f32.mrf.mxu0
      %4187 = vdwg.mxu0
      %4188 = vrot.lane.b32.xlu0 %v937, 32
      %v4189 = vpop.permute.xlu0 %4188
      %4190 = vrot.lane.b32.xlu0 %v957, 32
      %v4191 = vpop.permute.xlu0 %4190
      %v4193 = vsel %vm979, %v4189, 0
      %v4196 = vsel %vm979, %v4191, 0
      %4198 = vmatprep.subr.bf16.mxu0 0
      %4199 = vmatpush1.bf16.xpose.msra.mxu0 0
      %4200 = vmatprep.subr.bf16.mxu0 0
      %4201 = vmatpush1.bf16.xpose.msra.mxu0 0
      %4202 = vmatprep.subr.bf16.mxu0 0
      %4203 = vmatpush1.bf16.xpose.msra.mxu0 0
      %4204 = vmatprep.subr.bf16.mxu0 0
      %4205 = vmatpush1.bf16.xpose.msra.mxu0 0
      %4206 = vmatprep.subr.bf16.mxu0 0
      %4207 = vmatpush1.bf16.xpose.msra.mxu0 0
      %4208 = vmatprep.subr.bf16.mxu0 0
      %4209 = vmatpush1.bf16.xpose.msra.mxu0 0
      %4210 = vmatprep.subr.bf16.mxu0 0
      %4211 = vmatpush1.bf16.xpose.msra.mxu0 0
      %4212 = vmatprep.subr.bf16.mxu0 0
      %4213 = vmatpush1.bf16.xpose.msra.mxu0 %v4196
      %4214 = vmatprep.subr.bf16.mxu0 0
      %4215 = vmatpush2.bf16.xpose.msra.mxu0 0
      %4216 = vmatprep.subr.bf16.mxu0 0
      %4217 = vmatpush2.bf16.xpose.msra.mxu0 0
      %4218 = vmatprep.subr.bf16.mxu0 0
      %4219 = vmatpush2.bf16.xpose.msra.mxu0 0
      %4220 = vmatprep.subr.bf16.mxu0 0
      %4221 = vmatpush2.bf16.xpose.msra.mxu0 0
      %4222 = vmatprep.subr.bf16.mxu0 0
      %4223 = vmatpush2.bf16.xpose.msra.mxu0 0
      %4224 = vmatprep.subr.bf16.mxu0 0
      %4225 = vmatpush2.bf16.xpose.msra.mxu0 0
      %4226 = vmatprep.subr.bf16.mxu0 0
      %4227 = vmatpush2.bf16.xpose.msra.mxu0 0
      %4228 = vmatprep.subr.bf16.mxu0 0
      %4229 = vmatpush2.bf16.xpose.msra.mxu0 0
      %4230 = vmatprep.mubr.bf16.mxu0 0
      %4231 = vmatmul.mubr.bf16.gmra.mxu0 %v4193
      %v4232 = vpop.f32.mrf.mxu0
      %v4233 = vadd.f32 0.0, %v4232
      %v4234 = vpop.f32.mrf.mxu0
      %v4235 = vpop.f32.mrf.mxu0
      %v4236 = vpop.f32.mrf.mxu0
      %4237 = vdwg.mxu0
      %4238 = vrot.lane.b32.xlu0 %v938, 32
      %v4239 = vpop.permute.xlu0 %4238
      %4240 = vrot.lane.b32.xlu0 %v958, 32
      %v4241 = vpop.permute.xlu0 %4240
      %v4243 = vsel %vm979, %v4239, 0
      %v4246 = vsel %vm979, %v4241, 0
      %4248 = vmatprep.subr.bf16.mxu0 0
      %4249 = vmatpush1.bf16.xpose.msra.mxu0 0
      %4250 = vmatprep.subr.bf16.mxu0 0
      %4251 = vmatpush1.bf16.xpose.msra.mxu0 0
      %4252 = vmatprep.subr.bf16.mxu0 0
      %4253 = vmatpush1.bf16.xpose.msra.mxu0 0
      %4254 = vmatprep.subr.bf16.mxu0 0
      %4255 = vmatpush1.bf16.xpose.msra.mxu0 0
      %4256 = vmatprep.subr.bf16.mxu0 0
      %4257 = vmatpush1.bf16.xpose.msra.mxu0 0
      %4258 = vmatprep.subr.bf16.mxu0 0
      %4259 = vmatpush1.bf16.xpose.msra.mxu0 0
      %4260 = vmatprep.subr.bf16.mxu0 0
      %4261 = vmatpush1.bf16.xpose.msra.mxu0 0
      %4262 = vmatprep.subr.bf16.mxu0 0
      %4263 = vmatpush1.bf16.xpose.msra.mxu0 %v4246
      %4264 = vmatprep.subr.bf16.mxu0 0
      %4265 = vmatpush2.bf16.xpose.msra.mxu0 0
      %4266 = vmatprep.subr.bf16.mxu0 0
      %4267 = vmatpush2.bf16.xpose.msra.mxu0 0
      %4268 = vmatprep.subr.bf16.mxu0 0
      %4269 = vmatpush2.bf16.xpose.msra.mxu0 0
      %4270 = vmatprep.subr.bf16.mxu0 0
      %4271 = vmatpush2.bf16.xpose.msra.mxu0 0
      %4272 = vmatprep.subr.bf16.mxu0 0
      %4273 = vmatpush2.bf16.xpose.msra.mxu0 0
      %4274 = vmatprep.subr.bf16.mxu0 0
      %4275 = vmatpush2.bf16.xpose.msra.mxu0 0
      %4276 = vmatprep.subr.bf16.mxu0 0
      %4277 = vmatpush2.bf16.xpose.msra.mxu0 0
      %4278 = vmatprep.subr.bf16.mxu0 0
      %4279 = vmatpush2.bf16.xpose.msra.mxu0 0
      %4280 = vmatprep.mubr.bf16.mxu0 0
      %4281 = vmatmul.mubr.bf16.gmra.mxu0 %v4243
      %v4282 = vpop.f32.mrf.mxu0
      %v4283 = vadd.f32 0.0, %v4282
      %v4284 = vpop.f32.mrf.mxu0
      %v4285 = vpop.f32.mrf.mxu0
      %v4286 = vpop.f32.mrf.mxu0
      %4287 = vdwg.mxu0
      %v4288 = vsel %vm1350, %v3933, -1e+30
      %v4289 = vsel %vm1350, %v3983, -1e+30
      %v4290 = vsel %vm1350, %v4033, -1e+30
      %v4291 = vsel %vm1350, %v4083, -1e+30
      %v4292 = vsel %vm1350, %v4133, -1e+30
      %v4293 = vsel %vm1350, %v4183, -1e+30
      %v4294 = vsel %vm1350, %v4233, -1e+30
      %v4295 = vsel %vm1350, %v4283, -1e+30
      %v4296 = vsel %vm1359, %v4288, -inf
      %4297 = vmax.xlane.f32.xlu0 %v4296
      %v4298 = vpop.xlane.xlu0 %4297
      %v4299 = vsel %vm1359, %v4289, -inf
      %4300 = vmax.xlane.f32.xlu0 %v4299
      %v4301 = vpop.xlane.xlu0 %4300
      %v4302 = vsel %vm1359, %v4290, -inf
      %4303 = vmax.xlane.f32.xlu0 %v4302
      %v4304 = vpop.xlane.xlu0 %4303
      %v4305 = vsel %vm1359, %v4291, -inf
      %4306 = vmax.xlane.f32.xlu0 %v4305
      %v4307 = vpop.xlane.xlu0 %4306
      %v4308 = vsel %vm1359, %v4292, -inf
      %4309 = vmax.xlane.f32.xlu0 %v4308
      %v4310 = vpop.xlane.xlu0 %4309
      %v4311 = vsel %vm1359, %v4293, -inf
      %4312 = vmax.xlane.f32.xlu0 %v4311
      %v4313 = vpop.xlane.xlu0 %4312
      %v4314 = vsel %vm1359, %v4294, -inf
      %4315 = vmax.xlane.f32.xlu0 %v4314
      %v4316 = vpop.xlane.xlu0 %4315
      %v4317 = vsel %vm1359, %v4295, -inf
      %4318 = vmax.xlane.f32.xlu0 %v4317
      %v4319 = vpop.xlane.xlu0 %4318
      %v4320 = vsub.f32 %v4288, %v4298
      %v4321 = vsub.f32 %v4289, %v4301
      %v4322 = vsub.f32 %v4290, %v4304
      %v4323 = vsub.f32 %v4291, %v4307
      %v4324 = vsub.f32 %v4292, %v4310
      %v4325 = vsub.f32 %v4293, %v4313
      %v4326 = vsub.f32 %v4294, %v4316
      %v4327 = vsub.f32 %v4295, %v4319
      %v4328 = vmul.f32 %v4320, 1.442695
      %v4329 = vpow.pop %v4328
      %v4330 = vmul.f32 %v4321, 1.442695
      %v4331 = vpow.pop %v4330
      %v4332 = vmul.f32 %v4322, 1.442695
      %v4333 = vpow.pop %v4332
      %v4334 = vmul.f32 %v4323, 1.442695
      %v4335 = vpow.pop %v4334
      %v4336 = vmul.f32 %v4324, 1.442695
      %v4337 = vpow.pop %v4336
      %v4338 = vmul.f32 %v4325, 1.442695
      %v4339 = vpow.pop %v4338
      %v4340 = vmul.f32 %v4326, 1.442695
      %v4341 = vpow.pop %v4340
      %v4342 = vmul.f32 %v4327, 1.442695
      %v4343 = vpow.pop %v4342
      %v4344 = vsel %vm1359, %v4329, 0.0
      %4345 = vadd.xlane.f32.xlu0 %v4344
      %v4346 = vpop.xlane.xlu0 %4345
      %v4347 = vsel %vm1359, %v4331, 0.0
      %4348 = vadd.xlane.f32.xlu0 %v4347
      %v4349 = vpop.xlane.xlu0 %4348
      %v4350 = vsel %vm1359, %v4333, 0.0
      %4351 = vadd.xlane.f32.xlu0 %v4350
      %v4352 = vpop.xlane.xlu0 %4351
      %v4353 = vsel %vm1359, %v4335, 0.0
      %4354 = vadd.xlane.f32.xlu0 %v4353
      %v4355 = vpop.xlane.xlu0 %4354
      %v4356 = vsel %vm1359, %v4337, 0.0
      %4357 = vadd.xlane.f32.xlu0 %v4356
      %v4358 = vpop.xlane.xlu0 %4357
      %v4359 = vsel %vm1359, %v4339, 0.0
      %4360 = vadd.xlane.f32.xlu0 %v4359
      %v4361 = vpop.xlane.xlu0 %4360
      %v4362 = vsel %vm1359, %v4341, 0.0
      %4363 = vadd.xlane.f32.xlu0 %v4362
      %v4364 = vpop.xlane.xlu0 %4363
      %v4365 = vsel %vm1359, %v4343, 0.0
      %4366 = vadd.xlane.f32.xlu0 %v4365
      %v4367 = vpop.xlane.xlu0 %4366
      %v4368 = vrcp.pop %v4346
      %v4369 = vrcp.pop %v4349
      %v4370 = vrcp.pop %v4352
      %v4371 = vrcp.pop %v4355
      %v4372 = vrcp.pop %v4358
      %v4373 = vrcp.pop %v4361
      %v4374 = vrcp.pop %v4364
      %v4375 = vrcp.pop %v4367
      %v4376 = vmul.f32 %v4329, %v4368
      %v4377 = vmul.f32 %v4331, %v4369
      %v4378 = vmul.f32 %v4333, %v4370
      %v4379 = vmul.f32 %v4335, %v4371
      %v4380 = vmul.f32 %v4337, %v4372
      %v4381 = vmul.f32 %v4339, %v4373
      %v4382 = vmul.f32 %v4341, %v4374
      %v4383 = vmul.f32 %v4343, %v4375
      %v4384 = vpack.c.bf16 %v4376, %v4376
      %v4385 = vpack.c.bf16 %v4377, %v4377
      %v4386 = vpack.c.bf16 %v4378, %v4378
      %v4387 = vpack.c.bf16 %v4379, %v4379
      %v4388 = vpack.c.bf16 %v4380, %v4380
      %v4389 = vpack.c.bf16 %v4381, %v4381
      %v4390 = vpack.c.bf16 %v4382, %v4382
      %v4391 = vpack.c.bf16 %v4383, %v4383
      %4392 = vrot.lane.b32.xlu0 %v971, 32
      %v4393 = vpop.permute.xlu0 %4392
      %v4395 = vsel %vm1359, %v4384, 0
      %v4398 = vsel %vm1459, %v4393, 0
      %4400 = vmatprep.subr.bf16.mxu0 0
      %4401 = vmatpush1.bf16.msra.mxu0 0
      %4402 = vmatprep.subr.bf16.mxu0 0
      %4403 = vmatpush1.bf16.msra.mxu0 0
      %4404 = vmatprep.subr.bf16.mxu0 0
      %4405 = vmatpush1.bf16.msra.mxu0 0
      %4406 = vmatprep.subr.bf16.mxu0 0
      %4407 = vmatpush1.bf16.msra.mxu0 0
      %4408 = vmatprep.subr.bf16.mxu0 0
      %4409 = vmatpush1.bf16.msra.mxu0 0
      %4410 = vmatprep.subr.bf16.mxu0 0
      %4411 = vmatpush1.bf16.msra.mxu0 0
      %4412 = vmatprep.subr.bf16.mxu0 0
      %4413 = vmatpush1.bf16.msra.mxu0 0
      %4414 = vmatprep.subr.bf16.mxu0 0
      %4415 = vmatpush1.bf16.msra.mxu0 %v4398
      %4416 = vmatprep.subr.bf16.mxu0 0
      %4417 = vmatpush2.bf16.msra.mxu0 0
      %4418 = vmatprep.subr.bf16.mxu0 0
      %4419 = vmatpush2.bf16.msra.mxu0 0
      %4420 = vmatprep.subr.bf16.mxu0 0
      %4421 = vmatpush2.bf16.msra.mxu0 0
      %4422 = vmatprep.subr.bf16.mxu0 0
      %4423 = vmatpush2.bf16.msra.mxu0 0
      %4424 = vmatprep.subr.bf16.mxu0 0
      %4425 = vmatpush2.bf16.msra.mxu0 0
      %4426 = vmatprep.subr.bf16.mxu0 0
      %4427 = vmatpush2.bf16.msra.mxu0 0
      %4428 = vmatprep.subr.bf16.mxu0 0
      %4429 = vmatpush2.bf16.msra.mxu0 0
      %4430 = vmatprep.subr.bf16.mxu0 0
      %4431 = vmatpush2.bf16.msra.mxu0 0
      %4432 = vmatprep.mubr.bf16.mxu0 0
      %4433 = vmatmul.mubr.bf16.gmra.mxu0 %v4395
      %v4434 = vpop.f32.mrf.mxu0
      %v4435 = vadd.f32 0.0, %v4434
      %v4436 = vpop.f32.mrf.mxu0
      %v4437 = vpop.f32.mrf.mxu0
      %v4438 = vpop.f32.mrf.mxu0
      %4439 = vdwg.mxu0
      %4440 = vrot.lane.b32.xlu0 %v972, 32
      %v4441 = vpop.permute.xlu0 %4440
      %v4443 = vsel %vm1359, %v4385, 0
      %v4446 = vsel %vm1459, %v4441, 0
      %4448 = vmatprep.subr.bf16.mxu0 0
      %4449 = vmatpush1.bf16.msra.mxu0 0
      %4450 = vmatprep.subr.bf16.mxu0 0
      %4451 = vmatpush1.bf16.msra.mxu0 0
      %4452 = vmatprep.subr.bf16.mxu0 0
      %4453 = vmatpush1.bf16.msra.mxu0 0
      %4454 = vmatprep.subr.bf16.mxu0 0
      %4455 = vmatpush1.bf16.msra.mxu0 0
      %4456 = vmatprep.subr.bf16.mxu0 0
      %4457 = vmatpush1.bf16.msra.mxu0 0
      %4458 = vmatprep.subr.bf16.mxu0 0
      %4459 = vmatpush1.bf16.msra.mxu0 0
      %4460 = vmatprep.subr.bf16.mxu0 0
      %4461 = vmatpush1.bf16.msra.mxu0 0
      %4462 = vmatprep.subr.bf16.mxu0 0
      %4463 = vmatpush1.bf16.msra.mxu0 %v4446
      %4464 = vmatprep.subr.bf16.mxu0 0
      %4465 = vmatpush2.bf16.msra.mxu0 0
      %4466 = vmatprep.subr.bf16.mxu0 0
      %4467 = vmatpush2.bf16.msra.mxu0 0
      %4468 = vmatprep.subr.bf16.mxu0 0
      %4469 = vmatpush2.bf16.msra.mxu0 0
      %4470 = vmatprep.subr.bf16.mxu0 0
      %4471 = vmatpush2.bf16.msra.mxu0 0
      %4472 = vmatprep.subr.bf16.mxu0 0
      %4473 = vmatpush2.bf16.msra.mxu0 0
      %4474 = vmatprep.subr.bf16.mxu0 0
      %4475 = vmatpush2.bf16.msra.mxu0 0
      %4476 = vmatprep.subr.bf16.mxu0 0
      %4477 = vmatpush2.bf16.msra.mxu0 0
      %4478 = vmatprep.subr.bf16.mxu0 0
      %4479 = vmatpush2.bf16.msra.mxu0 0
      %4480 = vmatprep.mubr.bf16.mxu0 0
      %4481 = vmatmul.mubr.bf16.gmra.mxu0 %v4443
      %v4482 = vpop.f32.mrf.mxu0
      %v4483 = vadd.f32 0.0, %v4482
      %v4484 = vpop.f32.mrf.mxu0
      %v4485 = vpop.f32.mrf.mxu0
      %v4486 = vpop.f32.mrf.mxu0
      %4487 = vdwg.mxu0
      %4488 = vrot.lane.b32.xlu0 %v973, 32
      %v4489 = vpop.permute.xlu0 %4488
      %v4491 = vsel %vm1359, %v4386, 0
      %v4494 = vsel %vm1459, %v4489, 0
      %4496 = vmatprep.subr.bf16.mxu0 0
      %4497 = vmatpush1.bf16.msra.mxu0 0
      %4498 = vmatprep.subr.bf16.mxu0 0
      %4499 = vmatpush1.bf16.msra.mxu0 0
      %4500 = vmatprep.subr.bf16.mxu0 0
      %4501 = vmatpush1.bf16.msra.mxu0 0
      %4502 = vmatprep.subr.bf16.mxu0 0
      %4503 = vmatpush1.bf16.msra.mxu0 0
      %4504 = vmatprep.subr.bf16.mxu0 0
      %4505 = vmatpush1.bf16.msra.mxu0 0
      %4506 = vmatprep.subr.bf16.mxu0 0
      %4507 = vmatpush1.bf16.msra.mxu0 0
      %4508 = vmatprep.subr.bf16.mxu0 0
      %4509 = vmatpush1.bf16.msra.mxu0 0
      %4510 = vmatprep.subr.bf16.mxu0 0
      %4511 = vmatpush1.bf16.msra.mxu0 %v4494
      %4512 = vmatprep.subr.bf16.mxu0 0
      %4513 = vmatpush2.bf16.msra.mxu0 0
      %4514 = vmatprep.subr.bf16.mxu0 0
      %4515 = vmatpush2.bf16.msra.mxu0 0
      %4516 = vmatprep.subr.bf16.mxu0 0
      %4517 = vmatpush2.bf16.msra.mxu0 0
      %4518 = vmatprep.subr.bf16.mxu0 0
      %4519 = vmatpush2.bf16.msra.mxu0 0
      %4520 = vmatprep.subr.bf16.mxu0 0
      %4521 = vmatpush2.bf16.msra.mxu0 0
      %4522 = vmatprep.subr.bf16.mxu0 0
      %4523 = vmatpush2.bf16.msra.mxu0 0
      %4524 = vmatprep.subr.bf16.mxu0 0
      %4525 = vmatpush2.bf16.msra.mxu0 0
      %4526 = vmatprep.subr.bf16.mxu0 0
      %4527 = vmatpush2.bf16.msra.mxu0 0
      %4528 = vmatprep.mubr.bf16.mxu0 0
      %4529 = vmatmul.mubr.bf16.gmra.mxu0 %v4491
      %v4530 = vpop.f32.mrf.mxu0
      %v4531 = vadd.f32 0.0, %v4530
      %v4532 = vpop.f32.mrf.mxu0
      %v4533 = vpop.f32.mrf.mxu0
      %v4534 = vpop.f32.mrf.mxu0
      %4535 = vdwg.mxu0
      %4536 = vrot.lane.b32.xlu0 %v974, 32
      %v4537 = vpop.permute.xlu0 %4536
      %v4539 = vsel %vm1359, %v4387, 0
      %v4542 = vsel %vm1459, %v4537, 0
      %4544 = vmatprep.subr.bf16.mxu0 0
      %4545 = vmatpush1.bf16.msra.mxu0 0
      %4546 = vmatprep.subr.bf16.mxu0 0
      %4547 = vmatpush1.bf16.msra.mxu0 0
      %4548 = vmatprep.subr.bf16.mxu0 0
      %4549 = vmatpush1.bf16.msra.mxu0 0
      %4550 = vmatprep.subr.bf16.mxu0 0
      %4551 = vmatpush1.bf16.msra.mxu0 0
      %4552 = vmatprep.subr.bf16.mxu0 0
      %4553 = vmatpush1.bf16.msra.mxu0 0
      %4554 = vmatprep.subr.bf16.mxu0 0
      %4555 = vmatpush1.bf16.msra.mxu0 0
      %4556 = vmatprep.subr.bf16.mxu0 0
      %4557 = vmatpush1.bf16.msra.mxu0 0
      %4558 = vmatprep.subr.bf16.mxu0 0
      %4559 = vmatpush1.bf16.msra.mxu0 %v4542
      %4560 = vmatprep.subr.bf16.mxu0 0
      %4561 = vmatpush2.bf16.msra.mxu0 0
      %4562 = vmatprep.subr.bf16.mxu0 0
      %4563 = vmatpush2.bf16.msra.mxu0 0
      %4564 = vmatprep.subr.bf16.mxu0 0
      %4565 = vmatpush2.bf16.msra.mxu0 0
      %4566 = vmatprep.subr.bf16.mxu0 0
      %4567 = vmatpush2.bf16.msra.mxu0 0
      %4568 = vmatprep.subr.bf16.mxu0 0
      %4569 = vmatpush2.bf16.msra.mxu0 0
      %4570 = vmatprep.subr.bf16.mxu0 0
      %4571 = vmatpush2.bf16.msra.mxu0 0
      %4572 = vmatprep.subr.bf16.mxu0 0
      %4573 = vmatpush2.bf16.msra.mxu0 0
      %4574 = vmatprep.subr.bf16.mxu0 0
      %4575 = vmatpush2.bf16.msra.mxu0 0
      %4576 = vmatprep.mubr.bf16.mxu0 0
      %4577 = vmatmul.mubr.bf16.gmra.mxu0 %v4539
      %v4578 = vpop.f32.mrf.mxu0
      %v4579 = vadd.f32 0.0, %v4578
      %v4580 = vpop.f32.mrf.mxu0
      %v4581 = vpop.f32.mrf.mxu0
      %v4582 = vpop.f32.mrf.mxu0
      %4583 = vdwg.mxu0
      %4584 = vrot.lane.b32.xlu0 %v975, 32
      %v4585 = vpop.permute.xlu0 %4584
      %v4587 = vsel %vm1359, %v4388, 0
      %v4590 = vsel %vm1459, %v4585, 0
      %4592 = vmatprep.subr.bf16.mxu0 0
      %4593 = vmatpush1.bf16.msra.mxu0 0
      %4594 = vmatprep.subr.bf16.mxu0 0
      %4595 = vmatpush1.bf16.msra.mxu0 0
      %4596 = vmatprep.subr.bf16.mxu0 0
      %4597 = vmatpush1.bf16.msra.mxu0 0
      %4598 = vmatprep.subr.bf16.mxu0 0
      %4599 = vmatpush1.bf16.msra.mxu0 0
      %4600 = vmatprep.subr.bf16.mxu0 0
      %4601 = vmatpush1.bf16.msra.mxu0 0
      %4602 = vmatprep.subr.bf16.mxu0 0
      %4603 = vmatpush1.bf16.msra.mxu0 0
      %4604 = vmatprep.subr.bf16.mxu0 0
      %4605 = vmatpush1.bf16.msra.mxu0 0
      %4606 = vmatprep.subr.bf16.mxu0 0
      %4607 = vmatpush1.bf16.msra.mxu0 %v4590
      %4608 = vmatprep.subr.bf16.mxu0 0
      %4609 = vmatpush2.bf16.msra.mxu0 0
      %4610 = vmatprep.subr.bf16.mxu0 0
      %4611 = vmatpush2.bf16.msra.mxu0 0
      %4612 = vmatprep.subr.bf16.mxu0 0
      %4613 = vmatpush2.bf16.msra.mxu0 0
      %4614 = vmatprep.subr.bf16.mxu0 0
      %4615 = vmatpush2.bf16.msra.mxu0 0
      %4616 = vmatprep.subr.bf16.mxu0 0
      %4617 = vmatpush2.bf16.msra.mxu0 0
      %4618 = vmatprep.subr.bf16.mxu0 0
      %4619 = vmatpush2.bf16.msra.mxu0 0
      %4620 = vmatprep.subr.bf16.mxu0 0
      %4621 = vmatpush2.bf16.msra.mxu0 0
      %4622 = vmatprep.subr.bf16.mxu0 0
      %4623 = vmatpush2.bf16.msra.mxu0 0
      %4624 = vmatprep.mubr.bf16.mxu0 0
      %4625 = vmatmul.mubr.bf16.gmra.mxu0 %v4587
      %v4626 = vpop.f32.mrf.mxu0
      %v4627 = vadd.f32 0.0, %v4626
      %v4628 = vpop.f32.mrf.mxu0
      %v4629 = vpop.f32.mrf.mxu0
      %v4630 = vpop.f32.mrf.mxu0
      %4631 = vdwg.mxu0
      %4632 = vrot.lane.b32.xlu0 %v976, 32
      %v4633 = vpop.permute.xlu0 %4632
      %v4635 = vsel %vm1359, %v4389, 0
      %v4638 = vsel %vm1459, %v4633, 0
      %4640 = vmatprep.subr.bf16.mxu0 0
      %4641 = vmatpush1.bf16.msra.mxu0 0
      %4642 = vmatprep.subr.bf16.mxu0 0
      %4643 = vmatpush1.bf16.msra.mxu0 0
      %4644 = vmatprep.subr.bf16.mxu0 0
      %4645 = vmatpush1.bf16.msra.mxu0 0
      %4646 = vmatprep.subr.bf16.mxu0 0
      %4647 = vmatpush1.bf16.msra.mxu0 0
      %4648 = vmatprep.subr.bf16.mxu0 0
      %4649 = vmatpush1.bf16.msra.mxu0 0
      %4650 = vmatprep.subr.bf16.mxu0 0
      %4651 = vmatpush1.bf16.msra.mxu0 0
      %4652 = vmatprep.subr.bf16.mxu0 0
      %4653 = vmatpush1.bf16.msra.mxu0 0
      %4654 = vmatprep.subr.bf16.mxu0 0
      %4655 = vmatpush1.bf16.msra.mxu0 %v4638
      %4656 = vmatprep.subr.bf16.mxu0 0
      %4657 = vmatpush2.bf16.msra.mxu0 0
      %4658 = vmatprep.subr.bf16.mxu0 0
      %4659 = vmatpush2.bf16.msra.mxu0 0
      %4660 = vmatprep.subr.bf16.mxu0 0
      %4661 = vmatpush2.bf16.msra.mxu0 0
      %4662 = vmatprep.subr.bf16.mxu0 0
      %4663 = vmatpush2.bf16.msra.mxu0 0
      %4664 = vmatprep.subr.bf16.mxu0 0
      %4665 = vmatpush2.bf16.msra.mxu0 0
      %4666 = vmatprep.subr.bf16.mxu0 0
      %4667 = vmatpush2.bf16.msra.mxu0 0
      %4668 = vmatprep.subr.bf16.mxu0 0
      %4669 = vmatpush2.bf16.msra.mxu0 0
      %4670 = vmatprep.subr.bf16.mxu0 0
      %4671 = vmatpush2.bf16.msra.mxu0 0
      %4672 = vmatprep.mubr.bf16.mxu0 0
      %4673 = vmatmul.mubr.bf16.gmra.mxu0 %v4635
      %v4674 = vpop.f32.mrf.mxu0
      %v4675 = vadd.f32 0.0, %v4674
      %v4676 = vpop.f32.mrf.mxu0
      %v4677 = vpop.f32.mrf.mxu0
      %v4678 = vpop.f32.mrf.mxu0
      %4679 = vdwg.mxu0
      %4680 = vrot.lane.b32.xlu0 %v977, 32
      %v4681 = vpop.permute.xlu0 %4680
      %v4683 = vsel %vm1359, %v4390, 0
      %v4686 = vsel %vm1459, %v4681, 0
      %4688 = vmatprep.subr.bf16.mxu0 0
      %4689 = vmatpush1.bf16.msra.mxu0 0
      %4690 = vmatprep.subr.bf16.mxu0 0
      %4691 = vmatpush1.bf16.msra.mxu0 0
      %4692 = vmatprep.subr.bf16.mxu0 0
      %4693 = vmatpush1.bf16.msra.mxu0 0
      %4694 = vmatprep.subr.bf16.mxu0 0
      %4695 = vmatpush1.bf16.msra.mxu0 0
      %4696 = vmatprep.subr.bf16.mxu0 0
      %4697 = vmatpush1.bf16.msra.mxu0 0
      %4698 = vmatprep.subr.bf16.mxu0 0
      %4699 = vmatpush1.bf16.msra.mxu0 0
      %4700 = vmatprep.subr.bf16.mxu0 0
      %4701 = vmatpush1.bf16.msra.mxu0 0
      %4702 = vmatprep.subr.bf16.mxu0 0
      %4703 = vmatpush1.bf16.msra.mxu0 %v4686
      %4704 = vmatprep.subr.bf16.mxu0 0
      %4705 = vmatpush2.bf16.msra.mxu0 0
      %4706 = vmatprep.subr.bf16.mxu0 0
      %4707 = vmatpush2.bf16.msra.mxu0 0
      %4708 = vmatprep.subr.bf16.mxu0 0
      %4709 = vmatpush2.bf16.msra.mxu0 0
      %4710 = vmatprep.subr.bf16.mxu0 0
      %4711 = vmatpush2.bf16.msra.mxu0 0
      %4712 = vmatprep.subr.bf16.mxu0 0
      %4713 = vmatpush2.bf16.msra.mxu0 0
      %4714 = vmatprep.subr.bf16.mxu0 0
      %4715 = vmatpush2.bf16.msra.mxu0 0
      %4716 = vmatprep.subr.bf16.mxu0 0
      %4717 = vmatpush2.bf16.msra.mxu0 0
      %4718 = vmatprep.subr.bf16.mxu0 0
      %4719 = vmatpush2.bf16.msra.mxu0 0
      %4720 = vmatprep.mubr.bf16.mxu0 0
      %4721 = vmatmul.mubr.bf16.gmra.mxu0 %v4683
      %v4722 = vpop.f32.mrf.mxu0
      %v4723 = vadd.f32 0.0, %v4722
      %v4724 = vpop.f32.mrf.mxu0
      %v4725 = vpop.f32.mrf.mxu0
      %v4726 = vpop.f32.mrf.mxu0
      %4727 = vdwg.mxu0
      %4728 = vrot.lane.b32.xlu0 %v978, 32
      %v4729 = vpop.permute.xlu0 %4728
      %v4731 = vsel %vm1359, %v4391, 0
      %v4734 = vsel %vm1459, %v4729, 0
      %4736 = vmatprep.subr.bf16.mxu0 0
      %4737 = vmatpush1.bf16.msra.mxu0 0
      %4738 = vmatprep.subr.bf16.mxu0 0
      %4739 = vmatpush1.bf16.msra.mxu0 0
      %4740 = vmatprep.subr.bf16.mxu0 0
      %4741 = vmatpush1.bf16.msra.mxu0 0
      %4742 = vmatprep.subr.bf16.mxu0 0
      %4743 = vmatpush1.bf16.msra.mxu0 0
      %4744 = vmatprep.subr.bf16.mxu0 0
      %4745 = vmatpush1.bf16.msra.mxu0 0
      %4746 = vmatprep.subr.bf16.mxu0 0
      %4747 = vmatpush1.bf16.msra.mxu0 0
      %4748 = vmatprep.subr.bf16.mxu0 0
      %4749 = vmatpush1.bf16.msra.mxu0 0
      %4750 = vmatprep.subr.bf16.mxu0 0
      %4751 = vmatpush1.bf16.msra.mxu0 %v4734
      %4752 = vmatprep.subr.bf16.mxu0 0
      %4753 = vmatpush2.bf16.msra.mxu0 0
      %4754 = vmatprep.subr.bf16.mxu0 0
      %4755 = vmatpush2.bf16.msra.mxu0 0
      %4756 = vmatprep.subr.bf16.mxu0 0
      %4757 = vmatpush2.bf16.msra.mxu0 0
      %4758 = vmatprep.subr.bf16.mxu0 0
      %4759 = vmatpush2.bf16.msra.mxu0 0
      %4760 = vmatprep.subr.bf16.mxu0 0
      %4761 = vmatpush2.bf16.msra.mxu0 0
      %4762 = vmatprep.subr.bf16.mxu0 0
      %4763 = vmatpush2.bf16.msra.mxu0 0
      %4764 = vmatprep.subr.bf16.mxu0 0
      %4765 = vmatpush2.bf16.msra.mxu0 0
      %4766 = vmatprep.subr.bf16.mxu0 0
      %4767 = vmatpush2.bf16.msra.mxu0 0
      %4768 = vmatprep.mubr.bf16.mxu0 0
      %4769 = vmatmul.mubr.bf16.gmra.mxu0 %v4731
      %v4770 = vpop.f32.mrf.mxu0
      %v4771 = vadd.f32 0.0, %v4770
      %v4772 = vpop.f32.mrf.mxu0
      %v4773 = vpop.f32.mrf.mxu0
      %v4774 = vpop.f32.mrf.mxu0
      %4775 = vdwg.mxu0
      %v4776 = vpack.c.bf16 %v4483, %v4435
      %v4777 = vpack.c.bf16 %v4579, %v4531
      %v4778 = vpack.c.bf16 %v4675, %v4627
      %v4779 = vpack.c.bf16 %v4771, %v4723
      %v4784 = vunpack.c.l.b16 %v915
      %v4785 = vunpack.c.l.b16 %v916
      %v4786 = vunpack.c.l.b16 %v917
      %v4787 = vunpack.c.l.b16 %v918
      %v4788 = vpack.c.b16 %v4785, %v4784
      %v4789 = vpack.c.b16 %v4787, %v4786
      %v4793 = vsel %vm979, %v4776, 0
      %v4796 = vsel %vm979, %v4777, 0
      %v4799 = vsel %vm979, %v4778, 0
      %v4802 = vsel %vm979, %v4779, 0
      %4804 = vmatprep.subr.bf16.mxu0 0
      %4805 = vmatpush1.bf16.msra.mxu0 0
      %4806 = vmatprep.subr.bf16.mxu0 0
      %4807 = vmatpush1.bf16.msra.mxu0 0
      %4808 = vmatprep.subr.bf16.mxu0 0
      %4809 = vmatpush1.bf16.msra.mxu0 0
      %4810 = vmatprep.subr.bf16.mxu0 0
      %4811 = vmatpush1.bf16.msra.mxu0 0
      %4812 = vmatprep.subr.bf16.mxu0 0
      %4813 = vmatpush1.bf16.msra.mxu0 0
      %4814 = vmatprep.subr.bf16.mxu0 0
      %4815 = vmatpush1.bf16.msra.mxu0 0
      %4816 = vmatprep.subr.bf16.mxu0 0
      %4817 = vmatpush1.bf16.msra.mxu0 %v4789
      %4818 = vmatprep.subr.bf16.mxu0 0
      %4819 = vmatpush1.bf16.msra.mxu0 %v4788
      %4820 = vmatprep.subr.bf16.mxu0 0
      %4821 = vmatpush2.bf16.msra.mxu0 0
      %4822 = vmatprep.subr.bf16.mxu0 0
      %4823 = vmatpush2.bf16.msra.mxu0 0
      %4824 = vmatprep.subr.bf16.mxu0 0
      %4825 = vmatpush2.bf16.msra.mxu0 0
      %4826 = vmatprep.subr.bf16.mxu0 0
      %4827 = vmatpush2.bf16.msra.mxu0 0
      %4828 = vmatprep.subr.bf16.mxu0 0
      %4829 = vmatpush2.bf16.msra.mxu0 0
      %4830 = vmatprep.subr.bf16.mxu0 0
      %4831 = vmatpush2.bf16.msra.mxu0 0
      %4832 = vmatprep.subr.bf16.mxu0 0
      %4833 = vmatpush2.bf16.msra.mxu0 0
      %4834 = vmatprep.subr.bf16.mxu0 0
      %4835 = vmatpush2.bf16.msra.mxu0 0
      %4836 = vmatprep.mubr.bf16.mxu0 0
      %4837 = vmatmul.mubr.bf16.gmra.mxu0 %v4793
      %v4838 = vpop.f32.mrf.mxu0
      %v4839 = vadd.f32 0.0, %v4838
      %v4840 = vpop.f32.mrf.mxu0
      %v4841 = vpop.f32.mrf.mxu0
      %v4842 = vadd.f32 0.0, %v4841
      %v4843 = vpop.f32.mrf.mxu0
      %4844 = vmatprep.mubr.bf16.mxu0 0
      %4845 = vmatmul.mubr.bf16.gmra.mxu0 %v4796
      %v4846 = vpop.f32.mrf.mxu0
      %v4847 = vadd.f32 0.0, %v4846
      %v4848 = vpop.f32.mrf.mxu0
      %v4849 = vpop.f32.mrf.mxu0
      %v4850 = vadd.f32 0.0, %v4849
      %v4851 = vpop.f32.mrf.mxu0
      %4852 = vmatprep.mubr.bf16.mxu0 0
      %4853 = vmatmul.mubr.bf16.gmra.mxu0 %v4799
      %v4854 = vpop.f32.mrf.mxu0
      %v4855 = vadd.f32 0.0, %v4854
      %v4856 = vpop.f32.mrf.mxu0
      %v4857 = vpop.f32.mrf.mxu0
      %v4858 = vadd.f32 0.0, %v4857
      %v4859 = vpop.f32.mrf.mxu0
      %4860 = vmatprep.mubr.bf16.mxu0 0
      %4861 = vmatmul.mubr.bf16.gmra.mxu0 %v4802
      %v4862 = vpop.f32.mrf.mxu0
      %v4863 = vadd.f32 0.0, %v4862
      %v4864 = vpop.f32.mrf.mxu0
      %v4865 = vpop.f32.mrf.mxu0
      %v4866 = vadd.f32 0.0, %v4865
      %v4867 = vpop.f32.mrf.mxu0
      %4868 = vdwg.mxu0
      %v4869 = vadd.f32 %v3880, %v4839
      %v4870 = vadd.f32 %v3881, %v4842
      %v4871 = vadd.f32 %v3882, %v4847
      %v4872 = vadd.f32 %v3883, %v4850
      %v4873 = vadd.f32 %v3884, %v4855
      %v4874 = vadd.f32 %v3885, %v4858
      %v4875 = vadd.f32 %v3886, %v4863
      %v4876 = vadd.f32 %v3887, %v4866
      %v4877 = vadd.f32 %v445, %v4869
      %v4878 = vadd.f32 %v446, %v4870
      %v4879 = vadd.f32 %v447, %v4871
      %v4880 = vadd.f32 %v448, %v4872
      %v4881 = vadd.f32 %v449, %v4873
      %v4882 = vadd.f32 %v450, %v4874
      %v4883 = vadd.f32 %v451, %v4875
      %v4884 = vadd.f32 %v452, %v4876
      %v4885 = vld [vmem:[%s6] sm:$0x1]
      %v4887 = vlaneseq
      %v4888 = vshrl.u32 %v4887, 7
      %v4889 = vsub.s32 0, %v4888
      %v4890 = vrot.slane %v4885, %v4889
      %v4892 = vadd.f32 %v4877, %v4890
      %v4893 = vadd.f32 %v4878, %v4890
      %v4894 = vadd.f32 %v4879, %v4890
      %v4895 = vadd.f32 %v4880, %v4890
      %v4896 = vadd.f32 %v4881, %v4890
      %v4897 = vadd.f32 %v4882, %v4890
      %v4898 = vadd.f32 %v4883, %v4890
      %v4899 = vadd.f32 %v4884, %v4890
      %v4900 = vld [vmem:[%s7] sm:$0x1]
      %v4901 = vld [vmem:[%s8] sm:$0x1]
      %4902 = vadd.xlane.f32.xlu0 %v4892
      %v4903 = vpop.xlane.xlu0 %4902
      %4904 = vadd.xlane.f32.xlu0 %v4893
      %v4905 = vpop.xlane.xlu0 %4904
      %4906 = vadd.xlane.f32.xlu0 %v4894
      %v4907 = vpop.xlane.xlu0 %4906
      %4908 = vadd.xlane.f32.xlu0 %v4895
      %v4909 = vpop.xlane.xlu0 %4908
      %4910 = vadd.xlane.f32.xlu0 %v4896
      %v4911 = vpop.xlane.xlu0 %4910
      %4912 = vadd.xlane.f32.xlu0 %v4897
      %v4913 = vpop.xlane.xlu0 %4912
      %4914 = vadd.xlane.f32.xlu0 %v4898
      %v4915 = vpop.xlane.xlu0 %4914
      %4916 = vadd.xlane.f32.xlu0 %v4899
      %v4917 = vpop.xlane.xlu0 %4916
      %v4918 = vmul.f32 %v4903, %v471
      %v4919 = vmul.f32 %v4905, %v471
      %v4920 = vmul.f32 %v4907, %v471
      %v4921 = vmul.f32 %v4909, %v471
      %v4922 = vmul.f32 %v4911, %v471
      %v4923 = vmul.f32 %v4913, %v471
      %v4924 = vmul.f32 %v4915, %v471
      %v4925 = vmul.f32 %v4917, %v471
      %v4926 = vsub.f32 %v4892, %v4918
      %v4927 = vsub.f32 %v4893, %v4919
      %v4928 = vsub.f32 %v4894, %v4920
      %v4929 = vsub.f32 %v4895, %v4921
      %v4930 = vsub.f32 %v4896, %v4922
      %v4931 = vsub.f32 %v4897, %v4923
      %v4932 = vsub.f32 %v4898, %v4924
      %v4933 = vsub.f32 %v4899, %v4925
      %v4934 = vmul.f32 %v4926, %v4926
      %v4935 = vmul.f32 %v4927, %v4927
      %v4936 = vmul.f32 %v4928, %v4928
      %v4937 = vmul.f32 %v4929, %v4929
      %v4938 = vmul.f32 %v4930, %v4930
      %v4939 = vmul.f32 %v4931, %v4931
      %v4940 = vmul.f32 %v4932, %v4932
      %v4941 = vmul.f32 %v4933, %v4933
      %4942 = vadd.xlane.f32.xlu0 %v4934
      %v4943 = vpop.xlane.xlu0 %4942
      %4944 = vadd.xlane.f32.xlu0 %v4935
      %v4945 = vpop.xlane.xlu0 %4944
      %4946 = vadd.xlane.f32.xlu0 %v4936
      %v4947 = vpop.xlane.xlu0 %4946
      %4948 = vadd.xlane.f32.xlu0 %v4937
      %v4949 = vpop.xlane.xlu0 %4948
      %4950 = vadd.xlane.f32.xlu0 %v4938
      %v4951 = vpop.xlane.xlu0 %4950
      %4952 = vadd.xlane.f32.xlu0 %v4939
      %v4953 = vpop.xlane.xlu0 %4952
      %4954 = vadd.xlane.f32.xlu0 %v4940
      %v4955 = vpop.xlane.xlu0 %4954
      %4956 = vadd.xlane.f32.xlu0 %v4941
      %v4957 = vpop.xlane.xlu0 %4956
      %v4958 = vmul.f32 %v4943, %v471
      %v4959 = vmul.f32 %v4945, %v471
      %v4960 = vmul.f32 %v4947, %v471
      %v4961 = vmul.f32 %v4949, %v471
      %v4962 = vmul.f32 %v4951, %v471
      %v4963 = vmul.f32 %v4953, %v471
      %v4964 = vmul.f32 %v4955, %v471
      %v4965 = vmul.f32 %v4957, %v471
      %v4966 = vadd.f32 %v4958, 1e-06
      %v4967 = vadd.f32 %v4959, 1e-06
      %v4968 = vadd.f32 %v4960, 1e-06
      %v4969 = vadd.f32 %v4961, 1e-06
      %v4970 = vadd.f32 %v4962, 1e-06
      %v4971 = vadd.f32 %v4963, 1e-06
      %v4972 = vadd.f32 %v4964, 1e-06
      %v4973 = vadd.f32 %v4965, 1e-06
      %v4974 = vrsqrt.pop %v4966
      %v4975 = vrsqrt.pop %v4967
      %v4976 = vrsqrt.pop %v4968
      %v4977 = vrsqrt.pop %v4969
      %v4978 = vrsqrt.pop %v4970
      %v4979 = vrsqrt.pop %v4971
      %v4980 = vrsqrt.pop %v4972
      %v4981 = vrsqrt.pop %v4973
      %v4982 = vmul.f32 %v4926, %v4974
      %v4983 = vmul.f32 %v4927, %v4975
      %v4984 = vmul.f32 %v4928, %v4976
      %v4985 = vmul.f32 %v4929, %v4977
      %v4986 = vmul.f32 %v4930, %v4978
      %v4987 = vmul.f32 %v4931, %v4979
      %v4988 = vmul.f32 %v4932, %v4980
      %v4989 = vmul.f32 %v4933, %v4981
      %v4991 = vlaneseq
      %v4992 = vshrl.u32 %v4991, 7
      %v4993 = vsub.s32 0, %v4992
      %v4994 = vrot.slane %v4900, %v4993
      %v4996 = vmul.f32 %v4982, %v4994
      %v4997 = vmul.f32 %v4983, %v4994
      %v4998 = vmul.f32 %v4984, %v4994
      %v4999 = vmul.f32 %v4985, %v4994
      %v5000 = vmul.f32 %v4986, %v4994
      %v5001 = vmul.f32 %v4987, %v4994
      %v5002 = vmul.f32 %v4988, %v4994
      %v5003 = vmul.f32 %v4989, %v4994
      %v5005 = vlaneseq
      %v5006 = vshrl.u32 %v5005, 7
      %v5007 = vsub.s32 0, %v5006
      %v5008 = vrot.slane %v4901, %v5007
      %v5010 = vadd.f32 %v4996, %v5008
      %v5011 = vadd.f32 %v4997, %v5008
      %v5012 = vadd.f32 %v4998, %v5008
      %v5013 = vadd.f32 %v4999, %v5008
      %v5014 = vadd.f32 %v5000, %v5008
      %v5015 = vadd.f32 %v5001, %v5008
      %v5016 = vadd.f32 %v5002, %v5008
      %v5017 = vadd.f32 %v5003, %v5008
      %v5018 = vpack.c.bf16 %v5011, %v5010
      %v5019 = vpack.c.bf16 %v5013, %v5012
      %v5020 = vpack.c.bf16 %v5015, %v5014
      %v5021 = vpack.c.bf16 %v5017, %v5016
      %v5022 = vld [vmem:[%s9] sm:$0xff]
      %v5023 = vld [vmem:[%s9 + $0x8] sm:$0xff]
      %v5024 = vld [vmem:[%s9 + $0x10] sm:$0xff]
      %v5025 = vld [vmem:[%s9 + $0x18] sm:$0xff]
      %v5026 = vld [vmem:[%s9 + $0x20] sm:$0xff]
      %v5027 = vld [vmem:[%s9 + $0x28] sm:$0xff]
      %v5028 = vld [vmem:[%s9 + $0x30] sm:$0xff]
      %v5029 = vld [vmem:[%s9 + $0x38] sm:$0xff]
      %v5030 = vld [vmem:[%s9 + $0x40] sm:$0xff]
      %v5031 = vld [vmem:[%s9 + $0x48] sm:$0xff]
      %v5032 = vld [vmem:[%s9 + $0x50] sm:$0xff]
      %v5033 = vld [vmem:[%s9 + $0x58] sm:$0xff]
      %v5034 = vld [vmem:[%s9 + $0x60] sm:$0xff]
      %v5035 = vld [vmem:[%s9 + $0x68] sm:$0xff]
      %v5036 = vld [vmem:[%s9 + $0x70] sm:$0xff]
      %v5037 = vld [vmem:[%s9 + $0x78] sm:$0xff]
      %v5038 = vld [vmem:[%s9 + $0x80] sm:$0xff]
      %v5039 = vld [vmem:[%s9 + $0x88] sm:$0xff]
      %v5040 = vld [vmem:[%s9 + $0x90] sm:$0xff]
      %v5041 = vld [vmem:[%s9 + $0x98] sm:$0xff]
      %v5042 = vld [vmem:[%s9 + $0xa0] sm:$0xff]
      %v5043 = vld [vmem:[%s9 + $0xa8] sm:$0xff]
      %v5044 = vld [vmem:[%s9 + $0xb0] sm:$0xff]
      %v5045 = vld [vmem:[%s9 + $0xb8] sm:$0xff]
      %v5046 = vld [vmem:[%s9 + $0xc0] sm:$0xff]
      %v5047 = vld [vmem:[%s9 + $0xc8] sm:$0xff]
      %v5048 = vld [vmem:[%s9 + $0xd0] sm:$0xff]
      %v5049 = vld [vmem:[%s9 + $0xd8] sm:$0xff]
      %v5050 = vld [vmem:[%s9 + $0xe0] sm:$0xff]
      %v5051 = vld [vmem:[%s9 + $0xe8] sm:$0xff]
      %v5052 = vld [vmem:[%s9 + $0xf0] sm:$0xff]
      %v5053 = vld [vmem:[%s9 + $0xf8] sm:$0xff]
      %v5054 = vld [vmem:[%s10] sm:$0xf]
      %v5056 = vlaneseq
      %v5057 = vshrl.u32 %v5056, 7
      %v5058 = vsub.s32 0, %v5057
      %v5059 = vrot.slane %v5054, %v5058
      %v5060 = vlaneseq
      %v5061 = vshrl.u32 %v5060, 7
      %v5062 = vsub.s32 1, %v5061
      %v5063 = vrot.slane %v5054, %v5062
      %v5064 = vlaneseq
      %v5065 = vshrl.u32 %v5064, 7
      %v5066 = vsub.s32 2, %v5065
      %v5067 = vrot.slane %v5054, %v5066
      %v5068 = vlaneseq
      %v5069 = vshrl.u32 %v5068, 7
      %v5070 = vsub.s32 3, %v5069
      %v5071 = vrot.slane %v5054, %v5070
      %v5108 = vunpack.c.l.b16 %v5022
      %v5109 = vunpack.c.h.b16 %v5022
      %v5110 = vunpack.c.l.b16 %v5023
      %v5111 = vunpack.c.h.b16 %v5023
      %v5112 = vunpack.c.l.b16 %v5024
      %v5113 = vunpack.c.h.b16 %v5024
      %v5114 = vunpack.c.l.b16 %v5025
      %v5115 = vunpack.c.h.b16 %v5025
      %v5116 = vunpack.c.l.b16 %v5026
      %v5117 = vunpack.c.h.b16 %v5026
      %v5118 = vunpack.c.l.b16 %v5027
      %v5119 = vunpack.c.h.b16 %v5027
      %v5120 = vunpack.c.l.b16 %v5028
      %v5121 = vunpack.c.h.b16 %v5028
      %v5122 = vunpack.c.l.b16 %v5029
      %v5123 = vunpack.c.h.b16 %v5029
      %v5124 = vunpack.c.l.b16 %v5030
      %v5125 = vunpack.c.h.b16 %v5030
      %v5126 = vunpack.c.l.b16 %v5031
      %v5127 = vunpack.c.h.b16 %v5031
      %v5128 = vunpack.c.l.b16 %v5032
      %v5129 = vunpack.c.h.b16 %v5032
      %v5130 = vunpack.c.l.b16 %v5033
      %v5131 = vunpack.c.h.b16 %v5033
      %v5132 = vunpack.c.l.b16 %v5034
      %v5133 = vunpack.c.h.b16 %v5034
      %v5134 = vunpack.c.l.b16 %v5035
      %v5135 = vunpack.c.h.b16 %v5035
      %v5136 = vunpack.c.l.b16 %v5036
      %v5137 = vunpack.c.h.b16 %v5036
      %v5138 = vunpack.c.l.b16 %v5037
      %v5139 = vunpack.c.h.b16 %v5037
      %v5140 = vunpack.c.l.b16 %v5038
      %v5141 = vunpack.c.h.b16 %v5038
      %v5142 = vunpack.c.l.b16 %v5039
      %v5143 = vunpack.c.h.b16 %v5039
      %v5144 = vunpack.c.l.b16 %v5040
      %v5145 = vunpack.c.h.b16 %v5040
      %v5146 = vunpack.c.l.b16 %v5041
      %v5147 = vunpack.c.h.b16 %v5041
      %v5148 = vunpack.c.l.b16 %v5042
      %v5149 = vunpack.c.h.b16 %v5042
      %v5150 = vunpack.c.l.b16 %v5043
      %v5151 = vunpack.c.h.b16 %v5043
      %v5152 = vunpack.c.l.b16 %v5044
      %v5153 = vunpack.c.h.b16 %v5044
      %v5154 = vunpack.c.l.b16 %v5045
      %v5155 = vunpack.c.h.b16 %v5045
      %v5156 = vunpack.c.l.b16 %v5046
      %v5157 = vunpack.c.h.b16 %v5046
      %v5158 = vunpack.c.l.b16 %v5047
      %v5159 = vunpack.c.h.b16 %v5047
      %v5160 = vunpack.c.l.b16 %v5048
      %v5161 = vunpack.c.h.b16 %v5048
      %v5162 = vunpack.c.l.b16 %v5049
      %v5163 = vunpack.c.h.b16 %v5049
      %v5164 = vunpack.c.l.b16 %v5050
      %v5165 = vunpack.c.h.b16 %v5050
      %v5166 = vunpack.c.l.b16 %v5051
      %v5167 = vunpack.c.h.b16 %v5051
      %v5168 = vunpack.c.l.b16 %v5052
      %v5169 = vunpack.c.h.b16 %v5052
      %v5170 = vunpack.c.l.b16 %v5053
      %v5171 = vunpack.c.h.b16 %v5053
      %v5172 = vpack.c.b16 %v5112, %v5108
      %v5173 = vpack.c.b16 %v5113, %v5109
      %v5174 = vpack.c.b16 %v5114, %v5110
      %v5175 = vpack.c.b16 %v5115, %v5111
      %v5176 = vpack.c.b16 %v5120, %v5116
      %v5177 = vpack.c.b16 %v5121, %v5117
      %v5178 = vpack.c.b16 %v5122, %v5118
      %v5179 = vpack.c.b16 %v5123, %v5119
      %v5180 = vpack.c.b16 %v5128, %v5124
      %v5181 = vpack.c.b16 %v5129, %v5125
      %v5182 = vpack.c.b16 %v5130, %v5126
      %v5183 = vpack.c.b16 %v5131, %v5127
      %v5184 = vpack.c.b16 %v5136, %v5132
      %v5185 = vpack.c.b16 %v5137, %v5133
      %v5186 = vpack.c.b16 %v5138, %v5134
      %v5187 = vpack.c.b16 %v5139, %v5135
      %v5188 = vpack.c.b16 %v5144, %v5140
      %v5189 = vpack.c.b16 %v5145, %v5141
      %v5190 = vpack.c.b16 %v5146, %v5142
      %v5191 = vpack.c.b16 %v5147, %v5143
      %v5192 = vpack.c.b16 %v5152, %v5148
      %v5193 = vpack.c.b16 %v5153, %v5149
      %v5194 = vpack.c.b16 %v5154, %v5150
      %v5195 = vpack.c.b16 %v5155, %v5151
      %v5196 = vpack.c.b16 %v5160, %v5156
      %v5197 = vpack.c.b16 %v5161, %v5157
      %v5198 = vpack.c.b16 %v5162, %v5158
      %v5199 = vpack.c.b16 %v5163, %v5159
      %v5200 = vpack.c.b16 %v5168, %v5164
      %v5201 = vpack.c.b16 %v5169, %v5165
      %v5202 = vpack.c.b16 %v5170, %v5166
      %v5203 = vpack.c.b16 %v5171, %v5167
      %5236 = vmatprep.subr.bf16.mxu0 %v5201
      %5237 = vmatpush1.bf16.msra.mxu0 %v5200
      %5238 = vmatprep.subr.bf16.mxu0 %v5197
      %5239 = vmatpush1.bf16.msra.mxu0 %v5196
      %5240 = vmatprep.subr.bf16.mxu0 %v5193
      %5241 = vmatpush1.bf16.msra.mxu0 %v5192
      %5242 = vmatprep.subr.bf16.mxu0 %v5189
      %5243 = vmatpush1.bf16.msra.mxu0 %v5188
      %5244 = vmatprep.subr.bf16.mxu0 %v5185
      %5245 = vmatpush1.bf16.msra.mxu0 %v5184
      %5246 = vmatprep.subr.bf16.mxu0 %v5181
      %5247 = vmatpush1.bf16.msra.mxu0 %v5180
      %5248 = vmatprep.subr.bf16.mxu0 %v5177
      %5249 = vmatpush1.bf16.msra.mxu0 %v5176
      %5250 = vmatprep.subr.bf16.mxu0 %v5173
      %5251 = vmatpush1.bf16.msra.mxu0 %v5172
      %5252 = vmatprep.subr.bf16.mxu0 0
      %5253 = vmatpush2.bf16.msra.mxu0 0
      %5254 = vmatprep.subr.bf16.mxu0 0
      %5255 = vmatpush2.bf16.msra.mxu0 0
      %5256 = vmatprep.subr.bf16.mxu0 0
      %5257 = vmatpush2.bf16.msra.mxu0 0
      %5258 = vmatprep.subr.bf16.mxu0 0
      %5259 = vmatpush2.bf16.msra.mxu0 0
      %5260 = vmatprep.subr.bf16.mxu0 0
      %5261 = vmatpush2.bf16.msra.mxu0 0
      %5262 = vmatprep.subr.bf16.mxu0 0
      %5263 = vmatpush2.bf16.msra.mxu0 0
      %5264 = vmatprep.subr.bf16.mxu0 0
      %5265 = vmatpush2.bf16.msra.mxu0 0
      %5266 = vmatprep.subr.bf16.mxu0 0
      %5267 = vmatpush2.bf16.msra.mxu0 0
      %5268 = vmatprep.mubr.bf16.mxu0 0
      %5269 = vmatmul.mubr.bf16.gmra.mxu0 %v5018
      %v5270 = vpop.f32.mrf.mxu0
      %v5271 = vadd.f32 %v5059, %v5270
      %v5272 = vpop.f32.mrf.mxu0
      %v5273 = vadd.f32 %v5063, %v5272
      %v5274 = vpop.f32.mrf.mxu0
      %v5275 = vadd.f32 %v5059, %v5274
      %v5276 = vpop.f32.mrf.mxu0
      %v5277 = vadd.f32 %v5063, %v5276
      %5278 = vmatprep.mubr.bf16.mxu0 0
      %5279 = vmatmul.mubr.bf16.gmra.mxu0 %v5019
      %v5280 = vpop.f32.mrf.mxu0
      %v5281 = vadd.f32 %v5059, %v5280
      %v5282 = vpop.f32.mrf.mxu0
      %v5283 = vadd.f32 %v5063, %v5282
      %v5284 = vpop.f32.mrf.mxu0
      %v5285 = vadd.f32 %v5059, %v5284
      %v5286 = vpop.f32.mrf.mxu0
      %v5287 = vadd.f32 %v5063, %v5286
      %5288 = vmatprep.mubr.bf16.mxu0 0
      %5289 = vmatmul.mubr.bf16.gmra.mxu0 %v5020
      %v5290 = vpop.f32.mrf.mxu0
      %v5291 = vadd.f32 %v5059, %v5290
      %v5292 = vpop.f32.mrf.mxu0
      %v5293 = vadd.f32 %v5063, %v5292
      %v5294 = vpop.f32.mrf.mxu0
      %v5295 = vadd.f32 %v5059, %v5294
      %v5296 = vpop.f32.mrf.mxu0
      %v5297 = vadd.f32 %v5063, %v5296
      %5298 = vmatprep.mubr.bf16.mxu0 0
      %5299 = vmatmul.mubr.bf16.gmra.mxu0 %v5021
      %v5300 = vpop.f32.mrf.mxu0
      %v5301 = vadd.f32 %v5059, %v5300
      %v5302 = vpop.f32.mrf.mxu0
      %v5303 = vadd.f32 %v5063, %v5302
      %v5304 = vpop.f32.mrf.mxu0
      %v5305 = vadd.f32 %v5059, %v5304
      %v5306 = vpop.f32.mrf.mxu0
      %v5307 = vadd.f32 %v5063, %v5306
      %5308 = vdwg.mxu0
      %5309 = vmatprep.subr.bf16.mxu0 %v5203
      %5310 = vmatpush1.bf16.msra.mxu0 %v5202
      %5311 = vmatprep.subr.bf16.mxu0 %v5199
      %5312 = vmatpush1.bf16.msra.mxu0 %v5198
      %5313 = vmatprep.subr.bf16.mxu0 %v5195
      %5314 = vmatpush1.bf16.msra.mxu0 %v5194
      %5315 = vmatprep.subr.bf16.mxu0 %v5191
      %5316 = vmatpush1.bf16.msra.mxu0 %v5190
      %5317 = vmatprep.subr.bf16.mxu0 %v5187
      %5318 = vmatpush1.bf16.msra.mxu0 %v5186
      %5319 = vmatprep.subr.bf16.mxu0 %v5183
      %5320 = vmatpush1.bf16.msra.mxu0 %v5182
      %5321 = vmatprep.subr.bf16.mxu0 %v5179
      %5322 = vmatpush1.bf16.msra.mxu0 %v5178
      %5323 = vmatprep.subr.bf16.mxu0 %v5175
      %5324 = vmatpush1.bf16.msra.mxu0 %v5174
      %5325 = vmatprep.subr.bf16.mxu0 0
      %5326 = vmatpush2.bf16.msra.mxu0 0
      %5327 = vmatprep.subr.bf16.mxu0 0
      %5328 = vmatpush2.bf16.msra.mxu0 0
      %5329 = vmatprep.subr.bf16.mxu0 0
      %5330 = vmatpush2.bf16.msra.mxu0 0
      %5331 = vmatprep.subr.bf16.mxu0 0
      %5332 = vmatpush2.bf16.msra.mxu0 0
      %5333 = vmatprep.subr.bf16.mxu0 0
      %5334 = vmatpush2.bf16.msra.mxu0 0
      %5335 = vmatprep.subr.bf16.mxu0 0
      %5336 = vmatpush2.bf16.msra.mxu0 0
      %5337 = vmatprep.subr.bf16.mxu0 0
      %5338 = vmatpush2.bf16.msra.mxu0 0
      %5339 = vmatprep.subr.bf16.mxu0 0
      %5340 = vmatpush2.bf16.msra.mxu0 0
      %5341 = vmatprep.mubr.bf16.mxu0 0
      %5342 = vmatmul.mubr.bf16.gmra.mxu0 %v5018
      %v5343 = vpop.f32.mrf.mxu0
      %v5344 = vadd.f32 %v5067, %v5343
      %v5345 = vpop.f32.mrf.mxu0
      %v5346 = vadd.f32 %v5071, %v5345
      %v5347 = vpop.f32.mrf.mxu0
      %v5348 = vadd.f32 %v5067, %v5347
      %v5349 = vpop.f32.mrf.mxu0
      %v5350 = vadd.f32 %v5071, %v5349
      %5351 = vmatprep.mubr.bf16.mxu0 0
      %5352 = vmatmul.mubr.bf16.gmra.mxu0 %v5019
      %v5353 = vpop.f32.mrf.mxu0
      %v5354 = vadd.f32 %v5067, %v5353
      %v5355 = vpop.f32.mrf.mxu0
      %v5356 = vadd.f32 %v5071, %v5355
      %v5357 = vpop.f32.mrf.mxu0
      %v5358 = vadd.f32 %v5067, %v5357
      %v5359 = vpop.f32.mrf.mxu0
      %v5360 = vadd.f32 %v5071, %v5359
      %5361 = vmatprep.mubr.bf16.mxu0 0
      %5362 = vmatmul.mubr.bf16.gmra.mxu0 %v5020
      %v5363 = vpop.f32.mrf.mxu0
      %v5364 = vadd.f32 %v5067, %v5363
      %v5365 = vpop.f32.mrf.mxu0
      %v5366 = vadd.f32 %v5071, %v5365
      %v5367 = vpop.f32.mrf.mxu0
      %v5368 = vadd.f32 %v5067, %v5367
      %v5369 = vpop.f32.mrf.mxu0
      %v5370 = vadd.f32 %v5071, %v5369
      %5371 = vmatprep.mubr.bf16.mxu0 0
      %5372 = vmatmul.mubr.bf16.gmra.mxu0 %v5021
      %v5373 = vpop.f32.mrf.mxu0
      %v5374 = vadd.f32 %v5067, %v5373
      %v5375 = vpop.f32.mrf.mxu0
      %v5376 = vadd.f32 %v5071, %v5375
      %v5377 = vpop.f32.mrf.mxu0
      %v5378 = vadd.f32 %v5067, %v5377
      %v5379 = vpop.f32.mrf.mxu0
      %v5380 = vadd.f32 %v5071, %v5379
      %5381 = vdwg.mxu0
      %v5382 = vmul.f32 %v5271, %v5271
      %v5383 = vmul.f32 %v5273, %v5273
      %v5384 = vmul.f32 %v5344, %v5344
      %v5385 = vmul.f32 %v5346, %v5346
      %v5386 = vmul.f32 %v5275, %v5275
      %v5387 = vmul.f32 %v5277, %v5277
      %v5388 = vmul.f32 %v5348, %v5348
      %v5389 = vmul.f32 %v5350, %v5350
      %v5390 = vmul.f32 %v5281, %v5281
      %v5391 = vmul.f32 %v5283, %v5283
      %v5392 = vmul.f32 %v5354, %v5354
      %v5393 = vmul.f32 %v5356, %v5356
      %v5394 = vmul.f32 %v5285, %v5285
      %v5395 = vmul.f32 %v5287, %v5287
      %v5396 = vmul.f32 %v5358, %v5358
      %v5397 = vmul.f32 %v5360, %v5360
      %v5398 = vmul.f32 %v5291, %v5291
      %v5399 = vmul.f32 %v5293, %v5293
      %v5400 = vmul.f32 %v5364, %v5364
      %v5401 = vmul.f32 %v5366, %v5366
      %v5402 = vmul.f32 %v5295, %v5295
      %v5403 = vmul.f32 %v5297, %v5297
      %v5404 = vmul.f32 %v5368, %v5368
      %v5405 = vmul.f32 %v5370, %v5370
      %v5406 = vmul.f32 %v5301, %v5301
      %v5407 = vmul.f32 %v5303, %v5303
      %v5408 = vmul.f32 %v5374, %v5374
      %v5409 = vmul.f32 %v5376, %v5376
      %v5410 = vmul.f32 %v5305, %v5305
      %v5411 = vmul.f32 %v5307, %v5307
      %v5412 = vmul.f32 %v5378, %v5378
      %v5413 = vmul.f32 %v5380, %v5380
      %v5414 = vmul.f32 %v5271, %v5382
      %v5415 = vmul.f32 %v5273, %v5383
      %v5416 = vmul.f32 %v5344, %v5384
      %v5417 = vmul.f32 %v5346, %v5385
      %v5418 = vmul.f32 %v5275, %v5386
      %v5419 = vmul.f32 %v5277, %v5387
      %v5420 = vmul.f32 %v5348, %v5388
      %v5421 = vmul.f32 %v5350, %v5389
      %v5422 = vmul.f32 %v5281, %v5390
      %v5423 = vmul.f32 %v5283, %v5391
      %v5424 = vmul.f32 %v5354, %v5392
      %v5425 = vmul.f32 %v5356, %v5393
      %v5426 = vmul.f32 %v5285, %v5394
      %v5427 = vmul.f32 %v5287, %v5395
      %v5428 = vmul.f32 %v5358, %v5396
      %v5429 = vmul.f32 %v5360, %v5397
      %v5430 = vmul.f32 %v5291, %v5398
      %v5431 = vmul.f32 %v5293, %v5399
      %v5432 = vmul.f32 %v5364, %v5400
      %v5433 = vmul.f32 %v5366, %v5401
      %v5434 = vmul.f32 %v5295, %v5402
      %v5435 = vmul.f32 %v5297, %v5403
      %v5436 = vmul.f32 %v5368, %v5404
      %v5437 = vmul.f32 %v5370, %v5405
      %v5438 = vmul.f32 %v5301, %v5406
      %v5439 = vmul.f32 %v5303, %v5407
      %v5440 = vmul.f32 %v5374, %v5408
      %v5441 = vmul.f32 %v5376, %v5409
      %v5442 = vmul.f32 %v5305, %v5410
      %v5443 = vmul.f32 %v5307, %v5411
      %v5444 = vmul.f32 %v5378, %v5412
      %v5445 = vmul.f32 %v5380, %v5413
      %v5446 = vmul.f32 %v5414, 0.044715
      %v5447 = vmul.f32 %v5415, 0.044715
      %v5448 = vmul.f32 %v5416, 0.044715
      %v5449 = vmul.f32 %v5417, 0.044715
      %v5450 = vmul.f32 %v5418, 0.044715
      %v5451 = vmul.f32 %v5419, 0.044715
      %v5452 = vmul.f32 %v5420, 0.044715
      %v5453 = vmul.f32 %v5421, 0.044715
      %v5454 = vmul.f32 %v5422, 0.044715
      %v5455 = vmul.f32 %v5423, 0.044715
      %v5456 = vmul.f32 %v5424, 0.044715
      %v5457 = vmul.f32 %v5425, 0.044715
      %v5458 = vmul.f32 %v5426, 0.044715
      %v5459 = vmul.f32 %v5427, 0.044715
      %v5460 = vmul.f32 %v5428, 0.044715
      %v5461 = vmul.f32 %v5429, 0.044715
      %v5462 = vmul.f32 %v5430, 0.044715
      %v5463 = vmul.f32 %v5431, 0.044715
      %v5464 = vmul.f32 %v5432, 0.044715
      %v5465 = vmul.f32 %v5433, 0.044715
      %v5466 = vmul.f32 %v5434, 0.044715
      %v5467 = vmul.f32 %v5435, 0.044715
      %v5468 = vmul.f32 %v5436, 0.044715
      %v5469 = vmul.f32 %v5437, 0.044715
      %v5470 = vmul.f32 %v5438, 0.044715
      %v5471 = vmul.f32 %v5439, 0.044715
      %v5472 = vmul.f32 %v5440, 0.044715
      %v5473 = vmul.f32 %v5441, 0.044715
      %v5474 = vmul.f32 %v5442, 0.044715
      %v5475 = vmul.f32 %v5443, 0.044715
      %v5476 = vmul.f32 %v5444, 0.044715
      %v5477 = vmul.f32 %v5445, 0.044715
      %v5478 = vadd.f32 %v5271, %v5446
      %v5479 = vadd.f32 %v5273, %v5447
      %v5480 = vadd.f32 %v5344, %v5448
      %v5481 = vadd.f32 %v5346, %v5449
      %v5482 = vadd.f32 %v5275, %v5450
      %v5483 = vadd.f32 %v5277, %v5451
      %v5484 = vadd.f32 %v5348, %v5452
      %v5485 = vadd.f32 %v5350, %v5453
      %v5486 = vadd.f32 %v5281, %v5454
      %v5487 = vadd.f32 %v5283, %v5455
      %v5488 = vadd.f32 %v5354, %v5456
      %v5489 = vadd.f32 %v5356, %v5457
      %v5490 = vadd.f32 %v5285, %v5458
      %v5491 = vadd.f32 %v5287, %v5459
      %v5492 = vadd.f32 %v5358, %v5460
      %v5493 = vadd.f32 %v5360, %v5461
      %v5494 = vadd.f32 %v5291, %v5462
      %v5495 = vadd.f32 %v5293, %v5463
      %v5496 = vadd.f32 %v5364, %v5464
      %v5497 = vadd.f32 %v5366, %v5465
      %v5498 = vadd.f32 %v5295, %v5466
      %v5499 = vadd.f32 %v5297, %v5467
      %v5500 = vadd.f32 %v5368, %v5468
      %v5501 = vadd.f32 %v5370, %v5469
      %v5502 = vadd.f32 %v5301, %v5470
      %v5503 = vadd.f32 %v5303, %v5471
      %v5504 = vadd.f32 %v5374, %v5472
      %v5505 = vadd.f32 %v5376, %v5473
      %v5506 = vadd.f32 %v5305, %v5474
      %v5507 = vadd.f32 %v5307, %v5475
      %v5508 = vadd.f32 %v5378, %v5476
      %v5509 = vadd.f32 %v5380, %v5477
      %v5510 = vmul.f32 %v5478, 0.7978846
      %v5511 = vmul.f32 %v5479, 0.7978846
      %v5512 = vmul.f32 %v5480, 0.7978846
      %v5513 = vmul.f32 %v5481, 0.7978846
      %v5514 = vmul.f32 %v5482, 0.7978846
      %v5515 = vmul.f32 %v5483, 0.7978846
      %v5516 = vmul.f32 %v5484, 0.7978846
      %v5517 = vmul.f32 %v5485, 0.7978846
      %v5518 = vmul.f32 %v5486, 0.7978846
      %v5519 = vmul.f32 %v5487, 0.7978846
      %v5520 = vmul.f32 %v5488, 0.7978846
      %v5521 = vmul.f32 %v5489, 0.7978846
      %v5522 = vmul.f32 %v5490, 0.7978846
      %v5523 = vmul.f32 %v5491, 0.7978846
      %v5524 = vmul.f32 %v5492, 0.7978846
      %v5525 = vmul.f32 %v5493, 0.7978846
      %v5526 = vmul.f32 %v5494, 0.7978846
      %v5527 = vmul.f32 %v5495, 0.7978846
      %v5528 = vmul.f32 %v5496, 0.7978846
      %v5529 = vmul.f32 %v5497, 0.7978846
      %v5530 = vmul.f32 %v5498, 0.7978846
      %v5531 = vmul.f32 %v5499, 0.7978846
      %v5532 = vmul.f32 %v5500, 0.7978846
      %v5533 = vmul.f32 %v5501, 0.7978846
      %v5534 = vmul.f32 %v5502, 0.7978846
      %v5535 = vmul.f32 %v5503, 0.7978846
      %v5536 = vmul.f32 %v5504, 0.7978846
      %v5537 = vmul.f32 %v5505, 0.7978846
      %v5538 = vmul.f32 %v5506, 0.7978846
      %v5539 = vmul.f32 %v5507, 0.7978846
      %v5540 = vmul.f32 %v5508, 0.7978846
      %v5541 = vmul.f32 %v5509, 0.7978846
      %v5542 = vtanh.pop %v5510
      %v5543 = vtanh.pop %v5511
      %v5544 = vtanh.pop %v5512
      %v5545 = vtanh.pop %v5513
      %v5546 = vtanh.pop %v5514
      %v5547 = vtanh.pop %v5515
      %v5548 = vtanh.pop %v5516
      %v5549 = vtanh.pop %v5517
      %v5550 = vtanh.pop %v5518
      %v5551 = vtanh.pop %v5519
      %v5552 = vtanh.pop %v5520
      %v5553 = vtanh.pop %v5521
      %v5554 = vtanh.pop %v5522
      %v5555 = vtanh.pop %v5523
      %v5556 = vtanh.pop %v5524
      %v5557 = vtanh.pop %v5525
      %v5558 = vtanh.pop %v5526
      %v5559 = vtanh.pop %v5527
      %v5560 = vtanh.pop %v5528
      %v5561 = vtanh.pop %v5529
      %v5562 = vtanh.pop %v5530
      %v5563 = vtanh.pop %v5531
      %v5564 = vtanh.pop %v5532
      %v5565 = vtanh.pop %v5533
      %v5566 = vtanh.pop %v5534
      %v5567 = vtanh.pop %v5535
      %v5568 = vtanh.pop %v5536
      %v5569 = vtanh.pop %v5537
      %v5570 = vtanh.pop %v5538
      %v5571 = vtanh.pop %v5539
      %v5572 = vtanh.pop %v5540
      %v5573 = vtanh.pop %v5541
      %v5574 = vadd.f32 %v5542, 1.0
      %v5575 = vadd.f32 %v5543, 1.0
      %v5576 = vadd.f32 %v5544, 1.0
      %v5577 = vadd.f32 %v5545, 1.0
      %v5578 = vadd.f32 %v5546, 1.0
      %v5579 = vadd.f32 %v5547, 1.0
      %v5580 = vadd.f32 %v5548, 1.0
      %v5581 = vadd.f32 %v5549, 1.0
      %v5582 = vadd.f32 %v5550, 1.0
      %v5583 = vadd.f32 %v5551, 1.0
      %v5584 = vadd.f32 %v5552, 1.0
      %v5585 = vadd.f32 %v5553, 1.0
      %v5586 = vadd.f32 %v5554, 1.0
      %v5587 = vadd.f32 %v5555, 1.0
      %v5588 = vadd.f32 %v5556, 1.0
      %v5589 = vadd.f32 %v5557, 1.0
      %v5590 = vadd.f32 %v5558, 1.0
      %v5591 = vadd.f32 %v5559, 1.0
      %v5592 = vadd.f32 %v5560, 1.0
      %v5593 = vadd.f32 %v5561, 1.0
      %v5594 = vadd.f32 %v5562, 1.0
      %v5595 = vadd.f32 %v5563, 1.0
      %v5596 = vadd.f32 %v5564, 1.0
      %v5597 = vadd.f32 %v5565, 1.0
      %v5598 = vadd.f32 %v5566, 1.0
      %v5599 = vadd.f32 %v5567, 1.0
      %v5600 = vadd.f32 %v5568, 1.0
      %v5601 = vadd.f32 %v5569, 1.0
      %v5602 = vadd.f32 %v5570, 1.0
      %v5603 = vadd.f32 %v5571, 1.0
      %v5604 = vadd.f32 %v5572, 1.0
      %v5605 = vadd.f32 %v5573, 1.0
      %v5606 = vmul.f32 %v5574, 0.5
      %v5607 = vmul.f32 %v5575, 0.5
      %v5608 = vmul.f32 %v5576, 0.5
      %v5609 = vmul.f32 %v5577, 0.5
      %v5610 = vmul.f32 %v5578, 0.5
      %v5611 = vmul.f32 %v5579, 0.5
      %v5612 = vmul.f32 %v5580, 0.5
      %v5613 = vmul.f32 %v5581, 0.5
      %v5614 = vmul.f32 %v5582, 0.5
      %v5615 = vmul.f32 %v5583, 0.5
      %v5616 = vmul.f32 %v5584, 0.5
      %v5617 = vmul.f32 %v5585, 0.5
      %v5618 = vmul.f32 %v5586, 0.5
      %v5619 = vmul.f32 %v5587, 0.5
      %v5620 = vmul.f32 %v5588, 0.5
      %v5621 = vmul.f32 %v5589, 0.5
      %v5622 = vmul.f32 %v5590, 0.5
      %v5623 = vmul.f32 %v5591, 0.5
      %v5624 = vmul.f32 %v5592, 0.5
      %v5625 = vmul.f32 %v5593, 0.5
      %v5626 = vmul.f32 %v5594, 0.5
      %v5627 = vmul.f32 %v5595, 0.5
      %v5628 = vmul.f32 %v5596, 0.5
      %v5629 = vmul.f32 %v5597, 0.5
      %v5630 = vmul.f32 %v5598, 0.5
      %v5631 = vmul.f32 %v5599, 0.5
      %v5632 = vmul.f32 %v5600, 0.5
      %v5633 = vmul.f32 %v5601, 0.5
      %v5634 = vmul.f32 %v5602, 0.5
      %v5635 = vmul.f32 %v5603, 0.5
      %v5636 = vmul.f32 %v5604, 0.5
      %v5637 = vmul.f32 %v5605, 0.5
      %v5638 = vmul.f32 %v5271, %v5606
      %v5639 = vmul.f32 %v5273, %v5607
      %v5640 = vmul.f32 %v5344, %v5608
      %v5641 = vmul.f32 %v5346, %v5609
      %v5642 = vmul.f32 %v5275, %v5610
      %v5643 = vmul.f32 %v5277, %v5611
      %v5644 = vmul.f32 %v5348, %v5612
      %v5645 = vmul.f32 %v5350, %v5613
      %v5646 = vmul.f32 %v5281, %v5614
      %v5647 = vmul.f32 %v5283, %v5615
      %v5648 = vmul.f32 %v5354, %v5616
      %v5649 = vmul.f32 %v5356, %v5617
      %v5650 = vmul.f32 %v5285, %v5618
      %v5651 = vmul.f32 %v5287, %v5619
      %v5652 = vmul.f32 %v5358, %v5620
      %v5653 = vmul.f32 %v5360, %v5621
      %v5654 = vmul.f32 %v5291, %v5622
      %v5655 = vmul.f32 %v5293, %v5623
      %v5656 = vmul.f32 %v5364, %v5624
      %v5657 = vmul.f32 %v5366, %v5625
      %v5658 = vmul.f32 %v5295, %v5626
      %v5659 = vmul.f32 %v5297, %v5627
      %v5660 = vmul.f32 %v5368, %v5628
      %v5661 = vmul.f32 %v5370, %v5629
      %v5662 = vmul.f32 %v5301, %v5630
      %v5663 = vmul.f32 %v5303, %v5631
      %v5664 = vmul.f32 %v5374, %v5632
      %v5665 = vmul.f32 %v5376, %v5633
      %v5666 = vmul.f32 %v5305, %v5634
      %v5667 = vmul.f32 %v5307, %v5635
      %v5668 = vmul.f32 %v5378, %v5636
      %v5669 = vmul.f32 %v5380, %v5637
      %v5670 = vpack.c.bf16 %v5642, %v5638
      %v5671 = vpack.c.bf16 %v5643, %v5639
      %v5672 = vpack.c.bf16 %v5644, %v5640
      %v5673 = vpack.c.bf16 %v5645, %v5641
      %v5674 = vpack.c.bf16 %v5650, %v5646
      %v5675 = vpack.c.bf16 %v5651, %v5647
      %v5676 = vpack.c.bf16 %v5652, %v5648
      %v5677 = vpack.c.bf16 %v5653, %v5649
      %v5678 = vpack.c.bf16 %v5658, %v5654
      %v5679 = vpack.c.bf16 %v5659, %v5655
      %v5680 = vpack.c.bf16 %v5660, %v5656
      %v5681 = vpack.c.bf16 %v5661, %v5657
      %v5682 = vpack.c.bf16 %v5666, %v5662
      %v5683 = vpack.c.bf16 %v5667, %v5663
      %v5684 = vpack.c.bf16 %v5668, %v5664
      %v5685 = vpack.c.bf16 %v5669, %v5665
      %v5686 = vld [vmem:[%s11] sm:$0xf]
      %v5687 = vld [vmem:[%s11 + $0x4] sm:$0xf]
      %v5688 = vld [vmem:[%s11 + $0x8] sm:$0xf]
      %v5689 = vld [vmem:[%s11 + $0xc] sm:$0xf]
      %v5690 = vld [vmem:[%s11 + $0x10] sm:$0xf]
      %v5691 = vld [vmem:[%s11 + $0x14] sm:$0xf]
      %v5692 = vld [vmem:[%s11 + $0x18] sm:$0xf]
      %v5693 = vld [vmem:[%s11 + $0x1c] sm:$0xf]
      %v5694 = vld [vmem:[%s11 + $0x20] sm:$0xf]
      %v5695 = vld [vmem:[%s11 + $0x24] sm:$0xf]
      %v5696 = vld [vmem:[%s11 + $0x28] sm:$0xf]
      %v5697 = vld [vmem:[%s11 + $0x2c] sm:$0xf]
      %v5698 = vld [vmem:[%s11 + $0x30] sm:$0xf]
      %v5699 = vld [vmem:[%s11 + $0x34] sm:$0xf]
      %v5700 = vld [vmem:[%s11 + $0x38] sm:$0xf]
      %v5701 = vld [vmem:[%s11 + $0x3c] sm:$0xf]
      %v5702 = vld [vmem:[%s11 + $0x40] sm:$0xf]
      %v5703 = vld [vmem:[%s11 + $0x44] sm:$0xf]
      %v5704 = vld [vmem:[%s11 + $0x48] sm:$0xf]
      %v5705 = vld [vmem:[%s11 + $0x4c] sm:$0xf]
      %v5706 = vld [vmem:[%s11 + $0x50] sm:$0xf]
      %v5707 = vld [vmem:[%s11 + $0x54] sm:$0xf]
      %v5708 = vld [vmem:[%s11 + $0x58] sm:$0xf]
      %v5709 = vld [vmem:[%s11 + $0x5c] sm:$0xf]
      %v5710 = vld [vmem:[%s11 + $0x60] sm:$0xf]
      %v5711 = vld [vmem:[%s11 + $0x64] sm:$0xf]
      %v5712 = vld [vmem:[%s11 + $0x68] sm:$0xf]
      %v5713 = vld [vmem:[%s11 + $0x6c] sm:$0xf]
      %v5714 = vld [vmem:[%s11 + $0x70] sm:$0xf]
      %v5715 = vld [vmem:[%s11 + $0x74] sm:$0xf]
      %v5716 = vld [vmem:[%s11 + $0x78] sm:$0xf]
      %v5717 = vld [vmem:[%s11 + $0x7c] sm:$0xf]
      %v5718 = vld [vmem:[%s11 + $0x80] sm:$0xf]
      %v5719 = vld [vmem:[%s11 + $0x84] sm:$0xf]
      %v5720 = vld [vmem:[%s11 + $0x88] sm:$0xf]
      %v5721 = vld [vmem:[%s11 + $0x8c] sm:$0xf]
      %v5722 = vld [vmem:[%s11 + $0x90] sm:$0xf]
      %v5723 = vld [vmem:[%s11 + $0x94] sm:$0xf]
      %v5724 = vld [vmem:[%s11 + $0x98] sm:$0xf]
      %v5725 = vld [vmem:[%s11 + $0x9c] sm:$0xf]
      %v5726 = vld [vmem:[%s11 + $0xa0] sm:$0xf]
      %v5727 = vld [vmem:[%s11 + $0xa4] sm:$0xf]
      %v5728 = vld [vmem:[%s11 + $0xa8] sm:$0xf]
      %v5729 = vld [vmem:[%s11 + $0xac] sm:$0xf]
      %v5730 = vld [vmem:[%s11 + $0xb0] sm:$0xf]
      %v5731 = vld [vmem:[%s11 + $0xb4] sm:$0xf]
      %v5732 = vld [vmem:[%s11 + $0xb8] sm:$0xf]
      %v5733 = vld [vmem:[%s11 + $0xbc] sm:$0xf]
      %v5734 = vld [vmem:[%s11 + $0xc0] sm:$0xf]
      %v5735 = vld [vmem:[%s11 + $0xc4] sm:$0xf]
      %v5736 = vld [vmem:[%s11 + $0xc8] sm:$0xf]
      %v5737 = vld [vmem:[%s11 + $0xcc] sm:$0xf]
      %v5738 = vld [vmem:[%s11 + $0xd0] sm:$0xf]
      %v5739 = vld [vmem:[%s11 + $0xd4] sm:$0xf]
      %v5740 = vld [vmem:[%s11 + $0xd8] sm:$0xf]
      %v5741 = vld [vmem:[%s11 + $0xdc] sm:$0xf]
      %v5742 = vld [vmem:[%s11 + $0xe0] sm:$0xf]
      %v5743 = vld [vmem:[%s11 + $0xe4] sm:$0xf]
      %v5744 = vld [vmem:[%s11 + $0xe8] sm:$0xf]
      %v5745 = vld [vmem:[%s11 + $0xec] sm:$0xf]
      %v5746 = vld [vmem:[%s11 + $0xf0] sm:$0xf]
      %v5747 = vld [vmem:[%s11 + $0xf4] sm:$0xf]
      %v5748 = vld [vmem:[%s11 + $0xf8] sm:$0xf]
      %v5749 = vld [vmem:[%s11 + $0xfc] sm:$0xf]
      %v5750 = vld [vmem:[%s12] sm:$0x1]
      %v5752 = vlaneseq
      %v5753 = vshrl.u32 %v5752, 7
      %v5754 = vsub.s32 0, %v5753
      %v5755 = vrot.slane %v5750, %v5754
      %v5821 = vunpack.c.l.b16 %v5686
      %v5822 = vunpack.c.l.b16 %v5687
      %v5823 = vunpack.c.l.b16 %v5688
      %v5824 = vunpack.c.l.b16 %v5689
      %v5825 = vunpack.c.l.b16 %v5690
      %v5826 = vunpack.c.l.b16 %v5691
      %v5827 = vunpack.c.l.b16 %v5692
      %v5828 = vunpack.c.l.b16 %v5693
      %v5829 = vunpack.c.l.b16 %v5694
      %v5830 = vunpack.c.l.b16 %v5695
      %v5831 = vunpack.c.l.b16 %v5696
      %v5832 = vunpack.c.l.b16 %v5697
      %v5833 = vunpack.c.l.b16 %v5698
      %v5834 = vunpack.c.l.b16 %v5699
      %v5835 = vunpack.c.l.b16 %v5700
      %v5836 = vunpack.c.l.b16 %v5701
      %v5837 = vunpack.c.l.b16 %v5702
      %v5838 = vunpack.c.l.b16 %v5703
      %v5839 = vunpack.c.l.b16 %v5704
      %v5840 = vunpack.c.l.b16 %v5705
      %v5841 = vunpack.c.l.b16 %v5706
      %v5842 = vunpack.c.l.b16 %v5707
      %v5843 = vunpack.c.l.b16 %v5708
      %v5844 = vunpack.c.l.b16 %v5709
      %v5845 = vunpack.c.l.b16 %v5710
      %v5846 = vunpack.c.l.b16 %v5711
      %v5847 = vunpack.c.l.b16 %v5712
      %v5848 = vunpack.c.l.b16 %v5713
      %v5849 = vunpack.c.l.b16 %v5714
      %v5850 = vunpack.c.l.b16 %v5715
      %v5851 = vunpack.c.l.b16 %v5716
      %v5852 = vunpack.c.l.b16 %v5717
      %v5853 = vunpack.c.l.b16 %v5718
      %v5854 = vunpack.c.l.b16 %v5719
      %v5855 = vunpack.c.l.b16 %v5720
      %v5856 = vunpack.c.l.b16 %v5721
      %v5857 = vunpack.c.l.b16 %v5722
      %v5858 = vunpack.c.l.b16 %v5723
      %v5859 = vunpack.c.l.b16 %v5724
      %v5860 = vunpack.c.l.b16 %v5725
      %v5861 = vunpack.c.l.b16 %v5726
      %v5862 = vunpack.c.l.b16 %v5727
      %v5863 = vunpack.c.l.b16 %v5728
      %v5864 = vunpack.c.l.b16 %v5729
      %v5865 = vunpack.c.l.b16 %v5730
      %v5866 = vunpack.c.l.b16 %v5731
      %v5867 = vunpack.c.l.b16 %v5732
      %v5868 = vunpack.c.l.b16 %v5733
      %v5869 = vunpack.c.l.b16 %v5734
      %v5870 = vunpack.c.l.b16 %v5735
      %v5871 = vunpack.c.l.b16 %v5736
      %v5872 = vunpack.c.l.b16 %v5737
      %v5873 = vunpack.c.l.b16 %v5738
      %v5874 = vunpack.c.l.b16 %v5739
      %v5875 = vunpack.c.l.b16 %v5740
      %v5876 = vunpack.c.l.b16 %v5741
      %v5877 = vunpack.c.l.b16 %v5742
      %v5878 = vunpack.c.l.b16 %v5743
      %v5879 = vunpack.c.l.b16 %v5744
      %v5880 = vunpack.c.l.b16 %v5745
      %v5881 = vunpack.c.l.b16 %v5746
      %v5882 = vunpack.c.l.b16 %v5747
      %v5883 = vunpack.c.l.b16 %v5748
      %v5884 = vunpack.c.l.b16 %v5749
      %v5885 = vpack.c.b16 %v5822, %v5821
      %v5886 = vpack.c.b16 %v5824, %v5823
      %v5887 = vpack.c.b16 %v5826, %v5825
      %v5888 = vpack.c.b16 %v5828, %v5827
      %v5889 = vpack.c.b16 %v5830, %v5829
      %v5890 = vpack.c.b16 %v5832, %v5831
      %v5891 = vpack.c.b16 %v5834, %v5833
      %v5892 = vpack.c.b16 %v5836, %v5835
      %v5893 = vpack.c.b16 %v5838, %v5837
      %v5894 = vpack.c.b16 %v5840, %v5839
      %v5895 = vpack.c.b16 %v5842, %v5841
      %v5896 = vpack.c.b16 %v5844, %v5843
      %v5897 = vpack.c.b16 %v5846, %v5845
      %v5898 = vpack.c.b16 %v5848, %v5847
      %v5899 = vpack.c.b16 %v5850, %v5849
      %v5900 = vpack.c.b16 %v5852, %v5851
      %v5901 = vpack.c.b16 %v5854, %v5853
      %v5902 = vpack.c.b16 %v5856, %v5855
      %v5903 = vpack.c.b16 %v5858, %v5857
      %v5904 = vpack.c.b16 %v5860, %v5859
      %v5905 = vpack.c.b16 %v5862, %v5861
      %v5906 = vpack.c.b16 %v5864, %v5863
      %v5907 = vpack.c.b16 %v5866, %v5865
      %v5908 = vpack.c.b16 %v5868, %v5867
      %v5909 = vpack.c.b16 %v5870, %v5869
      %v5910 = vpack.c.b16 %v5872, %v5871
      %v5911 = vpack.c.b16 %v5874, %v5873
      %v5912 = vpack.c.b16 %v5876, %v5875
      %v5913 = vpack.c.b16 %v5878, %v5877
      %v5914 = vpack.c.b16 %v5880, %v5879
      %v5915 = vpack.c.b16 %v5882, %v5881
      %v5916 = vpack.c.b16 %v5884, %v5883
      %5949 = vmatprep.subr.bf16.mxu0 0
      %5950 = vmatpush1.bf16.msra.mxu0 %v5892
      %5951 = vmatprep.subr.bf16.mxu0 0
      %5952 = vmatpush1.bf16.msra.mxu0 %v5891
      %5953 = vmatprep.subr.bf16.mxu0 0
      %5954 = vmatpush1.bf16.msra.mxu0 %v5890
      %5955 = vmatprep.subr.bf16.mxu0 0
      %5956 = vmatpush1.bf16.msra.mxu0 %v5889
      %5957 = vmatprep.subr.bf16.mxu0 0
      %5958 = vmatpush1.bf16.msra.mxu0 %v5888
      %5959 = vmatprep.subr.bf16.mxu0 0
      %5960 = vmatpush1.bf16.msra.mxu0 %v5887
      %5961 = vmatprep.subr.bf16.mxu0 0
      %5962 = vmatpush1.bf16.msra.mxu0 %v5886
      %5963 = vmatprep.subr.bf16.mxu0 0
      %5964 = vmatpush1.bf16.msra.mxu0 %v5885
      %5965 = vmatprep.subr.bf16.mxu0 0
      %5966 = vmatpush2.bf16.msra.mxu0 %v5900
      %5967 = vmatprep.subr.bf16.mxu0 0
      %5968 = vmatpush2.bf16.msra.mxu0 %v5899
      %5969 = vmatprep.subr.bf16.mxu0 0
      %5970 = vmatpush2.bf16.msra.mxu0 %v5898
      %5971 = vmatprep.subr.bf16.mxu0 0
      %5972 = vmatpush2.bf16.msra.mxu0 %v5897
      %5973 = vmatprep.subr.bf16.mxu0 0
      %5974 = vmatpush2.bf16.msra.mxu0 %v5896
      %5975 = vmatprep.subr.bf16.mxu0 0
      %5976 = vmatpush2.bf16.msra.mxu0 %v5895
      %5977 = vmatprep.subr.bf16.mxu0 0
      %5978 = vmatpush2.bf16.msra.mxu0 %v5894
      %5979 = vmatprep.subr.bf16.mxu0 0
      %5980 = vmatpush2.bf16.msra.mxu0 %v5893
      %5981 = vmatprep.mubr.bf16.mxu0 %v5671
      %5982 = vmatmul.mubr.bf16.gmra.mxu0 %v5670
      %v5983 = vpop.f32.mrf.mxu0
      %v5984 = vadd.f32 %v5755, %v5983
      %v5985 = vpop.f32.mrf.mxu0
      %v5986 = vpop.f32.mrf.mxu0
      %v5987 = vadd.f32 %v5755, %v5986
      %v5988 = vpop.f32.mrf.mxu0
      %5989 = vmatprep.mubr.bf16.mxu0 %v5675
      %5990 = vmatmul.mubr.bf16.gmra.mxu0 %v5674
      %v5991 = vpop.f32.mrf.mxu0
      %v5992 = vadd.f32 %v5755, %v5991
      %v5993 = vpop.f32.mrf.mxu0
      %v5994 = vpop.f32.mrf.mxu0
      %v5995 = vadd.f32 %v5755, %v5994
      %v5996 = vpop.f32.mrf.mxu0
      %5997 = vmatprep.mubr.bf16.mxu0 %v5679
      %5998 = vmatmul.mubr.bf16.gmra.mxu0 %v5678
      %v5999 = vpop.f32.mrf.mxu0
      %v6000 = vadd.f32 %v5755, %v5999
      %v6001 = vpop.f32.mrf.mxu0
      %v6002 = vpop.f32.mrf.mxu0
      %v6003 = vadd.f32 %v5755, %v6002
      %v6004 = vpop.f32.mrf.mxu0
      %6005 = vmatprep.mubr.bf16.mxu0 %v5683
      %6006 = vmatmul.mubr.bf16.gmra.mxu0 %v5682
      %v6007 = vpop.f32.mrf.mxu0
      %v6008 = vadd.f32 %v5755, %v6007
      %v6009 = vpop.f32.mrf.mxu0
      %v6010 = vpop.f32.mrf.mxu0
      %v6011 = vadd.f32 %v5755, %v6010
      %v6012 = vpop.f32.mrf.mxu0
      %6013 = vdwg.mxu0
      %6014 = vmatprep.subr.bf16.mxu0 0
      %6015 = vmatpush1.bf16.msra.mxu0 %v5908
      %6016 = vmatprep.subr.bf16.mxu0 0
      %6017 = vmatpush1.bf16.msra.mxu0 %v5907
      %6018 = vmatprep.subr.bf16.mxu0 0
      %6019 = vmatpush1.bf16.msra.mxu0 %v5906
      %6020 = vmatprep.subr.bf16.mxu0 0
      %6021 = vmatpush1.bf16.msra.mxu0 %v5905
      %6022 = vmatprep.subr.bf16.mxu0 0
      %6023 = vmatpush1.bf16.msra.mxu0 %v5904
      %6024 = vmatprep.subr.bf16.mxu0 0
      %6025 = vmatpush1.bf16.msra.mxu0 %v5903
      %6026 = vmatprep.subr.bf16.mxu0 0
      %6027 = vmatpush1.bf16.msra.mxu0 %v5902
      %6028 = vmatprep.subr.bf16.mxu0 0
      %6029 = vmatpush1.bf16.msra.mxu0 %v5901
      %6030 = vmatprep.subr.bf16.mxu0 0
      %6031 = vmatpush2.bf16.msra.mxu0 %v5916
      %6032 = vmatprep.subr.bf16.mxu0 0
      %6033 = vmatpush2.bf16.msra.mxu0 %v5915
      %6034 = vmatprep.subr.bf16.mxu0 0
      %6035 = vmatpush2.bf16.msra.mxu0 %v5914
      %6036 = vmatprep.subr.bf16.mxu0 0
      %6037 = vmatpush2.bf16.msra.mxu0 %v5913
      %6038 = vmatprep.subr.bf16.mxu0 0
      %6039 = vmatpush2.bf16.msra.mxu0 %v5912
      %6040 = vmatprep.subr.bf16.mxu0 0
      %6041 = vmatpush2.bf16.msra.mxu0 %v5911
      %6042 = vmatprep.subr.bf16.mxu0 0
      %6043 = vmatpush2.bf16.msra.mxu0 %v5910
      %6044 = vmatprep.subr.bf16.mxu0 0
      %6045 = vmatpush2.bf16.msra.mxu0 %v5909
      %6046 = vmatprep.mubr.bf16.mxu0 %v5673
      %6047 = vmatmul.mubr.bf16.gmra.mxu0 %v5672
      %v6048 = vpop.f32.mrf.mxu0
      %v6049 = vadd.f32 %v5984, %v6048
      %v6050 = vpop.f32.mrf.mxu0
      %v6051 = vpop.f32.mrf.mxu0
      %v6052 = vadd.f32 %v5987, %v6051
      %v6053 = vpop.f32.mrf.mxu0
      %6054 = vmatprep.mubr.bf16.mxu0 %v5677
      %6055 = vmatmul.mubr.bf16.gmra.mxu0 %v5676
      %v6056 = vpop.f32.mrf.mxu0
      %v6057 = vadd.f32 %v5992, %v6056
      %v6058 = vpop.f32.mrf.mxu0
      %v6059 = vpop.f32.mrf.mxu0
      %v6060 = vadd.f32 %v5995, %v6059
      %v6061 = vpop.f32.mrf.mxu0
      %6062 = vmatprep.mubr.bf16.mxu0 %v5681
      %6063 = vmatmul.mubr.bf16.gmra.mxu0 %v5680
      %v6064 = vpop.f32.mrf.mxu0
      %v6065 = vadd.f32 %v6000, %v6064
      %v6066 = vpop.f32.mrf.mxu0
      %v6067 = vpop.f32.mrf.mxu0
      %v6068 = vadd.f32 %v6003, %v6067
      %v6069 = vpop.f32.mrf.mxu0
      %6070 = vmatprep.mubr.bf16.mxu0 %v5685
      %6071 = vmatmul.mubr.bf16.gmra.mxu0 %v5684
      %v6072 = vpop.f32.mrf.mxu0
      %v6073 = vadd.f32 %v6008, %v6072
      %v6074 = vpop.f32.mrf.mxu0
      %v6075 = vpop.f32.mrf.mxu0
      %v6076 = vadd.f32 %v6011, %v6075
      %v6077 = vpop.f32.mrf.mxu0
      %6078 = vdwg.mxu0
      %v6079 = vadd.f32 %v4892, %v6049
      %v6080 = vadd.f32 %v4893, %v6052
      %v6081 = vadd.f32 %v4894, %v6057
      %v6082 = vadd.f32 %v4895, %v6060
      %v6083 = vadd.f32 %v4896, %v6065
      %v6084 = vadd.f32 %v4897, %v6068
      %v6085 = vadd.f32 %v4898, %v6073
      %v6086 = vadd.f32 %v4899, %v6076
      %6087 = vst [vmem:[%s442] sm:$0xff] %v6079
      %6088 = vst [vmem:[%s442 + $0x8] sm:$0xff] %v6080
      %6089 = vst [vmem:[%s442 + $0x10] sm:$0xff] %v6081
      %6090 = vst [vmem:[%s442 + $0x18] sm:$0xff] %v6082
      %6091 = vst [vmem:[%s442 + $0x20] sm:$0xff] %v6083
      %6092 = vst [vmem:[%s442 + $0x28] sm:$0xff] %v6084
      %6093 = vst [vmem:[%s442 + $0x30] sm:$0xff] %v6085
      %6094 = vst [vmem:[%s442 + $0x38] sm:$0xff] %v6086
      %s6095 = smul.u32 8, %s24
      %p6096 = scmp.lt.s32.totalorder %s6095, 15
      %s6097 = scalar_select %p6096, %s6095, 15
      %s6098 = smul.addr %s6097, 8
      %s6099 = scalar_lea.vmem %s13, %s6098
      // Predicated region
      $region73: #{_lambda_.5} parent=71 // pred_check
        %p6100 = pneg %p320
      $region74: #{_lambda_.5} parent=71 // pred_check_branch
        %6102 = sbr.rel (%p6100) target = $region76
      $region75: #{_lambda_.5} parent=71 // pred_region
        %s6103 = smul.u32 8, %s24
      $region76: #{_lambda_.5} parent=71 // pred_fallthru
        _
    $region72: #{_lambda_.5} parent=5 // pred_fallthru
      _
    %p6104 = scmp.le.s32.totalorder 2, %s19
    // Predicated region
    $region77: #{_lambda_.5} parent=5 // pred_check
      %p6105 = pneg %p6104
    $region78: #{_lambda_.5} parent=5 // pred_check_branch
      %6107 = sbr.rel (%p6105) target = $region80
    $region79: #{_lambda_.5} parent=5 // pred_region
      %s6108 = ssub.s32 %s19, 2
      // Predicated region
      $region81: #{_lambda_.5} parent=79 // pred_check
        %p6109 = pneg %p326
      $region82: #{_lambda_.5} parent=79 // pred_check_branch
        %6111 = sbr.rel (%p6109) target = $region84
      $region83: #{_lambda_.5} parent=79 // pred_region
        %s6112 = smul.u32 8, %s25
        %p6113 = scmp.lt.s32.totalorder %s6112, 15
        %s6114 = scalar_select %p6113, %s6112, 15
        %s6115 = smul.addr %s6114, 8
        %s6116 = scalar_lea.vmem %s13, %s6115
      $region84: #{_lambda_.5} parent=79 // pred_fallthru
        _
    $region80: #{_lambda_.5} parent=5 // pred_fallthru
      _
  $region6: #{_lambda_.5} parent=0 // loop_footer
    %s23 = sadd.s32 1, %s19
  $region7: #{_lambda_.5} parent=0 // loop_footer_branch
    %18 = sbr.rel target = $region3
  $region8: #{_lambda_.5} parent=0 // loop_exit
    _

</llo_original>
